<compile_context>
chip_gen: v6e
topology: v6e:2x2x1
jax: 0.10.0
libtpu: 0.0.40
codegen_flags: <defaults>
</compile_context>

<pallas_src>
import functools
import math

import jax
import jax.numpy as jnp
from jax.experimental import pallas as pl
from jax.experimental.pallas import tpu as pltpu

EPS = 1e-6
NEG_BIG = 1e9
MXU_DTYPE = jnp.bfloat16          # MXU operand dtype (f32 accumulation kept)


def _vmem_limit_bytes():
    """Generation-aware VMEM budget: ~75% of capacity, capped, safe fallback."""
    cap = 64 * 1024 * 1024
    try:
        cap = int(pltpu.get_tpu_info().vmem_capacity_bytes)
    except Exception:
        pass
    return max(32 * 1024 * 1024, min((cap * 3) // 4, 100 * 1024 * 1024))


def _cparams(n_parallel_axes):
    return pltpu.CompilerParams(
        dimension_semantics=("parallel",) * n_parallel_axes,
        vmem_limit_bytes=_vmem_limit_bytes(),
    )


# ---------------- in-kernel helpers (pure jnp on VMEM values) ----------------

def _ln(x, a, b):
    """Repo's custom LayerNorm: a*(x-mean)/(std+eps)+b, std unbiased (n-1).

    NOTE: matches the module's LayerNorm (torch x.std default = unbiased, eps
    added to std), NOT torch.nn.LayerNorm.  Exact reciprocal here: the LN error
    would compound across the residual stack (review feedback).
    """
    d = x.shape[-1]
    mean = jnp.mean(x, axis=-1, keepdims=True)
    xc = x - mean
    var = jnp.sum(xc * xc, axis=-1, keepdims=True) * (1.0 / (d - 1))
    std = jnp.sqrt(var)
    return a * xc * pl.reciprocal(std + EPS, approx=False) + b


def _proj(x_f32, w, b):
    """x @ w + b with bf16 MXU operands and f32 accumulation."""
    y = jnp.dot(x_f32.astype(w.dtype), w, preferred_element_type=jnp.float32)
    return y + b


def _mha_core(q, k, v, mask_bias, n_heads, scale):
    """Multi-head attention on full (L, D) tensors.

    Heads are static lane slices (no reshape/transpose); mask_bias is the
    in-kernel additive (mask-1)*1e9 bias, shared across heads.
    """
    d = q.shape[-1]
    dh = d // n_heads
    outs = []
    for h in range(n_heads):
        sl = slice(h * dh, (h + 1) * dh)
        qh = q[:, sl].astype(MXU_DTYPE)
        kh = k[:, sl].astype(MXU_DTYPE)
        vh = v[:, sl].astype(MXU_DTYPE)
        s = jnp.einsum("qd,kd->qk", qh, kh,
                       preferred_element_type=jnp.float32) * scale
        s = s + mask_bias
        s = s - jnp.max(s, axis=-1, keepdims=True)          # stable softmax
        p = jnp.exp(s)
        p = p * pl.reciprocal(jnp.sum(p, axis=-1, keepdims=True), approx=True)
        outs.append(jnp.dot(p.astype(MXU_DTYPE), vh,
                            preferred_element_type=jnp.float32))
    return jnp.concatenate(outs, axis=-1)                    # (Lq, D) f32


# ------------------------- fused per-layer kernel -----------------------------

def _encoder_layer_kernel(x_ref, y_ref, mask_ref, rsi_ref,
                          ln1a_ref, ln1b_ref, wqkv_ref, bqkv_ref, wo1_ref, bo1_ref,
                          ln2a_ref, ln2b_ref, wq_ref, bq_ref, wkv_ref, bkv_ref,
                          wo2_ref, bo2_ref,
                          ln3a_ref, ln3b_ref, w1_ref, b1_ref, w2_ref, b2_ref,
                          flna_ref, flnb_ref, o_ref,
                          *, n_heads, scale, apply_final_ln):
    """One full fusion layer (3 sublayers) per grid step (per batch element).

    If `apply_final_ln` (last layer only) the Encoder's closing LayerNorm is
    applied before the single HBM writeback.
    """
    x = x_ref[0].astype(jnp.float32)                         # (Lx, D)
    y = y_ref[0].astype(jnp.float32)                         # (Ly, D)
    d = x.shape[-1]

    # additive mask biases computed in-kernel from the raw bf16 0/1 masks
    mbias = (mask_ref[0].astype(jnp.float32) - 1.0) * NEG_BIG   # (Lx, Lx)
    rbias = (rsi_ref[0].astype(jnp.float32) - 1.0) * NEG_BIG    # (Lx, Ly)

    # --- sublayer 1: x + Wo(MHA(LN(x), LN(x), LN(x), mask)) ---
    h = _ln(x, ln1a_ref[...], ln1b_ref[...])
    qkv = _proj(h, wqkv_ref[...], bqkv_ref[...])             # (Lx, 3D)
    attn = _mha_core(qkv[:, :d], qkv[:, d:2 * d], qkv[:, 2 * d:],
                     mbias, n_heads, scale)
    x = x + _proj(attn, wo1_ref[...], bo1_ref[...])

    # --- sublayer 2: x + Wo(MHA(LN(x), y, y, rsi_mask)) ---
    h = _ln(x, ln2a_ref[...], ln2b_ref[...])
    q = _proj(h, wq_ref[...], bq_ref[...])                   # (Lx, D)
    kv = _proj(y, wkv_ref[...], bkv_ref[...])                # (Ly, 2D)
    attn = _mha_core(q, kv[:, :d], kv[:, d:], rbias, n_heads, scale)
    x = x + _proj(attn, wo2_ref[...], bo2_ref[...])

    # --- sublayer 3: x + W2(relu(W1(LN(x)))) ---
    h = _ln(x, ln3a_ref[...], ln3b_ref[...])
    a = jnp.maximum(_proj(h, w1_ref[...], b1_ref[...]), 0.0)
    x = x + _proj(a, w2_ref[...], b2_ref[...])

    if apply_final_ln:        # static flag; last layer only (Encoder.norm)
        x = _ln(x, flna_ref[...], flnb_ref[...])

    o_ref[0] = x.astype(o_ref.dtype)


# ------------------------------- wrappers ------------------------------------

def encoder_layer(x, y, m01, r01, lp, fln_a, fln_b, *, n_heads, apply_final_ln):
    B, L, D = x.shape
    Ly = y.shape[1]
    sp, cp, fp = lp["self"], lp["cross"], lp["ffn"]
    Dff = fp["w1"].shape[1]

    kern = functools.partial(
        _encoder_layer_kernel, n_heads=n_heads,
        scale=1.0 / math.sqrt(D // n_heads), apply_final_ln=apply_final_ln)

    rep = lambda b: (0, 0)                 # weights: resident across batch axis
    vec = lambda dim: pl.BlockSpec((1, dim), rep)
    mat = lambda r, c: pl.BlockSpec((r, c), rep)

    in_specs = [
        pl.BlockSpec((1, L, D), lambda b: (b, 0, 0)),        # x
        pl.BlockSpec((1, Ly, D), lambda b: (b, 0, 0)),       # y
        pl.BlockSpec((1, L, L), lambda b: (b, 0, 0)),        # self mask (bf16)
        pl.BlockSpec((1, L, Ly), lambda b: (b, 0, 0)),       # rsi mask (bf16)
        # self-attention
        vec(D), vec(D), mat(D, 3 * D), vec(3 * D), mat(D, D), vec(D),
        # cross-attention
        vec(D), vec(D), mat(D, D), vec(D), mat(D, 2 * D), vec(2 * D),
        mat(D, D), vec(D),
        # feed-forward
        vec(D), vec(D), mat(D, Dff), vec(Dff), mat(Dff, D), vec(D),
        # final LayerNorm (used only when apply_final_ln)
        vec(D), vec(D),
    ]

    args = (
        x, y, m01, r01,
        sp["ln_a"].reshape(1, D), sp["ln_b"].reshape(1, D),
        sp["wqkv"], sp["bqkv"].reshape(1, 3 * D),
        sp["wo"], sp["bo"].reshape(1, D),
        cp["ln_a"].reshape(1, D), cp["ln_b"].reshape(1, D),
        cp["wq"], cp["bq"].reshape(1, D),
        cp["wkv"], cp["bkv"].reshape(1, 2 * D),
        cp["wo"], cp["bo"].reshape(1, D),
        fp["ln_a"].reshape(1, D), fp["ln_b"].reshape(1, D),
        fp["w1"], fp["b1"].reshape(1, Dff),
        fp["w2"], fp["b2"].reshape(1, D),
        fln_a.reshape(1, D), fln_b.reshape(1, D),
    )

    return pl.pallas_call(
        kern,
        out_shape=jax.ShapeDtypeStruct((B, L, D), x.dtype),
        grid=(B,),
        in_specs=in_specs,
        out_specs=pl.BlockSpec((1, L, D), lambda b: (b, 0, 0)),
        compiler_params=_cparams(1),
    )(*args)


def encoder_forward(x, y, mask, rsi_mask, params, *, n_heads):
    """Encoder.forward: x through each fusion layer, then the final LayerNorm
    (folded into the last layer's kernel).

    mask / rsi_mask: (B, 1, Lq, Lk), 1 = attend, 0 = masked (PyTorch
    masked_fill(mask==0, -1e9) semantics, realized as an in-kernel -1e9 bias).
    """
    # raw 0/1 masks, head dim squeezed, bf16 to halve the per-layer mask DMA
    m01 = mask[:, 0].astype(jnp.bfloat16)                    # (B, Lx, Lx)
    r01 = rsi_mask[:, 0].astype(jnp.bfloat16)                # (B, Lx, Ly)

    n_layers = len(params["layers"])
    for i, lp in enumerate(params["layers"]):
        x = encoder_layer(x, y, m01, r01, lp,
                          params["norm_a"], params["norm_b"],
                          n_heads=n_heads,
                          apply_final_ln=(i == n_layers - 1))
    return x


# ------------------------------ param init -----------------------------------

def init_params(key, n_layers, d_model, n_heads, d_ff):
    assert d_model % n_heads == 0

    def dense(k, din, dout):
        kw, kb = jax.random.split(k)
        w = (jax.random.normal(kw, (din, dout), jnp.float32) * 0.02
             ).astype(MXU_DTYPE)                             # weights in bf16
        b = jax.random.normal(kb, (dout,), jnp.float32) * 0.02
        return w, b

    ones = jnp.ones((d_model,), jnp.float32)
    zeros = jnp.zeros((d_model,), jnp.float32)

    layers = []
    for _ in range(n_layers):
        key, kq, kk, kv, ko, kq2, kk2, kv2, ko2, kf1, kf2 = jax.random.split(key, 11)
        # self-attention: fused QKV projection
        wq, bq = dense(kq, d_model, d_model)
        wk, bk = dense(kk, d_model, d_model)
        wv, bv = dense(kv, d_model, d_model)
        wo, bo = dense(ko, d_model, d_model)
        self_p = dict(
            wqkv=jnp.concatenate([wq, wk, wv], axis=1),
            bqkv=jnp.concatenate([bq, bk, bv], axis=0),
            wo=wo, bo=bo, ln_a=ones, ln_b=zeros)
        # cross-attention: separate Q, fused KV projection
        wq2, bq2 = dense(kq2, d_model, d_model)
        wk2, bk2 = dense(kk2, d_model, d_model)
        wv2, bv2 = dense(kv2, d_model, d_model)
        wo2, bo2 = dense(ko2, d_model, d_model)
        cross_p = dict(
            wq=wq2, bq=bq2,
            wkv=jnp.concatenate([wk2, wv2], axis=1),
            bkv=jnp.concatenate([bk2, bv2], axis=0),
            wo=wo2, bo=bo2, ln_a=ones, ln_b=zeros)
        # position-wise feed-forward
        w1, b1 = dense(kf1, d_model, d_ff)
        w2, b2 = dense(kf2, d_ff, d_model)
        ffn_p = dict(w1=w1, b1=b1, w2=w2, b2=b2, ln_a=ones, ln_b=zeros)
        layers.append(dict(self=self_p, cross=cross_p, ffn=ffn_p))

    return dict(layers=layers, norm_a=ones, norm_b=zeros)


# --------------------------------- main ---------------------------------------

if __name__ == "__main__":
    # D / Dff multiples of 128 so every matmul / output lane dim is lane-dense.
    B, LX, LY, D, H, DFF, N = 2, 8, 8, 128, 4, 256, 2

    key = jax.random.PRNGKey(0)
    kx, ky, kp = jax.random.split(key, 3)
    x = jax.random.normal(kx, (B, LX, D), jnp.float32)
    y = jax.random.normal(ky, (B, LY, D), jnp.float32)

    # mask: (B, 1, LX, LX), rsi_mask: (B, 1, LX, LY); 1 = attend, 0 = masked
    mask = jnp.ones((B, 1, LX, LX), jnp.float32)
    mask = mask.at[1, :, :, LX - 2:].set(0.0)
    rsi_mask = jnp.ones((B, 1, LX, LY), jnp.float32)
    rsi_mask = rsi_mask.at[0, :, :, LY - 1:].set(0.0)

    params = init_params(kp, N, D, H, DFF)

    fwd = jax.jit(encoder_forward, static_argnames=("n_heads",))
    out = fwd(x, y, mask, rsi_mask, params, n_heads=H)
    out = jax.block_until_ready(out)

    assert out.shape == (B, LX, D) and out.dtype == jnp.float32
    assert bool(jnp.all(jnp.isfinite(out)))
    print("KERNEL_OK")
</pallas_src>

<mosaic_0001>
module attributes {stable_mosaic.version = 11 : i64} {
  func.func @_encoder_layer_kernel(%arg0: i32, %arg1: memref<1x8x128xf32, #tpu.memory_space<vmem>>, %arg2: memref<1x8x128xf32, #tpu.memory_space<vmem>>, %arg3: memref<1x8x8xbf16, #tpu.memory_space<vmem>>, %arg4: memref<1x8x8xbf16, #tpu.memory_space<vmem>>, %arg5: memref<1x128xf32, #tpu.memory_space<vmem>>, %arg6: memref<1x128xf32, #tpu.memory_space<vmem>>, %arg7: memref<128x384xbf16, #tpu.memory_space<vmem>>, %arg8: memref<1x384xf32, #tpu.memory_space<vmem>>, %arg9: memref<128x128xbf16, #tpu.memory_space<vmem>>, %arg10: memref<1x128xf32, #tpu.memory_space<vmem>>, %arg11: memref<1x128xf32, #tpu.memory_space<vmem>>, %arg12: memref<1x128xf32, #tpu.memory_space<vmem>>, %arg13: memref<128x128xbf16, #tpu.memory_space<vmem>>, %arg14: memref<1x128xf32, #tpu.memory_space<vmem>>, %arg15: memref<128x256xbf16, #tpu.memory_space<vmem>>, %arg16: memref<1x256xf32, #tpu.memory_space<vmem>>, %arg17: memref<128x128xbf16, #tpu.memory_space<vmem>>, %arg18: memref<1x128xf32, #tpu.memory_space<vmem>>, %arg19: memref<1x128xf32, #tpu.memory_space<vmem>>, %arg20: memref<1x128xf32, #tpu.memory_space<vmem>>, %arg21: memref<128x256xbf16, #tpu.memory_space<vmem>>, %arg22: memref<1x256xf32, #tpu.memory_space<vmem>>, %arg23: memref<256x128xbf16, #tpu.memory_space<vmem>>, %arg24: memref<1x128xf32, #tpu.memory_space<vmem>>, %arg25: memref<1x128xf32, #tpu.memory_space<vmem>>, %arg26: memref<1x128xf32, #tpu.memory_space<vmem>>, %arg27: memref<1x8x128xf32, #tpu.memory_space<vmem>>) attributes {dimension_semantics = [#tpu.dimension_semantics<parallel>], iteration_bounds = array<i64: 2>, scalar_prefetch = 0 : i64, scratch_operands = 0 : i64, tpu.core_type = #tpu.core_type<tc>, window_params = [{transform_indices = @transform_0, window_bounds = array<i64: 1, 8, 128>}, {transform_indices = @transform_1, window_bounds = array<i64: 1, 8, 128>}, {transform_indices = @transform_2, window_bounds = array<i64: 1, 8, 8>}, {transform_indices = @transform_3, window_bounds = array<i64: 1, 8, 8>}, {pipeline_mode = #tpu.pipeline_mode<synchronous>, transform_indices = @transform_4, window_bounds = array<i64: 1, 128>}, {pipeline_mode = #tpu.pipeline_mode<synchronous>, transform_indices = @transform_5, window_bounds = array<i64: 1, 128>}, {pipeline_mode = #tpu.pipeline_mode<synchronous>, transform_indices = @transform_6, window_bounds = array<i64: 128, 384>}, {pipeline_mode = #tpu.pipeline_mode<synchronous>, transform_indices = @transform_7, window_bounds = array<i64: 1, 384>}, {pipeline_mode = #tpu.pipeline_mode<synchronous>, transform_indices = @transform_8, window_bounds = array<i64: 128, 128>}, {pipeline_mode = #tpu.pipeline_mode<synchronous>, transform_indices = @transform_9, window_bounds = array<i64: 1, 128>}, {pipeline_mode = #tpu.pipeline_mode<synchronous>, transform_indices = @transform_10, window_bounds = array<i64: 1, 128>}, {pipeline_mode = #tpu.pipeline_mode<synchronous>, transform_indices = @transform_11, window_bounds = array<i64: 1, 128>}, {pipeline_mode = #tpu.pipeline_mode<synchronous>, transform_indices = @transform_12, window_bounds = array<i64: 128, 128>}, {pipeline_mode = #tpu.pipeline_mode<synchronous>, transform_indices = @transform_13, window_bounds = array<i64: 1, 128>}, {pipeline_mode = #tpu.pipeline_mode<synchronous>, transform_indices = @transform_14, window_bounds = array<i64: 128, 256>}, {pipeline_mode = #tpu.pipeline_mode<synchronous>, transform_indices = @transform_15, window_bounds = array<i64: 1, 256>}, {pipeline_mode = #tpu.pipeline_mode<synchronous>, transform_indices = @transform_16, window_bounds = array<i64: 128, 128>}, {pipeline_mode = #tpu.pipeline_mode<synchronous>, transform_indices = @transform_17, window_bounds = array<i64: 1, 128>}, {pipeline_mode = #tpu.pipeline_mode<synchronous>, transform_indices = @transform_18, window_bounds = array<i64: 1, 128>}, {pipeline_mode = #tpu.pipeline_mode<synchronous>, transform_indices = @transform_19, window_bounds = array<i64: 1, 128>}, {pipeline_mode = #tpu.pipeline_mode<synchronous>, transform_indices = @transform_20, window_bounds = array<i64: 128, 256>}, {pipeline_mode = #tpu.pipeline_mode<synchronous>, transform_indices = @transform_21, window_bounds = array<i64: 1, 256>}, {pipeline_mode = #tpu.pipeline_mode<synchronous>, transform_indices = @transform_22, window_bounds = array<i64: 256, 128>}, {pipeline_mode = #tpu.pipeline_mode<synchronous>, transform_indices = @transform_23, window_bounds = array<i64: 1, 128>}, {pipeline_mode = #tpu.pipeline_mode<synchronous>, transform_indices = @transform_24, window_bounds = array<i64: 1, 128>}, {pipeline_mode = #tpu.pipeline_mode<synchronous>, transform_indices = @transform_25, window_bounds = array<i64: 1, 128>}, {transform_indices = @transform_26, window_bounds = array<i64: 1, 8, 128>}]} {
    %c0 = arith.constant 0 : index
    %c0_0 = arith.constant 0 : index
    %c0_1 = arith.constant 0 : index
    %0 = vector.load %arg1[%c0, %c0_0, %c0_1] : memref<1x8x128xf32, #tpu.memory_space<vmem>>, vector<1x8x128xf32>
    %1 = vector.shape_cast %0 : vector<1x8x128xf32> to vector<8x128xf32>
    %c0_2 = arith.constant 0 : index
    %c0_3 = arith.constant 0 : index
    %c0_4 = arith.constant 0 : index
    %2 = vector.load %arg2[%c0_2, %c0_3, %c0_4] : memref<1x8x128xf32, #tpu.memory_space<vmem>>, vector<1x8x128xf32>
    %3 = vector.shape_cast %2 : vector<1x8x128xf32> to vector<8x128xf32>
    %c0_5 = arith.constant 0 : index
    %c0_6 = arith.constant 0 : index
    %c0_7 = arith.constant 0 : index
    %4 = vector.load %arg3[%c0_5, %c0_6, %c0_7] : memref<1x8x8xbf16, #tpu.memory_space<vmem>>, vector<1x8x8xbf16>
    %5 = vector.shape_cast %4 : vector<1x8x8xbf16> to vector<8x8xbf16>
    %6 = arith.extf %5 : vector<8x8xbf16> to vector<8x8xf32>
    %cst = arith.constant 1.000000e+00 : f32
    %7 = vector.broadcast %cst : f32 to vector<8x8xf32>
    %8 = arith.subf %6, %7 : vector<8x8xf32>
    %cst_8 = arith.constant 1.000000e+09 : f32
    %9 = vector.broadcast %cst_8 : f32 to vector<8x8xf32>
    %10 = arith.mulf %8, %9 : vector<8x8xf32>
    %c0_9 = arith.constant 0 : index
    %c0_10 = arith.constant 0 : index
    %c0_11 = arith.constant 0 : index
    %11 = vector.load %arg4[%c0_9, %c0_10, %c0_11] : memref<1x8x8xbf16, #tpu.memory_space<vmem>>, vector<1x8x8xbf16>
    %12 = vector.shape_cast %11 : vector<1x8x8xbf16> to vector<8x8xbf16>
    %13 = arith.extf %12 : vector<8x8xbf16> to vector<8x8xf32>
    %cst_12 = arith.constant 1.000000e+00 : f32
    %14 = vector.broadcast %cst_12 : f32 to vector<8x8xf32>
    %15 = arith.subf %13, %14 : vector<8x8xf32>
    %cst_13 = arith.constant 1.000000e+09 : f32
    %16 = vector.broadcast %cst_13 : f32 to vector<8x8xf32>
    %17 = arith.mulf %15, %16 : vector<8x8xf32>
    %c0_14 = arith.constant 0 : index
    %c0_15 = arith.constant 0 : index
    %18 = vector.load %arg5[%c0_14, %c0_15] : memref<1x128xf32, #tpu.memory_space<vmem>>, vector<1x128xf32>
    %c0_16 = arith.constant 0 : index
    %c0_17 = arith.constant 0 : index
    %19 = vector.load %arg6[%c0_16, %c0_17] : memref<1x128xf32, #tpu.memory_space<vmem>>, vector<1x128xf32>
    %cst_18 = arith.constant dense<0.000000e+00> : vector<8xf32>
    %20 = vector.multi_reduction <add>, %1, %cst_18 [1] : vector<8x128xf32> to vector<8xf32>
    %21 = vector.shape_cast %20 : vector<8xf32> to vector<8x1xf32>
    %cst_19 = arith.constant 1.280000e+02 : f32
    %22 = vector.broadcast %cst_19 : f32 to vector<8x1xf32>
    %23 = arith.divf %21, %22 : vector<8x1xf32>
    %24 = vector.broadcast %23 : vector<8x1xf32> to vector<8x128xf32>
    %25 = arith.subf %1, %24 : vector<8x128xf32>
    %26 = arith.mulf %25, %25 : vector<8x128xf32>
    %cst_20 = arith.constant dense<0.000000e+00> : vector<8xf32>
    %27 = vector.multi_reduction <add>, %26, %cst_20 [1] : vector<8x128xf32> to vector<8xf32>
    %28 = vector.shape_cast %27 : vector<8xf32> to vector<8x1xf32>
    %cst_21 = arith.constant 0.00787401571 : f32
    %29 = vector.broadcast %cst_21 : f32 to vector<8x1xf32>
    %30 = arith.mulf %28, %29 : vector<8x1xf32>
    %31 = math.sqrt %30 : vector<8x1xf32>
    %32 = vector.broadcast %18 : vector<1x128xf32> to vector<8x128xf32>
    %33 = arith.mulf %32, %25 : vector<8x128xf32>
    %cst_22 = arith.constant 9.99999997E-7 : f32
    %34 = vector.broadcast %cst_22 : f32 to vector<8x1xf32>
    %35 = arith.addf %31, %34 : vector<8x1xf32>
    %36 = tpu.reciprocal %35 : vector<8x1xf32> -> vector<8x1xf32>
    %37 = vector.broadcast %36 : vector<8x1xf32> to vector<8x128xf32>
    %38 = arith.mulf %33, %37 : vector<8x128xf32>
    %39 = vector.broadcast %19 : vector<1x128xf32> to vector<8x128xf32>
    %40 = arith.addf %38, %39 : vector<8x128xf32>
    %c0_23 = arith.constant 0 : index
    %c0_24 = arith.constant 0 : index
    %41 = vector.load %arg7[%c0_23, %c0_24] : memref<128x384xbf16, #tpu.memory_space<vmem>>, vector<128x384xbf16>
    %c0_25 = arith.constant 0 : index
    %c0_26 = arith.constant 0 : index
    %42 = vector.load %arg8[%c0_25, %c0_26] : memref<1x384xf32, #tpu.memory_space<vmem>>, vector<1x384xf32>
    %43 = arith.truncf %40 : vector<8x128xf32> to vector<8x128xbf16>
    %cst_27 = arith.constant dense<0.000000e+00> : vector<8x384xf32>
    %44 = tpu.matmul %43, %41, %cst_27 {dimension_numbers = #tpu.dot_dimension_numbers<[1], [0], [0], [1], [0, 0, 1, 1], [], []>} : vector<8x128xbf16>, vector<128x384xbf16>, vector<8x384xf32> -> vector<8x384xf32>
    %45 = vector.broadcast %42 : vector<1x384xf32> to vector<8x384xf32>
    %46 = arith.addf %44, %45 : vector<8x384xf32>
    %47 = vector.extract_strided_slice %46 {offsets = [0, 0], sizes = [8, 128], strides = [1, 1]} : vector<8x384xf32> to vector<8x128xf32>
    %48 = vector.extract_strided_slice %46 {offsets = [0, 128], sizes = [8, 128], strides = [1, 1]} : vector<8x384xf32> to vector<8x128xf32>
    %49 = vector.extract_strided_slice %46 {offsets = [0, 256], sizes = [8, 128], strides = [1, 1]} : vector<8x384xf32> to vector<8x128xf32>
    %50 = vector.extract_strided_slice %47 {offsets = [0, 0], sizes = [8, 32], strides = [1, 1]} : vector<8x128xf32> to vector<8x32xf32>
    %51 = arith.truncf %50 : vector<8x32xf32> to vector<8x32xbf16>
    %52 = vector.extract_strided_slice %48 {offsets = [0, 0], sizes = [8, 32], strides = [1, 1]} : vector<8x128xf32> to vector<8x32xf32>
    %53 = arith.truncf %52 : vector<8x32xf32> to vector<8x32xbf16>
    %54 = vector.extract_strided_slice %49 {offsets = [0, 0], sizes = [8, 32], strides = [1, 1]} : vector<8x128xf32> to vector<8x32xf32>
    %55 = arith.truncf %54 : vector<8x32xf32> to vector<8x32xbf16>
    "tpu.trace_start"() <{level = 10 : i32, message = "qd,kd->qk"}> : () -> ()
    %cst_28 = arith.constant dense<0.000000e+00> : vector<8x8xf32>
    %56 = tpu.matmul %51, %53, %cst_28 {dimension_numbers = #tpu.dot_dimension_numbers<[1], [1], [0], [0], [0, 0, 1, 0], [], []>} : vector<8x32xbf16>, vector<8x32xbf16>, vector<8x8xf32> -> vector<8x8xf32>
    "tpu.trace_stop"() : () -> ()
    %cst_29 = arith.constant 0.176776692 : f32
    %57 = vector.broadcast %cst_29 : f32 to vector<8x8xf32>
    %58 = arith.mulf %56, %57 : vector<8x8xf32>
    %59 = arith.addf %58, %10 : vector<8x8xf32>
    %cst_30 = arith.constant dense<0xFF800000> : vector<8xf32>
    %60 = vector.multi_reduction <maximumf>, %59, %cst_30 [1] : vector<8x8xf32> to vector<8xf32>
    %61 = vector.shape_cast %60 : vector<8xf32> to vector<8x1xf32>
    %62 = vector.broadcast %61 : vector<8x1xf32> to vector<8x8xf32>
    %63 = arith.subf %59, %62 : vector<8x8xf32>
    %64 = math.exp %63 : vector<8x8xf32>
    %cst_31 = arith.constant dense<0.000000e+00> : vector<8xf32>
    %65 = vector.multi_reduction <add>, %64, %cst_31 [1] : vector<8x8xf32> to vector<8xf32>
    %66 = vector.shape_cast %65 : vector<8xf32> to vector<8x1xf32>
    %67 = tpu.reciprocal %66 {approx = true} : vector<8x1xf32> -> vector<8x1xf32>
    %68 = vector.broadcast %67 : vector<8x1xf32> to vector<8x8xf32>
    %69 = arith.mulf %64, %68 : vector<8x8xf32>
    %70 = arith.truncf %69 : vector<8x8xf32> to vector<8x8xbf16>
    %cst_32 = arith.constant dense<0.000000e+00> : vector<8x32xf32>
    %71 = tpu.matmul %70, %55, %cst_32 {dimension_numbers = #tpu.dot_dimension_numbers<[1], [0], [0], [1], [0, 0, 1, 1], [], []>} : vector<8x8xbf16>, vector<8x32xbf16>, vector<8x32xf32> -> vector<8x32xf32>
    %72 = vector.extract_strided_slice %47 {offsets = [0, 32], sizes = [8, 32], strides = [1, 1]} : vector<8x128xf32> to vector<8x32xf32>
    %73 = arith.truncf %72 : vector<8x32xf32> to vector<8x32xbf16>
    %74 = vector.extract_strided_slice %48 {offsets = [0, 32], sizes = [8, 32], strides = [1, 1]} : vector<8x128xf32> to vector<8x32xf32>
    %75 = arith.truncf %74 : vector<8x32xf32> to vector<8x32xbf16>
    %76 = vector.extract_strided_slice %49 {offsets = [0, 32], sizes = [8, 32], strides = [1, 1]} : vector<8x128xf32> to vector<8x32xf32>
    %77 = arith.truncf %76 : vector<8x32xf32> to vector<8x32xbf16>
    "tpu.trace_start"() <{level = 10 : i32, message = "qd,kd->qk"}> : () -> ()
    %cst_33 = arith.constant dense<0.000000e+00> : vector<8x8xf32>
    %78 = tpu.matmul %73, %75, %cst_33 {dimension_numbers = #tpu.dot_dimension_numbers<[1], [1], [0], [0], [0, 0, 1, 0], [], []>} : vector<8x32xbf16>, vector<8x32xbf16>, vector<8x8xf32> -> vector<8x8xf32>
    "tpu.trace_stop"() : () -> ()
    %cst_34 = arith.constant 0.176776692 : f32
    %79 = vector.broadcast %cst_34 : f32 to vector<8x8xf32>
    %80 = arith.mulf %78, %79 : vector<8x8xf32>
    %81 = arith.addf %80, %10 : vector<8x8xf32>
    %cst_35 = arith.constant dense<0xFF800000> : vector<8xf32>
    %82 = vector.multi_reduction <maximumf>, %81, %cst_35 [1] : vector<8x8xf32> to vector<8xf32>
    %83 = vector.shape_cast %82 : vector<8xf32> to vector<8x1xf32>
    %84 = vector.broadcast %83 : vector<8x1xf32> to vector<8x8xf32>
    %85 = arith.subf %81, %84 : vector<8x8xf32>
    %86 = math.exp %85 : vector<8x8xf32>
    %cst_36 = arith.constant dense<0.000000e+00> : vector<8xf32>
    %87 = vector.multi_reduction <add>, %86, %cst_36 [1] : vector<8x8xf32> to vector<8xf32>
    %88 = vector.shape_cast %87 : vector<8xf32> to vector<8x1xf32>
    %89 = tpu.reciprocal %88 {approx = true} : vector<8x1xf32> -> vector<8x1xf32>
    %90 = vector.broadcast %89 : vector<8x1xf32> to vector<8x8xf32>
    %91 = arith.mulf %86, %90 : vector<8x8xf32>
    %92 = arith.truncf %91 : vector<8x8xf32> to vector<8x8xbf16>
    %cst_37 = arith.constant dense<0.000000e+00> : vector<8x32xf32>
    %93 = tpu.matmul %92, %77, %cst_37 {dimension_numbers = #tpu.dot_dimension_numbers<[1], [0], [0], [1], [0, 0, 1, 1], [], []>} : vector<8x8xbf16>, vector<8x32xbf16>, vector<8x32xf32> -> vector<8x32xf32>
    %94 = vector.extract_strided_slice %47 {offsets = [0, 64], sizes = [8, 32], strides = [1, 1]} : vector<8x128xf32> to vector<8x32xf32>
    %95 = arith.truncf %94 : vector<8x32xf32> to vector<8x32xbf16>
    %96 = vector.extract_strided_slice %48 {offsets = [0, 64], sizes = [8, 32], strides = [1, 1]} : vector<8x128xf32> to vector<8x32xf32>
    %97 = arith.truncf %96 : vector<8x32xf32> to vector<8x32xbf16>
    %98 = vector.extract_strided_slice %49 {offsets = [0, 64], sizes = [8, 32], strides = [1, 1]} : vector<8x128xf32> to vector<8x32xf32>
    %99 = arith.truncf %98 : vector<8x32xf32> to vector<8x32xbf16>
    "tpu.trace_start"() <{level = 10 : i32, message = "qd,kd->qk"}> : () -> ()
    %cst_38 = arith.constant dense<0.000000e+00> : vector<8x8xf32>
    %100 = tpu.matmul %95, %97, %cst_38 {dimension_numbers = #tpu.dot_dimension_numbers<[1], [1], [0], [0], [0, 0, 1, 0], [], []>} : vector<8x32xbf16>, vector<8x32xbf16>, vector<8x8xf32> -> vector<8x8xf32>
    "tpu.trace_stop"() : () -> ()
    %cst_39 = arith.constant 0.176776692 : f32
    %101 = vector.broadcast %cst_39 : f32 to vector<8x8xf32>
    %102 = arith.mulf %100, %101 : vector<8x8xf32>
    %103 = arith.addf %102, %10 : vector<8x8xf32>
    %cst_40 = arith.constant dense<0xFF800000> : vector<8xf32>
    %104 = vector.multi_reduction <maximumf>, %103, %cst_40 [1] : vector<8x8xf32> to vector<8xf32>
    %105 = vector.shape_cast %104 : vector<8xf32> to vector<8x1xf32>
    %106 = vector.broadcast %105 : vector<8x1xf32> to vector<8x8xf32>
    %107 = arith.subf %103, %106 : vector<8x8xf32>
    %108 = math.exp %107 : vector<8x8xf32>
    %cst_41 = arith.constant dense<0.000000e+00> : vector<8xf32>
    %109 = vector.multi_reduction <add>, %108, %cst_41 [1] : vector<8x8xf32> to vector<8xf32>
    %110 = vector.shape_cast %109 : vector<8xf32> to vector<8x1xf32>
    %111 = tpu.reciprocal %110 {approx = true} : vector<8x1xf32> -> vector<8x1xf32>
    %112 = vector.broadcast %111 : vector<8x1xf32> to vector<8x8xf32>
    %113 = arith.mulf %108, %112 : vector<8x8xf32>
    %114 = arith.truncf %113 : vector<8x8xf32> to vector<8x8xbf16>
    %cst_42 = arith.constant dense<0.000000e+00> : vector<8x32xf32>
    %115 = tpu.matmul %114, %99, %cst_42 {dimension_numbers = #tpu.dot_dimension_numbers<[1], [0], [0], [1], [0, 0, 1, 1], [], []>} : vector<8x8xbf16>, vector<8x32xbf16>, vector<8x32xf32> -> vector<8x32xf32>
    %116 = vector.extract_strided_slice %47 {offsets = [0, 96], sizes = [8, 32], strides = [1, 1]} : vector<8x128xf32> to vector<8x32xf32>
    %117 = arith.truncf %116 : vector<8x32xf32> to vector<8x32xbf16>
    %118 = vector.extract_strided_slice %48 {offsets = [0, 96], sizes = [8, 32], strides = [1, 1]} : vector<8x128xf32> to vector<8x32xf32>
    %119 = arith.truncf %118 : vector<8x32xf32> to vector<8x32xbf16>
    %120 = vector.extract_strided_slice %49 {offsets = [0, 96], sizes = [8, 32], strides = [1, 1]} : vector<8x128xf32> to vector<8x32xf32>
    %121 = arith.truncf %120 : vector<8x32xf32> to vector<8x32xbf16>
    "tpu.trace_start"() <{level = 10 : i32, message = "qd,kd->qk"}> : () -> ()
    %cst_43 = arith.constant dense<0.000000e+00> : vector<8x8xf32>
    %122 = tpu.matmul %117, %119, %cst_43 {dimension_numbers = #tpu.dot_dimension_numbers<[1], [1], [0], [0], [0, 0, 1, 0], [], []>} : vector<8x32xbf16>, vector<8x32xbf16>, vector<8x8xf32> -> vector<8x8xf32>
    "tpu.trace_stop"() : () -> ()
    %cst_44 = arith.constant 0.176776692 : f32
    %123 = vector.broadcast %cst_44 : f32 to vector<8x8xf32>
    %124 = arith.mulf %122, %123 : vector<8x8xf32>
    %125 = arith.addf %124, %10 : vector<8x8xf32>
    %cst_45 = arith.constant dense<0xFF800000> : vector<8xf32>
    %126 = vector.multi_reduction <maximumf>, %125, %cst_45 [1] : vector<8x8xf32> to vector<8xf32>
    %127 = vector.shape_cast %126 : vector<8xf32> to vector<8x1xf32>
    %128 = vector.broadcast %127 : vector<8x1xf32> to vector<8x8xf32>
    %129 = arith.subf %125, %128 : vector<8x8xf32>
    %130 = math.exp %129 : vector<8x8xf32>
    %cst_46 = arith.constant dense<0.000000e+00> : vector<8xf32>
    %131 = vector.multi_reduction <add>, %130, %cst_46 [1] : vector<8x8xf32> to vector<8xf32>
    %132 = vector.shape_cast %131 : vector<8xf32> to vector<8x1xf32>
    %133 = tpu.reciprocal %132 {approx = true} : vector<8x1xf32> -> vector<8x1xf32>
    %134 = vector.broadcast %133 : vector<8x1xf32> to vector<8x8xf32>
    %135 = arith.mulf %130, %134 : vector<8x8xf32>
    %136 = arith.truncf %135 : vector<8x8xf32> to vector<8x8xbf16>
    %cst_47 = arith.constant dense<0.000000e+00> : vector<8x32xf32>
    %137 = tpu.matmul %136, %121, %cst_47 {dimension_numbers = #tpu.dot_dimension_numbers<[1], [0], [0], [1], [0, 0, 1, 1], [], []>} : vector<8x8xbf16>, vector<8x32xbf16>, vector<8x32xf32> -> vector<8x32xf32>
    %138 = tpu.concatenate %71, %93, %115, %137 in 1 : vector<8x32xf32>, vector<8x32xf32>, vector<8x32xf32>, vector<8x32xf32> -> vector<8x128xf32>
    %c0_48 = arith.constant 0 : index
    %c0_49 = arith.constant 0 : index
    %139 = vector.load %arg9[%c0_48, %c0_49] : memref<128x128xbf16, #tpu.memory_space<vmem>>, vector<128x128xbf16>
    %c0_50 = arith.constant 0 : index
    %c0_51 = arith.constant 0 : index
    %140 = vector.load %arg10[%c0_50, %c0_51] : memref<1x128xf32, #tpu.memory_space<vmem>>, vector<1x128xf32>
    %141 = arith.truncf %138 : vector<8x128xf32> to vector<8x128xbf16>
    %cst_52 = arith.constant dense<0.000000e+00> : vector<8x128xf32>
    %142 = tpu.matmul %141, %139, %cst_52 {dimension_numbers = #tpu.dot_dimension_numbers<[1], [0], [0], [1], [0, 0, 1, 1], [], []>} : vector<8x128xbf16>, vector<128x128xbf16>, vector<8x128xf32> -> vector<8x128xf32>
    %143 = vector.broadcast %140 : vector<1x128xf32> to vector<8x128xf32>
    %144 = arith.addf %142, %143 : vector<8x128xf32>
    %145 = arith.addf %1, %144 : vector<8x128xf32>
    %c0_53 = arith.constant 0 : index
    %c0_54 = arith.constant 0 : index
    %146 = vector.load %arg11[%c0_53, %c0_54] : memref<1x128xf32, #tpu.memory_space<vmem>>, vector<1x128xf32>
    %c0_55 = arith.constant 0 : index
    %c0_56 = arith.constant 0 : index
    %147 = vector.load %arg12[%c0_55, %c0_56] : memref<1x128xf32, #tpu.memory_space<vmem>>, vector<1x128xf32>
    %cst_57 = arith.constant dense<0.000000e+00> : vector<8xf32>
    %148 = vector.multi_reduction <add>, %145, %cst_57 [1] : vector<8x128xf32> to vector<8xf32>
    %149 = vector.shape_cast %148 : vector<8xf32> to vector<8x1xf32>
    %cst_58 = arith.constant 1.280000e+02 : f32
    %150 = vector.broadcast %cst_58 : f32 to vector<8x1xf32>
    %151 = arith.divf %149, %150 : vector<8x1xf32>
    %152 = vector.broadcast %151 : vector<8x1xf32> to vector<8x128xf32>
    %153 = arith.subf %145, %152 : vector<8x128xf32>
    %154 = arith.mulf %153, %153 : vector<8x128xf32>
    %cst_59 = arith.constant dense<0.000000e+00> : vector<8xf32>
    %155 = vector.multi_reduction <add>, %154, %cst_59 [1] : vector<8x128xf32> to vector<8xf32>
    %156 = vector.shape_cast %155 : vector<8xf32> to vector<8x1xf32>
    %cst_60 = arith.constant 0.00787401571 : f32
    %157 = vector.broadcast %cst_60 : f32 to vector<8x1xf32>
    %158 = arith.mulf %156, %157 : vector<8x1xf32>
    %159 = math.sqrt %158 : vector<8x1xf32>
    %160 = vector.broadcast %146 : vector<1x128xf32> to vector<8x128xf32>
    %161 = arith.mulf %160, %153 : vector<8x128xf32>
    %cst_61 = arith.constant 9.99999997E-7 : f32
    %162 = vector.broadcast %cst_61 : f32 to vector<8x1xf32>
    %163 = arith.addf %159, %162 : vector<8x1xf32>
    %164 = tpu.reciprocal %163 : vector<8x1xf32> -> vector<8x1xf32>
    %165 = vector.broadcast %164 : vector<8x1xf32> to vector<8x128xf32>
    %166 = arith.mulf %161, %165 : vector<8x128xf32>
    %167 = vector.broadcast %147 : vector<1x128xf32> to vector<8x128xf32>
    %168 = arith.addf %166, %167 : vector<8x128xf32>
    %c0_62 = arith.constant 0 : index
    %c0_63 = arith.constant 0 : index
    %169 = vector.load %arg13[%c0_62, %c0_63] : memref<128x128xbf16, #tpu.memory_space<vmem>>, vector<128x128xbf16>
    %c0_64 = arith.constant 0 : index
    %c0_65 = arith.constant 0 : index
    %170 = vector.load %arg14[%c0_64, %c0_65] : memref<1x128xf32, #tpu.memory_space<vmem>>, vector<1x128xf32>
    %171 = arith.truncf %168 : vector<8x128xf32> to vector<8x128xbf16>
    %cst_66 = arith.constant dense<0.000000e+00> : vector<8x128xf32>
    %172 = tpu.matmul %171, %169, %cst_66 {dimension_numbers = #tpu.dot_dimension_numbers<[1], [0], [0], [1], [0, 0, 1, 1], [], []>} : vector<8x128xbf16>, vector<128x128xbf16>, vector<8x128xf32> -> vector<8x128xf32>
    %173 = vector.broadcast %170 : vector<1x128xf32> to vector<8x128xf32>
    %174 = arith.addf %172, %173 : vector<8x128xf32>
    %c0_67 = arith.constant 0 : index
    %c0_68 = arith.constant 0 : index
    %175 = vector.load %arg15[%c0_67, %c0_68] : memref<128x256xbf16, #tpu.memory_space<vmem>>, vector<128x256xbf16>
    %c0_69 = arith.constant 0 : index
    %c0_70 = arith.constant 0 : index
    %176 = vector.load %arg16[%c0_69, %c0_70] : memref<1x256xf32, #tpu.memory_space<vmem>>, vector<1x256xf32>
    %177 = arith.truncf %3 : vector<8x128xf32> to vector<8x128xbf16>
    %cst_71 = arith.constant dense<0.000000e+00> : vector<8x256xf32>
    %178 = tpu.matmul %177, %175, %cst_71 {dimension_numbers = #tpu.dot_dimension_numbers<[1], [0], [0], [1], [0, 0, 1, 1], [], []>} : vector<8x128xbf16>, vector<128x256xbf16>, vector<8x256xf32> -> vector<8x256xf32>
    %179 = vector.broadcast %176 : vector<1x256xf32> to vector<8x256xf32>
    %180 = arith.addf %178, %179 : vector<8x256xf32>
    %181 = vector.extract_strided_slice %180 {offsets = [0, 0], sizes = [8, 128], strides = [1, 1]} : vector<8x256xf32> to vector<8x128xf32>
    %182 = vector.extract_strided_slice %180 {offsets = [0, 128], sizes = [8, 128], strides = [1, 1]} : vector<8x256xf32> to vector<8x128xf32>
    %183 = vector.extract_strided_slice %174 {offsets = [0, 0], sizes = [8, 32], strides = [1, 1]} : vector<8x128xf32> to vector<8x32xf32>
    %184 = arith.truncf %183 : vector<8x32xf32> to vector<8x32xbf16>
    %185 = vector.extract_strided_slice %181 {offsets = [0, 0], sizes = [8, 32], strides = [1, 1]} : vector<8x128xf32> to vector<8x32xf32>
    %186 = arith.truncf %185 : vector<8x32xf32> to vector<8x32xbf16>
    %187 = vector.extract_strided_slice %182 {offsets = [0, 0], sizes = [8, 32], strides = [1, 1]} : vector<8x128xf32> to vector<8x32xf32>
    %188 = arith.truncf %187 : vector<8x32xf32> to vector<8x32xbf16>
    "tpu.trace_start"() <{level = 10 : i32, message = "qd,kd->qk"}> : () -> ()
    %cst_72 = arith.constant dense<0.000000e+00> : vector<8x8xf32>
    %189 = tpu.matmul %184, %186, %cst_72 {dimension_numbers = #tpu.dot_dimension_numbers<[1], [1], [0], [0], [0, 0, 1, 0], [], []>} : vector<8x32xbf16>, vector<8x32xbf16>, vector<8x8xf32> -> vector<8x8xf32>
    "tpu.trace_stop"() : () -> ()
    %cst_73 = arith.constant 0.176776692 : f32
    %190 = vector.broadcast %cst_73 : f32 to vector<8x8xf32>
    %191 = arith.mulf %189, %190 : vector<8x8xf32>
    %192 = arith.addf %191, %17 : vector<8x8xf32>
    %cst_74 = arith.constant dense<0xFF800000> : vector<8xf32>
    %193 = vector.multi_reduction <maximumf>, %192, %cst_74 [1] : vector<8x8xf32> to vector<8xf32>
    %194 = vector.shape_cast %193 : vector<8xf32> to vector<8x1xf32>
    %195 = vector.broadcast %194 : vector<8x1xf32> to vector<8x8xf32>
    %196 = arith.subf %192, %195 : vector<8x8xf32>
    %197 = math.exp %196 : vector<8x8xf32>
    %cst_75 = arith.constant dense<0.000000e+00> : vector<8xf32>
    %198 = vector.multi_reduction <add>, %197, %cst_75 [1] : vector<8x8xf32> to vector<8xf32>
    %199 = vector.shape_cast %198 : vector<8xf32> to vector<8x1xf32>
    %200 = tpu.reciprocal %199 {approx = true} : vector<8x1xf32> -> vector<8x1xf32>
    %201 = vector.broadcast %200 : vector<8x1xf32> to vector<8x8xf32>
    %202 = arith.mulf %197, %201 : vector<8x8xf32>
    %203 = arith.truncf %202 : vector<8x8xf32> to vector<8x8xbf16>
    %cst_76 = arith.constant dense<0.000000e+00> : vector<8x32xf32>
    %204 = tpu.matmul %203, %188, %cst_76 {dimension_numbers = #tpu.dot_dimension_numbers<[1], [0], [0], [1], [0, 0, 1, 1], [], []>} : vector<8x8xbf16>, vector<8x32xbf16>, vector<8x32xf32> -> vector<8x32xf32>
    %205 = vector.extract_strided_slice %174 {offsets = [0, 32], sizes = [8, 32], strides = [1, 1]} : vector<8x128xf32> to vector<8x32xf32>
    %206 = arith.truncf %205 : vector<8x32xf32> to vector<8x32xbf16>
    %207 = vector.extract_strided_slice %181 {offsets = [0, 32], sizes = [8, 32], strides = [1, 1]} : vector<8x128xf32> to vector<8x32xf32>
    %208 = arith.truncf %207 : vector<8x32xf32> to vector<8x32xbf16>
    %209 = vector.extract_strided_slice %182 {offsets = [0, 32], sizes = [8, 32], strides = [1, 1]} : vector<8x128xf32> to vector<8x32xf32>
    %210 = arith.truncf %209 : vector<8x32xf32> to vector<8x32xbf16>
    "tpu.trace_start"() <{level = 10 : i32, message = "qd,kd->qk"}> : () -> ()
    %cst_77 = arith.constant dense<0.000000e+00> : vector<8x8xf32>
    %211 = tpu.matmul %206, %208, %cst_77 {dimension_numbers = #tpu.dot_dimension_numbers<[1], [1], [0], [0], [0, 0, 1, 0], [], []>} : vector<8x32xbf16>, vector<8x32xbf16>, vector<8x8xf32> -> vector<8x8xf32>
    "tpu.trace_stop"() : () -> ()
    %cst_78 = arith.constant 0.176776692 : f32
    %212 = vector.broadcast %cst_78 : f32 to vector<8x8xf32>
    %213 = arith.mulf %211, %212 : vector<8x8xf32>
    %214 = arith.addf %213, %17 : vector<8x8xf32>
    %cst_79 = arith.constant dense<0xFF800000> : vector<8xf32>
    %215 = vector.multi_reduction <maximumf>, %214, %cst_79 [1] : vector<8x8xf32> to vector<8xf32>
    %216 = vector.shape_cast %215 : vector<8xf32> to vector<8x1xf32>
    %217 = vector.broadcast %216 : vector<8x1xf32> to vector<8x8xf32>
    %218 = arith.subf %214, %217 : vector<8x8xf32>
    %219 = math.exp %218 : vector<8x8xf32>
    %cst_80 = arith.constant dense<0.000000e+00> : vector<8xf32>
    %220 = vector.multi_reduction <add>, %219, %cst_80 [1] : vector<8x8xf32> to vector<8xf32>
    %221 = vector.shape_cast %220 : vector<8xf32> to vector<8x1xf32>
    %222 = tpu.reciprocal %221 {approx = true} : vector<8x1xf32> -> vector<8x1xf32>
    %223 = vector.broadcast %222 : vector<8x1xf32> to vector<8x8xf32>
    %224 = arith.mulf %219, %223 : vector<8x8xf32>
    %225 = arith.truncf %224 : vector<8x8xf32> to vector<8x8xbf16>
    %cst_81 = arith.constant dense<0.000000e+00> : vector<8x32xf32>
    %226 = tpu.matmul %225, %210, %cst_81 {dimension_numbers = #tpu.dot_dimension_numbers<[1], [0], [0], [1], [0, 0, 1, 1], [], []>} : vector<8x8xbf16>, vector<8x32xbf16>, vector<8x32xf32> -> vector<8x32xf32>
    %227 = vector.extract_strided_slice %174 {offsets = [0, 64], sizes = [8, 32], strides = [1, 1]} : vector<8x128xf32> to vector<8x32xf32>
    %228 = arith.truncf %227 : vector<8x32xf32> to vector<8x32xbf16>
    %229 = vector.extract_strided_slice %181 {offsets = [0, 64], sizes = [8, 32], strides = [1, 1]} : vector<8x128xf32> to vector<8x32xf32>
    %230 = arith.truncf %229 : vector<8x32xf32> to vector<8x32xbf16>
    %231 = vector.extract_strided_slice %182 {offsets = [0, 64], sizes = [8, 32], strides = [1, 1]} : vector<8x128xf32> to vector<8x32xf32>
    %232 = arith.truncf %231 : vector<8x32xf32> to vector<8x32xbf16>
    "tpu.trace_start"() <{level = 10 : i32, message = "qd,kd->qk"}> : () -> ()
    %cst_82 = arith.constant dense<0.000000e+00> : vector<8x8xf32>
    %233 = tpu.matmul %228, %230, %cst_82 {dimension_numbers = #tpu.dot_dimension_numbers<[1], [1], [0], [0], [0, 0, 1, 0], [], []>} : vector<8x32xbf16>, vector<8x32xbf16>, vector<8x8xf32> -> vector<8x8xf32>
    "tpu.trace_stop"() : () -> ()
    %cst_83 = arith.constant 0.176776692 : f32
    %234 = vector.broadcast %cst_83 : f32 to vector<8x8xf32>
    %235 = arith.mulf %233, %234 : vector<8x8xf32>
    %236 = arith.addf %235, %17 : vector<8x8xf32>
    %cst_84 = arith.constant dense<0xFF800000> : vector<8xf32>
    %237 = vector.multi_reduction <maximumf>, %236, %cst_84 [1] : vector<8x8xf32> to vector<8xf32>
    %238 = vector.shape_cast %237 : vector<8xf32> to vector<8x1xf32>
    %239 = vector.broadcast %238 : vector<8x1xf32> to vector<8x8xf32>
    %240 = arith.subf %236, %239 : vector<8x8xf32>
    %241 = math.exp %240 : vector<8x8xf32>
    %cst_85 = arith.constant dense<0.000000e+00> : vector<8xf32>
    %242 = vector.multi_reduction <add>, %241, %cst_85 [1] : vector<8x8xf32> to vector<8xf32>
    %243 = vector.shape_cast %242 : vector<8xf32> to vector<8x1xf32>
    %244 = tpu.reciprocal %243 {approx = true} : vector<8x1xf32> -> vector<8x1xf32>
    %245 = vector.broadcast %244 : vector<8x1xf32> to vector<8x8xf32>
    %246 = arith.mulf %241, %245 : vector<8x8xf32>
    %247 = arith.truncf %246 : vector<8x8xf32> to vector<8x8xbf16>
    %cst_86 = arith.constant dense<0.000000e+00> : vector<8x32xf32>
    %248 = tpu.matmul %247, %232, %cst_86 {dimension_numbers = #tpu.dot_dimension_numbers<[1], [0], [0], [1], [0, 0, 1, 1], [], []>} : vector<8x8xbf16>, vector<8x32xbf16>, vector<8x32xf32> -> vector<8x32xf32>
    %249 = vector.extract_strided_slice %174 {offsets = [0, 96], sizes = [8, 32], strides = [1, 1]} : vector<8x128xf32> to vector<8x32xf32>
    %250 = arith.truncf %249 : vector<8x32xf32> to vector<8x32xbf16>
    %251 = vector.extract_strided_slice %181 {offsets = [0, 96], sizes = [8, 32], strides = [1, 1]} : vector<8x128xf32> to vector<8x32xf32>
    %252 = arith.truncf %251 : vector<8x32xf32> to vector<8x32xbf16>
    %253 = vector.extract_strided_slice %182 {offsets = [0, 96], sizes = [8, 32], strides = [1, 1]} : vector<8x128xf32> to vector<8x32xf32>
    %254 = arith.truncf %253 : vector<8x32xf32> to vector<8x32xbf16>
    "tpu.trace_start"() <{level = 10 : i32, message = "qd,kd->qk"}> : () -> ()
    %cst_87 = arith.constant dense<0.000000e+00> : vector<8x8xf32>
    %255 = tpu.matmul %250, %252, %cst_87 {dimension_numbers = #tpu.dot_dimension_numbers<[1], [1], [0], [0], [0, 0, 1, 0], [], []>} : vector<8x32xbf16>, vector<8x32xbf16>, vector<8x8xf32> -> vector<8x8xf32>
    "tpu.trace_stop"() : () -> ()
    %cst_88 = arith.constant 0.176776692 : f32
    %256 = vector.broadcast %cst_88 : f32 to vector<8x8xf32>
    %257 = arith.mulf %255, %256 : vector<8x8xf32>
    %258 = arith.addf %257, %17 : vector<8x8xf32>
    %cst_89 = arith.constant dense<0xFF800000> : vector<8xf32>
    %259 = vector.multi_reduction <maximumf>, %258, %cst_89 [1] : vector<8x8xf32> to vector<8xf32>
    %260 = vector.shape_cast %259 : vector<8xf32> to vector<8x1xf32>
    %261 = vector.broadcast %260 : vector<8x1xf32> to vector<8x8xf32>
    %262 = arith.subf %258, %261 : vector<8x8xf32>
    %263 = math.exp %262 : vector<8x8xf32>
    %cst_90 = arith.constant dense<0.000000e+00> : vector<8xf32>
    %264 = vector.multi_reduction <add>, %263, %cst_90 [1] : vector<8x8xf32> to vector<8xf32>
    %265 = vector.shape_cast %264 : vector<8xf32> to vector<8x1xf32>
    %266 = tpu.reciprocal %265 {approx = true} : vector<8x1xf32> -> vector<8x1xf32>
    %267 = vector.broadcast %266 : vector<8x1xf32> to vector<8x8xf32>
    %268 = arith.mulf %263, %267 : vector<8x8xf32>
    %269 = arith.truncf %268 : vector<8x8xf32> to vector<8x8xbf16>
    %cst_91 = arith.constant dense<0.000000e+00> : vector<8x32xf32>
    %270 = tpu.matmul %269, %254, %cst_91 {dimension_numbers = #tpu.dot_dimension_numbers<[1], [0], [0], [1], [0, 0, 1, 1], [], []>} : vector<8x8xbf16>, vector<8x32xbf16>, vector<8x32xf32> -> vector<8x32xf32>
    %271 = tpu.concatenate %204, %226, %248, %270 in 1 : vector<8x32xf32>, vector<8x32xf32>, vector<8x32xf32>, vector<8x32xf32> -> vector<8x128xf32>
    %c0_92 = arith.constant 0 : index
    %c0_93 = arith.constant 0 : index
    %272 = vector.load %arg17[%c0_92, %c0_93] : memref<128x128xbf16, #tpu.memory_space<vmem>>, vector<128x128xbf16>
    %c0_94 = arith.constant 0 : index
    %c0_95 = arith.constant 0 : index
    %273 = vector.load %arg18[%c0_94, %c0_95] : memref<1x128xf32, #tpu.memory_space<vmem>>, vector<1x128xf32>
    %274 = arith.truncf %271 : vector<8x128xf32> to vector<8x128xbf16>
    %cst_96 = arith.constant dense<0.000000e+00> : vector<8x128xf32>
    %275 = tpu.matmul %274, %272, %cst_96 {dimension_numbers = #tpu.dot_dimension_numbers<[1], [0], [0], [1], [0, 0, 1, 1], [], []>} : vector<8x128xbf16>, vector<128x128xbf16>, vector<8x128xf32> -> vector<8x128xf32>
    %276 = vector.broadcast %273 : vector<1x128xf32> to vector<8x128xf32>
    %277 = arith.addf %275, %276 : vector<8x128xf32>
    %278 = arith.addf %145, %277 : vector<8x128xf32>
    %c0_97 = arith.constant 0 : index
    %c0_98 = arith.constant 0 : index
    %279 = vector.load %arg19[%c0_97, %c0_98] : memref<1x128xf32, #tpu.memory_space<vmem>>, vector<1x128xf32>
    %c0_99 = arith.constant 0 : index
    %c0_100 = arith.constant 0 : index
    %280 = vector.load %arg20[%c0_99, %c0_100] : memref<1x128xf32, #tpu.memory_space<vmem>>, vector<1x128xf32>
    %cst_101 = arith.constant dense<0.000000e+00> : vector<8xf32>
    %281 = vector.multi_reduction <add>, %278, %cst_101 [1] : vector<8x128xf32> to vector<8xf32>
    %282 = vector.shape_cast %281 : vector<8xf32> to vector<8x1xf32>
    %cst_102 = arith.constant 1.280000e+02 : f32
    %283 = vector.broadcast %cst_102 : f32 to vector<8x1xf32>
    %284 = arith.divf %282, %283 : vector<8x1xf32>
    %285 = vector.broadcast %284 : vector<8x1xf32> to vector<8x128xf32>
    %286 = arith.subf %278, %285 : vector<8x128xf32>
    %287 = arith.mulf %286, %286 : vector<8x128xf32>
    %cst_103 = arith.constant dense<0.000000e+00> : vector<8xf32>
    %288 = vector.multi_reduction <add>, %287, %cst_103 [1] : vector<8x128xf32> to vector<8xf32>
    %289 = vector.shape_cast %288 : vector<8xf32> to vector<8x1xf32>
    %cst_104 = arith.constant 0.00787401571 : f32
    %290 = vector.broadcast %cst_104 : f32 to vector<8x1xf32>
    %291 = arith.mulf %289, %290 : vector<8x1xf32>
    %292 = math.sqrt %291 : vector<8x1xf32>
    %293 = vector.broadcast %279 : vector<1x128xf32> to vector<8x128xf32>
    %294 = arith.mulf %293, %286 : vector<8x128xf32>
    %cst_105 = arith.constant 9.99999997E-7 : f32
    %295 = vector.broadcast %cst_105 : f32 to vector<8x1xf32>
    %296 = arith.addf %292, %295 : vector<8x1xf32>
    %297 = tpu.reciprocal %296 : vector<8x1xf32> -> vector<8x1xf32>
    %298 = vector.broadcast %297 : vector<8x1xf32> to vector<8x128xf32>
    %299 = arith.mulf %294, %298 : vector<8x128xf32>
    %300 = vector.broadcast %280 : vector<1x128xf32> to vector<8x128xf32>
    %301 = arith.addf %299, %300 : vector<8x128xf32>
    %c0_106 = arith.constant 0 : index
    %c0_107 = arith.constant 0 : index
    %302 = vector.load %arg21[%c0_106, %c0_107] : memref<128x256xbf16, #tpu.memory_space<vmem>>, vector<128x256xbf16>
    %c0_108 = arith.constant 0 : index
    %c0_109 = arith.constant 0 : index
    %303 = vector.load %arg22[%c0_108, %c0_109] : memref<1x256xf32, #tpu.memory_space<vmem>>, vector<1x256xf32>
    %304 = arith.truncf %301 : vector<8x128xf32> to vector<8x128xbf16>
    %cst_110 = arith.constant dense<0.000000e+00> : vector<8x256xf32>
    %305 = tpu.matmul %304, %302, %cst_110 {dimension_numbers = #tpu.dot_dimension_numbers<[1], [0], [0], [1], [0, 0, 1, 1], [], []>} : vector<8x128xbf16>, vector<128x256xbf16>, vector<8x256xf32> -> vector<8x256xf32>
    %306 = vector.broadcast %303 : vector<1x256xf32> to vector<8x256xf32>
    %307 = arith.addf %305, %306 : vector<8x256xf32>
    %cst_111 = arith.constant 0.000000e+00 : f32
    %308 = vector.broadcast %cst_111 : f32 to vector<8x256xf32>
    %309 = arith.maximumf %307, %308 : vector<8x256xf32>
    %c0_112 = arith.constant 0 : index
    %c0_113 = arith.constant 0 : index
    %310 = vector.load %arg23[%c0_112, %c0_113] : memref<256x128xbf16, #tpu.memory_space<vmem>>, vector<256x128xbf16>
    %c0_114 = arith.constant 0 : index
    %c0_115 = arith.constant 0 : index
    %311 = vector.load %arg24[%c0_114, %c0_115] : memref<1x128xf32, #tpu.memory_space<vmem>>, vector<1x128xf32>
    %312 = arith.truncf %309 : vector<8x256xf32> to vector<8x256xbf16>
    %cst_116 = arith.constant dense<0.000000e+00> : vector<8x128xf32>
    %313 = tpu.matmul %312, %310, %cst_116 {dimension_numbers = #tpu.dot_dimension_numbers<[1], [0], [0], [1], [0, 0, 1, 1], [], []>} : vector<8x256xbf16>, vector<256x128xbf16>, vector<8x128xf32> -> vector<8x128xf32>
    %314 = vector.broadcast %311 : vector<1x128xf32> to vector<8x128xf32>
    %315 = arith.addf %313, %314 : vector<8x128xf32>
    %316 = arith.addf %278, %315 : vector<8x128xf32>
    %c0_117 = arith.constant 0 : index
    %c0_118 = arith.constant 0 : index
    %c0_119 = arith.constant 0 : index
    %317 = vector.load %arg27[%c0_117, %c0_118, %c0_119] : memref<1x8x128xf32, #tpu.memory_space<vmem>>, vector<1x8x128xf32>
    %318 = vector.shape_cast %317 : vector<1x8x128xf32> to vector<8x128xf32>
    %319 = vector.shape_cast %316 : vector<8x128xf32> to vector<1x8x128xf32>
    tpu.vector_store %arg27[%c0_117, %c0_118, %c0_119], %319 {strides = array<i32>} : memref<1x8x128xf32, #tpu.memory_space<vmem>>, vector<1x8x128xf32>,
    return
  }
  func.func @transform_0(%arg0: i32) -> (i32, i32, i32) {
    %c0_i32 = arith.constant 0 : i32
    %c0_i32_0 = arith.constant 0 : i32
    %c0_i32_1 = arith.constant 0 : i32
    return %arg0, %c0_i32, %c0_i32_0 : i32, i32, i32
  }
  func.func @transform_1(%arg0: i32) -> (i32, i32, i32) {
    %c0_i32 = arith.constant 0 : i32
    %c0_i32_0 = arith.constant 0 : i32
    %c0_i32_1 = arith.constant 0 : i32
    return %arg0, %c0_i32, %c0_i32_0 : i32, i32, i32
  }
  func.func @transform_2(%arg0: i32) -> (i32, i32, i32) {
    %c0_i32 = arith.constant 0 : i32
    %c0_i32_0 = arith.constant 0 : i32
    %c0_i32_1 = arith.constant 0 : i32
    return %arg0, %c0_i32, %c0_i32_0 : i32, i32, i32
  }
  func.func @transform_3(%arg0: i32) -> (i32, i32, i32) {
    %c0_i32 = arith.constant 0 : i32
    %c0_i32_0 = arith.constant 0 : i32
    %c0_i32_1 = arith.constant 0 : i32
    return %arg0, %c0_i32, %c0_i32_0 : i32, i32, i32
  }
  func.func @transform_4(%arg0: i32) -> (i32, i32) {
    %c0_i32 = arith.constant 0 : i32
    %c0_i32_0 = arith.constant 0 : i32
    %c0_i32_1 = arith.constant 0 : i32
    return %c0_i32, %c0_i32_0 : i32, i32
  }
  func.func @transform_5(%arg0: i32) -> (i32, i32) {
    %c0_i32 = arith.constant 0 : i32
    %c0_i32_0 = arith.constant 0 : i32
    %c0_i32_1 = arith.constant 0 : i32
    return %c0_i32, %c0_i32_0 : i32, i32
  }
  func.func @transform_6(%arg0: i32) -> (i32, i32) {
    %c0_i32 = arith.constant 0 : i32
    %c0_i32_0 = arith.constant 0 : i32
    %c0_i32_1 = arith.constant 0 : i32
    return %c0_i32, %c0_i32_0 : i32, i32
  }
  func.func @transform_7(%arg0: i32) -> (i32, i32) {
    %c0_i32 = arith.constant 0 : i32
    %c0_i32_0 = arith.constant 0 : i32
    %c0_i32_1 = arith.constant 0 : i32
    return %c0_i32, %c0_i32_0 : i32, i32
  }
  func.func @transform_8(%arg0: i32) -> (i32, i32) {
    %c0_i32 = arith.constant 0 : i32
    %c0_i32_0 = arith.constant 0 : i32
    %c0_i32_1 = arith.constant 0 : i32
    return %c0_i32, %c0_i32_0 : i32, i32
  }
  func.func @transform_9(%arg0: i32) -> (i32, i32) {
    %c0_i32 = arith.constant 0 : i32
    %c0_i32_0 = arith.constant 0 : i32
    %c0_i32_1 = arith.constant 0 : i32
    return %c0_i32, %c0_i32_0 : i32, i32
  }
  func.func @transform_10(%arg0: i32) -> (i32, i32) {
    %c0_i32 = arith.constant 0 : i32
    %c0_i32_0 = arith.constant 0 : i32
    %c0_i32_1 = arith.constant 0 : i32
    return %c0_i32, %c0_i32_0 : i32, i32
  }
  func.func @transform_11(%arg0: i32) -> (i32, i32) {
    %c0_i32 = arith.constant 0 : i32
    %c0_i32_0 = arith.constant 0 : i32
    %c0_i32_1 = arith.constant 0 : i32
    return %c0_i32, %c0_i32_0 : i32, i32
  }
  func.func @transform_12(%arg0: i32) -> (i32, i32) {
    %c0_i32 = arith.constant 0 : i32
    %c0_i32_0 = arith.constant 0 : i32
    %c0_i32_1 = arith.constant 0 : i32
    return %c0_i32, %c0_i32_0 : i32, i32
  }
  func.func @transform_13(%arg0: i32) -> (i32, i32) {
    %c0_i32 = arith.constant 0 : i32
    %c0_i32_0 = arith.constant 0 : i32
    %c0_i32_1 = arith.constant 0 : i32
    return %c0_i32, %c0_i32_0 : i32, i32
  }
  func.func @transform_14(%arg0: i32) -> (i32, i32) {
    %c0_i32 = arith.constant 0 : i32
    %c0_i32_0 = arith.constant 0 : i32
    %c0_i32_1 = arith.constant 0 : i32
    return %c0_i32, %c0_i32_0 : i32, i32
  }
  func.func @transform_15(%arg0: i32) -> (i32, i32) {
    %c0_i32 = arith.constant 0 : i32
    %c0_i32_0 = arith.constant 0 : i32
    %c0_i32_1 = arith.constant 0 : i32
    return %c0_i32, %c0_i32_0 : i32, i32
  }
  func.func @transform_16(%arg0: i32) -> (i32, i32) {
    %c0_i32 = arith.constant 0 : i32
    %c0_i32_0 = arith.constant 0 : i32
    %c0_i32_1 = arith.constant 0 : i32
    return %c0_i32, %c0_i32_0 : i32, i32
  }
  func.func @transform_17(%arg0: i32) -> (i32, i32) {
    %c0_i32 = arith.constant 0 : i32
    %c0_i32_0 = arith.constant 0 : i32
    %c0_i32_1 = arith.constant 0 : i32
    return %c0_i32, %c0_i32_0 : i32, i32
  }
  func.func @transform_18(%arg0: i32) -> (i32, i32) {
    %c0_i32 = arith.constant 0 : i32
    %c0_i32_0 = arith.constant 0 : i32
    %c0_i32_1 = arith.constant 0 : i32
    return %c0_i32, %c0_i32_0 : i32, i32
  }
  func.func @transform_19(%arg0: i32) -> (i32, i32) {
    %c0_i32 = arith.constant 0 : i32
    %c0_i32_0 = arith.constant 0 : i32
    %c0_i32_1 = arith.constant 0 : i32
    return %c0_i32, %c0_i32_0 : i32, i32
  }
  func.func @transform_20(%arg0: i32) -> (i32, i32) {
    %c0_i32 = arith.constant 0 : i32
    %c0_i32_0 = arith.constant 0 : i32
    %c0_i32_1 = arith.constant 0 : i32
    return %c0_i32, %c0_i32_0 : i32, i32
  }
  func.func @transform_21(%arg0: i32) -> (i32, i32) {
    %c0_i32 = arith.constant 0 : i32
    %c0_i32_0 = arith.constant 0 : i32
    %c0_i32_1 = arith.constant 0 : i32
    return %c0_i32, %c0_i32_0 : i32, i32
  }
  func.func @transform_22(%arg0: i32) -> (i32, i32) {
    %c0_i32 = arith.constant 0 : i32
    %c0_i32_0 = arith.constant 0 : i32
    %c0_i32_1 = arith.constant 0 : i32
    return %c0_i32, %c0_i32_0 : i32, i32
  }
  func.func @transform_23(%arg0: i32) -> (i32, i32) {
    %c0_i32 = arith.constant 0 : i32
    %c0_i32_0 = arith.constant 0 : i32
    %c0_i32_1 = arith.constant 0 : i32
    return %c0_i32, %c0_i32_0 : i32, i32
  }
  func.func @transform_24(%arg0: i32) -> (i32, i32) {
    %c0_i32 = arith.constant 0 : i32
    %c0_i32_0 = arith.constant 0 : i32
    %c0_i32_1 = arith.constant 0 : i32
    return %c0_i32, %c0_i32_0 : i32, i32
  }
  func.func @transform_25(%arg0: i32) -> (i32, i32) {
    %c0_i32 = arith.constant 0 : i32
    %c0_i32_0 = arith.constant 0 : i32
    %c0_i32_1 = arith.constant 0 : i32
    return %c0_i32, %c0_i32_0 : i32, i32
  }
  func.func @transform_26(%arg0: i32) -> (i32, i32, i32) {
    %c0_i32 = arith.constant 0 : i32
    %c0_i32_0 = arith.constant 0 : i32
    %c0_i32_1 = arith.constant 0 : i32
    return %arg0, %c0_i32, %c0_i32_0 : i32, i32, i32
  }
}

module attributes {stable_mosaic.version = 11 : i64} {
  func.func @_encoder_layer_kernel(%arg0: i32, %arg1: memref<1x8x128xf32, #tpu.memory_space<vmem>>, %arg2: memref<1x8x128xf32, #tpu.memory_space<vmem>>, %arg3: memref<1x8x8xbf16, #tpu.memory_space<vmem>>, %arg4: memref<1x8x8xbf16, #tpu.memory_space<vmem>>, %arg5: memref<1x128xf32, #tpu.memory_space<vmem>>, %arg6: memref<1x128xf32, #tpu.memory_space<vmem>>, %arg7: memref<128x384xbf16, #tpu.memory_space<vmem>>, %arg8: memref<1x384xf32, #tpu.memory_space<vmem>>, %arg9: memref<128x128xbf16, #tpu.memory_space<vmem>>, %arg10: memref<1x128xf32, #tpu.memory_space<vmem>>, %arg11: memref<1x128xf32, #tpu.memory_space<vmem>>, %arg12: memref<1x128xf32, #tpu.memory_space<vmem>>, %arg13: memref<128x128xbf16, #tpu.memory_space<vmem>>, %arg14: memref<1x128xf32, #tpu.memory_space<vmem>>, %arg15: memref<128x256xbf16, #tpu.memory_space<vmem>>, %arg16: memref<1x256xf32, #tpu.memory_space<vmem>>, %arg17: memref<128x128xbf16, #tpu.memory_space<vmem>>, %arg18: memref<1x128xf32, #tpu.memory_space<vmem>>, %arg19: memref<1x128xf32, #tpu.memory_space<vmem>>, %arg20: memref<1x128xf32, #tpu.memory_space<vmem>>, %arg21: memref<128x256xbf16, #tpu.memory_space<vmem>>, %arg22: memref<1x256xf32, #tpu.memory_space<vmem>>, %arg23: memref<256x128xbf16, #tpu.memory_space<vmem>>, %arg24: memref<1x128xf32, #tpu.memory_space<vmem>>, %arg25: memref<1x128xf32, #tpu.memory_space<vmem>>, %arg26: memref<1x128xf32, #tpu.memory_space<vmem>>, %arg27: memref<1x8x128xf32, #tpu.memory_space<vmem>>) attributes {dimension_semantics = [#tpu.dimension_semantics<parallel>], iteration_bounds = array<i64: 2>, scalar_prefetch = 0 : i64, scratch_operands = 0 : i64, tpu.core_type = #tpu.core_type<tc>, window_params = [{transform_indices = @transform_0, window_bounds = array<i64: 1, 8, 128>}, {transform_indices = @transform_1, window_bounds = array<i64: 1, 8, 128>}, {transform_indices = @transform_2, window_bounds = array<i64: 1, 8, 8>}, {transform_indices = @transform_3, window_bounds = array<i64: 1, 8, 8>}, {pipeline_mode = #tpu.pipeline_mode<synchronous>, transform_indices = @transform_4, window_bounds = array<i64: 1, 128>}, {pipeline_mode = #tpu.pipeline_mode<synchronous>, transform_indices = @transform_5, window_bounds = array<i64: 1, 128>}, {pipeline_mode = #tpu.pipeline_mode<synchronous>, transform_indices = @transform_6, window_bounds = array<i64: 128, 384>}, {pipeline_mode = #tpu.pipeline_mode<synchronous>, transform_indices = @transform_7, window_bounds = array<i64: 1, 384>}, {pipeline_mode = #tpu.pipeline_mode<synchronous>, transform_indices = @transform_8, window_bounds = array<i64: 128, 128>}, {pipeline_mode = #tpu.pipeline_mode<synchronous>, transform_indices = @transform_9, window_bounds = array<i64: 1, 128>}, {pipeline_mode = #tpu.pipeline_mode<synchronous>, transform_indices = @transform_10, window_bounds = array<i64: 1, 128>}, {pipeline_mode = #tpu.pipeline_mode<synchronous>, transform_indices = @transform_11, window_bounds = array<i64: 1, 128>}, {pipeline_mode = #tpu.pipeline_mode<synchronous>, transform_indices = @transform_12, window_bounds = array<i64: 128, 128>}, {pipeline_mode = #tpu.pipeline_mode<synchronous>, transform_indices = @transform_13, window_bounds = array<i64: 1, 128>}, {pipeline_mode = #tpu.pipeline_mode<synchronous>, transform_indices = @transform_14, window_bounds = array<i64: 128, 256>}, {pipeline_mode = #tpu.pipeline_mode<synchronous>, transform_indices = @transform_15, window_bounds = array<i64: 1, 256>}, {pipeline_mode = #tpu.pipeline_mode<synchronous>, transform_indices = @transform_16, window_bounds = array<i64: 128, 128>}, {pipeline_mode = #tpu.pipeline_mode<synchronous>, transform_indices = @transform_17, window_bounds = array<i64: 1, 128>}, {pipeline_mode = #tpu.pipeline_mode<synchronous>, transform_indices = @transform_18, window_bounds = array<i64: 1, 128>}, {pipeline_mode = #tpu.pipeline_mode<synchronous>, transform_indices = @transform_19, window_bounds = array<i64: 1, 128>}, {pipeline_mode = #tpu.pipeline_mode<synchronous>, transform_indices = @transform_20, window_bounds = array<i64: 128, 256>}, {pipeline_mode = #tpu.pipeline_mode<synchronous>, transform_indices = @transform_21, window_bounds = array<i64: 1, 256>}, {pipeline_mode = #tpu.pipeline_mode<synchronous>, transform_indices = @transform_22, window_bounds = array<i64: 256, 128>}, {pipeline_mode = #tpu.pipeline_mode<synchronous>, transform_indices = @transform_23, window_bounds = array<i64: 1, 128>}, {pipeline_mode = #tpu.pipeline_mode<synchronous>, transform_indices = @transform_24, window_bounds = array<i64: 1, 128>}, {pipeline_mode = #tpu.pipeline_mode<synchronous>, transform_indices = @transform_25, window_bounds = array<i64: 1, 128>}, {transform_indices = @transform_26, window_bounds = array<i64: 1, 8, 128>}]} {
    %c0 = arith.constant 0 : index
    %c0_0 = arith.constant 0 : index
    %c0_1 = arith.constant 0 : index
    %0 = vector.load %arg1[%c0, %c0_0, %c0_1] : memref<1x8x128xf32, #tpu.memory_space<vmem>>, vector<1x8x128xf32>
    %1 = vector.shape_cast %0 : vector<1x8x128xf32> to vector<8x128xf32>
    %c0_2 = arith.constant 0 : index
    %c0_3 = arith.constant 0 : index
    %c0_4 = arith.constant 0 : index
    %2 = vector.load %arg2[%c0_2, %c0_3, %c0_4] : memref<1x8x128xf32, #tpu.memory_space<vmem>>, vector<1x8x128xf32>
    %3 = vector.shape_cast %2 : vector<1x8x128xf32> to vector<8x128xf32>
    %c0_5 = arith.constant 0 : index
    %c0_6 = arith.constant 0 : index
    %c0_7 = arith.constant 0 : index
    %4 = vector.load %arg3[%c0_5, %c0_6, %c0_7] : memref<1x8x8xbf16, #tpu.memory_space<vmem>>, vector<1x8x8xbf16>
    %5 = vector.shape_cast %4 : vector<1x8x8xbf16> to vector<8x8xbf16>
    %6 = arith.extf %5 : vector<8x8xbf16> to vector<8x8xf32>
    %cst = arith.constant 1.000000e+00 : f32
    %7 = vector.broadcast %cst : f32 to vector<8x8xf32>
    %8 = arith.subf %6, %7 : vector<8x8xf32>
    %cst_8 = arith.constant 1.000000e+09 : f32
    %9 = vector.broadcast %cst_8 : f32 to vector<8x8xf32>
    %10 = arith.mulf %8, %9 : vector<8x8xf32>
    %c0_9 = arith.constant 0 : index
    %c0_10 = arith.constant 0 : index
    %c0_11 = arith.constant 0 : index
    %11 = vector.load %arg4[%c0_9, %c0_10, %c0_11] : memref<1x8x8xbf16, #tpu.memory_space<vmem>>, vector<1x8x8xbf16>
    %12 = vector.shape_cast %11 : vector<1x8x8xbf16> to vector<8x8xbf16>
    %13 = arith.extf %12 : vector<8x8xbf16> to vector<8x8xf32>
    %cst_12 = arith.constant 1.000000e+00 : f32
    %14 = vector.broadcast %cst_12 : f32 to vector<8x8xf32>
    %15 = arith.subf %13, %14 : vector<8x8xf32>
    %cst_13 = arith.constant 1.000000e+09 : f32
    %16 = vector.broadcast %cst_13 : f32 to vector<8x8xf32>
    %17 = arith.mulf %15, %16 : vector<8x8xf32>
    %c0_14 = arith.constant 0 : index
    %c0_15 = arith.constant 0 : index
    %18 = vector.load %arg5[%c0_14, %c0_15] : memref<1x128xf32, #tpu.memory_space<vmem>>, vector<1x128xf32>
    %c0_16 = arith.constant 0 : index
    %c0_17 = arith.constant 0 : index
    %19 = vector.load %arg6[%c0_16, %c0_17] : memref<1x128xf32, #tpu.memory_space<vmem>>, vector<1x128xf32>
    %cst_18 = arith.constant dense<0.000000e+00> : vector<8xf32>
    %20 = vector.multi_reduction <add>, %1, %cst_18 [1] : vector<8x128xf32> to vector<8xf32>
    %21 = vector.shape_cast %20 : vector<8xf32> to vector<8x1xf32>
    %cst_19 = arith.constant 1.280000e+02 : f32
    %22 = vector.broadcast %cst_19 : f32 to vector<8x1xf32>
    %23 = arith.divf %21, %22 : vector<8x1xf32>
    %24 = vector.broadcast %23 : vector<8x1xf32> to vector<8x128xf32>
    %25 = arith.subf %1, %24 : vector<8x128xf32>
    %26 = arith.mulf %25, %25 : vector<8x128xf32>
    %cst_20 = arith.constant dense<0.000000e+00> : vector<8xf32>
    %27 = vector.multi_reduction <add>, %26, %cst_20 [1] : vector<8x128xf32> to vector<8xf32>
    %28 = vector.shape_cast %27 : vector<8xf32> to vector<8x1xf32>
    %cst_21 = arith.constant 0.00787401571 : f32
    %29 = vector.broadcast %cst_21 : f32 to vector<8x1xf32>
    %30 = arith.mulf %28, %29 : vector<8x1xf32>
    %31 = math.sqrt %30 : vector<8x1xf32>
    %32 = vector.broadcast %18 : vector<1x128xf32> to vector<8x128xf32>
    %33 = arith.mulf %32, %25 : vector<8x128xf32>
    %cst_22 = arith.constant 9.99999997E-7 : f32
    %34 = vector.broadcast %cst_22 : f32 to vector<8x1xf32>
    %35 = arith.addf %31, %34 : vector<8x1xf32>
    %36 = tpu.reciprocal %35 : vector<8x1xf32> -> vector<8x1xf32>
    %37 = vector.broadcast %36 : vector<8x1xf32> to vector<8x128xf32>
    %38 = arith.mulf %33, %37 : vector<8x128xf32>
    %39 = vector.broadcast %19 : vector<1x128xf32> to vector<8x128xf32>
    %40 = arith.addf %38, %39 : vector<8x128xf32>
    %c0_23 = arith.constant 0 : index
    %c0_24 = arith.constant 0 : index
    %41 = vector.load %arg7[%c0_23, %c0_24] : memref<128x384xbf16, #tpu.memory_space<vmem>>, vector<128x384xbf16>
    %c0_25 = arith.constant 0 : index
    %c0_26 = arith.constant 0 : index
    %42 = vector.load %arg8[%c0_25, %c0_26] : memref<1x384xf32, #tpu.memory_space<vmem>>, vector<1x384xf32>
    %43 = arith.truncf %40 : vector<8x128xf32> to vector<8x128xbf16>
    %cst_27 = arith.constant dense<0.000000e+00> : vector<8x384xf32>
    %44 = tpu.matmul %43, %41, %cst_27 {dimension_numbers = #tpu.dot_dimension_numbers<[1], [0], [0], [1], [0, 0, 1, 1], [], []>} : vector<8x128xbf16>, vector<128x384xbf16>, vector<8x384xf32> -> vector<8x384xf32>
    %45 = vector.broadcast %42 : vector<1x384xf32> to vector<8x384xf32>
    %46 = arith.addf %44, %45 : vector<8x384xf32>
    %47 = vector.extract_strided_slice %46 {offsets = [0, 0], sizes = [8, 128], strides = [1, 1]} : vector<8x384xf32> to vector<8x128xf32>
    %48 = vector.extract_strided_slice %46 {offsets = [0, 128], sizes = [8, 128], strides = [1, 1]} : vector<8x384xf32> to vector<8x128xf32>
    %49 = vector.extract_strided_slice %46 {offsets = [0, 256], sizes = [8, 128], strides = [1, 1]} : vector<8x384xf32> to vector<8x128xf32>
    %50 = vector.extract_strided_slice %47 {offsets = [0, 0], sizes = [8, 32], strides = [1, 1]} : vector<8x128xf32> to vector<8x32xf32>
    %51 = arith.truncf %50 : vector<8x32xf32> to vector<8x32xbf16>
    %52 = vector.extract_strided_slice %48 {offsets = [0, 0], sizes = [8, 32], strides = [1, 1]} : vector<8x128xf32> to vector<8x32xf32>
    %53 = arith.truncf %52 : vector<8x32xf32> to vector<8x32xbf16>
    %54 = vector.extract_strided_slice %49 {offsets = [0, 0], sizes = [8, 32], strides = [1, 1]} : vector<8x128xf32> to vector<8x32xf32>
    %55 = arith.truncf %54 : vector<8x32xf32> to vector<8x32xbf16>
    "tpu.trace_start"() <{level = 10 : i32, message = "qd,kd->qk"}> : () -> ()
    %cst_28 = arith.constant dense<0.000000e+00> : vector<8x8xf32>
    %56 = tpu.matmul %51, %53, %cst_28 {dimension_numbers = #tpu.dot_dimension_numbers<[1], [1], [0], [0], [0, 0, 1, 0], [], []>} : vector<8x32xbf16>, vector<8x32xbf16>, vector<8x8xf32> -> vector<8x8xf32>
    "tpu.trace_stop"() : () -> ()
    %cst_29 = arith.constant 0.176776692 : f32
    %57 = vector.broadcast %cst_29 : f32 to vector<8x8xf32>
    %58 = arith.mulf %56, %57 : vector<8x8xf32>
    %59 = arith.addf %58, %10 : vector<8x8xf32>
    %cst_30 = arith.constant dense<0xFF800000> : vector<8xf32>
    %60 = vector.multi_reduction <maximumf>, %59, %cst_30 [1] : vector<8x8xf32> to vector<8xf32>
    %61 = vector.shape_cast %60 : vector<8xf32> to vector<8x1xf32>
    %62 = vector.broadcast %61 : vector<8x1xf32> to vector<8x8xf32>
    %63 = arith.subf %59, %62 : vector<8x8xf32>
    %64 = math.exp %63 : vector<8x8xf32>
    %cst_31 = arith.constant dense<0.000000e+00> : vector<8xf32>
    %65 = vector.multi_reduction <add>, %64, %cst_31 [1] : vector<8x8xf32> to vector<8xf32>
    %66 = vector.shape_cast %65 : vector<8xf32> to vector<8x1xf32>
    %67 = tpu.reciprocal %66 {approx = true} : vector<8x1xf32> -> vector<8x1xf32>
    %68 = vector.broadcast %67 : vector<8x1xf32> to vector<8x8xf32>
    %69 = arith.mulf %64, %68 : vector<8x8xf32>
    %70 = arith.truncf %69 : vector<8x8xf32> to vector<8x8xbf16>
    %cst_32 = arith.constant dense<0.000000e+00> : vector<8x32xf32>
    %71 = tpu.matmul %70, %55, %cst_32 {dimension_numbers = #tpu.dot_dimension_numbers<[1], [0], [0], [1], [0, 0, 1, 1], [], []>} : vector<8x8xbf16>, vector<8x32xbf16>, vector<8x32xf32> -> vector<8x32xf32>
    %72 = vector.extract_strided_slice %47 {offsets = [0, 32], sizes = [8, 32], strides = [1, 1]} : vector<8x128xf32> to vector<8x32xf32>
    %73 = arith.truncf %72 : vector<8x32xf32> to vector<8x32xbf16>
    %74 = vector.extract_strided_slice %48 {offsets = [0, 32], sizes = [8, 32], strides = [1, 1]} : vector<8x128xf32> to vector<8x32xf32>
    %75 = arith.truncf %74 : vector<8x32xf32> to vector<8x32xbf16>
    %76 = vector.extract_strided_slice %49 {offsets = [0, 32], sizes = [8, 32], strides = [1, 1]} : vector<8x128xf32> to vector<8x32xf32>
    %77 = arith.truncf %76 : vector<8x32xf32> to vector<8x32xbf16>
    "tpu.trace_start"() <{level = 10 : i32, message = "qd,kd->qk"}> : () -> ()
    %cst_33 = arith.constant dense<0.000000e+00> : vector<8x8xf32>
    %78 = tpu.matmul %73, %75, %cst_33 {dimension_numbers = #tpu.dot_dimension_numbers<[1], [1], [0], [0], [0, 0, 1, 0], [], []>} : vector<8x32xbf16>, vector<8x32xbf16>, vector<8x8xf32> -> vector<8x8xf32>
    "tpu.trace_stop"() : () -> ()
    %cst_34 = arith.constant 0.176776692 : f32
    %79 = vector.broadcast %cst_34 : f32 to vector<8x8xf32>
    %80 = arith.mulf %78, %79 : vector<8x8xf32>
    %81 = arith.addf %80, %10 : vector<8x8xf32>
    %cst_35 = arith.constant dense<0xFF800000> : vector<8xf32>
    %82 = vector.multi_reduction <maximumf>, %81, %cst_35 [1] : vector<8x8xf32> to vector<8xf32>
    %83 = vector.shape_cast %82 : vector<8xf32> to vector<8x1xf32>
    %84 = vector.broadcast %83 : vector<8x1xf32> to vector<8x8xf32>
    %85 = arith.subf %81, %84 : vector<8x8xf32>
    %86 = math.exp %85 : vector<8x8xf32>
    %cst_36 = arith.constant dense<0.000000e+00> : vector<8xf32>
    %87 = vector.multi_reduction <add>, %86, %cst_36 [1] : vector<8x8xf32> to vector<8xf32>
    %88 = vector.shape_cast %87 : vector<8xf32> to vector<8x1xf32>
    %89 = tpu.reciprocal %88 {approx = true} : vector<8x1xf32> -> vector<8x1xf32>
    %90 = vector.broadcast %89 : vector<8x1xf32> to vector<8x8xf32>
    %91 = arith.mulf %86, %90 : vector<8x8xf32>
    %92 = arith.truncf %91 : vector<8x8xf32> to vector<8x8xbf16>
    %cst_37 = arith.constant dense<0.000000e+00> : vector<8x32xf32>
    %93 = tpu.matmul %92, %77, %cst_37 {dimension_numbers = #tpu.dot_dimension_numbers<[1], [0], [0], [1], [0, 0, 1, 1], [], []>} : vector<8x8xbf16>, vector<8x32xbf16>, vector<8x32xf32> -> vector<8x32xf32>
    %94 = vector.extract_strided_slice %47 {offsets = [0, 64], sizes = [8, 32], strides = [1, 1]} : vector<8x128xf32> to vector<8x32xf32>
    %95 = arith.truncf %94 : vector<8x32xf32> to vector<8x32xbf16>
    %96 = vector.extract_strided_slice %48 {offsets = [0, 64], sizes = [8, 32], strides = [1, 1]} : vector<8x128xf32> to vector<8x32xf32>
    %97 = arith.truncf %96 : vector<8x32xf32> to vector<8x32xbf16>
    %98 = vector.extract_strided_slice %49 {offsets = [0, 64], sizes = [8, 32], strides = [1, 1]} : vector<8x128xf32> to vector<8x32xf32>
    %99 = arith.truncf %98 : vector<8x32xf32> to vector<8x32xbf16>
    "tpu.trace_start"() <{level = 10 : i32, message = "qd,kd->qk"}> : () -> ()
    %cst_38 = arith.constant dense<0.000000e+00> : vector<8x8xf32>
    %100 = tpu.matmul %95, %97, %cst_38 {dimension_numbers = #tpu.dot_dimension_numbers<[1], [1], [0], [0], [0, 0, 1, 0], [], []>} : vector<8x32xbf16>, vector<8x32xbf16>, vector<8x8xf32> -> vector<8x8xf32>
    "tpu.trace_stop"() : () -> ()
    %cst_39 = arith.constant 0.176776692 : f32
    %101 = vector.broadcast %cst_39 : f32 to vector<8x8xf32>
    %102 = arith.mulf %100, %101 : vector<8x8xf32>
    %103 = arith.addf %102, %10 : vector<8x8xf32>
    %cst_40 = arith.constant dense<0xFF800000> : vector<8xf32>
    %104 = vector.multi_reduction <maximumf>, %103, %cst_40 [1] : vector<8x8xf32> to vector<8xf32>
    %105 = vector.shape_cast %104 : vector<8xf32> to vector<8x1xf32>
    %106 = vector.broadcast %105 : vector<8x1xf32> to vector<8x8xf32>
    %107 = arith.subf %103, %106 : vector<8x8xf32>
    %108 = math.exp %107 : vector<8x8xf32>
    %cst_41 = arith.constant dense<0.000000e+00> : vector<8xf32>
    %109 = vector.multi_reduction <add>, %108, %cst_41 [1] : vector<8x8xf32> to vector<8xf32>
    %110 = vector.shape_cast %109 : vector<8xf32> to vector<8x1xf32>
    %111 = tpu.reciprocal %110 {approx = true} : vector<8x1xf32> -> vector<8x1xf32>
    %112 = vector.broadcast %111 : vector<8x1xf32> to vector<8x8xf32>
    %113 = arith.mulf %108, %112 : vector<8x8xf32>
    %114 = arith.truncf %113 : vector<8x8xf32> to vector<8x8xbf16>
    %cst_42 = arith.constant dense<0.000000e+00> : vector<8x32xf32>
    %115 = tpu.matmul %114, %99, %cst_42 {dimension_numbers = #tpu.dot_dimension_numbers<[1], [0], [0], [1], [0, 0, 1, 1], [], []>} : vector<8x8xbf16>, vector<8x32xbf16>, vector<8x32xf32> -> vector<8x32xf32>
    %116 = vector.extract_strided_slice %47 {offsets = [0, 96], sizes = [8, 32], strides = [1, 1]} : vector<8x128xf32> to vector<8x32xf32>
    %117 = arith.truncf %116 : vector<8x32xf32> to vector<8x32xbf16>
    %118 = vector.extract_strided_slice %48 {offsets = [0, 96], sizes = [8, 32], strides = [1, 1]} : vector<8x128xf32> to vector<8x32xf32>
    %119 = arith.truncf %118 : vector<8x32xf32> to vector<8x32xbf16>
    %120 = vector.extract_strided_slice %49 {offsets = [0, 96], sizes = [8, 32], strides = [1, 1]} : vector<8x128xf32> to vector<8x32xf32>
    %121 = arith.truncf %120 : vector<8x32xf32> to vector<8x32xbf16>
    "tpu.trace_start"() <{level = 10 : i32, message = "qd,kd->qk"}> : () -> ()
    %cst_43 = arith.constant dense<0.000000e+00> : vector<8x8xf32>
    %122 = tpu.matmul %117, %119, %cst_43 {dimension_numbers = #tpu.dot_dimension_numbers<[1], [1], [0], [0], [0, 0, 1, 0], [], []>} : vector<8x32xbf16>, vector<8x32xbf16>, vector<8x8xf32> -> vector<8x8xf32>
    "tpu.trace_stop"() : () -> ()
    %cst_44 = arith.constant 0.176776692 : f32
    %123 = vector.broadcast %cst_44 : f32 to vector<8x8xf32>
    %124 = arith.mulf %122, %123 : vector<8x8xf32>
    %125 = arith.addf %124, %10 : vector<8x8xf32>
    %cst_45 = arith.constant dense<0xFF800000> : vector<8xf32>
    %126 = vector.multi_reduction <maximumf>, %125, %cst_45 [1] : vector<8x8xf32> to vector<8xf32>
    %127 = vector.shape_cast %126 : vector<8xf32> to vector<8x1xf32>
    %128 = vector.broadcast %127 : vector<8x1xf32> to vector<8x8xf32>
    %129 = arith.subf %125, %128 : vector<8x8xf32>
    %130 = math.exp %129 : vector<8x8xf32>
    %cst_46 = arith.constant dense<0.000000e+00> : vector<8xf32>
    %131 = vector.multi_reduction <add>, %130, %cst_46 [1] : vector<8x8xf32> to vector<8xf32>
    %132 = vector.shape_cast %131 : vector<8xf32> to vector<8x1xf32>
    %133 = tpu.reciprocal %132 {approx = true} : vector<8x1xf32> -> vector<8x1xf32>
    %134 = vector.broadcast %133 : vector<8x1xf32> to vector<8x8xf32>
    %135 = arith.mulf %130, %134 : vector<8x8xf32>
    %136 = arith.truncf %135 : vector<8x8xf32> to vector<8x8xbf16>
    %cst_47 = arith.constant dense<0.000000e+00> : vector<8x32xf32>
    %137 = tpu.matmul %136, %121, %cst_47 {dimension_numbers = #tpu.dot_dimension_numbers<[1], [0], [0], [1], [0, 0, 1, 1], [], []>} : vector<8x8xbf16>, vector<8x32xbf16>, vector<8x32xf32> -> vector<8x32xf32>
    %138 = tpu.concatenate %71, %93, %115, %137 in 1 : vector<8x32xf32>, vector<8x32xf32>, vector<8x32xf32>, vector<8x32xf32> -> vector<8x128xf32>
    %c0_48 = arith.constant 0 : index
    %c0_49 = arith.constant 0 : index
    %139 = vector.load %arg9[%c0_48, %c0_49] : memref<128x128xbf16, #tpu.memory_space<vmem>>, vector<128x128xbf16>
    %c0_50 = arith.constant 0 : index
    %c0_51 = arith.constant 0 : index
    %140 = vector.load %arg10[%c0_50, %c0_51] : memref<1x128xf32, #tpu.memory_space<vmem>>, vector<1x128xf32>
    %141 = arith.truncf %138 : vector<8x128xf32> to vector<8x128xbf16>
    %cst_52 = arith.constant dense<0.000000e+00> : vector<8x128xf32>
    %142 = tpu.matmul %141, %139, %cst_52 {dimension_numbers = #tpu.dot_dimension_numbers<[1], [0], [0], [1], [0, 0, 1, 1], [], []>} : vector<8x128xbf16>, vector<128x128xbf16>, vector<8x128xf32> -> vector<8x128xf32>
    %143 = vector.broadcast %140 : vector<1x128xf32> to vector<8x128xf32>
    %144 = arith.addf %142, %143 : vector<8x128xf32>
    %145 = arith.addf %1, %144 : vector<8x128xf32>
    %c0_53 = arith.constant 0 : index
    %c0_54 = arith.constant 0 : index
    %146 = vector.load %arg11[%c0_53, %c0_54] : memref<1x128xf32, #tpu.memory_space<vmem>>, vector<1x128xf32>
    %c0_55 = arith.constant 0 : index
    %c0_56 = arith.constant 0 : index
    %147 = vector.load %arg12[%c0_55, %c0_56] : memref<1x128xf32, #tpu.memory_space<vmem>>, vector<1x128xf32>
    %cst_57 = arith.constant dense<0.000000e+00> : vector<8xf32>
    %148 = vector.multi_reduction <add>, %145, %cst_57 [1] : vector<8x128xf32> to vector<8xf32>
    %149 = vector.shape_cast %148 : vector<8xf32> to vector<8x1xf32>
    %cst_58 = arith.constant 1.280000e+02 : f32
    %150 = vector.broadcast %cst_58 : f32 to vector<8x1xf32>
    %151 = arith.divf %149, %150 : vector<8x1xf32>
    %152 = vector.broadcast %151 : vector<8x1xf32> to vector<8x128xf32>
    %153 = arith.subf %145, %152 : vector<8x128xf32>
    %154 = arith.mulf %153, %153 : vector<8x128xf32>
    %cst_59 = arith.constant dense<0.000000e+00> : vector<8xf32>
    %155 = vector.multi_reduction <add>, %154, %cst_59 [1] : vector<8x128xf32> to vector<8xf32>
    %156 = vector.shape_cast %155 : vector<8xf32> to vector<8x1xf32>
    %cst_60 = arith.constant 0.00787401571 : f32
    %157 = vector.broadcast %cst_60 : f32 to vector<8x1xf32>
    %158 = arith.mulf %156, %157 : vector<8x1xf32>
    %159 = math.sqrt %158 : vector<8x1xf32>
    %160 = vector.broadcast %146 : vector<1x128xf32> to vector<8x128xf32>
    %161 = arith.mulf %160, %153 : vector<8x128xf32>
    %cst_61 = arith.constant 9.99999997E-7 : f32
    %162 = vector.broadcast %cst_61 : f32 to vector<8x1xf32>
    %163 = arith.addf %159, %162 : vector<8x1xf32>
    %164 = tpu.reciprocal %163 : vector<8x1xf32> -> vector<8x1xf32>
    %165 = vector.broadcast %164 : vector<8x1xf32> to vector<8x128xf32>
    %166 = arith.mulf %161, %165 : vector<8x128xf32>
    %167 = vector.broadcast %147 : vector<1x128xf32> to vector<8x128xf32>
    %168 = arith.addf %166, %167 : vector<8x128xf32>
    %c0_62 = arith.constant 0 : index
    %c0_63 = arith.constant 0 : index
    %169 = vector.load %arg13[%c0_62, %c0_63] : memref<128x128xbf16, #tpu.memory_space<vmem>>, vector<128x128xbf16>
    %c0_64 = arith.constant 0 : index
    %c0_65 = arith.constant 0 : index
    %170 = vector.load %arg14[%c0_64, %c0_65] : memref<1x128xf32, #tpu.memory_space<vmem>>, vector<1x128xf32>
    %171 = arith.truncf %168 : vector<8x128xf32> to vector<8x128xbf16>
    %cst_66 = arith.constant dense<0.000000e+00> : vector<8x128xf32>
    %172 = tpu.matmul %171, %169, %cst_66 {dimension_numbers = #tpu.dot_dimension_numbers<[1], [0], [0], [1], [0, 0, 1, 1], [], []>} : vector<8x128xbf16>, vector<128x128xbf16>, vector<8x128xf32> -> vector<8x128xf32>
    %173 = vector.broadcast %170 : vector<1x128xf32> to vector<8x128xf32>
    %174 = arith.addf %172, %173 : vector<8x128xf32>
    %c0_67 = arith.constant 0 : index
    %c0_68 = arith.constant 0 : index
    %175 = vector.load %arg15[%c0_67, %c0_68] : memref<128x256xbf16, #tpu.memory_space<vmem>>, vector<128x256xbf16>
    %c0_69 = arith.constant 0 : index
    %c0_70 = arith.constant 0 : index
    %176 = vector.load %arg16[%c0_69, %c0_70] : memref<1x256xf32, #tpu.memory_space<vmem>>, vector<1x256xf32>
    %177 = arith.truncf %3 : vector<8x128xf32> to vector<8x128xbf16>
    %cst_71 = arith.constant dense<0.000000e+00> : vector<8x256xf32>
    %178 = tpu.matmul %177, %175, %cst_71 {dimension_numbers = #tpu.dot_dimension_numbers<[1], [0], [0], [1], [0, 0, 1, 1], [], []>} : vector<8x128xbf16>, vector<128x256xbf16>, vector<8x256xf32> -> vector<8x256xf32>
    %179 = vector.broadcast %176 : vector<1x256xf32> to vector<8x256xf32>
    %180 = arith.addf %178, %179 : vector<8x256xf32>
    %181 = vector.extract_strided_slice %180 {offsets = [0, 0], sizes = [8, 128], strides = [1, 1]} : vector<8x256xf32> to vector<8x128xf32>
    %182 = vector.extract_strided_slice %180 {offsets = [0, 128], sizes = [8, 128], strides = [1, 1]} : vector<8x256xf32> to vector<8x128xf32>
    %183 = vector.extract_strided_slice %174 {offsets = [0, 0], sizes = [8, 32], strides = [1, 1]} : vector<8x128xf32> to vector<8x32xf32>
    %184 = arith.truncf %183 : vector<8x32xf32> to vector<8x32xbf16>
    %185 = vector.extract_strided_slice %181 {offsets = [0, 0], sizes = [8, 32], strides = [1, 1]} : vector<8x128xf32> to vector<8x32xf32>
    %186 = arith.truncf %185 : vector<8x32xf32> to vector<8x32xbf16>
    %187 = vector.extract_strided_slice %182 {offsets = [0, 0], sizes = [8, 32], strides = [1, 1]} : vector<8x128xf32> to vector<8x32xf32>
    %188 = arith.truncf %187 : vector<8x32xf32> to vector<8x32xbf16>
    "tpu.trace_start"() <{level = 10 : i32, message = "qd,kd->qk"}> : () -> ()
    %cst_72 = arith.constant dense<0.000000e+00> : vector<8x8xf32>
    %189 = tpu.matmul %184, %186, %cst_72 {dimension_numbers = #tpu.dot_dimension_numbers<[1], [1], [0], [0], [0, 0, 1, 0], [], []>} : vector<8x32xbf16>, vector<8x32xbf16>, vector<8x8xf32> -> vector<8x8xf32>
    "tpu.trace_stop"() : () -> ()
    %cst_73 = arith.constant 0.176776692 : f32
    %190 = vector.broadcast %cst_73 : f32 to vector<8x8xf32>
    %191 = arith.mulf %189, %190 : vector<8x8xf32>
    %192 = arith.addf %191, %17 : vector<8x8xf32>
    %cst_74 = arith.constant dense<0xFF800000> : vector<8xf32>
    %193 = vector.multi_reduction <maximumf>, %192, %cst_74 [1] : vector<8x8xf32> to vector<8xf32>
    %194 = vector.shape_cast %193 : vector<8xf32> to vector<8x1xf32>
    %195 = vector.broadcast %194 : vector<8x1xf32> to vector<8x8xf32>
    %196 = arith.subf %192, %195 : vector<8x8xf32>
    %197 = math.exp %196 : vector<8x8xf32>
    %cst_75 = arith.constant dense<0.000000e+00> : vector<8xf32>
    %198 = vector.multi_reduction <add>, %197, %cst_75 [1] : vector<8x8xf32> to vector<8xf32>
    %199 = vector.shape_cast %198 : vector<8xf32> to vector<8x1xf32>
    %200 = tpu.reciprocal %199 {approx = true} : vector<8x1xf32> -> vector<8x1xf32>
    %201 = vector.broadcast %200 : vector<8x1xf32> to vector<8x8xf32>
    %202 = arith.mulf %197, %201 : vector<8x8xf32>
    %203 = arith.truncf %202 : vector<8x8xf32> to vector<8x8xbf16>
    %cst_76 = arith.constant dense<0.000000e+00> : vector<8x32xf32>
    %204 = tpu.matmul %203, %188, %cst_76 {dimension_numbers = #tpu.dot_dimension_numbers<[1], [0], [0], [1], [0, 0, 1, 1], [], []>} : vector<8x8xbf16>, vector<8x32xbf16>, vector<8x32xf32> -> vector<8x32xf32>
    %205 = vector.extract_strided_slice %174 {offsets = [0, 32], sizes = [8, 32], strides = [1, 1]} : vector<8x128xf32> to vector<8x32xf32>
    %206 = arith.truncf %205 : vector<8x32xf32> to vector<8x32xbf16>
    %207 = vector.extract_strided_slice %181 {offsets = [0, 32], sizes = [8, 32], strides = [1, 1]} : vector<8x128xf32> to vector<8x32xf32>
    %208 = arith.truncf %207 : vector<8x32xf32> to vector<8x32xbf16>
    %209 = vector.extract_strided_slice %182 {offsets = [0, 32], sizes = [8, 32], strides = [1, 1]} : vector<8x128xf32> to vector<8x32xf32>
    %210 = arith.truncf %209 : vector<8x32xf32> to vector<8x32xbf16>
    "tpu.trace_start"() <{level = 10 : i32, message = "qd,kd->qk"}> : () -> ()
    %cst_77 = arith.constant dense<0.000000e+00> : vector<8x8xf32>
    %211 = tpu.matmul %206, %208, %cst_77 {dimension_numbers = #tpu.dot_dimension_numbers<[1], [1], [0], [0], [0, 0, 1, 0], [], []>} : vector<8x32xbf16>, vector<8x32xbf16>, vector<8x8xf32> -> vector<8x8xf32>
    "tpu.trace_stop"() : () -> ()
    %cst_78 = arith.constant 0.176776692 : f32
    %212 = vector.broadcast %cst_78 : f32 to vector<8x8xf32>
    %213 = arith.mulf %211, %212 : vector<8x8xf32>
    %214 = arith.addf %213, %17 : vector<8x8xf32>
    %cst_79 = arith.constant dense<0xFF800000> : vector<8xf32>
    %215 = vector.multi_reduction <maximumf>, %214, %cst_79 [1] : vector<8x8xf32> to vector<8xf32>
    %216 = vector.shape_cast %215 : vector<8xf32> to vector<8x1xf32>
    %217 = vector.broadcast %216 : vector<8x1xf32> to vector<8x8xf32>
    %218 = arith.subf %214, %217 : vector<8x8xf32>
    %219 = math.exp %218 : vector<8x8xf32>
    %cst_80 = arith.constant dense<0.000000e+00> : vector<8xf32>
    %220 = vector.multi_reduction <add>, %219, %cst_80 [1] : vector<8x8xf32> to vector<8xf32>
    %221 = vector.shape_cast %220 : vector<8xf32> to vector<8x1xf32>
    %222 = tpu.reciprocal %221 {approx = true} : vector<8x1xf32> -> vector<8x1xf32>
    %223 = vector.broadcast %222 : vector<8x1xf32> to vector<8x8xf32>
    %224 = arith.mulf %219, %223 : vector<8x8xf32>
    %225 = arith.truncf %224 : vector<8x8xf32> to vector<8x8xbf16>
    %cst_81 = arith.constant dense<0.000000e+00> : vector<8x32xf32>
    %226 = tpu.matmul %225, %210, %cst_81 {dimension_numbers = #tpu.dot_dimension_numbers<[1], [0], [0], [1], [0, 0, 1, 1], [], []>} : vector<8x8xbf16>, vector<8x32xbf16>, vector<8x32xf32> -> vector<8x32xf32>
    %227 = vector.extract_strided_slice %174 {offsets = [0, 64], sizes = [8, 32], strides = [1, 1]} : vector<8x128xf32> to vector<8x32xf32>
    %228 = arith.truncf %227 : vector<8x32xf32> to vector<8x32xbf16>
    %229 = vector.extract_strided_slice %181 {offsets = [0, 64], sizes = [8, 32], strides = [1, 1]} : vector<8x128xf32> to vector<8x32xf32>
    %230 = arith.truncf %229 : vector<8x32xf32> to vector<8x32xbf16>
    %231 = vector.extract_strided_slice %182 {offsets = [0, 64], sizes = [8, 32], strides = [1, 1]} : vector<8x128xf32> to vector<8x32xf32>
    %232 = arith.truncf %231 : vector<8x32xf32> to vector<8x32xbf16>
    "tpu.trace_start"() <{level = 10 : i32, message = "qd,kd->qk"}> : () -> ()
    %cst_82 = arith.constant dense<0.000000e+00> : vector<8x8xf32>
    %233 = tpu.matmul %228, %230, %cst_82 {dimension_numbers = #tpu.dot_dimension_numbers<[1], [1], [0], [0], [0, 0, 1, 0], [], []>} : vector<8x32xbf16>, vector<8x32xbf16>, vector<8x8xf32> -> vector<8x8xf32>
    "tpu.trace_stop"() : () -> ()
    %cst_83 = arith.constant 0.176776692 : f32
    %234 = vector.broadcast %cst_83 : f32 to vector<8x8xf32>
    %235 = arith.mulf %233, %234 : vector<8x8xf32>
    %236 = arith.addf %235, %17 : vector<8x8xf32>
    %cst_84 = arith.constant dense<0xFF800000> : vector<8xf32>
    %237 = vector.multi_reduction <maximumf>, %236, %cst_84 [1] : vector<8x8xf32> to vector<8xf32>
    %238 = vector.shape_cast %237 : vector<8xf32> to vector<8x1xf32>
    %239 = vector.broadcast %238 : vector<8x1xf32> to vector<8x8xf32>
    %240 = arith.subf %236, %239 : vector<8x8xf32>
    %241 = math.exp %240 : vector<8x8xf32>
    %cst_85 = arith.constant dense<0.000000e+00> : vector<8xf32>
    %242 = vector.multi_reduction <add>, %241, %cst_85 [1] : vector<8x8xf32> to vector<8xf32>
    %243 = vector.shape_cast %242 : vector<8xf32> to vector<8x1xf32>
    %244 = tpu.reciprocal %243 {approx = true} : vector<8x1xf32> -> vector<8x1xf32>
    %245 = vector.broadcast %244 : vector<8x1xf32> to vector<8x8xf32>
    %246 = arith.mulf %241, %245 : vector<8x8xf32>
    %247 = arith.truncf %246 : vector<8x8xf32> to vector<8x8xbf16>
    %cst_86 = arith.constant dense<0.000000e+00> : vector<8x32xf32>
    %248 = tpu.matmul %247, %232, %cst_86 {dimension_numbers = #tpu.dot_dimension_numbers<[1], [0], [0], [1], [0, 0, 1, 1], [], []>} : vector<8x8xbf16>, vector<8x32xbf16>, vector<8x32xf32> -> vector<8x32xf32>
    %249 = vector.extract_strided_slice %174 {offsets = [0, 96], sizes = [8, 32], strides = [1, 1]} : vector<8x128xf32> to vector<8x32xf32>
    %250 = arith.truncf %249 : vector<8x32xf32> to vector<8x32xbf16>
    %251 = vector.extract_strided_slice %181 {offsets = [0, 96], sizes = [8, 32], strides = [1, 1]} : vector<8x128xf32> to vector<8x32xf32>
    %252 = arith.truncf %251 : vector<8x32xf32> to vector<8x32xbf16>
    %253 = vector.extract_strided_slice %182 {offsets = [0, 96], sizes = [8, 32], strides = [1, 1]} : vector<8x128xf32> to vector<8x32xf32>
    %254 = arith.truncf %253 : vector<8x32xf32> to vector<8x32xbf16>
    "tpu.trace_start"() <{level = 10 : i32, message = "qd,kd->qk"}> : () -> ()
    %cst_87 = arith.constant dense<0.000000e+00> : vector<8x8xf32>
    %255 = tpu.matmul %250, %252, %cst_87 {dimension_numbers = #tpu.dot_dimension_numbers<[1], [1], [0], [0], [0, 0, 1, 0], [], []>} : vector<8x32xbf16>, vector<8x32xbf16>, vector<8x8xf32> -> vector<8x8xf32>
    "tpu.trace_stop"() : () -> ()
    %cst_88 = arith.constant 0.176776692 : f32
    %256 = vector.broadcast %cst_88 : f32 to vector<8x8xf32>
    %257 = arith.mulf %255, %256 : vector<8x8xf32>
    %258 = arith.addf %257, %17 : vector<8x8xf32>
    %cst_89 = arith.constant dense<0xFF800000> : vector<8xf32>
    %259 = vector.multi_reduction <maximumf>, %258, %cst_89 [1] : vector<8x8xf32> to vector<8xf32>
    %260 = vector.shape_cast %259 : vector<8xf32> to vector<8x1xf32>
    %261 = vector.broadcast %260 : vector<8x1xf32> to vector<8x8xf32>
    %262 = arith.subf %258, %261 : vector<8x8xf32>
    %263 = math.exp %262 : vector<8x8xf32>
    %cst_90 = arith.constant dense<0.000000e+00> : vector<8xf32>
    %264 = vector.multi_reduction <add>, %263, %cst_90 [1] : vector<8x8xf32> to vector<8xf32>
    %265 = vector.shape_cast %264 : vector<8xf32> to vector<8x1xf32>
    %266 = tpu.reciprocal %265 {approx = true} : vector<8x1xf32> -> vector<8x1xf32>
    %267 = vector.broadcast %266 : vector<8x1xf32> to vector<8x8xf32>
    %268 = arith.mulf %263, %267 : vector<8x8xf32>
    %269 = arith.truncf %268 : vector<8x8xf32> to vector<8x8xbf16>
    %cst_91 = arith.constant dense<0.000000e+00> : vector<8x32xf32>
    %270 = tpu.matmul %269, %254, %cst_91 {dimension_numbers = #tpu.dot_dimension_numbers<[1], [0], [0], [1], [0, 0, 1, 1], [], []>} : vector<8x8xbf16>, vector<8x32xbf16>, vector<8x32xf32> -> vector<8x32xf32>
    %271 = tpu.concatenate %204, %226, %248, %270 in 1 : vector<8x32xf32>, vector<8x32xf32>, vector<8x32xf32>, vector<8x32xf32> -> vector<8x128xf32>
    %c0_92 = arith.constant 0 : index
    %c0_93 = arith.constant 0 : index
    %272 = vector.load %arg17[%c0_92, %c0_93] : memref<128x128xbf16, #tpu.memory_space<vmem>>, vector<128x128xbf16>
    %c0_94 = arith.constant 0 : index
    %c0_95 = arith.constant 0 : index
    %273 = vector.load %arg18[%c0_94, %c0_95] : memref<1x128xf32, #tpu.memory_space<vmem>>, vector<1x128xf32>
    %274 = arith.truncf %271 : vector<8x128xf32> to vector<8x128xbf16>
    %cst_96 = arith.constant dense<0.000000e+00> : vector<8x128xf32>
    %275 = tpu.matmul %274, %272, %cst_96 {dimension_numbers = #tpu.dot_dimension_numbers<[1], [0], [0], [1], [0, 0, 1, 1], [], []>} : vector<8x128xbf16>, vector<128x128xbf16>, vector<8x128xf32> -> vector<8x128xf32>
    %276 = vector.broadcast %273 : vector<1x128xf32> to vector<8x128xf32>
    %277 = arith.addf %275, %276 : vector<8x128xf32>
    %278 = arith.addf %145, %277 : vector<8x128xf32>
    %c0_97 = arith.constant 0 : index
    %c0_98 = arith.constant 0 : index
    %279 = vector.load %arg19[%c0_97, %c0_98] : memref<1x128xf32, #tpu.memory_space<vmem>>, vector<1x128xf32>
    %c0_99 = arith.constant 0 : index
    %c0_100 = arith.constant 0 : index
    %280 = vector.load %arg20[%c0_99, %c0_100] : memref<1x128xf32, #tpu.memory_space<vmem>>, vector<1x128xf32>
    %cst_101 = arith.constant dense<0.000000e+00> : vector<8xf32>
    %281 = vector.multi_reduction <add>, %278, %cst_101 [1] : vector<8x128xf32> to vector<8xf32>
    %282 = vector.shape_cast %281 : vector<8xf32> to vector<8x1xf32>
    %cst_102 = arith.constant 1.280000e+02 : f32
    %283 = vector.broadcast %cst_102 : f32 to vector<8x1xf32>
    %284 = arith.divf %282, %283 : vector<8x1xf32>
    %285 = vector.broadcast %284 : vector<8x1xf32> to vector<8x128xf32>
    %286 = arith.subf %278, %285 : vector<8x128xf32>
    %287 = arith.mulf %286, %286 : vector<8x128xf32>
    %cst_103 = arith.constant dense<0.000000e+00> : vector<8xf32>
    %288 = vector.multi_reduction <add>, %287, %cst_103 [1] : vector<8x128xf32> to vector<8xf32>
    %289 = vector.shape_cast %288 : vector<8xf32> to vector<8x1xf32>
    %cst_104 = arith.constant 0.00787401571 : f32
    %290 = vector.broadcast %cst_104 : f32 to vector<8x1xf32>
    %291 = arith.mulf %289, %290 : vector<8x1xf32>
    %292 = math.sqrt %291 : vector<8x1xf32>
    %293 = vector.broadcast %279 : vector<1x128xf32> to vector<8x128xf32>
    %294 = arith.mulf %293, %286 : vector<8x128xf32>
    %cst_105 = arith.constant 9.99999997E-7 : f32
    %295 = vector.broadcast %cst_105 : f32 to vector<8x1xf32>
    %296 = arith.addf %292, %295 : vector<8x1xf32>
    %297 = tpu.reciprocal %296 : vector<8x1xf32> -> vector<8x1xf32>
    %298 = vector.broadcast %297 : vector<8x1xf32> to vector<8x128xf32>
    %299 = arith.mulf %294, %298 : vector<8x128xf32>
    %300 = vector.broadcast %280 : vector<1x128xf32> to vector<8x128xf32>
    %301 = arith.addf %299, %300 : vector<8x128xf32>
    %c0_106 = arith.constant 0 : index
    %c0_107 = arith.constant 0 : index
    %302 = vector.load %arg21[%c0_106, %c0_107] : memref<128x256xbf16, #tpu.memory_space<vmem>>, vector<128x256xbf16>
    %c0_108 = arith.constant 0 : index
    %c0_109 = arith.constant 0 : index
    %303 = vector.load %arg22[%c0_108, %c0_109] : memref<1x256xf32, #tpu.memory_space<vmem>>, vector<1x256xf32>
    %304 = arith.truncf %301 : vector<8x128xf32> to vector<8x128xbf16>
    %cst_110 = arith.constant dense<0.000000e+00> : vector<8x256xf32>
    %305 = tpu.matmul %304, %302, %cst_110 {dimension_numbers = #tpu.dot_dimension_numbers<[1], [0], [0], [1], [0, 0, 1, 1], [], []>} : vector<8x128xbf16>, vector<128x256xbf16>, vector<8x256xf32> -> vector<8x256xf32>
    %306 = vector.broadcast %303 : vector<1x256xf32> to vector<8x256xf32>
    %307 = arith.addf %305, %306 : vector<8x256xf32>
    %cst_111 = arith.constant 0.000000e+00 : f32
    %308 = vector.broadcast %cst_111 : f32 to vector<8x256xf32>
    %309 = arith.maximumf %307, %308 : vector<8x256xf32>
    %c0_112 = arith.constant 0 : index
    %c0_113 = arith.constant 0 : index
    %310 = vector.load %arg23[%c0_112, %c0_113] : memref<256x128xbf16, #tpu.memory_space<vmem>>, vector<256x128xbf16>
    %c0_114 = arith.constant 0 : index
    %c0_115 = arith.constant 0 : index
    %311 = vector.load %arg24[%c0_114, %c0_115] : memref<1x128xf32, #tpu.memory_space<vmem>>, vector<1x128xf32>
    %312 = arith.truncf %309 : vector<8x256xf32> to vector<8x256xbf16>
    %cst_116 = arith.constant dense<0.000000e+00> : vector<8x128xf32>
    %313 = tpu.matmul %312, %310, %cst_116 {dimension_numbers = #tpu.dot_dimension_numbers<[1], [0], [0], [1], [0, 0, 1, 1], [], []>} : vector<8x256xbf16>, vector<256x128xbf16>, vector<8x128xf32> -> vector<8x128xf32>
    %314 = vector.broadcast %311 : vector<1x128xf32> to vector<8x128xf32>
    %315 = arith.addf %313, %314 : vector<8x128xf32>
    %316 = arith.addf %278, %315 : vector<8x128xf32>
    %c0_117 = arith.constant 0 : index
    %c0_118 = arith.constant 0 : index
    %317 = vector.load %arg25[%c0_117, %c0_118] : memref<1x128xf32, #tpu.memory_space<vmem>>, vector<1x128xf32>
    %c0_119 = arith.constant 0 : index
    %c0_120 = arith.constant 0 : index
    %318 = vector.load %arg26[%c0_119, %c0_120] : memref<1x128xf32, #tpu.memory_space<vmem>>, vector<1x128xf32>
    %cst_121 = arith.constant dense<0.000000e+00> : vector<8xf32>
    %319 = vector.multi_reduction <add>, %316, %cst_121 [1] : vector<8x128xf32> to vector<8xf32>
    %320 = vector.shape_cast %319 : vector<8xf32> to vector<8x1xf32>
    %cst_122 = arith.constant 1.280000e+02 : f32
    %321 = vector.broadcast %cst_122 : f32 to vector<8x1xf32>
    %322 = arith.divf %320, %321 : vector<8x1xf32>
    %323 = vector.broadcast %322 : vector<8x1xf32> to vector<8x128xf32>
    %324 = arith.subf %316, %323 : vector<8x128xf32>
    %325 = arith.mulf %324, %324 : vector<8x128xf32>
    %cst_123 = arith.constant dense<0.000000e+00> : vector<8xf32>
    %326 = vector.multi_reduction <add>, %325, %cst_123 [1] : vector<8x128xf32> to vector<8xf32>
    %327 = vector.shape_cast %326 : vector<8xf32> to vector<8x1xf32>
    %cst_124 = arith.constant 0.00787401571 : f32
    %328 = vector.broadcast %cst_124 : f32 to vector<8x1xf32>
    %329 = arith.mulf %327, %328 : vector<8x1xf32>
    %330 = math.sqrt %329 : vector<8x1xf32>
    %331 = vector.broadcast %317 : vector<1x128xf32> to vector<8x128xf32>
    %332 = arith.mulf %331, %324 : vector<8x128xf32>
    %cst_125 = arith.constant 9.99999997E-7 : f32
    %333 = vector.broadcast %cst_125 : f32 to vector<8x1xf32>
    %334 = arith.addf %330, %333 : vector<8x1xf32>
    %335 = tpu.reciprocal %334 : vector<8x1xf32> -> vector<8x1xf32>
    %336 = vector.broadcast %335 : vector<8x1xf32> to vector<8x128xf32>
    %337 = arith.mulf %332, %336 : vector<8x128xf32>
    %338 = vector.broadcast %318 : vector<1x128xf32> to vector<8x128xf32>
    %339 = arith.addf %337, %338 : vector<8x128xf32>
    %c0_126 = arith.constant 0 : index
    %c0_127 = arith.constant 0 : index
    %c0_128 = arith.constant 0 : index
    %340 = vector.load %arg27[%c0_126, %c0_127, %c0_128] : memref<1x8x128xf32, #tpu.memory_space<vmem>>, vector<1x8x128xf32>
    %341 = vector.shape_cast %340 : vector<1x8x128xf32> to vector<8x128xf32>
    %342 = vector.shape_cast %339 : vector<8x128xf32> to vector<1x8x128xf32>
    tpu.vector_store %arg27[%c0_126, %c0_127, %c0_128], %342 {strides = array<i32>} : memref<1x8x128xf32, #tpu.memory_space<vmem>>, vector<1x8x128xf32>,
    return
  }
  func.func @transform_0(%arg0: i32) -> (i32, i32, i32) {
    %c0_i32 = arith.constant 0 : i32
    %c0_i32_0 = arith.constant 0 : i32
    %c0_i32_1 = arith.constant 0 : i32
    return %arg0, %c0_i32, %c0_i32_0 : i32, i32, i32
  }
  func.func @transform_1(%arg0: i32) -> (i32, i32, i32) {
    %c0_i32 = arith.constant 0 : i32
    %c0_i32_0 = arith.constant 0 : i32
    %c0_i32_1 = arith.constant 0 : i32
    return %arg0, %c0_i32, %c0_i32_0 : i32, i32, i32
  }
  func.func @transform_2(%arg0: i32) -> (i32, i32, i32) {
    %c0_i32 = arith.constant 0 : i32
    %c0_i32_0 = arith.constant 0 : i32
    %c0_i32_1 = arith.constant 0 : i32
    return %arg0, %c0_i32, %c0_i32_0 : i32, i32, i32
  }
  func.func @transform_3(%arg0: i32) -> (i32, i32, i32) {
    %c0_i32 = arith.constant 0 : i32
    %c0_i32_0 = arith.constant 0 : i32
    %c0_i32_1 = arith.constant 0 : i32
    return %arg0, %c0_i32, %c0_i32_0 : i32, i32, i32
  }
  func.func @transform_4(%arg0: i32) -> (i32, i32) {
    %c0_i32 = arith.constant 0 : i32
    %c0_i32_0 = arith.constant 0 : i32
    %c0_i32_1 = arith.constant 0 : i32
    return %c0_i32, %c0_i32_0 : i32, i32
  }
  func.func @transform_5(%arg0: i32) -> (i32, i32) {
    %c0_i32 = arith.constant 0 : i32
    %c0_i32_0 = arith.constant 0 : i32
    %c0_i32_1 = arith.constant 0 : i32
    return %c0_i32, %c0_i32_0 : i32, i32
  }
  func.func @transform_6(%arg0: i32) -> (i32, i32) {
    %c0_i32 = arith.constant 0 : i32
    %c0_i32_0 = arith.constant 0 : i32
    %c0_i32_1 = arith.constant 0 : i32
    return %c0_i32, %c0_i32_0 : i32, i32
  }
  func.func @transform_7(%arg0: i32) -> (i32, i32) {
    %c0_i32 = arith.constant 0 : i32
    %c0_i32_0 = arith.constant 0 : i32
    %c0_i32_1 = arith.constant 0 : i32
    return %c0_i32, %c0_i32_0 : i32, i32
  }
  func.func @transform_8(%arg0: i32) -> (i32, i32) {
    %c0_i32 = arith.constant 0 : i32
    %c0_i32_0 = arith.constant 0 : i32
    %c0_i32_1 = arith.constant 0 : i32
    return %c0_i32, %c0_i32_0 : i32, i32
  }
  func.func @transform_9(%arg0: i32) -> (i32, i32) {
    %c0_i32 = arith.constant 0 : i32
    %c0_i32_0 = arith.constant 0 : i32
    %c0_i32_1 = arith.constant 0 : i32
    return %c0_i32, %c0_i32_0 : i32, i32
  }
  func.func @transform_10(%arg0: i32) -> (i32, i32) {
    %c0_i32 = arith.constant 0 : i32
    %c0_i32_0 = arith.constant 0 : i32
    %c0_i32_1 = arith.constant 0 : i32
    return %c0_i32, %c0_i32_0 : i32, i32
  }
  func.func @transform_11(%arg0: i32) -> (i32, i32) {
    %c0_i32 = arith.constant 0 : i32
    %c0_i32_0 = arith.constant 0 : i32
    %c0_i32_1 = arith.constant 0 : i32
    return %c0_i32, %c0_i32_0 : i32, i32
  }
  func.func @transform_12(%arg0: i32) -> (i32, i32) {
    %c0_i32 = arith.constant 0 : i32
    %c0_i32_0 = arith.constant 0 : i32
    %c0_i32_1 = arith.constant 0 : i32
    return %c0_i32, %c0_i32_0 : i32, i32
  }
  func.func @transform_13(%arg0: i32) -> (i32, i32) {
    %c0_i32 = arith.constant 0 : i32
    %c0_i32_0 = arith.constant 0 : i32
    %c0_i32_1 = arith.constant 0 : i32
    return %c0_i32, %c0_i32_0 : i32, i32
  }
  func.func @transform_14(%arg0: i32) -> (i32, i32) {
    %c0_i32 = arith.constant 0 : i32
    %c0_i32_0 = arith.constant 0 : i32
    %c0_i32_1 = arith.constant 0 : i32
    return %c0_i32, %c0_i32_0 : i32, i32
  }
  func.func @transform_15(%arg0: i32) -> (i32, i32) {
    %c0_i32 = arith.constant 0 : i32
    %c0_i32_0 = arith.constant 0 : i32
    %c0_i32_1 = arith.constant 0 : i32
    return %c0_i32, %c0_i32_0 : i32, i32
  }
  func.func @transform_16(%arg0: i32) -> (i32, i32) {
    %c0_i32 = arith.constant 0 : i32
    %c0_i32_0 = arith.constant 0 : i32
    %c0_i32_1 = arith.constant 0 : i32
    return %c0_i32, %c0_i32_0 : i32, i32
  }
  func.func @transform_17(%arg0: i32) -> (i32, i32) {
    %c0_i32 = arith.constant 0 : i32
    %c0_i32_0 = arith.constant 0 : i32
    %c0_i32_1 = arith.constant 0 : i32
    return %c0_i32, %c0_i32_0 : i32, i32
  }
  func.func @transform_18(%arg0: i32) -> (i32, i32) {
    %c0_i32 = arith.constant 0 : i32
    %c0_i32_0 = arith.constant 0 : i32
    %c0_i32_1 = arith.constant 0 : i32
    return %c0_i32, %c0_i32_0 : i32, i32
  }
  func.func @transform_19(%arg0: i32) -> (i32, i32) {
    %c0_i32 = arith.constant 0 : i32
    %c0_i32_0 = arith.constant 0 : i32
    %c0_i32_1 = arith.constant 0 : i32
    return %c0_i32, %c0_i32_0 : i32, i32
  }
  func.func @transform_20(%arg0: i32) -> (i32, i32) {
    %c0_i32 = arith.constant 0 : i32
    %c0_i32_0 = arith.constant 0 : i32
    %c0_i32_1 = arith.constant 0 : i32
    return %c0_i32, %c0_i32_0 : i32, i32
  }
  func.func @transform_21(%arg0: i32) -> (i32, i32) {
    %c0_i32 = arith.constant 0 : i32
    %c0_i32_0 = arith.constant 0 : i32
    %c0_i32_1 = arith.constant 0 : i32
    return %c0_i32, %c0_i32_0 : i32, i32
  }
  func.func @transform_22(%arg0: i32) -> (i32, i32) {
    %c0_i32 = arith.constant 0 : i32
    %c0_i32_0 = arith.constant 0 : i32
    %c0_i32_1 = arith.constant 0 : i32
    return %c0_i32, %c0_i32_0 : i32, i32
  }
  func.func @transform_23(%arg0: i32) -> (i32, i32) {
    %c0_i32 = arith.constant 0 : i32
    %c0_i32_0 = arith.constant 0 : i32
    %c0_i32_1 = arith.constant 0 : i32
    return %c0_i32, %c0_i32_0 : i32, i32
  }
  func.func @transform_24(%arg0: i32) -> (i32, i32) {
    %c0_i32 = arith.constant 0 : i32
    %c0_i32_0 = arith.constant 0 : i32
    %c0_i32_1 = arith.constant 0 : i32
    return %c0_i32, %c0_i32_0 : i32, i32
  }
  func.func @transform_25(%arg0: i32) -> (i32, i32) {
    %c0_i32 = arith.constant 0 : i32
    %c0_i32_0 = arith.constant 0 : i32
    %c0_i32_1 = arith.constant 0 : i32
    return %c0_i32, %c0_i32_0 : i32, i32
  }
  func.func @transform_26(%arg0: i32) -> (i32, i32, i32) {
    %c0_i32 = arith.constant 0 : i32
    %c0_i32_0 = arith.constant 0 : i32
    %c0_i32_1 = arith.constant 0 : i32
    return %arg0, %c0_i32, %c0_i32_0 : i32, i32, i32
  }
}

</mosaic_0001>

<llo_original>
// kernel: encoder_forward.2
$region0: #{encoder_forward.2}
  #allocation0 [shape = 'u32[]', space=smem, size = 0x4, offset = 0x4, fixed_abs, tag = 'smem constant byte address 0x4 - core index']
  #allocation1 [shape = 'u32[144,128]{1,0:T(1,128)}', space=vmem, size = 0x12000, scoped, tag = 'internal scratch']
  %s0 = inlined_call_operand.hbm [shape: f32[2,8,128], index: 0, kind: input, shape index: {}]
  %s1 = inlined_call_operand.vmem [shape: f32[2,8,128], index: 1, kind: input, shape index: {}]
  %s2 = inlined_call_operand.vmem [shape: bf16[2,8,8], index: 2, kind: input, shape index: {}]
  %s3 = inlined_call_operand.vmem [shape: bf16[2,8,8], index: 3, kind: input, shape index: {}]
  %s4 = inlined_call_operand.vmem [shape: f32[1,128], index: 4, kind: input, shape index: {}]
  %s5 = inlined_call_operand.hbm [shape: f32[1,128], index: 5, kind: input, shape index: {}]
  %s6 = inlined_call_operand.hbm [shape: bf16[128,384], index: 6, kind: input, shape index: {}]
  %s7 = inlined_call_operand.vmem [shape: f32[1,384], index: 7, kind: input, shape index: {}]
  %s8 = inlined_call_operand.hbm [shape: bf16[128,128], index: 8, kind: input, shape index: {}]
  %s9 = inlined_call_operand.hbm [shape: f32[1,128], index: 9, kind: input, shape index: {}]
  %s10 = inlined_call_operand.hbm [shape: f32[1,128], index: 10, kind: input, shape index: {}]
  %s11 = inlined_call_operand.hbm [shape: f32[1,128], index: 11, kind: input, shape index: {}]
  %s12 = inlined_call_operand.hbm [shape: bf16[128,128], index: 12, kind: input, shape index: {}]
  %s13 = inlined_call_operand.hbm [shape: f32[1,128], index: 13, kind: input, shape index: {}]
  %s14 = inlined_call_operand.hbm [shape: bf16[128,256], index: 14, kind: input, shape index: {}]
  %s15 = inlined_call_operand.hbm [shape: f32[1,256], index: 15, kind: input, shape index: {}]
  %s16 = inlined_call_operand.hbm [shape: bf16[128,128], index: 16, kind: input, shape index: {}]
  %s17 = inlined_call_operand.hbm [shape: f32[1,128], index: 17, kind: input, shape index: {}]
  %s18 = inlined_call_operand.hbm [shape: f32[1,128], index: 18, kind: input, shape index: {}]
  %s19 = inlined_call_operand.hbm [shape: f32[1,128], index: 19, kind: input, shape index: {}]
  %s20 = inlined_call_operand.vmem [shape: bf16[128,256], index: 20, kind: input, shape index: {}]
  %s21 = inlined_call_operand.hbm [shape: f32[1,256], index: 21, kind: input, shape index: {}]
  %s22 = inlined_call_operand.hbm [shape: bf16[256,128], index: 22, kind: input, shape index: {}]
  %s23 = inlined_call_operand.hbm [shape: f32[1,128], index: 23, kind: input, shape index: {}]
  %s24 = inlined_call_operand.vmem [shape: f32[1,128], index: 24, kind: input, shape index: {}]
  %s25 = inlined_call_operand.vmem [shape: f32[1,128], index: 25, kind: input, shape index: {}]
  %s26 = inlined_call_operand.vmem [shape: f32[2,8,128], index: 26, kind: output, shape index: {}]
  %s27 = sld [smem:[#allocation0]]
  $region209: #{encoder_forward.2} parent=0
    _
  %s29 = ssub.s32 1, %s27
  %s30 = scalar_select 0, %s29, %s27
  $region1: #{encoder_forward.2} parent=0
    #allocation2 [shape = 'u8[8192]{0}', space=vmem, size = 0x2000, scoped, tag = 'input window, operand 0']
    #allocation3 [shape = 's32[2]{0}', space=sflag, size = 0x8, scoped, tag = 'scoped memory for encoder_forward.2']
    #allocation4 [shape = 'u8[512]{0}', space=vmem, size = 0x400, scoped, tag = 'input window, operand 5, single buffered']
    #allocation5 [shape = 's32[1]{0}', space=sflag, size = 0x4, scoped, tag = 'scoped memory for encoder_forward.2']
    #allocation6 [shape = 'u8[98304]{0}', space=vmem, size = 0x18000, scoped, tag = 'input window, operand 6, single buffered']
    #allocation7 [shape = 'u8[32768]{0}', space=vmem, size = 0x8000, scoped, tag = 'input window, operand 8, single buffered']
    #allocation8 [shape = 's32[1]{0}', space=sflag, size = 0x4, scoped, tag = 'scoped memory for encoder_forward.2']
    #allocation9 [shape = 'u8[512]{0}', space=vmem, size = 0x400, scoped, tag = 'input window, operand 9, single buffered']
    #allocation10 [shape = 'u8[512]{0}', space=vmem, size = 0x400, scoped, tag = 'input window, operand 10, single buffered']
    #allocation11 [shape = 's32[1]{0}', space=sflag, size = 0x4, scoped, tag = 'scoped memory for encoder_forward.2']
    #allocation12 [shape = 'u8[512]{0}', space=vmem, size = 0x400, scoped, tag = 'input window, operand 11, single buffered']
    #allocation13 [shape = 'u8[32768]{0}', space=vmem, size = 0x8000, scoped, tag = 'input window, operand 12, single buffered']
    #allocation14 [shape = 's32[1]{0}', space=sflag, size = 0x4, scoped, tag = 'scoped memory for encoder_forward.2']
    #allocation15 [shape = 'u8[512]{0}', space=vmem, size = 0x400, scoped, tag = 'input window, operand 13, single buffered']
    #allocation16 [shape = 'u8[65536]{0}', space=vmem, size = 0x10000, scoped, tag = 'input window, operand 14, single buffered']
    #allocation17 [shape = 's32[1]{0}', space=sflag, size = 0x4, scoped, tag = 'scoped memory for encoder_forward.2']
    #allocation18 [shape = 'u8[1024]{0}', space=vmem, size = 0x400, scoped, tag = 'input window, operand 15, single buffered']
    #allocation19 [shape = 'u8[32768]{0}', space=vmem, size = 0x8000, scoped, tag = 'input window, operand 16, single buffered']
    #allocation20 [shape = 's32[1]{0}', space=sflag, size = 0x4, scoped, tag = 'scoped memory for encoder_forward.2']
    #allocation21 [shape = 'u8[512]{0}', space=vmem, size = 0x400, scoped, tag = 'input window, operand 17, single buffered']
    #allocation22 [shape = 'u8[512]{0}', space=vmem, size = 0x400, scoped, tag = 'input window, operand 18, single buffered']
    #allocation23 [shape = 's32[1]{0}', space=sflag, size = 0x4, scoped, tag = 'scoped memory for encoder_forward.2']
    #allocation24 [shape = 'u8[512]{0}', space=vmem, size = 0x400, scoped, tag = 'input window, operand 19, single buffered']
    #allocation25 [shape = 'u8[1024]{0}', space=vmem, size = 0x400, scoped, tag = 'input window, operand 21, single buffered']
    #allocation26 [shape = 's32[1]{0}', space=sflag, size = 0x4, scoped, tag = 'scoped memory for encoder_forward.2']
    #allocation27 [shape = 'u8[65536]{0}', space=vmem, size = 0x10000, scoped, tag = 'input window, operand 22, single buffered']
    #allocation28 [shape = 'u8[512]{0}', space=vmem, size = 0x400, scoped, tag = 'input window, operand 23, single buffered']
    #allocation29 [shape = 's32[1]{0}', space=sflag, size = 0x4, scoped, tag = 'scoped memory for encoder_forward.2']
    %31 = vsyncpa [#allocation3], 0
    %s32 = scalar_lea.sflag [#allocation3], 1
    %33 = vsyncpa %s32, 0
    %34 = vsyncpa [#allocation5], 0
    %35 = vsyncpa [#allocation8], 0
    %36 = vsyncpa [#allocation11], 0
    %37 = vsyncpa [#allocation14], 0
    %38 = vsyncpa [#allocation17], 0
    %39 = vsyncpa [#allocation20], 0
    %40 = vsyncpa [#allocation23], 0
    %41 = vsyncpa [#allocation26], 0
    %42 = vsyncpa [#allocation29], 0
    loop: start=0, step=1, limit=4
    $region2: #{encoder_forward.2} parent=1 // loop_pre_header
      _
    $region3: #{encoder_forward.2} parent=1 // loop_header
      %s44 = sphi 0, %s48
      %p45 = scmp.ge.s32.totalorder %s44, 4
      %s54 = sphi 0, %s56
      %s57 = sphi 0, %s54
      %s58 = sphi 0, %s57
      %s74 = sphi 0, %s58
      %s80 = sphi 0, %s82
      %s83 = sphi 0, %s80
      %s84 = sphi 0, %s83
      %s100 = sphi 0, %s84
      %s106 = sphi 0, %s108
      %s109 = sphi 0, %s106
      %s110 = sphi 0, %s109
      %s126 = sphi 0, %s110
      %s132 = sphi 0, %s134
      %s135 = sphi 0, %s132
      %s136 = sphi 0, %s135
      %s152 = sphi 0, %s136
      %s156 = sphi 0, %s156
      %s158 = sphi 0, %s156
      %s159 = sphi 0, %s158
      %s173 = sphi 0, %s159
      %s177 = sphi 0, %s177
      %s179 = sphi 0, %s177
      %s180 = sphi 0, %s179
      %s194 = sphi 0, %s180
      %s198 = sphi 0, %s198
      %s200 = sphi 0, %s198
      %s201 = sphi 0, %s200
      %s215 = sphi 0, %s201
      %s219 = sphi 0, %s219
      %s221 = sphi 0, %s219
      %s222 = sphi 0, %s221
      %s236 = sphi 0, %s222
      %s240 = sphi 0, %s240
      %s242 = sphi 0, %s240
      %s243 = sphi 0, %s242
      %s257 = sphi 0, %s243
      %s261 = sphi 0, %s261
      %s263 = sphi 0, %s261
      %s264 = sphi 0, %s263
      %s278 = sphi 0, %s264
      %s282 = sphi 0, %s282
      %s284 = sphi 0, %s282
      %s285 = sphi 0, %s284
      %s299 = sphi 0, %s285
      %s303 = sphi 0, %s303
      %s305 = sphi 0, %s303
      %s306 = sphi 0, %s305
      %s320 = sphi 0, %s306
      %s324 = sphi 0, %s324
      %s326 = sphi 0, %s324
      %s327 = sphi 0, %s326
      %s341 = sphi 0, %s327
      %s345 = sphi 0, %s345
      %s347 = sphi 0, %s345
      %s348 = sphi 0, %s347
      %s362 = sphi 0, %s348
      %s366 = sphi 0, %s366
      %s368 = sphi 0, %s366
      %s369 = sphi 0, %s368
      %s383 = sphi 0, %s369
      %s387 = sphi 0, %s387
      %s389 = sphi 0, %s387
      %s390 = sphi 0, %s389
      %s404 = sphi 0, %s390
      %s408 = sphi 0, %s408
      %s410 = sphi 0, %s408
      %s411 = sphi 0, %s410
      %s425 = sphi 0, %s411
      %s429 = sphi 0, %s429
      %s431 = sphi 0, %s429
      %s432 = sphi 0, %s431
      %s446 = sphi 0, %s432
      %s450 = sphi 0, %s450
      %s452 = sphi 0, %s450
      %s453 = sphi 0, %s452
      %s467 = sphi 0, %s453
      %s471 = sphi 0, %s471
      %s473 = sphi 0, %s471
      %s474 = sphi 0, %s473
      %s488 = sphi 0, %s474
      %s492 = sphi 0, %s492
      %s494 = sphi 0, %s492
      %s495 = sphi 0, %s494
      %s509 = sphi 0, %s495
      %s513 = sphi 0, %s513
      %s515 = sphi 0, %s513
      %s516 = sphi 0, %s515
      %s530 = sphi 0, %s516
      %s534 = sphi 0, %s534
      %s536 = sphi 0, %s534
      %s537 = sphi 0, %s536
      %s551 = sphi 0, %s537
      %s555 = sphi 0, %s555
      %s557 = sphi 0, %s555
      %s558 = sphi 0, %s557
      %s572 = sphi 0, %s558
      %s576 = sphi 0, %s576
      %s578 = sphi 0, %s576
      %s579 = sphi 0, %s578
      %s593 = sphi 0, %s579
      %s597 = sphi 0, %s597
      %s599 = sphi 0, %s597
      %s600 = sphi 0, %s599
      %s614 = sphi 0, %s600
      %s620 = sphi 0, %s622
      %s623 = sphi 0, %s620
      %s624 = sphi 0, %s623
      %s640 = sphi 0, %s624
    $region4: #{encoder_forward.2} parent=1 // loop_header_branch
      %47 = sbr.rel (%p45) target = $region8
    $region5: #{encoder_forward.2} parent=1 // loop_body
      %s49 = ssub.s32 %s44, 1
      %s50 = ssub.s32 %s44, 2
      %s51 = sadd.s32 %s44, 1
      %s52 = ssub.s32 %s44, %s51
      %p53 = scmp.eq.s32.totalorder %s52, 0
      %s55 = sadd.s32 %s54, 1
      %s56 = scalar_select %p53, %s54, %s55
      %p59 = pneg %p53
      %p60 = scmp.eq.s32.totalorder %s44, 1
      %p61 = por %p59, %p60
      %p62 = scmp.ne.s32.totalorder %s54, %s57
      %p63 = scmp.eq.s32.totalorder %s44, 0
      %p64 = por %p62, %p63
      %p65 = scmp.ne.s32.totalorder %s54, %s57
      %p66 = scmp.eq.s32.totalorder %s49, 1
      %p67 = por %p65, %p66
      %p68 = scmp.ne.s32.totalorder %s57, %s58
      %p69 = scmp.eq.s32.totalorder %s49, 0
      %p70 = por %p68, %p69
      %p71 = scmp.ne.s32.totalorder %s57, %s58
      %p72 = scmp.eq.s32.totalorder %s50, 1
      %p73 = por %p71, %p72
      %p75 = scmp.ne.s32.totalorder %s58, %s74
      %p76 = scmp.eq.s32.totalorder %s50, 0
      %p77 = por %p75, %p76
      %s78 = ssub.s32 %s44, %s51
      %p79 = scmp.eq.s32.totalorder %s78, 0
      %s81 = sadd.s32 %s80, 1
      %s82 = scalar_select %p79, %s80, %s81
      %p85 = pneg %p79
      %p86 = scmp.eq.s32.totalorder %s44, 1
      %p87 = por %p85, %p86
      %p88 = scmp.ne.s32.totalorder %s80, %s83
      %p89 = scmp.eq.s32.totalorder %s44, 0
      %p90 = por %p88, %p89
      %p91 = scmp.ne.s32.totalorder %s80, %s83
      %p92 = scmp.eq.s32.totalorder %s49, 1
      %p93 = por %p91, %p92
      %p94 = scmp.ne.s32.totalorder %s83, %s84
      %p95 = scmp.eq.s32.totalorder %s49, 0
      %p96 = por %p94, %p95
      %p97 = scmp.ne.s32.totalorder %s83, %s84
      %p98 = scmp.eq.s32.totalorder %s50, 1
      %p99 = por %p97, %p98
      %p101 = scmp.ne.s32.totalorder %s84, %s100
      %p102 = scmp.eq.s32.totalorder %s50, 0
      %p103 = por %p101, %p102
      %s104 = ssub.s32 %s44, %s51
      %p105 = scmp.eq.s32.totalorder %s104, 0
      %s107 = sadd.s32 %s106, 1
      %s108 = scalar_select %p105, %s106, %s107
      %p111 = pneg %p105
      %p112 = scmp.eq.s32.totalorder %s44, 1
      %p113 = por %p111, %p112
      %p114 = scmp.ne.s32.totalorder %s106, %s109
      %p115 = scmp.eq.s32.totalorder %s44, 0
      %p116 = por %p114, %p115
      %p117 = scmp.ne.s32.totalorder %s106, %s109
      %p118 = scmp.eq.s32.totalorder %s49, 1
      %p119 = por %p117, %p118
      %p120 = scmp.ne.s32.totalorder %s109, %s110
      %p121 = scmp.eq.s32.totalorder %s49, 0
      %p122 = por %p120, %p121
      %p123 = scmp.ne.s32.totalorder %s109, %s110
      %p124 = scmp.eq.s32.totalorder %s50, 1
      %p125 = por %p123, %p124
      %p127 = scmp.ne.s32.totalorder %s110, %s126
      %p128 = scmp.eq.s32.totalorder %s50, 0
      %p129 = por %p127, %p128
      %s130 = ssub.s32 %s44, %s51
      %p131 = scmp.eq.s32.totalorder %s130, 0
      %s133 = sadd.s32 %s132, 1
      %s134 = scalar_select %p131, %s132, %s133
      %p137 = pneg %p131
      %p138 = scmp.eq.s32.totalorder %s44, 1
      %p139 = por %p137, %p138
      %p140 = scmp.ne.s32.totalorder %s132, %s135
      %p141 = scmp.eq.s32.totalorder %s44, 0
      %p142 = por %p140, %p141
      %p143 = scmp.ne.s32.totalorder %s132, %s135
      %p144 = scmp.eq.s32.totalorder %s49, 1
      %p145 = por %p143, %p144
      %p146 = scmp.ne.s32.totalorder %s135, %s136
      %p147 = scmp.eq.s32.totalorder %s49, 0
      %p148 = por %p146, %p147
      %p149 = scmp.ne.s32.totalorder %s135, %s136
      %p150 = scmp.eq.s32.totalorder %s50, 1
      %p151 = por %p149, %p150
      %p153 = scmp.ne.s32.totalorder %s136, %s152
      %p154 = scmp.eq.s32.totalorder %s50, 0
      %p155 = por %p153, %p154
      %s157 = sadd.s32 %s156, 1
      %p160 = scmp.eq.s32.totalorder %s44, 1
      %p161 = scmp.ne.s32.totalorder %s156, %s158
      %p162 = scmp.eq.s32.totalorder %s44, 0
      %p163 = por %p161, %p162
      %p164 = scmp.ne.s32.totalorder %s156, %s158
      %p165 = scmp.eq.s32.totalorder %s49, 1
      %p166 = por %p164, %p165
      %p167 = scmp.ne.s32.totalorder %s158, %s159
      %p168 = scmp.eq.s32.totalorder %s49, 0
      %p169 = por %p167, %p168
      %p170 = scmp.ne.s32.totalorder %s158, %s159
      %p171 = scmp.eq.s32.totalorder %s50, 1
      %p172 = por %p170, %p171
      %p174 = scmp.ne.s32.totalorder %s159, %s173
      %p175 = scmp.eq.s32.totalorder %s50, 0
      %p176 = por %p174, %p175
      %s178 = sadd.s32 %s177, 1
      %p181 = scmp.eq.s32.totalorder %s44, 1
      %p182 = scmp.ne.s32.totalorder %s177, %s179
      %p183 = scmp.eq.s32.totalorder %s44, 0
      %p184 = por %p182, %p183
      %p185 = scmp.ne.s32.totalorder %s177, %s179
      %p186 = scmp.eq.s32.totalorder %s49, 1
      %p187 = por %p185, %p186
      %p188 = scmp.ne.s32.totalorder %s179, %s180
      %p189 = scmp.eq.s32.totalorder %s49, 0
      %p190 = por %p188, %p189
      %p191 = scmp.ne.s32.totalorder %s179, %s180
      %p192 = scmp.eq.s32.totalorder %s50, 1
      %p193 = por %p191, %p192
      %p195 = scmp.ne.s32.totalorder %s180, %s194
      %p196 = scmp.eq.s32.totalorder %s50, 0
      %p197 = por %p195, %p196
      %s199 = sadd.s32 %s198, 1
      %p202 = scmp.eq.s32.totalorder %s44, 1
      %p203 = scmp.ne.s32.totalorder %s198, %s200
      %p204 = scmp.eq.s32.totalorder %s44, 0
      %p205 = por %p203, %p204
      %p206 = scmp.ne.s32.totalorder %s198, %s200
      %p207 = scmp.eq.s32.totalorder %s49, 1
      %p208 = por %p206, %p207
      %p209 = scmp.ne.s32.totalorder %s200, %s201
      %p210 = scmp.eq.s32.totalorder %s49, 0
      %p211 = por %p209, %p210
      %p212 = scmp.ne.s32.totalorder %s200, %s201
      %p213 = scmp.eq.s32.totalorder %s50, 1
      %p214 = por %p212, %p213
      %p216 = scmp.ne.s32.totalorder %s201, %s215
      %p217 = scmp.eq.s32.totalorder %s50, 0
      %p218 = por %p216, %p217
      %s220 = sadd.s32 %s219, 1
      %p223 = scmp.eq.s32.totalorder %s44, 1
      %p224 = scmp.ne.s32.totalorder %s219, %s221
      %p225 = scmp.eq.s32.totalorder %s44, 0
      %p226 = por %p224, %p225
      %p227 = scmp.ne.s32.totalorder %s219, %s221
      %p228 = scmp.eq.s32.totalorder %s49, 1
      %p229 = por %p227, %p228
      %p230 = scmp.ne.s32.totalorder %s221, %s222
      %p231 = scmp.eq.s32.totalorder %s49, 0
      %p232 = por %p230, %p231
      %p233 = scmp.ne.s32.totalorder %s221, %s222
      %p234 = scmp.eq.s32.totalorder %s50, 1
      %p235 = por %p233, %p234
      %p237 = scmp.ne.s32.totalorder %s222, %s236
      %p238 = scmp.eq.s32.totalorder %s50, 0
      %p239 = por %p237, %p238
      %s241 = sadd.s32 %s240, 1
      %p244 = scmp.eq.s32.totalorder %s44, 1
      %p245 = scmp.ne.s32.totalorder %s240, %s242
      %p246 = scmp.eq.s32.totalorder %s44, 0
      %p247 = por %p245, %p246
      %p248 = scmp.ne.s32.totalorder %s240, %s242
      %p249 = scmp.eq.s32.totalorder %s49, 1
      %p250 = por %p248, %p249
      %p251 = scmp.ne.s32.totalorder %s242, %s243
      %p252 = scmp.eq.s32.totalorder %s49, 0
      %p253 = por %p251, %p252
      %p254 = scmp.ne.s32.totalorder %s242, %s243
      %p255 = scmp.eq.s32.totalorder %s50, 1
      %p256 = por %p254, %p255
      %p258 = scmp.ne.s32.totalorder %s243, %s257
      %p259 = scmp.eq.s32.totalorder %s50, 0
      %p260 = por %p258, %p259
      %s262 = sadd.s32 %s261, 1
      %p265 = scmp.eq.s32.totalorder %s44, 1
      %p266 = scmp.ne.s32.totalorder %s261, %s263
      %p267 = scmp.eq.s32.totalorder %s44, 0
      %p268 = por %p266, %p267
      %p269 = scmp.ne.s32.totalorder %s261, %s263
      %p270 = scmp.eq.s32.totalorder %s49, 1
      %p271 = por %p269, %p270
      %p272 = scmp.ne.s32.totalorder %s263, %s264
      %p273 = scmp.eq.s32.totalorder %s49, 0
      %p274 = por %p272, %p273
      %p275 = scmp.ne.s32.totalorder %s263, %s264
      %p276 = scmp.eq.s32.totalorder %s50, 1
      %p277 = por %p275, %p276
      %p279 = scmp.ne.s32.totalorder %s264, %s278
      %p280 = scmp.eq.s32.totalorder %s50, 0
      %p281 = por %p279, %p280
      %s283 = sadd.s32 %s282, 1
      %p286 = scmp.eq.s32.totalorder %s44, 1
      %p287 = scmp.ne.s32.totalorder %s282, %s284
      %p288 = scmp.eq.s32.totalorder %s44, 0
      %p289 = por %p287, %p288
      %p290 = scmp.ne.s32.totalorder %s282, %s284
      %p291 = scmp.eq.s32.totalorder %s49, 1
      %p292 = por %p290, %p291
      %p293 = scmp.ne.s32.totalorder %s284, %s285
      %p294 = scmp.eq.s32.totalorder %s49, 0
      %p295 = por %p293, %p294
      %p296 = scmp.ne.s32.totalorder %s284, %s285
      %p297 = scmp.eq.s32.totalorder %s50, 1
      %p298 = por %p296, %p297
      %p300 = scmp.ne.s32.totalorder %s285, %s299
      %p301 = scmp.eq.s32.totalorder %s50, 0
      %p302 = por %p300, %p301
      %s304 = sadd.s32 %s303, 1
      %p307 = scmp.eq.s32.totalorder %s44, 1
      %p308 = scmp.ne.s32.totalorder %s303, %s305
      %p309 = scmp.eq.s32.totalorder %s44, 0
      %p310 = por %p308, %p309
      %p311 = scmp.ne.s32.totalorder %s303, %s305
      %p312 = scmp.eq.s32.totalorder %s49, 1
      %p313 = por %p311, %p312
      %p314 = scmp.ne.s32.totalorder %s305, %s306
      %p315 = scmp.eq.s32.totalorder %s49, 0
      %p316 = por %p314, %p315
      %p317 = scmp.ne.s32.totalorder %s305, %s306
      %p318 = scmp.eq.s32.totalorder %s50, 1
      %p319 = por %p317, %p318
      %p321 = scmp.ne.s32.totalorder %s306, %s320
      %p322 = scmp.eq.s32.totalorder %s50, 0
      %p323 = por %p321, %p322
      %s325 = sadd.s32 %s324, 1
      %p328 = scmp.eq.s32.totalorder %s44, 1
      %p329 = scmp.ne.s32.totalorder %s324, %s326
      %p330 = scmp.eq.s32.totalorder %s44, 0
      %p331 = por %p329, %p330
      %p332 = scmp.ne.s32.totalorder %s324, %s326
      %p333 = scmp.eq.s32.totalorder %s49, 1
      %p334 = por %p332, %p333
      %p335 = scmp.ne.s32.totalorder %s326, %s327
      %p336 = scmp.eq.s32.totalorder %s49, 0
      %p337 = por %p335, %p336
      %p338 = scmp.ne.s32.totalorder %s326, %s327
      %p339 = scmp.eq.s32.totalorder %s50, 1
      %p340 = por %p338, %p339
      %p342 = scmp.ne.s32.totalorder %s327, %s341
      %p343 = scmp.eq.s32.totalorder %s50, 0
      %p344 = por %p342, %p343
      %s346 = sadd.s32 %s345, 1
      %p349 = scmp.eq.s32.totalorder %s44, 1
      %p350 = scmp.ne.s32.totalorder %s345, %s347
      %p351 = scmp.eq.s32.totalorder %s44, 0
      %p352 = por %p350, %p351
      %p353 = scmp.ne.s32.totalorder %s345, %s347
      %p354 = scmp.eq.s32.totalorder %s49, 1
      %p355 = por %p353, %p354
      %p356 = scmp.ne.s32.totalorder %s347, %s348
      %p357 = scmp.eq.s32.totalorder %s49, 0
      %p358 = por %p356, %p357
      %p359 = scmp.ne.s32.totalorder %s347, %s348
      %p360 = scmp.eq.s32.totalorder %s50, 1
      %p361 = por %p359, %p360
      %p363 = scmp.ne.s32.totalorder %s348, %s362
      %p364 = scmp.eq.s32.totalorder %s50, 0
      %p365 = por %p363, %p364
      %s367 = sadd.s32 %s366, 1
      %p370 = scmp.eq.s32.totalorder %s44, 1
      %p371 = scmp.ne.s32.totalorder %s366, %s368
      %p372 = scmp.eq.s32.totalorder %s44, 0
      %p373 = por %p371, %p372
      %p374 = scmp.ne.s32.totalorder %s366, %s368
      %p375 = scmp.eq.s32.totalorder %s49, 1
      %p376 = por %p374, %p375
      %p377 = scmp.ne.s32.totalorder %s368, %s369
      %p378 = scmp.eq.s32.totalorder %s49, 0
      %p379 = por %p377, %p378
      %p380 = scmp.ne.s32.totalorder %s368, %s369
      %p381 = scmp.eq.s32.totalorder %s50, 1
      %p382 = por %p380, %p381
      %p384 = scmp.ne.s32.totalorder %s369, %s383
      %p385 = scmp.eq.s32.totalorder %s50, 0
      %p386 = por %p384, %p385
      %s388 = sadd.s32 %s387, 1
      %p391 = scmp.eq.s32.totalorder %s44, 1
      %p392 = scmp.ne.s32.totalorder %s387, %s389
      %p393 = scmp.eq.s32.totalorder %s44, 0
      %p394 = por %p392, %p393
      %p395 = scmp.ne.s32.totalorder %s387, %s389
      %p396 = scmp.eq.s32.totalorder %s49, 1
      %p397 = por %p395, %p396
      %p398 = scmp.ne.s32.totalorder %s389, %s390
      %p399 = scmp.eq.s32.totalorder %s49, 0
      %p400 = por %p398, %p399
      %p401 = scmp.ne.s32.totalorder %s389, %s390
      %p402 = scmp.eq.s32.totalorder %s50, 1
      %p403 = por %p401, %p402
      %p405 = scmp.ne.s32.totalorder %s390, %s404
      %p406 = scmp.eq.s32.totalorder %s50, 0
      %p407 = por %p405, %p406
      %s409 = sadd.s32 %s408, 1
      %p412 = scmp.eq.s32.totalorder %s44, 1
      %p413 = scmp.ne.s32.totalorder %s408, %s410
      %p414 = scmp.eq.s32.totalorder %s44, 0
      %p415 = por %p413, %p414
      %p416 = scmp.ne.s32.totalorder %s408, %s410
      %p417 = scmp.eq.s32.totalorder %s49, 1
      %p418 = por %p416, %p417
      %p419 = scmp.ne.s32.totalorder %s410, %s411
      %p420 = scmp.eq.s32.totalorder %s49, 0
      %p421 = por %p419, %p420
      %p422 = scmp.ne.s32.totalorder %s410, %s411
      %p423 = scmp.eq.s32.totalorder %s50, 1
      %p424 = por %p422, %p423
      %p426 = scmp.ne.s32.totalorder %s411, %s425
      %p427 = scmp.eq.s32.totalorder %s50, 0
      %p428 = por %p426, %p427
      %s430 = sadd.s32 %s429, 1
      %p433 = scmp.eq.s32.totalorder %s44, 1
      %p434 = scmp.ne.s32.totalorder %s429, %s431
      %p435 = scmp.eq.s32.totalorder %s44, 0
      %p436 = por %p434, %p435
      %p437 = scmp.ne.s32.totalorder %s429, %s431
      %p438 = scmp.eq.s32.totalorder %s49, 1
      %p439 = por %p437, %p438
      %p440 = scmp.ne.s32.totalorder %s431, %s432
      %p441 = scmp.eq.s32.totalorder %s49, 0
      %p442 = por %p440, %p441
      %p443 = scmp.ne.s32.totalorder %s431, %s432
      %p444 = scmp.eq.s32.totalorder %s50, 1
      %p445 = por %p443, %p444
      %p447 = scmp.ne.s32.totalorder %s432, %s446
      %p448 = scmp.eq.s32.totalorder %s50, 0
      %p449 = por %p447, %p448
      %s451 = sadd.s32 %s450, 1
      %p454 = scmp.eq.s32.totalorder %s44, 1
      %p455 = scmp.ne.s32.totalorder %s450, %s452
      %p456 = scmp.eq.s32.totalorder %s44, 0
      %p457 = por %p455, %p456
      %p458 = scmp.ne.s32.totalorder %s450, %s452
      %p459 = scmp.eq.s32.totalorder %s49, 1
      %p460 = por %p458, %p459
      %p461 = scmp.ne.s32.totalorder %s452, %s453
      %p462 = scmp.eq.s32.totalorder %s49, 0
      %p463 = por %p461, %p462
      %p464 = scmp.ne.s32.totalorder %s452, %s453
      %p465 = scmp.eq.s32.totalorder %s50, 1
      %p466 = por %p464, %p465
      %p468 = scmp.ne.s32.totalorder %s453, %s467
      %p469 = scmp.eq.s32.totalorder %s50, 0
      %p470 = por %p468, %p469
      %s472 = sadd.s32 %s471, 1
      %p475 = scmp.eq.s32.totalorder %s44, 1
      %p476 = scmp.ne.s32.totalorder %s471, %s473
      %p477 = scmp.eq.s32.totalorder %s44, 0
      %p478 = por %p476, %p477
      %p479 = scmp.ne.s32.totalorder %s471, %s473
      %p480 = scmp.eq.s32.totalorder %s49, 1
      %p481 = por %p479, %p480
      %p482 = scmp.ne.s32.totalorder %s473, %s474
      %p483 = scmp.eq.s32.totalorder %s49, 0
      %p484 = por %p482, %p483
      %p485 = scmp.ne.s32.totalorder %s473, %s474
      %p486 = scmp.eq.s32.totalorder %s50, 1
      %p487 = por %p485, %p486
      %p489 = scmp.ne.s32.totalorder %s474, %s488
      %p490 = scmp.eq.s32.totalorder %s50, 0
      %p491 = por %p489, %p490
      %s493 = sadd.s32 %s492, 1
      %p496 = scmp.eq.s32.totalorder %s44, 1
      %p497 = scmp.ne.s32.totalorder %s492, %s494
      %p498 = scmp.eq.s32.totalorder %s44, 0
      %p499 = por %p497, %p498
      %p500 = scmp.ne.s32.totalorder %s492, %s494
      %p501 = scmp.eq.s32.totalorder %s49, 1
      %p502 = por %p500, %p501
      %p503 = scmp.ne.s32.totalorder %s494, %s495
      %p504 = scmp.eq.s32.totalorder %s49, 0
      %p505 = por %p503, %p504
      %p506 = scmp.ne.s32.totalorder %s494, %s495
      %p507 = scmp.eq.s32.totalorder %s50, 1
      %p508 = por %p506, %p507
      %p510 = scmp.ne.s32.totalorder %s495, %s509
      %p511 = scmp.eq.s32.totalorder %s50, 0
      %p512 = por %p510, %p511
      %s514 = sadd.s32 %s513, 1
      %p517 = scmp.eq.s32.totalorder %s44, 1
      %p518 = scmp.ne.s32.totalorder %s513, %s515
      %p519 = scmp.eq.s32.totalorder %s44, 0
      %p520 = por %p518, %p519
      %p521 = scmp.ne.s32.totalorder %s513, %s515
      %p522 = scmp.eq.s32.totalorder %s49, 1
      %p523 = por %p521, %p522
      %p524 = scmp.ne.s32.totalorder %s515, %s516
      %p525 = scmp.eq.s32.totalorder %s49, 0
      %p526 = por %p524, %p525
      %p527 = scmp.ne.s32.totalorder %s515, %s516
      %p528 = scmp.eq.s32.totalorder %s50, 1
      %p529 = por %p527, %p528
      %p531 = scmp.ne.s32.totalorder %s516, %s530
      %p532 = scmp.eq.s32.totalorder %s50, 0
      %p533 = por %p531, %p532
      %s535 = sadd.s32 %s534, 1
      %p538 = scmp.eq.s32.totalorder %s44, 1
      %p539 = scmp.ne.s32.totalorder %s534, %s536
      %p540 = scmp.eq.s32.totalorder %s44, 0
      %p541 = por %p539, %p540
      %p542 = scmp.ne.s32.totalorder %s534, %s536
      %p543 = scmp.eq.s32.totalorder %s49, 1
      %p544 = por %p542, %p543
      %p545 = scmp.ne.s32.totalorder %s536, %s537
      %p546 = scmp.eq.s32.totalorder %s49, 0
      %p547 = por %p545, %p546
      %p548 = scmp.ne.s32.totalorder %s536, %s537
      %p549 = scmp.eq.s32.totalorder %s50, 1
      %p550 = por %p548, %p549
      %p552 = scmp.ne.s32.totalorder %s537, %s551
      %p553 = scmp.eq.s32.totalorder %s50, 0
      %p554 = por %p552, %p553
      %s556 = sadd.s32 %s555, 1
      %p559 = scmp.eq.s32.totalorder %s44, 1
      %p560 = scmp.ne.s32.totalorder %s555, %s557
      %p561 = scmp.eq.s32.totalorder %s44, 0
      %p562 = por %p560, %p561
      %p563 = scmp.ne.s32.totalorder %s555, %s557
      %p564 = scmp.eq.s32.totalorder %s49, 1
      %p565 = por %p563, %p564
      %p566 = scmp.ne.s32.totalorder %s557, %s558
      %p567 = scmp.eq.s32.totalorder %s49, 0
      %p568 = por %p566, %p567
      %p569 = scmp.ne.s32.totalorder %s557, %s558
      %p570 = scmp.eq.s32.totalorder %s50, 1
      %p571 = por %p569, %p570
      %p573 = scmp.ne.s32.totalorder %s558, %s572
      %p574 = scmp.eq.s32.totalorder %s50, 0
      %p575 = por %p573, %p574
      %s577 = sadd.s32 %s576, 1
      %p580 = scmp.eq.s32.totalorder %s44, 1
      %p581 = scmp.ne.s32.totalorder %s576, %s578
      %p582 = scmp.eq.s32.totalorder %s44, 0
      %p583 = por %p581, %p582
      %p584 = scmp.ne.s32.totalorder %s576, %s578
      %p585 = scmp.eq.s32.totalorder %s49, 1
      %p586 = por %p584, %p585
      %p587 = scmp.ne.s32.totalorder %s578, %s579
      %p588 = scmp.eq.s32.totalorder %s49, 0
      %p589 = por %p587, %p588
      %p590 = scmp.ne.s32.totalorder %s578, %s579
      %p591 = scmp.eq.s32.totalorder %s50, 1
      %p592 = por %p590, %p591
      %p594 = scmp.ne.s32.totalorder %s579, %s593
      %p595 = scmp.eq.s32.totalorder %s50, 0
      %p596 = por %p594, %p595
      %s598 = sadd.s32 %s597, 1
      %p601 = scmp.eq.s32.totalorder %s44, 1
      %p602 = scmp.ne.s32.totalorder %s597, %s599
      %p603 = scmp.eq.s32.totalorder %s44, 0
      %p604 = por %p602, %p603
      %p605 = scmp.ne.s32.totalorder %s597, %s599
      %p606 = scmp.eq.s32.totalorder %s49, 1
      %p607 = por %p605, %p606
      %p608 = scmp.ne.s32.totalorder %s599, %s600
      %p609 = scmp.eq.s32.totalorder %s49, 0
      %p610 = por %p608, %p609
      %p611 = scmp.ne.s32.totalorder %s599, %s600
      %p612 = scmp.eq.s32.totalorder %s50, 1
      %p613 = por %p611, %p612
      %p615 = scmp.ne.s32.totalorder %s600, %s614
      %p616 = scmp.eq.s32.totalorder %s50, 0
      %p617 = por %p615, %p616
      %s618 = ssub.s32 %s44, %s51
      %p619 = scmp.eq.s32.totalorder %s618, 0
      %s621 = sadd.s32 %s620, 1
      %s622 = scalar_select %p619, %s620, %s621
      %p625 = pneg %p619
      %p626 = scmp.eq.s32.totalorder %s44, 1
      %p627 = por %p625, %p626
      %p628 = scmp.ne.s32.totalorder %s620, %s623
      %p629 = scmp.eq.s32.totalorder %s44, 0
      %p630 = por %p628, %p629
      %p631 = scmp.ne.s32.totalorder %s620, %s623
      %p632 = scmp.eq.s32.totalorder %s49, 1
      %p633 = por %p631, %p632
      %p634 = scmp.ne.s32.totalorder %s623, %s624
      %p635 = scmp.eq.s32.totalorder %s49, 0
      %p636 = por %p634, %p635
      %p637 = scmp.ne.s32.totalorder %s623, %s624
      %p638 = scmp.eq.s32.totalorder %s50, 1
      %p639 = por %p637, %p638
      %p641 = scmp.ne.s32.totalorder %s624, %s640
      %p642 = scmp.eq.s32.totalorder %s50, 0
      %p643 = por %p641, %p642
      %p644 = scmp.le.s32.totalorder 1, %s44
      %p645 = scmp.lt.s32.totalorder %s44, 3
      %p646 = pnand %p644, %p645
      %p647 = pneg %p646
      // Predicated region
      $region9: #{encoder_forward.2} parent=5 // pred_check
        _
      $region10: #{encoder_forward.2} parent=5 // pred_check_branch
        %649 = sbr.rel (%p646) target = $region12
      $region11: #{encoder_forward.2} parent=5 // pred_region
        %s650 = ssub.s32 %s44, 1
        // Predicated region
        $region13: #{encoder_forward.2} parent=11 // pred_check
          %p651 = pneg %p169
        $region14: #{encoder_forward.2} parent=11 // pred_check_branch
          %653 = sbr.rel (%p651) target = $region16
        $region15: #{encoder_forward.2} parent=11 // pred_region
          _
        $region16: #{encoder_forward.2} parent=11 // pred_fallthru
          _
        // Predicated region
        $region17: #{encoder_forward.2} parent=11 // pred_check
          %p654 = pneg %p190
        $region18: #{encoder_forward.2} parent=11 // pred_check_branch
          %656 = sbr.rel (%p654) target = $region20
        $region19: #{encoder_forward.2} parent=11 // pred_region
          %s658 = ssub.s32 16, 16
          %659 = vsyncadd [#allocation5], %s658
          %s661 = sshll.u32 [#allocation4], 4
          %s662 = int_to_ptr.vmem [resolvable:$true] %s661
          %664 = dma.hbm_to_vmem [thread:$0]  %s5, 16, %s662, [#allocation5]
        $region20: #{encoder_forward.2} parent=11 // pred_fallthru
          _
        // Predicated region
        $region21: #{encoder_forward.2} parent=11 // pred_check
          %p665 = pneg %p211
        $region22: #{encoder_forward.2} parent=11 // pred_check_branch
          %667 = sbr.rel (%p665) target = $region24
        $region23: #{encoder_forward.2} parent=11 // pred_region
          %s669 = ssub.s32 3072, 3072
          %670 = vsyncadd [#allocation5], %s669
          %s671 = sshll.u32 [#allocation6], 4
          %s672 = int_to_ptr.vmem [resolvable:$true] %s671
          %677 = dma.hbm_to_vmem [thread:$0]  %s6, 3072, %s672, [#allocation5], 192, 192, 12
        $region24: #{encoder_forward.2} parent=11 // pred_fallthru
          _
        // Predicated region
        $region25: #{encoder_forward.2} parent=11 // pred_check
          %p678 = pneg %p232
        $region26: #{encoder_forward.2} parent=11 // pred_check_branch
          %680 = sbr.rel (%p678) target = $region28
        $region27: #{encoder_forward.2} parent=11 // pred_region
          _
        $region28: #{encoder_forward.2} parent=11 // pred_fallthru
          _
        // Predicated region
        $region29: #{encoder_forward.2} parent=11 // pred_check
          %p681 = pneg %p253
        $region30: #{encoder_forward.2} parent=11 // pred_check_branch
          %683 = sbr.rel (%p681) target = $region32
        $region31: #{encoder_forward.2} parent=11 // pred_region
          %s685 = ssub.s32 1024, 1024
          %686 = vsyncadd [#allocation8], %s685
          %s687 = sshll.u32 [#allocation7], 4
          %s688 = int_to_ptr.vmem [resolvable:$true] %s687
          %693 = dma.hbm_to_vmem [thread:$0]  %s8, 1024, %s688, [#allocation8], 64, 64, 4
        $region32: #{encoder_forward.2} parent=11 // pred_fallthru
          _
        // Predicated region
        $region33: #{encoder_forward.2} parent=11 // pred_check
          %p694 = pneg %p274
        $region34: #{encoder_forward.2} parent=11 // pred_check_branch
          %696 = sbr.rel (%p694) target = $region36
        $region35: #{encoder_forward.2} parent=11 // pred_region
          %s698 = ssub.s32 16, 16
          %699 = vsyncadd [#allocation8], %s698
          %s701 = sshll.u32 [#allocation9], 4
          %s702 = int_to_ptr.vmem [resolvable:$true] %s701
          %704 = dma.hbm_to_vmem [thread:$0]  %s9, 16, %s702, [#allocation8]
        $region36: #{encoder_forward.2} parent=11 // pred_fallthru
          _
        // Predicated region
        $region37: #{encoder_forward.2} parent=11 // pred_check
          %p705 = pneg %p295
        $region38: #{encoder_forward.2} parent=11 // pred_check_branch
          %707 = sbr.rel (%p705) target = $region40
        $region39: #{encoder_forward.2} parent=11 // pred_region
          %s709 = ssub.s32 16, 16
          %710 = vsyncadd [#allocation11], %s709
          %s712 = sshll.u32 [#allocation10], 4
          %s713 = int_to_ptr.vmem [resolvable:$true] %s712
          %715 = dma.hbm_to_vmem [thread:$0]  %s10, 16, %s713, [#allocation11]
        $region40: #{encoder_forward.2} parent=11 // pred_fallthru
          _
        // Predicated region
        $region41: #{encoder_forward.2} parent=11 // pred_check
          %p716 = pneg %p316
        $region42: #{encoder_forward.2} parent=11 // pred_check_branch
          %718 = sbr.rel (%p716) target = $region44
        $region43: #{encoder_forward.2} parent=11 // pred_region
          %s720 = ssub.s32 16, 16
          %721 = vsyncadd [#allocation11], %s720
          %s723 = sshll.u32 [#allocation12], 4
          %s724 = int_to_ptr.vmem [resolvable:$true] %s723
          %726 = dma.hbm_to_vmem [thread:$0]  %s11, 16, %s724, [#allocation11]
        $region44: #{encoder_forward.2} parent=11 // pred_fallthru
          _
        // Predicated region
        $region45: #{encoder_forward.2} parent=11 // pred_check
          %p727 = pneg %p337
        $region46: #{encoder_forward.2} parent=11 // pred_check_branch
          %729 = sbr.rel (%p727) target = $region48
        $region47: #{encoder_forward.2} parent=11 // pred_region
          %s731 = ssub.s32 1024, 1024
          %732 = vsyncadd [#allocation14], %s731
          %s733 = sshll.u32 [#allocation13], 4
          %s734 = int_to_ptr.vmem [resolvable:$true] %s733
          %739 = dma.hbm_to_vmem [thread:$0]  %s12, 1024, %s734, [#allocation14], 64, 64, 4
        $region48: #{encoder_forward.2} parent=11 // pred_fallthru
          _
        // Predicated region
        $region49: #{encoder_forward.2} parent=11 // pred_check
          %p740 = pneg %p358
        $region50: #{encoder_forward.2} parent=11 // pred_check_branch
          %742 = sbr.rel (%p740) target = $region52
        $region51: #{encoder_forward.2} parent=11 // pred_region
          %s744 = ssub.s32 16, 16
          %745 = vsyncadd [#allocation14], %s744
          %s747 = sshll.u32 [#allocation15], 4
          %s748 = int_to_ptr.vmem [resolvable:$true] %s747
          %750 = dma.hbm_to_vmem [thread:$0]  %s13, 16, %s748, [#allocation14]
        $region52: #{encoder_forward.2} parent=11 // pred_fallthru
          _
        // Predicated region
        $region53: #{encoder_forward.2} parent=11 // pred_check
          %p751 = pneg %p379
        $region54: #{encoder_forward.2} parent=11 // pred_check_branch
          %753 = sbr.rel (%p751) target = $region56
        $region55: #{encoder_forward.2} parent=11 // pred_region
          %s755 = ssub.s32 2048, 2048
          %756 = vsyncadd [#allocation17], %s755
          %s757 = sshll.u32 [#allocation16], 4
          %s758 = int_to_ptr.vmem [resolvable:$true] %s757
          %763 = dma.hbm_to_vmem [thread:$0]  %s14, 2048, %s758, [#allocation17], 128, 128, 8
        $region56: #{encoder_forward.2} parent=11 // pred_fallthru
          _
        // Predicated region
        $region57: #{encoder_forward.2} parent=11 // pred_check
          %p764 = pneg %p400
        $region58: #{encoder_forward.2} parent=11 // pred_check_branch
          %766 = sbr.rel (%p764) target = $region60
        $region59: #{encoder_forward.2} parent=11 // pred_region
          %s768 = ssub.s32 32, 32
          %769 = vsyncadd [#allocation17], %s768
          %s771 = sshll.u32 [#allocation18], 4
          %s772 = int_to_ptr.vmem [resolvable:$true] %s771
          %774 = dma.hbm_to_vmem [thread:$0]  %s15, 32, %s772, [#allocation17]
        $region60: #{encoder_forward.2} parent=11 // pred_fallthru
          _
        // Predicated region
        $region61: #{encoder_forward.2} parent=11 // pred_check
          %p775 = pneg %p421
        $region62: #{encoder_forward.2} parent=11 // pred_check_branch
          %777 = sbr.rel (%p775) target = $region64
        $region63: #{encoder_forward.2} parent=11 // pred_region
          %s779 = ssub.s32 1024, 1024
          %780 = vsyncadd [#allocation20], %s779
          %s781 = sshll.u32 [#allocation19], 4
          %s782 = int_to_ptr.vmem [resolvable:$true] %s781
          %787 = dma.hbm_to_vmem [thread:$0]  %s16, 1024, %s782, [#allocation20], 64, 64, 4
        $region64: #{encoder_forward.2} parent=11 // pred_fallthru
          _
        // Predicated region
        $region65: #{encoder_forward.2} parent=11 // pred_check
          %p788 = pneg %p442
        $region66: #{encoder_forward.2} parent=11 // pred_check_branch
          %790 = sbr.rel (%p788) target = $region68
        $region67: #{encoder_forward.2} parent=11 // pred_region
          %s792 = ssub.s32 16, 16
          %793 = vsyncadd [#allocation20], %s792
          %s795 = sshll.u32 [#allocation21], 4
          %s796 = int_to_ptr.vmem [resolvable:$true] %s795
          %798 = dma.hbm_to_vmem [thread:$0]  %s17, 16, %s796, [#allocation20]
        $region68: #{encoder_forward.2} parent=11 // pred_fallthru
          _
        // Predicated region
        $region69: #{encoder_forward.2} parent=11 // pred_check
          %p799 = pneg %p463
        $region70: #{encoder_forward.2} parent=11 // pred_check_branch
          %801 = sbr.rel (%p799) target = $region72
        $region71: #{encoder_forward.2} parent=11 // pred_region
          %s803 = ssub.s32 16, 16
          %804 = vsyncadd [#allocation23], %s803
          %s806 = sshll.u32 [#allocation22], 4
          %s807 = int_to_ptr.vmem [resolvable:$true] %s806
          %809 = dma.hbm_to_vmem [thread:$0]  %s18, 16, %s807, [#allocation23]
        $region72: #{encoder_forward.2} parent=11 // pred_fallthru
          _
        // Predicated region
        $region73: #{encoder_forward.2} parent=11 // pred_check
          %p810 = pneg %p484
        $region74: #{encoder_forward.2} parent=11 // pred_check_branch
          %812 = sbr.rel (%p810) target = $region76
        $region75: #{encoder_forward.2} parent=11 // pred_region
          %s814 = ssub.s32 16, 16
          %815 = vsyncadd [#allocation23], %s814
          %s817 = sshll.u32 [#allocation24], 4
          %s818 = int_to_ptr.vmem [resolvable:$true] %s817
          %820 = dma.hbm_to_vmem [thread:$0]  %s19, 16, %s818, [#allocation23]
        $region76: #{encoder_forward.2} parent=11 // pred_fallthru
          _
        // Predicated region
        $region77: #{encoder_forward.2} parent=11 // pred_check
          %p821 = pneg %p505
        $region78: #{encoder_forward.2} parent=11 // pred_check_branch
          %823 = sbr.rel (%p821) target = $region80
        $region79: #{encoder_forward.2} parent=11 // pred_region
          _
        $region80: #{encoder_forward.2} parent=11 // pred_fallthru
          _
        // Predicated region
        $region81: #{encoder_forward.2} parent=11 // pred_check
          %p824 = pneg %p526
        $region82: #{encoder_forward.2} parent=11 // pred_check_branch
          %826 = sbr.rel (%p824) target = $region84
        $region83: #{encoder_forward.2} parent=11 // pred_region
          %s828 = ssub.s32 32, 32
          %829 = vsyncadd [#allocation26], %s828
          %s831 = sshll.u32 [#allocation25], 4
          %s832 = int_to_ptr.vmem [resolvable:$true] %s831
          %834 = dma.hbm_to_vmem [thread:$0]  %s21, 32, %s832, [#allocation26]
        $region84: #{encoder_forward.2} parent=11 // pred_fallthru
          _
        // Predicated region
        $region85: #{encoder_forward.2} parent=11 // pred_check
          %p835 = pneg %p547
        $region86: #{encoder_forward.2} parent=11 // pred_check_branch
          %837 = sbr.rel (%p835) target = $region88
        $region87: #{encoder_forward.2} parent=11 // pred_region
          %s839 = ssub.s32 2048, 2048
          %840 = vsyncadd [#allocation26], %s839
          %s841 = sshll.u32 [#allocation27], 4
          %s842 = int_to_ptr.vmem [resolvable:$true] %s841
          %847 = dma.hbm_to_vmem [thread:$0]  %s22, 2048, %s842, [#allocation26], 64, 64, 4
        $region88: #{encoder_forward.2} parent=11 // pred_fallthru
          _
        // Predicated region
        $region89: #{encoder_forward.2} parent=11 // pred_check
          %p848 = pneg %p568
        $region90: #{encoder_forward.2} parent=11 // pred_check_branch
          %850 = sbr.rel (%p848) target = $region92
        $region91: #{encoder_forward.2} parent=11 // pred_region
          %s852 = ssub.s32 16, 16
          %853 = vsyncadd [#allocation29], %s852
          %s855 = sshll.u32 [#allocation28], 4
          %s856 = int_to_ptr.vmem [resolvable:$true] %s855
          %858 = dma.hbm_to_vmem [thread:$0]  %s23, 16, %s856, [#allocation29]
        $region92: #{encoder_forward.2} parent=11 // pred_fallthru
          _
        // Predicated region
        $region93: #{encoder_forward.2} parent=11 // pred_check
          %p859 = pneg %p589
        $region94: #{encoder_forward.2} parent=11 // pred_check_branch
          %861 = sbr.rel (%p859) target = $region96
        $region95: #{encoder_forward.2} parent=11 // pred_region
          _
        $region96: #{encoder_forward.2} parent=11 // pred_fallthru
          _
        // Predicated region
        $region97: #{encoder_forward.2} parent=11 // pred_check
          %p862 = pneg %p610
        $region98: #{encoder_forward.2} parent=11 // pred_check_branch
          %864 = sbr.rel (%p862) target = $region100
        $region99: #{encoder_forward.2} parent=11 // pred_region
          _
        $region100: #{encoder_forward.2} parent=11 // pred_fallthru
          _
      $region12: #{encoder_forward.2} parent=5 // pred_fallthru
        _
      %p865 = scmp.lt.s32.totalorder %s44, 2
      // Predicated region
      $region101: #{encoder_forward.2} parent=5 // pred_check
        %p866 = pneg %p865
      $region102: #{encoder_forward.2} parent=5 // pred_check_branch
        %868 = sbr.rel (%p866) target = $region104
      $region103: #{encoder_forward.2} parent=5 // pred_region
        // Predicated region
        $region105: #{encoder_forward.2} parent=103 // pred_check
          %p869 = pneg %p64
        $region106: #{encoder_forward.2} parent=103 // pred_check_branch
          %871 = sbr.rel (%p869) target = $region108
        $region107: #{encoder_forward.2} parent=103 // pred_region
          %s872 = sand.u32 %s54, 1
          %s873 = scalar_lea.sflag [#allocation3], %s872
          %s874 = sand.u32 %s54, 1
          %s875 = smul.addr %s874, 8
          %s876 = scalar_lea.vmem [#allocation2], %s875
          %s878 = ssub.s32 128, 128
          %879 = vsyncadd %s873, %s878
          %s880 = smul.addr %s44, 128
          %s881 = scalar_lea.hbm %s0, %s880
          %s883 = sshll.u32 %s876, 4
          %s884 = int_to_ptr.vmem [resolvable:$true] %s883
          %886 = dma.hbm_to_vmem [thread:$0]  %s881, 128, %s884, %s873
        $region108: #{encoder_forward.2} parent=103 // pred_fallthru
          _
        // Predicated region
        $region109: #{encoder_forward.2} parent=103 // pred_check
          %p887 = pneg %p90
        $region110: #{encoder_forward.2} parent=103 // pred_check_branch
          %889 = sbr.rel (%p887) target = $region112
        $region111: #{encoder_forward.2} parent=103 // pred_region
          %p890 = scmp.lt.s32.totalorder %s44, 1
          %s891 = scalar_select %p890, %s44, 1
          %s892 = smul.addr %s891, 8
          %s893 = scalar_lea.vmem %s1, %s892
        $region112: #{encoder_forward.2} parent=103 // pred_fallthru
          _
        // Predicated region
        $region113: #{encoder_forward.2} parent=103 // pred_check
          %p894 = pneg %p116
        $region114: #{encoder_forward.2} parent=103 // pred_check_branch
          %896 = sbr.rel (%p894) target = $region116
        $region115: #{encoder_forward.2} parent=103 // pred_region
          %p897 = scmp.lt.s32.totalorder %s44, 1
          %s898 = scalar_select %p897, %s44, 1
          %s899 = smul.addr %s898, 4
          %s900 = scalar_lea.vmem %s2, %s899
        $region116: #{encoder_forward.2} parent=103 // pred_fallthru
          _
        // Predicated region
        $region117: #{encoder_forward.2} parent=103 // pred_check
          %p901 = pneg %p142
        $region118: #{encoder_forward.2} parent=103 // pred_check_branch
          %903 = sbr.rel (%p901) target = $region120
        $region119: #{encoder_forward.2} parent=103 // pred_region
          %p904 = scmp.lt.s32.totalorder %s44, 1
          %s905 = scalar_select %p904, %s44, 1
          %s906 = smul.addr %s905, 4
          %s907 = scalar_lea.vmem %s3, %s906
        $region120: #{encoder_forward.2} parent=103 // pred_fallthru
          _
      $region104: #{encoder_forward.2} parent=5 // pred_fallthru
        _
      %p908 = scmp.le.s32.totalorder 1, %s44
      %p909 = scmp.lt.s32.totalorder %s44, 3
      %p910 = pnand %p908, %p909
      %p911 = pneg %p910
      // Predicated region
      $region121: #{encoder_forward.2} parent=5 // pred_check
        _
      $region122: #{encoder_forward.2} parent=5 // pred_check_branch
        %913 = sbr.rel (%p910) target = $region124
      $region123: #{encoder_forward.2} parent=5 // pred_region
        %s914 = ssub.s32 %s44, 1
        %s915 = sand.u32 %s57, 1
        %s916 = scalar_lea.sflag [#allocation3], %s915
        %s917 = sand.u32 %s57, 1
        %s918 = smul.addr %s917, 8
        %s919 = scalar_lea.vmem [#allocation2], %s918
        // Predicated region
        $region125: #{encoder_forward.2} parent=123 // pred_check
          %p920 = pneg %p70
        $region126: #{encoder_forward.2} parent=123 // pred_check_branch
          %922 = sbr.rel (%p920) target = $region128
        $region127: #{encoder_forward.2} parent=123 // pred_region
          %923 = dma.done %s916, 128
        $region128: #{encoder_forward.2} parent=123 // pred_fallthru
          _
        // Predicated region
        $region129: #{encoder_forward.2} parent=123 // pred_check
          %p924 = pneg %p190
        $region130: #{encoder_forward.2} parent=123 // pred_check_branch
          %926 = sbr.rel (%p924) target = $region132
        $region131: #{encoder_forward.2} parent=123 // pred_region
          %927 = dma.done [#allocation5], 16
        $region132: #{encoder_forward.2} parent=123 // pred_fallthru
          _
        // Predicated region
        $region133: #{encoder_forward.2} parent=123 // pred_check
          %p928 = pneg %p211
        $region134: #{encoder_forward.2} parent=123 // pred_check_branch
          %930 = sbr.rel (%p928) target = $region136
        $region135: #{encoder_forward.2} parent=123 // pred_region
          %931 = dma.done [#allocation5], 3072
        $region136: #{encoder_forward.2} parent=123 // pred_fallthru
          _
        // Predicated region
        $region137: #{encoder_forward.2} parent=123 // pred_check
          %p932 = pneg %p253
        $region138: #{encoder_forward.2} parent=123 // pred_check_branch
          %934 = sbr.rel (%p932) target = $region140
        $region139: #{encoder_forward.2} parent=123 // pred_region
          %935 = dma.done [#allocation8], 1024
        $region140: #{encoder_forward.2} parent=123 // pred_fallthru
          _
        // Predicated region
        $region141: #{encoder_forward.2} parent=123 // pred_check
          %p936 = pneg %p274
        $region142: #{encoder_forward.2} parent=123 // pred_check_branch
          %938 = sbr.rel (%p936) target = $region144
        $region143: #{encoder_forward.2} parent=123 // pred_region
          %939 = dma.done [#allocation8], 16
        $region144: #{encoder_forward.2} parent=123 // pred_fallthru
          _
        // Predicated region
        $region145: #{encoder_forward.2} parent=123 // pred_check
          %p940 = pneg %p295
        $region146: #{encoder_forward.2} parent=123 // pred_check_branch
          %942 = sbr.rel (%p940) target = $region148
        $region147: #{encoder_forward.2} parent=123 // pred_region
          %943 = dma.done [#allocation11], 16
        $region148: #{encoder_forward.2} parent=123 // pred_fallthru
          _
        // Predicated region
        $region149: #{encoder_forward.2} parent=123 // pred_check
          %p944 = pneg %p316
        $region150: #{encoder_forward.2} parent=123 // pred_check_branch
          %946 = sbr.rel (%p944) target = $region152
        $region151: #{encoder_forward.2} parent=123 // pred_region
          %947 = dma.done [#allocation11], 16
        $region152: #{encoder_forward.2} parent=123 // pred_fallthru
          _
        // Predicated region
        $region153: #{encoder_forward.2} parent=123 // pred_check
          %p948 = pneg %p337
        $region154: #{encoder_forward.2} parent=123 // pred_check_branch
          %950 = sbr.rel (%p948) target = $region156
        $region155: #{encoder_forward.2} parent=123 // pred_region
          %951 = dma.done [#allocation14], 1024
        $region156: #{encoder_forward.2} parent=123 // pred_fallthru
          _
        // Predicated region
        $region157: #{encoder_forward.2} parent=123 // pred_check
          %p952 = pneg %p358
        $region158: #{encoder_forward.2} parent=123 // pred_check_branch
          %954 = sbr.rel (%p952) target = $region160
        $region159: #{encoder_forward.2} parent=123 // pred_region
          %955 = dma.done [#allocation14], 16
        $region160: #{encoder_forward.2} parent=123 // pred_fallthru
          _
        // Predicated region
        $region161: #{encoder_forward.2} parent=123 // pred_check
          %p956 = pneg %p379
        $region162: #{encoder_forward.2} parent=123 // pred_check_branch
          %958 = sbr.rel (%p956) target = $region164
        $region163: #{encoder_forward.2} parent=123 // pred_region
          %959 = dma.done [#allocation17], 2048
        $region164: #{encoder_forward.2} parent=123 // pred_fallthru
          _
        // Predicated region
        $region165: #{encoder_forward.2} parent=123 // pred_check
          %p960 = pneg %p400
        $region166: #{encoder_forward.2} parent=123 // pred_check_branch
          %962 = sbr.rel (%p960) target = $region168
        $region167: #{encoder_forward.2} parent=123 // pred_region
          %963 = dma.done [#allocation17], 32
        $region168: #{encoder_forward.2} parent=123 // pred_fallthru
          _
        // Predicated region
        $region169: #{encoder_forward.2} parent=123 // pred_check
          %p964 = pneg %p421
        $region170: #{encoder_forward.2} parent=123 // pred_check_branch
          %966 = sbr.rel (%p964) target = $region172
        $region171: #{encoder_forward.2} parent=123 // pred_region
          %967 = dma.done [#allocation20], 1024
        $region172: #{encoder_forward.2} parent=123 // pred_fallthru
          _
        // Predicated region
        $region173: #{encoder_forward.2} parent=123 // pred_check
          %p968 = pneg %p442
        $region174: #{encoder_forward.2} parent=123 // pred_check_branch
          %970 = sbr.rel (%p968) target = $region176
        $region175: #{encoder_forward.2} parent=123 // pred_region
          %971 = dma.done [#allocation20], 16
        $region176: #{encoder_forward.2} parent=123 // pred_fallthru
          _
        // Predicated region
        $region177: #{encoder_forward.2} parent=123 // pred_check
          %p972 = pneg %p463
        $region178: #{encoder_forward.2} parent=123 // pred_check_branch
          %974 = sbr.rel (%p972) target = $region180
        $region179: #{encoder_forward.2} parent=123 // pred_region
          %975 = dma.done [#allocation23], 16
        $region180: #{encoder_forward.2} parent=123 // pred_fallthru
          _
        // Predicated region
        $region181: #{encoder_forward.2} parent=123 // pred_check
          %p976 = pneg %p484
        $region182: #{encoder_forward.2} parent=123 // pred_check_branch
          %978 = sbr.rel (%p976) target = $region184
        $region183: #{encoder_forward.2} parent=123 // pred_region
          %979 = dma.done [#allocation23], 16
        $region184: #{encoder_forward.2} parent=123 // pred_fallthru
          _
        // Predicated region
        $region185: #{encoder_forward.2} parent=123 // pred_check
          %p980 = pneg %p526
        $region186: #{encoder_forward.2} parent=123 // pred_check_branch
          %982 = sbr.rel (%p980) target = $region188
        $region187: #{encoder_forward.2} parent=123 // pred_region
          %983 = dma.done [#allocation26], 32
        $region188: #{encoder_forward.2} parent=123 // pred_fallthru
          _
        // Predicated region
        $region189: #{encoder_forward.2} parent=123 // pred_check
          %p984 = pneg %p547
        $region190: #{encoder_forward.2} parent=123 // pred_check_branch
          %986 = sbr.rel (%p984) target = $region192
        $region191: #{encoder_forward.2} parent=123 // pred_region
          %987 = dma.done [#allocation26], 2048
        $region192: #{encoder_forward.2} parent=123 // pred_fallthru
          _
        // Predicated region
        $region193: #{encoder_forward.2} parent=123 // pred_check
          %p988 = pneg %p568
        $region194: #{encoder_forward.2} parent=123 // pred_check_branch
          %990 = sbr.rel (%p988) target = $region196
        $region195: #{encoder_forward.2} parent=123 // pred_region
          %991 = dma.done [#allocation29], 16
        $region196: #{encoder_forward.2} parent=123 // pred_fallthru
          _
        %s992 = sand.u32 %s57, 1
        %s993 = scalar_lea.sflag [#allocation3], %s992
        %s994 = sand.u32 %s57, 1
        %s995 = smul.addr %s994, 8
        %s996 = scalar_lea.vmem [#allocation2], %s995
        %p997 = pneg %p70
        %p998 = pneg %p67
        %p999 = scmp.lt.s32.totalorder %s49, 1
        %s1000 = scalar_select %p999, %s49, 1
        %s1001 = smul.addr %s1000, 8
        %s1002 = scalar_lea.vmem %s1, %s1001
        %p1003 = pneg %p96
        %p1004 = pneg %p93
        %p1005 = scmp.lt.s32.totalorder %s49, 1
        %s1006 = scalar_select %p1005, %s49, 1
        %s1007 = smul.addr %s1006, 4
        %s1008 = scalar_lea.vmem %s2, %s1007
        %p1009 = pneg %p122
        %p1010 = pneg %p119
        %p1011 = scmp.lt.s32.totalorder %s49, 1
        %s1012 = scalar_select %p1011, %s49, 1
        %s1013 = smul.addr %s1012, 4
        %s1014 = scalar_lea.vmem %s3, %s1013
        %p1015 = pneg %p148
        %p1016 = pneg %p145
        %p1017 = pneg %p169
        %p1018 = pneg %p166
        %p1019 = pneg %p190
        %p1020 = pneg %p187
        %p1021 = pneg %p211
        %p1022 = pneg %p208
        %p1023 = pneg %p232
        %p1024 = pneg %p229
        %p1025 = pneg %p253
        %p1026 = pneg %p250
        %p1027 = pneg %p274
        %p1028 = pneg %p271
        %p1029 = pneg %p295
        %p1030 = pneg %p292
        %p1031 = pneg %p316
        %p1032 = pneg %p313
        %p1033 = pneg %p337
        %p1034 = pneg %p334
        %p1035 = pneg %p358
        %p1036 = pneg %p355
        %p1037 = pneg %p379
        %p1038 = pneg %p376
        %p1039 = pneg %p400
        %p1040 = pneg %p397
        %p1041 = pneg %p421
        %p1042 = pneg %p418
        %p1043 = pneg %p442
        %p1044 = pneg %p439
        %p1045 = pneg %p463
        %p1046 = pneg %p460
        %p1047 = pneg %p484
        %p1048 = pneg %p481
        %p1049 = pneg %p505
        %p1050 = pneg %p502
        %p1051 = pneg %p526
        %p1052 = pneg %p523
        %p1053 = pneg %p547
        %p1054 = pneg %p544
        %p1055 = pneg %p568
        %p1056 = pneg %p565
        %p1057 = pneg %p589
        %p1058 = pneg %p586
        %p1059 = pneg %p610
        %p1060 = pneg %p607
        %p1061 = pneg %p636
        %p1062 = pneg %p633
        %p1063 = scmp.lt.s32.totalorder %s49, 1
        %s1064 = scalar_select %p1063, %s49, 1
        %s1065 = smul.addr %s1064, 8
        %s1066 = scalar_lea.vmem %s26, %s1065
        %p1067 = scmp.lt.s32.totalorder %s49, 1
        %s1068 = scalar_select %p1067, %s49, 1
        %s1069 = smul.addr %s1068, 8
        %s1070 = scalar_lea.vmem %s1, %s1069
        %p1071 = scmp.lt.s32.totalorder %s49, 1
        %s1072 = scalar_select %p1071, %s49, 1
        %s1073 = smul.addr %s1072, 4
        %s1074 = scalar_lea.vmem %s2, %s1073
        %p1075 = scmp.lt.s32.totalorder %s49, 1
        %s1076 = scalar_select %p1075, %s49, 1
        %s1077 = smul.addr %s1076, 4
        %s1078 = scalar_lea.vmem %s3, %s1077
        %p1079 = scmp.lt.s32.totalorder %s49, 1
        %s1080 = scalar_select %p1079, %s49, 1
        %s1081 = smul.addr %s1080, 8
        %s1082 = scalar_lea.vmem %s26, %s1081
        %v1084 = vld [vmem:[%s919] sm:$0xff]
        %v1085 = vld [vmem:[%s1070] sm:$0xff]
        %v1086 = vld [vmem:[%s1074] sm:$0xf]
        %v1087 = vunpack.c.l.bf16 %v1086
        %v1088 = vsub.f32 %v1087, 1.0
        %v1089 = vmul.f32 %v1088, 1e+09
        %v1090 = vld [vmem:[%s1078] sm:$0xf]
        %v1091 = vunpack.c.l.bf16 %v1090
        %v1092 = vsub.f32 %v1091, 1.0
        %v1093 = vmul.f32 %v1092, 1e+09
        %v1094 = vld [vmem:[%s4] sm:$0x1]
        %v1095 = vld [vmem:[#allocation4] sm:$0x1]
        %1096 = vadd.xlane.f32.xlu0 %v1084
        %v1097 = vpop.xlane.xlu0 %1096
        %v1098 = vrcp.pop 128.0
        %v1099 = vmul.f32 %v1097, %v1098
        %v1100 = vsub.f32 %v1084, %v1099
        %v1101 = vmul.f32 %v1100, %v1100
        %1102 = vadd.xlane.f32.xlu0 %v1101
        %v1103 = vpop.xlane.xlu0 %1102
        %v1104 = vmul.f32 %v1103, 0.007874016
        %v1105 = vrsqrt.pop %v1104
        %v1106 = vmul.f32 %v1104, %v1105
        %vm1107 = vcmp.eq.f32.partialorder %v1104, inf
        %v1108 = vsel %vm1107, %v1104, %v1106
        %vm1109 = vcmp.eq.f32.partialorder %v1104, 0.0
        %v1110 = vand.u32 %v1104, 2147483648
        %v1111 = vsel %vm1109, %v1110, %v1108
        %v1113 = vlaneseq
        %v1114 = vshrl.u32 %v1113, 7
        %v1115 = vsub.s32 0, %v1114
        %v1116 = vrot.slane %v1094, %v1115
        %v1118 = vmul.f32 %v1116, %v1100
        %v1119 = vadd.f32 %v1111, 1e-06
        %v1120 = vrcp.pop %v1119
        %v1121 = vmul.f32 %v1118, %v1120
        %v1123 = vlaneseq
        %v1124 = vshrl.u32 %v1123, 7
        %v1125 = vsub.s32 0, %v1124
        %v1126 = vrot.slane %v1095, %v1125
        %v1128 = vadd.f32 %v1121, %v1126
        %v1129 = vld [vmem:[#allocation6] sm:$0xff]
        %v1130 = vld [vmem:[#allocation6 + $0x8] sm:$0xf]
        %v1131 = vld [vmem:[#allocation6 + $0xc] sm:$0xff]
        %v1132 = vld [vmem:[#allocation6 + $0x14] sm:$0xf]
        %v1133 = vld [vmem:[#allocation6 + $0x18] sm:$0xff]
        %v1134 = vld [vmem:[#allocation6 + $0x20] sm:$0xf]
        %v1135 = vld [vmem:[#allocation6 + $0x24] sm:$0xff]
        %v1136 = vld [vmem:[#allocation6 + $0x2c] sm:$0xf]
        %v1137 = vld [vmem:[#allocation6 + $0x30] sm:$0xff]
        %v1138 = vld [vmem:[#allocation6 + $0x38] sm:$0xf]
        %v1139 = vld [vmem:[#allocation6 + $0x3c] sm:$0xff]
        %v1140 = vld [vmem:[#allocation6 + $0x44] sm:$0xf]
        %v1141 = vld [vmem:[#allocation6 + $0x48] sm:$0xff]
        %v1142 = vld [vmem:[#allocation6 + $0x50] sm:$0xf]
        %v1143 = vld [vmem:[#allocation6 + $0x54] sm:$0xff]
        %v1144 = vld [vmem:[#allocation6 + $0x5c] sm:$0xf]
        %v1145 = vld [vmem:[#allocation6 + $0x60] sm:$0xff]
        %v1146 = vld [vmem:[#allocation6 + $0x68] sm:$0xf]
        %v1147 = vld [vmem:[#allocation6 + $0x6c] sm:$0xff]
        %v1148 = vld [vmem:[#allocation6 + $0x74] sm:$0xf]
        %v1149 = vld [vmem:[#allocation6 + $0x78] sm:$0xff]
        %v1150 = vld [vmem:[#allocation6 + $0x80] sm:$0xf]
        %v1151 = vld [vmem:[#allocation6 + $0x84] sm:$0xff]
        %v1152 = vld [vmem:[#allocation6 + $0x8c] sm:$0xf]
        %v1153 = vld [vmem:[#allocation6 + $0x90] sm:$0xff]
        %v1154 = vld [vmem:[#allocation6 + $0x98] sm:$0xf]
        %v1155 = vld [vmem:[#allocation6 + $0x9c] sm:$0xff]
        %v1156 = vld [vmem:[#allocation6 + $0xa4] sm:$0xf]
        %v1157 = vld [vmem:[#allocation6 + $0xa8] sm:$0xff]
        %v1158 = vld [vmem:[#allocation6 + $0xb0] sm:$0xf]
        %v1159 = vld [vmem:[#allocation6 + $0xb4] sm:$0xff]
        %v1160 = vld [vmem:[#allocation6 + $0xbc] sm:$0xf]
        %v1161 = vld [vmem:[%s7] sm:$0x7]
        %v1162 = vpack.c.bf16 %v1128, %v1128
        %v1164 = vlaneseq
        %v1165 = vshrl.u32 %v1164, 7
        %v1166 = vsub.s32 0, %v1165
        %v1167 = vrot.slane %v1161, %v1166
        %v1168 = vlaneseq
        %v1169 = vshrl.u32 %v1168, 7
        %v1170 = vsub.s32 1, %v1169
        %v1171 = vrot.slane %v1161, %v1170
        %v1172 = vlaneseq
        %v1173 = vshrl.u32 %v1172, 7
        %v1174 = vsub.s32 2, %v1173
        %v1175 = vrot.slane %v1161, %v1174
        %v1211 = vunpack.c.l.b16 %v1129
        %v1212 = vunpack.c.h.b16 %v1129
        %v1213 = vunpack.c.l.b16 %v1130
        %v1214 = vunpack.c.l.b16 %v1131
        %v1215 = vunpack.c.h.b16 %v1131
        %v1216 = vunpack.c.l.b16 %v1132
        %v1217 = vunpack.c.l.b16 %v1133
        %v1218 = vunpack.c.h.b16 %v1133
        %v1219 = vunpack.c.l.b16 %v1134
        %v1220 = vunpack.c.l.b16 %v1135
        %v1221 = vunpack.c.h.b16 %v1135
        %v1222 = vunpack.c.l.b16 %v1136
        %v1223 = vunpack.c.l.b16 %v1137
        %v1224 = vunpack.c.h.b16 %v1137
        %v1225 = vunpack.c.l.b16 %v1138
        %v1226 = vunpack.c.l.b16 %v1139
        %v1227 = vunpack.c.h.b16 %v1139
        %v1228 = vunpack.c.l.b16 %v1140
        %v1229 = vunpack.c.l.b16 %v1141
        %v1230 = vunpack.c.h.b16 %v1141
        %v1231 = vunpack.c.l.b16 %v1142
        %v1232 = vunpack.c.l.b16 %v1143
        %v1233 = vunpack.c.h.b16 %v1143
        %v1234 = vunpack.c.l.b16 %v1144
        %v1235 = vunpack.c.l.b16 %v1145
        %v1236 = vunpack.c.h.b16 %v1145
        %v1237 = vunpack.c.l.b16 %v1146
        %v1238 = vunpack.c.l.b16 %v1147
        %v1239 = vunpack.c.h.b16 %v1147
        %v1240 = vunpack.c.l.b16 %v1148
        %v1241 = vunpack.c.l.b16 %v1149
        %v1242 = vunpack.c.h.b16 %v1149
        %v1243 = vunpack.c.l.b16 %v1150
        %v1244 = vunpack.c.l.b16 %v1151
        %v1245 = vunpack.c.h.b16 %v1151
        %v1246 = vunpack.c.l.b16 %v1152
        %v1247 = vunpack.c.l.b16 %v1153
        %v1248 = vunpack.c.h.b16 %v1153
        %v1249 = vunpack.c.l.b16 %v1154
        %v1250 = vunpack.c.l.b16 %v1155
        %v1251 = vunpack.c.h.b16 %v1155
        %v1252 = vunpack.c.l.b16 %v1156
        %v1253 = vunpack.c.l.b16 %v1157
        %v1254 = vunpack.c.h.b16 %v1157
        %v1255 = vunpack.c.l.b16 %v1158
        %v1256 = vunpack.c.l.b16 %v1159
        %v1257 = vunpack.c.h.b16 %v1159
        %v1258 = vunpack.c.l.b16 %v1160
        %v1259 = vpack.c.b16 %v1214, %v1211
        %v1260 = vpack.c.b16 %v1215, %v1212
        %v1261 = vpack.c.b16 %v1216, %v1213
        %v1262 = vpack.c.b16 %v1220, %v1217
        %v1263 = vpack.c.b16 %v1221, %v1218
        %v1264 = vpack.c.b16 %v1222, %v1219
        %v1265 = vpack.c.b16 %v1226, %v1223
        %v1266 = vpack.c.b16 %v1227, %v1224
        %v1267 = vpack.c.b16 %v1228, %v1225
        %v1268 = vpack.c.b16 %v1232, %v1229
        %v1269 = vpack.c.b16 %v1233, %v1230
        %v1270 = vpack.c.b16 %v1234, %v1231
        %v1271 = vpack.c.b16 %v1238, %v1235
        %v1272 = vpack.c.b16 %v1239, %v1236
        %v1273 = vpack.c.b16 %v1240, %v1237
        %v1274 = vpack.c.b16 %v1244, %v1241
        %v1275 = vpack.c.b16 %v1245, %v1242
        %v1276 = vpack.c.b16 %v1246, %v1243
        %v1277 = vpack.c.b16 %v1250, %v1247
        %v1278 = vpack.c.b16 %v1251, %v1248
        %v1279 = vpack.c.b16 %v1252, %v1249
        %v1280 = vpack.c.b16 %v1256, %v1253
        %v1281 = vpack.c.b16 %v1257, %v1254
        %v1282 = vpack.c.b16 %v1258, %v1255
        %1307 = vmatprep.subr.bf16.mxu0 %v1281
        %1308 = vmatpush1.bf16.msra.mxu0 %v1280
        %1309 = vmatprep.subr.bf16.mxu0 %v1278
        %1310 = vmatpush1.bf16.msra.mxu0 %v1277
        %1311 = vmatprep.subr.bf16.mxu0 %v1275
        %1312 = vmatpush1.bf16.msra.mxu0 %v1274
        %1313 = vmatprep.subr.bf16.mxu0 %v1272
        %1314 = vmatpush1.bf16.msra.mxu0 %v1271
        %1315 = vmatprep.subr.bf16.mxu0 %v1269
        %1316 = vmatpush1.bf16.msra.mxu0 %v1268
        %1317 = vmatprep.subr.bf16.mxu0 %v1266
        %1318 = vmatpush1.bf16.msra.mxu0 %v1265
        %1319 = vmatprep.subr.bf16.mxu0 %v1263
        %1320 = vmatpush1.bf16.msra.mxu0 %v1262
        %1321 = vmatprep.subr.bf16.mxu0 %v1260
        %1322 = vmatpush1.bf16.msra.mxu0 %v1259
        %1323 = vmatprep.subr.bf16.mxu0 0
        %1324 = vmatpush2.bf16.msra.mxu0 0
        %1325 = vmatprep.subr.bf16.mxu0 0
        %1326 = vmatpush2.bf16.msra.mxu0 0
        %1327 = vmatprep.subr.bf16.mxu0 0
        %1328 = vmatpush2.bf16.msra.mxu0 0
        %1329 = vmatprep.subr.bf16.mxu0 0
        %1330 = vmatpush2.bf16.msra.mxu0 0
        %1331 = vmatprep.subr.bf16.mxu0 0
        %1332 = vmatpush2.bf16.msra.mxu0 0
        %1333 = vmatprep.subr.bf16.mxu0 0
        %1334 = vmatpush2.bf16.msra.mxu0 0
        %1335 = vmatprep.subr.bf16.mxu0 0
        %1336 = vmatpush2.bf16.msra.mxu0 0
        %1337 = vmatprep.subr.bf16.mxu0 0
        %1338 = vmatpush2.bf16.msra.mxu0 0
        %1339 = vmatprep.mubr.bf16.mxu0 0
        %1340 = vmatmul.mubr.bf16.gmra.mxu0 %v1162
        %v1341 = vpop.f32.mrf.mxu0
        %v1342 = vadd.f32 %v1167, %v1341
        %v1343 = vpop.f32.mrf.mxu0
        %v1344 = vadd.f32 %v1171, %v1343
        %v1345 = vpop.f32.mrf.mxu0
        %v1346 = vpop.f32.mrf.mxu0
        %1347 = vdwg.mxu0
        %1348 = vmatprep.subr.bf16.mxu0 0
        %1349 = vmatpush1.bf16.msra.mxu0 %v1282
        %1350 = vmatprep.subr.bf16.mxu0 0
        %1351 = vmatpush1.bf16.msra.mxu0 %v1279
        %1352 = vmatprep.subr.bf16.mxu0 0
        %1353 = vmatpush1.bf16.msra.mxu0 %v1276
        %1354 = vmatprep.subr.bf16.mxu0 0
        %1355 = vmatpush1.bf16.msra.mxu0 %v1273
        %1356 = vmatprep.subr.bf16.mxu0 0
        %1357 = vmatpush1.bf16.msra.mxu0 %v1270
        %1358 = vmatprep.subr.bf16.mxu0 0
        %1359 = vmatpush1.bf16.msra.mxu0 %v1267
        %1360 = vmatprep.subr.bf16.mxu0 0
        %1361 = vmatpush1.bf16.msra.mxu0 %v1264
        %1362 = vmatprep.subr.bf16.mxu0 0
        %1363 = vmatpush1.bf16.msra.mxu0 %v1261
        %1364 = vmatprep.subr.bf16.mxu0 0
        %1365 = vmatpush2.bf16.msra.mxu0 0
        %1366 = vmatprep.subr.bf16.mxu0 0
        %1367 = vmatpush2.bf16.msra.mxu0 0
        %1368 = vmatprep.subr.bf16.mxu0 0
        %1369 = vmatpush2.bf16.msra.mxu0 0
        %1370 = vmatprep.subr.bf16.mxu0 0
        %1371 = vmatpush2.bf16.msra.mxu0 0
        %1372 = vmatprep.subr.bf16.mxu0 0
        %1373 = vmatpush2.bf16.msra.mxu0 0
        %1374 = vmatprep.subr.bf16.mxu0 0
        %1375 = vmatpush2.bf16.msra.mxu0 0
        %1376 = vmatprep.subr.bf16.mxu0 0
        %1377 = vmatpush2.bf16.msra.mxu0 0
        %1378 = vmatprep.subr.bf16.mxu0 0
        %1379 = vmatpush2.bf16.msra.mxu0 0
        %1380 = vmatprep.mubr.bf16.mxu0 0
        %1381 = vmatmul.mubr.bf16.gmra.mxu0 %v1162
        %v1382 = vpop.f32.mrf.mxu0
        %v1383 = vadd.f32 %v1175, %v1382
        %v1384 = vpop.f32.mrf.mxu0
        %v1385 = vpop.f32.mrf.mxu0
        %v1386 = vpop.f32.mrf.mxu0
        %1387 = vdwg.mxu0
        %v1388 = vpack.c.bf16 %v1342, %v1342
        %v1389 = vpack.c.bf16 %v1344, %v1344
        %v1390 = vpack.c.bf16 %v1383, %v1383
        %vm1391 = vcmask 261120
        %v1393 = vsel %vm1391, %v1388, 0
        %v1396 = vsel %vm1391, %v1389, 0
        %1398 = vmatprep.subr.bf16.mxu0 0
        %1399 = vmatpush1.bf16.xpose.msra.mxu0 0
        %1400 = vmatprep.subr.bf16.mxu0 0
        %1401 = vmatpush1.bf16.xpose.msra.mxu0 0
        %1402 = vmatprep.subr.bf16.mxu0 0
        %1403 = vmatpush1.bf16.xpose.msra.mxu0 0
        %1404 = vmatprep.subr.bf16.mxu0 0
        %1405 = vmatpush1.bf16.xpose.msra.mxu0 0
        %1406 = vmatprep.subr.bf16.mxu0 0
        %1407 = vmatpush1.bf16.xpose.msra.mxu0 0
        %1408 = vmatprep.subr.bf16.mxu0 0
        %1409 = vmatpush1.bf16.xpose.msra.mxu0 0
        %1410 = vmatprep.subr.bf16.mxu0 0
        %1411 = vmatpush1.bf16.xpose.msra.mxu0 0
        %1412 = vmatprep.subr.bf16.mxu0 0
        %1413 = vmatpush1.bf16.xpose.msra.mxu0 %v1396
        %1414 = vmatprep.subr.bf16.mxu0 0
        %1415 = vmatpush2.bf16.xpose.msra.mxu0 0
        %1416 = vmatprep.subr.bf16.mxu0 0
        %1417 = vmatpush2.bf16.xpose.msra.mxu0 0
        %1418 = vmatprep.subr.bf16.mxu0 0
        %1419 = vmatpush2.bf16.xpose.msra.mxu0 0
        %1420 = vmatprep.subr.bf16.mxu0 0
        %1421 = vmatpush2.bf16.xpose.msra.mxu0 0
        %1422 = vmatprep.subr.bf16.mxu0 0
        %1423 = vmatpush2.bf16.xpose.msra.mxu0 0
        %1424 = vmatprep.subr.bf16.mxu0 0
        %1425 = vmatpush2.bf16.xpose.msra.mxu0 0
        %1426 = vmatprep.subr.bf16.mxu0 0
        %1427 = vmatpush2.bf16.xpose.msra.mxu0 0
        %1428 = vmatprep.subr.bf16.mxu0 0
        %1429 = vmatpush2.bf16.xpose.msra.mxu0 0
        %1430 = vmatprep.mubr.bf16.mxu0 0
        %1431 = vmatmul.mubr.bf16.gmra.mxu0 %v1393
        %v1432 = vpop.f32.mrf.mxu0
        %v1433 = vadd.f32 0.0, %v1432
        %v1434 = vpop.f32.mrf.mxu0
        %v1435 = vpop.f32.mrf.mxu0
        %v1436 = vpop.f32.mrf.mxu0
        %1437 = vdwg.mxu0
        %v1438 = vmul.f32 %v1433, 0.17677669
        %v1439 = vadd.f32 %v1438, %v1089
        %vm1440 = vcmask 64512
        %v1441 = vsel %vm1440, %v1439, -inf
        %1442 = vmax.xlane.f32.xlu0 %v1441
        %v1443 = vpop.xlane.xlu0 %1442
        %v1444 = vsub.f32 %v1439, %v1443
        %v1445 = vmul.f32 %v1444, 1.442695
        %v1446 = vpow.pop %v1445
        %v1447 = vsel %vm1440, %v1446, 0.0
        %1448 = vadd.xlane.f32.xlu0 %v1447
        %v1449 = vpop.xlane.xlu0 %1448
        %v1450 = vrcp.pop %v1449
        %v1451 = vmul.f32 %v1446, %v1450
        %v1452 = vpack.c.bf16 %v1451, %v1451
        %v1454 = vsel %vm1440, %v1452, 0
        %vm1456 = vcmask 1043456
        %v1458 = vsel %vm1456, %v1390, 0
        %1460 = vmatprep.subr.bf16.mxu0 0
        %1461 = vmatpush1.bf16.msra.mxu0 0
        %1462 = vmatprep.subr.bf16.mxu0 0
        %1463 = vmatpush1.bf16.msra.mxu0 0
        %1464 = vmatprep.subr.bf16.mxu0 0
        %1465 = vmatpush1.bf16.msra.mxu0 0
        %1466 = vmatprep.subr.bf16.mxu0 0
        %1467 = vmatpush1.bf16.msra.mxu0 0
        %1468 = vmatprep.subr.bf16.mxu0 0
        %1469 = vmatpush1.bf16.msra.mxu0 0
        %1470 = vmatprep.subr.bf16.mxu0 0
        %1471 = vmatpush1.bf16.msra.mxu0 0
        %1472 = vmatprep.subr.bf16.mxu0 0
        %1473 = vmatpush1.bf16.msra.mxu0 0
        %1474 = vmatprep.subr.bf16.mxu0 0
        %1475 = vmatpush1.bf16.msra.mxu0 %v1458
        %1476 = vmatprep.subr.bf16.mxu0 0
        %1477 = vmatpush2.bf16.msra.mxu0 0
        %1478 = vmatprep.subr.bf16.mxu0 0
        %1479 = vmatpush2.bf16.msra.mxu0 0
        %1480 = vmatprep.subr.bf16.mxu0 0
        %1481 = vmatpush2.bf16.msra.mxu0 0
        %1482 = vmatprep.subr.bf16.mxu0 0
        %1483 = vmatpush2.bf16.msra.mxu0 0
        %1484 = vmatprep.subr.bf16.mxu0 0
        %1485 = vmatpush2.bf16.msra.mxu0 0
        %1486 = vmatprep.subr.bf16.mxu0 0
        %1487 = vmatpush2.bf16.msra.mxu0 0
        %1488 = vmatprep.subr.bf16.mxu0 0
        %1489 = vmatpush2.bf16.msra.mxu0 0
        %1490 = vmatprep.subr.bf16.mxu0 0
        %1491 = vmatpush2.bf16.msra.mxu0 0
        %1492 = vmatprep.mubr.bf16.mxu0 0
        %1493 = vmatmul.mubr.bf16.gmra.mxu0 %v1454
        %v1494 = vpop.f32.mrf.mxu0
        %v1495 = vadd.f32 0.0, %v1494
        %v1496 = vpop.f32.mrf.mxu0
        %v1497 = vpop.f32.mrf.mxu0
        %v1498 = vpop.f32.mrf.mxu0
        %1499 = vdwg.mxu0
        %1501 = vrot.lane.b32.xlu0 %v1388, 96
        %v1502 = vpop.permute.xlu0 %1501
        %1504 = vrot.lane.b32.xlu0 %v1389, 96
        %v1505 = vpop.permute.xlu0 %1504
        %v1507 = vsel %vm1391, %v1502, 0
        %v1510 = vsel %vm1391, %v1505, 0
        %1512 = vmatprep.subr.bf16.mxu0 0
        %1513 = vmatpush1.bf16.xpose.msra.mxu0 0
        %1514 = vmatprep.subr.bf16.mxu0 0
        %1515 = vmatpush1.bf16.xpose.msra.mxu0 0
        %1516 = vmatprep.subr.bf16.mxu0 0
        %1517 = vmatpush1.bf16.xpose.msra.mxu0 0
        %1518 = vmatprep.subr.bf16.mxu0 0
        %1519 = vmatpush1.bf16.xpose.msra.mxu0 0
        %1520 = vmatprep.subr.bf16.mxu0 0
        %1521 = vmatpush1.bf16.xpose.msra.mxu0 0
        %1522 = vmatprep.subr.bf16.mxu0 0
        %1523 = vmatpush1.bf16.xpose.msra.mxu0 0
        %1524 = vmatprep.subr.bf16.mxu0 0
        %1525 = vmatpush1.bf16.xpose.msra.mxu0 0
        %1526 = vmatprep.subr.bf16.mxu0 0
        %1527 = vmatpush1.bf16.xpose.msra.mxu0 %v1510
        %1528 = vmatprep.subr.bf16.mxu0 0
        %1529 = vmatpush2.bf16.xpose.msra.mxu0 0
        %1530 = vmatprep.subr.bf16.mxu0 0
        %1531 = vmatpush2.bf16.xpose.msra.mxu0 0
        %1532 = vmatprep.subr.bf16.mxu0 0
        %1533 = vmatpush2.bf16.xpose.msra.mxu0 0
        %1534 = vmatprep.subr.bf16.mxu0 0
        %1535 = vmatpush2.bf16.xpose.msra.mxu0 0
        %1536 = vmatprep.subr.bf16.mxu0 0
        %1537 = vmatpush2.bf16.xpose.msra.mxu0 0
        %1538 = vmatprep.subr.bf16.mxu0 0
        %1539 = vmatpush2.bf16.xpose.msra.mxu0 0
        %1540 = vmatprep.subr.bf16.mxu0 0
        %1541 = vmatpush2.bf16.xpose.msra.mxu0 0
        %1542 = vmatprep.subr.bf16.mxu0 0
        %1543 = vmatpush2.bf16.xpose.msra.mxu0 0
        %1544 = vmatprep.mubr.bf16.mxu0 0
        %1545 = vmatmul.mubr.bf16.gmra.mxu0 %v1507
        %v1546 = vpop.f32.mrf.mxu0
        %v1547 = vadd.f32 0.0, %v1546
        %v1548 = vpop.f32.mrf.mxu0
        %v1549 = vpop.f32.mrf.mxu0
        %v1550 = vpop.f32.mrf.mxu0
        %1551 = vdwg.mxu0
        %v1552 = vmul.f32 %v1547, 0.17677669
        %v1553 = vadd.f32 %v1552, %v1089
        %v1554 = vsel %vm1440, %v1553, -inf
        %1555 = vmax.xlane.f32.xlu0 %v1554
        %v1556 = vpop.xlane.xlu0 %1555
        %v1557 = vsub.f32 %v1553, %v1556
        %v1558 = vmul.f32 %v1557, 1.442695
        %v1559 = vpow.pop %v1558
        %v1560 = vsel %vm1440, %v1559, 0.0
        %1561 = vadd.xlane.f32.xlu0 %v1560
        %v1562 = vpop.xlane.xlu0 %1561
        %v1563 = vrcp.pop %v1562
        %v1564 = vmul.f32 %v1559, %v1563
        %v1565 = vpack.c.bf16 %v1564, %v1564
        %1567 = vrot.lane.b32.xlu0 %v1390, 96
        %v1568 = vpop.permute.xlu0 %1567
        %v1570 = vsel %vm1440, %v1565, 0
        %v1573 = vsel %vm1456, %v1568, 0
        %1575 = vmatprep.subr.bf16.mxu0 0
        %1576 = vmatpush1.bf16.msra.mxu0 0
        %1577 = vmatprep.subr.bf16.mxu0 0
        %1578 = vmatpush1.bf16.msra.mxu0 0
        %1579 = vmatprep.subr.bf16.mxu0 0
        %1580 = vmatpush1.bf16.msra.mxu0 0
        %1581 = vmatprep.subr.bf16.mxu0 0
        %1582 = vmatpush1.bf16.msra.mxu0 0
        %1583 = vmatprep.subr.bf16.mxu0 0
        %1584 = vmatpush1.bf16.msra.mxu0 0
        %1585 = vmatprep.subr.bf16.mxu0 0
        %1586 = vmatpush1.bf16.msra.mxu0 0
        %1587 = vmatprep.subr.bf16.mxu0 0
        %1588 = vmatpush1.bf16.msra.mxu0 0
        %1589 = vmatprep.subr.bf16.mxu0 0
        %1590 = vmatpush1.bf16.msra.mxu0 %v1573
        %1591 = vmatprep.subr.bf16.mxu0 0
        %1592 = vmatpush2.bf16.msra.mxu0 0
        %1593 = vmatprep.subr.bf16.mxu0 0
        %1594 = vmatpush2.bf16.msra.mxu0 0
        %1595 = vmatprep.subr.bf16.mxu0 0
        %1596 = vmatpush2.bf16.msra.mxu0 0
        %1597 = vmatprep.subr.bf16.mxu0 0
        %1598 = vmatpush2.bf16.msra.mxu0 0
        %1599 = vmatprep.subr.bf16.mxu0 0
        %1600 = vmatpush2.bf16.msra.mxu0 0
        %1601 = vmatprep.subr.bf16.mxu0 0
        %1602 = vmatpush2.bf16.msra.mxu0 0
        %1603 = vmatprep.subr.bf16.mxu0 0
        %1604 = vmatpush2.bf16.msra.mxu0 0
        %1605 = vmatprep.subr.bf16.mxu0 0
        %1606 = vmatpush2.bf16.msra.mxu0 0
        %1607 = vmatprep.mubr.bf16.mxu0 0
        %1608 = vmatmul.mubr.bf16.gmra.mxu0 %v1570
        %v1609 = vpop.f32.mrf.mxu0
        %v1610 = vadd.f32 0.0, %v1609
        %v1611 = vpop.f32.mrf.mxu0
        %v1612 = vpop.f32.mrf.mxu0
        %v1613 = vpop.f32.mrf.mxu0
        %1614 = vdwg.mxu0
        %1615 = vrot.lane.b32.xlu0 %v1388, 64
        %v1616 = vpop.permute.xlu0 %1615
        %1617 = vrot.lane.b32.xlu0 %v1389, 64
        %v1618 = vpop.permute.xlu0 %1617
        %v1620 = vsel %vm1391, %v1616, 0
        %v1623 = vsel %vm1391, %v1618, 0
        %1625 = vmatprep.subr.bf16.mxu0 0
        %1626 = vmatpush1.bf16.xpose.msra.mxu0 0
        %1627 = vmatprep.subr.bf16.mxu0 0
        %1628 = vmatpush1.bf16.xpose.msra.mxu0 0
        %1629 = vmatprep.subr.bf16.mxu0 0
        %1630 = vmatpush1.bf16.xpose.msra.mxu0 0
        %1631 = vmatprep.subr.bf16.mxu0 0
        %1632 = vmatpush1.bf16.xpose.msra.mxu0 0
        %1633 = vmatprep.subr.bf16.mxu0 0
        %1634 = vmatpush1.bf16.xpose.msra.mxu0 0
        %1635 = vmatprep.subr.bf16.mxu0 0
        %1636 = vmatpush1.bf16.xpose.msra.mxu0 0
        %1637 = vmatprep.subr.bf16.mxu0 0
        %1638 = vmatpush1.bf16.xpose.msra.mxu0 0
        %1639 = vmatprep.subr.bf16.mxu0 0
        %1640 = vmatpush1.bf16.xpose.msra.mxu0 %v1623
        %1641 = vmatprep.subr.bf16.mxu0 0
        %1642 = vmatpush2.bf16.xpose.msra.mxu0 0
        %1643 = vmatprep.subr.bf16.mxu0 0
        %1644 = vmatpush2.bf16.xpose.msra.mxu0 0
        %1645 = vmatprep.subr.bf16.mxu0 0
        %1646 = vmatpush2.bf16.xpose.msra.mxu0 0
        %1647 = vmatprep.subr.bf16.mxu0 0
        %1648 = vmatpush2.bf16.xpose.msra.mxu0 0
        %1649 = vmatprep.subr.bf16.mxu0 0
        %1650 = vmatpush2.bf16.xpose.msra.mxu0 0
        %1651 = vmatprep.subr.bf16.mxu0 0
        %1652 = vmatpush2.bf16.xpose.msra.mxu0 0
        %1653 = vmatprep.subr.bf16.mxu0 0
        %1654 = vmatpush2.bf16.xpose.msra.mxu0 0
        %1655 = vmatprep.subr.bf16.mxu0 0
        %1656 = vmatpush2.bf16.xpose.msra.mxu0 0
        %1657 = vmatprep.mubr.bf16.mxu0 0
        %1658 = vmatmul.mubr.bf16.gmra.mxu0 %v1620
        %v1659 = vpop.f32.mrf.mxu0
        %v1660 = vadd.f32 0.0, %v1659
        %v1661 = vpop.f32.mrf.mxu0
        %v1662 = vpop.f32.mrf.mxu0
        %v1663 = vpop.f32.mrf.mxu0
        %1664 = vdwg.mxu0
        %v1665 = vmul.f32 %v1660, 0.17677669
        %v1666 = vadd.f32 %v1665, %v1089
        %v1667 = vsel %vm1440, %v1666, -inf
        %1668 = vmax.xlane.f32.xlu0 %v1667
        %v1669 = vpop.xlane.xlu0 %1668
        %v1670 = vsub.f32 %v1666, %v1669
        %v1671 = vmul.f32 %v1670, 1.442695
        %v1672 = vpow.pop %v1671
        %v1673 = vsel %vm1440, %v1672, 0.0
        %1674 = vadd.xlane.f32.xlu0 %v1673
        %v1675 = vpop.xlane.xlu0 %1674
        %v1676 = vrcp.pop %v1675
        %v1677 = vmul.f32 %v1672, %v1676
        %v1678 = vpack.c.bf16 %v1677, %v1677
        %1679 = vrot.lane.b32.xlu0 %v1390, 64
        %v1680 = vpop.permute.xlu0 %1679
        %v1682 = vsel %vm1440, %v1678, 0
        %v1685 = vsel %vm1456, %v1680, 0
        %1687 = vmatprep.subr.bf16.mxu0 0
        %1688 = vmatpush1.bf16.msra.mxu0 0
        %1689 = vmatprep.subr.bf16.mxu0 0
        %1690 = vmatpush1.bf16.msra.mxu0 0
        %1691 = vmatprep.subr.bf16.mxu0 0
        %1692 = vmatpush1.bf16.msra.mxu0 0
        %1693 = vmatprep.subr.bf16.mxu0 0
        %1694 = vmatpush1.bf16.msra.mxu0 0
        %1695 = vmatprep.subr.bf16.mxu0 0
        %1696 = vmatpush1.bf16.msra.mxu0 0
        %1697 = vmatprep.subr.bf16.mxu0 0
        %1698 = vmatpush1.bf16.msra.mxu0 0
        %1699 = vmatprep.subr.bf16.mxu0 0
        %1700 = vmatpush1.bf16.msra.mxu0 0
        %1701 = vmatprep.subr.bf16.mxu0 0
        %1702 = vmatpush1.bf16.msra.mxu0 %v1685
        %1703 = vmatprep.subr.bf16.mxu0 0
        %1704 = vmatpush2.bf16.msra.mxu0 0
        %1705 = vmatprep.subr.bf16.mxu0 0
        %1706 = vmatpush2.bf16.msra.mxu0 0
        %1707 = vmatprep.subr.bf16.mxu0 0
        %1708 = vmatpush2.bf16.msra.mxu0 0
        %1709 = vmatprep.subr.bf16.mxu0 0
        %1710 = vmatpush2.bf16.msra.mxu0 0
        %1711 = vmatprep.subr.bf16.mxu0 0
        %1712 = vmatpush2.bf16.msra.mxu0 0
        %1713 = vmatprep.subr.bf16.mxu0 0
        %1714 = vmatpush2.bf16.msra.mxu0 0
        %1715 = vmatprep.subr.bf16.mxu0 0
        %1716 = vmatpush2.bf16.msra.mxu0 0
        %1717 = vmatprep.subr.bf16.mxu0 0
        %1718 = vmatpush2.bf16.msra.mxu0 0
        %1719 = vmatprep.mubr.bf16.mxu0 0
        %1720 = vmatmul.mubr.bf16.gmra.mxu0 %v1682
        %v1721 = vpop.f32.mrf.mxu0
        %v1722 = vadd.f32 0.0, %v1721
        %v1723 = vpop.f32.mrf.mxu0
        %v1724 = vpop.f32.mrf.mxu0
        %v1725 = vpop.f32.mrf.mxu0
        %1726 = vdwg.mxu0
        %1727 = vrot.lane.b32.xlu0 %v1388, 32
        %v1728 = vpop.permute.xlu0 %1727
        %1729 = vrot.lane.b32.xlu0 %v1389, 32
        %v1730 = vpop.permute.xlu0 %1729
        %v1732 = vsel %vm1391, %v1728, 0
        %v1735 = vsel %vm1391, %v1730, 0
        %1737 = vmatprep.subr.bf16.mxu0 0
        %1738 = vmatpush1.bf16.xpose.msra.mxu0 0
        %1739 = vmatprep.subr.bf16.mxu0 0
        %1740 = vmatpush1.bf16.xpose.msra.mxu0 0
        %1741 = vmatprep.subr.bf16.mxu0 0
        %1742 = vmatpush1.bf16.xpose.msra.mxu0 0
        %1743 = vmatprep.subr.bf16.mxu0 0
        %1744 = vmatpush1.bf16.xpose.msra.mxu0 0
        %1745 = vmatprep.subr.bf16.mxu0 0
        %1746 = vmatpush1.bf16.xpose.msra.mxu0 0
        %1747 = vmatprep.subr.bf16.mxu0 0
        %1748 = vmatpush1.bf16.xpose.msra.mxu0 0
        %1749 = vmatprep.subr.bf16.mxu0 0
        %1750 = vmatpush1.bf16.xpose.msra.mxu0 0
        %1751 = vmatprep.subr.bf16.mxu0 0
        %1752 = vmatpush1.bf16.xpose.msra.mxu0 %v1735
        %1753 = vmatprep.subr.bf16.mxu0 0
        %1754 = vmatpush2.bf16.xpose.msra.mxu0 0
        %1755 = vmatprep.subr.bf16.mxu0 0
        %1756 = vmatpush2.bf16.xpose.msra.mxu0 0
        %1757 = vmatprep.subr.bf16.mxu0 0
        %1758 = vmatpush2.bf16.xpose.msra.mxu0 0
        %1759 = vmatprep.subr.bf16.mxu0 0
        %1760 = vmatpush2.bf16.xpose.msra.mxu0 0
        %1761 = vmatprep.subr.bf16.mxu0 0
        %1762 = vmatpush2.bf16.xpose.msra.mxu0 0
        %1763 = vmatprep.subr.bf16.mxu0 0
        %1764 = vmatpush2.bf16.xpose.msra.mxu0 0
        %1765 = vmatprep.subr.bf16.mxu0 0
        %1766 = vmatpush2.bf16.xpose.msra.mxu0 0
        %1767 = vmatprep.subr.bf16.mxu0 0
        %1768 = vmatpush2.bf16.xpose.msra.mxu0 0
        %1769 = vmatprep.mubr.bf16.mxu0 0
        %1770 = vmatmul.mubr.bf16.gmra.mxu0 %v1732
        %v1771 = vpop.f32.mrf.mxu0
        %v1772 = vadd.f32 0.0, %v1771
        %v1773 = vpop.f32.mrf.mxu0
        %v1774 = vpop.f32.mrf.mxu0
        %v1775 = vpop.f32.mrf.mxu0
        %1776 = vdwg.mxu0
        %v1777 = vmul.f32 %v1772, 0.17677669
        %v1778 = vadd.f32 %v1777, %v1089
        %v1779 = vsel %vm1440, %v1778, -inf
        %1780 = vmax.xlane.f32.xlu0 %v1779
        %v1781 = vpop.xlane.xlu0 %1780
        %v1782 = vsub.f32 %v1778, %v1781
        %v1783 = vmul.f32 %v1782, 1.442695
        %v1784 = vpow.pop %v1783
        %v1785 = vsel %vm1440, %v1784, 0.0
        %1786 = vadd.xlane.f32.xlu0 %v1785
        %v1787 = vpop.xlane.xlu0 %1786
        %v1788 = vrcp.pop %v1787
        %v1789 = vmul.f32 %v1784, %v1788
        %v1790 = vpack.c.bf16 %v1789, %v1789
        %1791 = vrot.lane.b32.xlu0 %v1390, 32
        %v1792 = vpop.permute.xlu0 %1791
        %v1794 = vsel %vm1440, %v1790, 0
        %v1797 = vsel %vm1456, %v1792, 0
        %1799 = vmatprep.subr.bf16.mxu0 0
        %1800 = vmatpush1.bf16.msra.mxu0 0
        %1801 = vmatprep.subr.bf16.mxu0 0
        %1802 = vmatpush1.bf16.msra.mxu0 0
        %1803 = vmatprep.subr.bf16.mxu0 0
        %1804 = vmatpush1.bf16.msra.mxu0 0
        %1805 = vmatprep.subr.bf16.mxu0 0
        %1806 = vmatpush1.bf16.msra.mxu0 0
        %1807 = vmatprep.subr.bf16.mxu0 0
        %1808 = vmatpush1.bf16.msra.mxu0 0
        %1809 = vmatprep.subr.bf16.mxu0 0
        %1810 = vmatpush1.bf16.msra.mxu0 0
        %1811 = vmatprep.subr.bf16.mxu0 0
        %1812 = vmatpush1.bf16.msra.mxu0 0
        %1813 = vmatprep.subr.bf16.mxu0 0
        %1814 = vmatpush1.bf16.msra.mxu0 %v1797
        %1815 = vmatprep.subr.bf16.mxu0 0
        %1816 = vmatpush2.bf16.msra.mxu0 0
        %1817 = vmatprep.subr.bf16.mxu0 0
        %1818 = vmatpush2.bf16.msra.mxu0 0
        %1819 = vmatprep.subr.bf16.mxu0 0
        %1820 = vmatpush2.bf16.msra.mxu0 0
        %1821 = vmatprep.subr.bf16.mxu0 0
        %1822 = vmatpush2.bf16.msra.mxu0 0
        %1823 = vmatprep.subr.bf16.mxu0 0
        %1824 = vmatpush2.bf16.msra.mxu0 0
        %1825 = vmatprep.subr.bf16.mxu0 0
        %1826 = vmatpush2.bf16.msra.mxu0 0
        %1827 = vmatprep.subr.bf16.mxu0 0
        %1828 = vmatpush2.bf16.msra.mxu0 0
        %1829 = vmatprep.subr.bf16.mxu0 0
        %1830 = vmatpush2.bf16.msra.mxu0 0
        %1831 = vmatprep.mubr.bf16.mxu0 0
        %1832 = vmatmul.mubr.bf16.gmra.mxu0 %v1794
        %v1833 = vpop.f32.mrf.mxu0
        %v1834 = vadd.f32 0.0, %v1833
        %v1835 = vpop.f32.mrf.mxu0
        %v1836 = vpop.f32.mrf.mxu0
        %v1837 = vpop.f32.mrf.mxu0
        %1838 = vdwg.mxu0
        %1840 = vrot.lane.b32.xlu0 %v1610, 32
        %v1841 = vpop.permute.xlu0 %1840
        %1844 = vrot.lane.b32.xlu0 %v1722, 64
        %v1845 = vpop.permute.xlu0 %1844
        %1848 = vrot.lane.b32.xlu0 %v1834, 96
        %v1849 = vpop.permute.xlu0 %1848
        %v1851 = vsel %vm1391, %v1495, %v1841
        %vm1852 = vcmask 523264
        %v1853 = vsel %vm1852, %v1851, %v1845
        %vm1854 = vcmask 785408
        %v1855 = vsel %vm1854, %v1853, %v1849
        %v1856 = vld [vmem:[#allocation7] sm:$0xf]
        %v1857 = vld [vmem:[#allocation7 + $0x4] sm:$0xf]
        %v1858 = vld [vmem:[#allocation7 + $0x8] sm:$0xf]
        %v1859 = vld [vmem:[#allocation7 + $0xc] sm:$0xf]
        %v1860 = vld [vmem:[#allocation7 + $0x10] sm:$0xf]
        %v1861 = vld [vmem:[#allocation7 + $0x14] sm:$0xf]
        %v1862 = vld [vmem:[#allocation7 + $0x18] sm:$0xf]
        %v1863 = vld [vmem:[#allocation7 + $0x1c] sm:$0xf]
        %v1864 = vld [vmem:[#allocation7 + $0x20] sm:$0xf]
        %v1865 = vld [vmem:[#allocation7 + $0x24] sm:$0xf]
        %v1866 = vld [vmem:[#allocation7 + $0x28] sm:$0xf]
        %v1867 = vld [vmem:[#allocation7 + $0x2c] sm:$0xf]
        %v1868 = vld [vmem:[#allocation7 + $0x30] sm:$0xf]
        %v1869 = vld [vmem:[#allocation7 + $0x34] sm:$0xf]
        %v1870 = vld [vmem:[#allocation7 + $0x38] sm:$0xf]
        %v1871 = vld [vmem:[#allocation7 + $0x3c] sm:$0xf]
        %v1872 = vld [vmem:[#allocation9] sm:$0x1]
        %v1873 = vpack.c.bf16 %v1855, %v1855
        %v1875 = vlaneseq
        %v1876 = vshrl.u32 %v1875, 7
        %v1877 = vsub.s32 0, %v1876
        %v1878 = vrot.slane %v1872, %v1877
        %v1896 = vunpack.c.l.b16 %v1856
        %v1897 = vunpack.c.l.b16 %v1857
        %v1898 = vunpack.c.l.b16 %v1858
        %v1899 = vunpack.c.l.b16 %v1859
        %v1900 = vunpack.c.l.b16 %v1860
        %v1901 = vunpack.c.l.b16 %v1861
        %v1902 = vunpack.c.l.b16 %v1862
        %v1903 = vunpack.c.l.b16 %v1863
        %v1904 = vunpack.c.l.b16 %v1864
        %v1905 = vunpack.c.l.b16 %v1865
        %v1906 = vunpack.c.l.b16 %v1866
        %v1907 = vunpack.c.l.b16 %v1867
        %v1908 = vunpack.c.l.b16 %v1868
        %v1909 = vunpack.c.l.b16 %v1869
        %v1910 = vunpack.c.l.b16 %v1870
        %v1911 = vunpack.c.l.b16 %v1871
        %v1912 = vpack.c.b16 %v1897, %v1896
        %v1913 = vpack.c.b16 %v1899, %v1898
        %v1914 = vpack.c.b16 %v1901, %v1900
        %v1915 = vpack.c.b16 %v1903, %v1902
        %v1916 = vpack.c.b16 %v1905, %v1904
        %v1917 = vpack.c.b16 %v1907, %v1906
        %v1918 = vpack.c.b16 %v1909, %v1908
        %v1919 = vpack.c.b16 %v1911, %v1910
        %1928 = vmatprep.subr.bf16.mxu0 0
        %1929 = vmatpush1.bf16.msra.mxu0 %v1919
        %1930 = vmatprep.subr.bf16.mxu0 0
        %1931 = vmatpush1.bf16.msra.mxu0 %v1918
        %1932 = vmatprep.subr.bf16.mxu0 0
        %1933 = vmatpush1.bf16.msra.mxu0 %v1917
        %1934 = vmatprep.subr.bf16.mxu0 0
        %1935 = vmatpush1.bf16.msra.mxu0 %v1916
        %1936 = vmatprep.subr.bf16.mxu0 0
        %1937 = vmatpush1.bf16.msra.mxu0 %v1915
        %1938 = vmatprep.subr.bf16.mxu0 0
        %1939 = vmatpush1.bf16.msra.mxu0 %v1914
        %1940 = vmatprep.subr.bf16.mxu0 0
        %1941 = vmatpush1.bf16.msra.mxu0 %v1913
        %1942 = vmatprep.subr.bf16.mxu0 0
        %1943 = vmatpush1.bf16.msra.mxu0 %v1912
        %1944 = vmatprep.subr.bf16.mxu0 0
        %1945 = vmatpush2.bf16.msra.mxu0 0
        %1946 = vmatprep.subr.bf16.mxu0 0
        %1947 = vmatpush2.bf16.msra.mxu0 0
        %1948 = vmatprep.subr.bf16.mxu0 0
        %1949 = vmatpush2.bf16.msra.mxu0 0
        %1950 = vmatprep.subr.bf16.mxu0 0
        %1951 = vmatpush2.bf16.msra.mxu0 0
        %1952 = vmatprep.subr.bf16.mxu0 0
        %1953 = vmatpush2.bf16.msra.mxu0 0
        %1954 = vmatprep.subr.bf16.mxu0 0
        %1955 = vmatpush2.bf16.msra.mxu0 0
        %1956 = vmatprep.subr.bf16.mxu0 0
        %1957 = vmatpush2.bf16.msra.mxu0 0
        %1958 = vmatprep.subr.bf16.mxu0 0
        %1959 = vmatpush2.bf16.msra.mxu0 0
        %1960 = vmatprep.mubr.bf16.mxu0 0
        %1961 = vmatmul.mubr.bf16.gmra.mxu0 %v1873
        %v1962 = vpop.f32.mrf.mxu0
        %v1963 = vadd.f32 %v1878, %v1962
        %v1964 = vpop.f32.mrf.mxu0
        %v1965 = vpop.f32.mrf.mxu0
        %v1966 = vpop.f32.mrf.mxu0
        %1967 = vdwg.mxu0
        %v1968 = vadd.f32 %v1084, %v1963
        %v1969 = vld [vmem:[#allocation10] sm:$0x1]
        %v1970 = vld [vmem:[#allocation12] sm:$0x1]
        %1971 = vadd.xlane.f32.xlu0 %v1968
        %v1972 = vpop.xlane.xlu0 %1971
        %v1973 = vmul.f32 %v1972, %v1098
        %v1974 = vsub.f32 %v1968, %v1973
        %v1975 = vmul.f32 %v1974, %v1974
        %1976 = vadd.xlane.f32.xlu0 %v1975
        %v1977 = vpop.xlane.xlu0 %1976
        %v1978 = vmul.f32 %v1977, 0.007874016
        %v1979 = vrsqrt.pop %v1978
        %v1980 = vmul.f32 %v1978, %v1979
        %vm1981 = vcmp.eq.f32.partialorder %v1978, inf
        %v1982 = vsel %vm1981, %v1978, %v1980
        %vm1983 = vcmp.eq.f32.partialorder %v1978, 0.0
        %v1984 = vand.u32 %v1978, 2147483648
        %v1985 = vsel %vm1983, %v1984, %v1982
        %v1987 = vlaneseq
        %v1988 = vshrl.u32 %v1987, 7
        %v1989 = vsub.s32 0, %v1988
        %v1990 = vrot.slane %v1969, %v1989
        %v1992 = vmul.f32 %v1990, %v1974
        %v1993 = vadd.f32 %v1985, 1e-06
        %v1994 = vrcp.pop %v1993
        %v1995 = vmul.f32 %v1992, %v1994
        %v1997 = vlaneseq
        %v1998 = vshrl.u32 %v1997, 7
        %v1999 = vsub.s32 0, %v1998
        %v2000 = vrot.slane %v1970, %v1999
        %v2002 = vadd.f32 %v1995, %v2000
        %v2003 = vld [vmem:[#allocation13] sm:$0xf]
        %v2004 = vld [vmem:[#allocation13 + $0x4] sm:$0xf]
        %v2005 = vld [vmem:[#allocation13 + $0x8] sm:$0xf]
        %v2006 = vld [vmem:[#allocation13 + $0xc] sm:$0xf]
        %v2007 = vld [vmem:[#allocation13 + $0x10] sm:$0xf]
        %v2008 = vld [vmem:[#allocation13 + $0x14] sm:$0xf]
        %v2009 = vld [vmem:[#allocation13 + $0x18] sm:$0xf]
        %v2010 = vld [vmem:[#allocation13 + $0x1c] sm:$0xf]
        %v2011 = vld [vmem:[#allocation13 + $0x20] sm:$0xf]
        %v2012 = vld [vmem:[#allocation13 + $0x24] sm:$0xf]
        %v2013 = vld [vmem:[#allocation13 + $0x28] sm:$0xf]
        %v2014 = vld [vmem:[#allocation13 + $0x2c] sm:$0xf]
        %v2015 = vld [vmem:[#allocation13 + $0x30] sm:$0xf]
        %v2016 = vld [vmem:[#allocation13 + $0x34] sm:$0xf]
        %v2017 = vld [vmem:[#allocation13 + $0x38] sm:$0xf]
        %v2018 = vld [vmem:[#allocation13 + $0x3c] sm:$0xf]
        %v2019 = vld [vmem:[#allocation15] sm:$0x1]
        %v2020 = vpack.c.bf16 %v2002, %v2002
        %v2022 = vlaneseq
        %v2023 = vshrl.u32 %v2022, 7
        %v2024 = vsub.s32 0, %v2023
        %v2025 = vrot.slane %v2019, %v2024
        %v2043 = vunpack.c.l.b16 %v2003
        %v2044 = vunpack.c.l.b16 %v2004
        %v2045 = vunpack.c.l.b16 %v2005
        %v2046 = vunpack.c.l.b16 %v2006
        %v2047 = vunpack.c.l.b16 %v2007
        %v2048 = vunpack.c.l.b16 %v2008
        %v2049 = vunpack.c.l.b16 %v2009
        %v2050 = vunpack.c.l.b16 %v2010
        %v2051 = vunpack.c.l.b16 %v2011
        %v2052 = vunpack.c.l.b16 %v2012
        %v2053 = vunpack.c.l.b16 %v2013
        %v2054 = vunpack.c.l.b16 %v2014
        %v2055 = vunpack.c.l.b16 %v2015
        %v2056 = vunpack.c.l.b16 %v2016
        %v2057 = vunpack.c.l.b16 %v2017
        %v2058 = vunpack.c.l.b16 %v2018
        %v2059 = vpack.c.b16 %v2044, %v2043
        %v2060 = vpack.c.b16 %v2046, %v2045
        %v2061 = vpack.c.b16 %v2048, %v2047
        %v2062 = vpack.c.b16 %v2050, %v2049
        %v2063 = vpack.c.b16 %v2052, %v2051
        %v2064 = vpack.c.b16 %v2054, %v2053
        %v2065 = vpack.c.b16 %v2056, %v2055
        %v2066 = vpack.c.b16 %v2058, %v2057
        %2075 = vmatprep.subr.bf16.mxu0 0
        %2076 = vmatpush1.bf16.msra.mxu0 %v2066
        %2077 = vmatprep.subr.bf16.mxu0 0
        %2078 = vmatpush1.bf16.msra.mxu0 %v2065
        %2079 = vmatprep.subr.bf16.mxu0 0
        %2080 = vmatpush1.bf16.msra.mxu0 %v2064
        %2081 = vmatprep.subr.bf16.mxu0 0
        %2082 = vmatpush1.bf16.msra.mxu0 %v2063
        %2083 = vmatprep.subr.bf16.mxu0 0
        %2084 = vmatpush1.bf16.msra.mxu0 %v2062
        %2085 = vmatprep.subr.bf16.mxu0 0
        %2086 = vmatpush1.bf16.msra.mxu0 %v2061
        %2087 = vmatprep.subr.bf16.mxu0 0
        %2088 = vmatpush1.bf16.msra.mxu0 %v2060
        %2089 = vmatprep.subr.bf16.mxu0 0
        %2090 = vmatpush1.bf16.msra.mxu0 %v2059
        %2091 = vmatprep.subr.bf16.mxu0 0
        %2092 = vmatpush2.bf16.msra.mxu0 0
        %2093 = vmatprep.subr.bf16.mxu0 0
        %2094 = vmatpush2.bf16.msra.mxu0 0
        %2095 = vmatprep.subr.bf16.mxu0 0
        %2096 = vmatpush2.bf16.msra.mxu0 0
        %2097 = vmatprep.subr.bf16.mxu0 0
        %2098 = vmatpush2.bf16.msra.mxu0 0
        %2099 = vmatprep.subr.bf16.mxu0 0
        %2100 = vmatpush2.bf16.msra.mxu0 0
        %2101 = vmatprep.subr.bf16.mxu0 0
        %2102 = vmatpush2.bf16.msra.mxu0 0
        %2103 = vmatprep.subr.bf16.mxu0 0
        %2104 = vmatpush2.bf16.msra.mxu0 0
        %2105 = vmatprep.subr.bf16.mxu0 0
        %2106 = vmatpush2.bf16.msra.mxu0 0
        %2107 = vmatprep.mubr.bf16.mxu0 0
        %2108 = vmatmul.mubr.bf16.gmra.mxu0 %v2020
        %v2109 = vpop.f32.mrf.mxu0
        %v2110 = vadd.f32 %v2025, %v2109
        %v2111 = vpop.f32.mrf.mxu0
        %v2112 = vpop.f32.mrf.mxu0
        %v2113 = vpop.f32.mrf.mxu0
        %2114 = vdwg.mxu0
        %v2115 = vld [vmem:[#allocation16] sm:$0xff]
        %v2116 = vld [vmem:[#allocation16 + $0x8] sm:$0xff]
        %v2117 = vld [vmem:[#allocation16 + $0x10] sm:$0xff]
        %v2118 = vld [vmem:[#allocation16 + $0x18] sm:$0xff]
        %v2119 = vld [vmem:[#allocation16 + $0x20] sm:$0xff]
        %v2120 = vld [vmem:[#allocation16 + $0x28] sm:$0xff]
        %v2121 = vld [vmem:[#allocation16 + $0x30] sm:$0xff]
        %v2122 = vld [vmem:[#allocation16 + $0x38] sm:$0xff]
        %v2123 = vld [vmem:[#allocation16 + $0x40] sm:$0xff]
        %v2124 = vld [vmem:[#allocation16 + $0x48] sm:$0xff]
        %v2125 = vld [vmem:[#allocation16 + $0x50] sm:$0xff]
        %v2126 = vld [vmem:[#allocation16 + $0x58] sm:$0xff]
        %v2127 = vld [vmem:[#allocation16 + $0x60] sm:$0xff]
        %v2128 = vld [vmem:[#allocation16 + $0x68] sm:$0xff]
        %v2129 = vld [vmem:[#allocation16 + $0x70] sm:$0xff]
        %v2130 = vld [vmem:[#allocation16 + $0x78] sm:$0xff]
        %v2131 = vld [vmem:[#allocation18] sm:$0x3]
        %v2132 = vpack.c.bf16 %v1085, %v1085
        %v2134 = vlaneseq
        %v2135 = vshrl.u32 %v2134, 7
        %v2136 = vsub.s32 0, %v2135
        %v2137 = vrot.slane %v2131, %v2136
        %v2138 = vlaneseq
        %v2139 = vshrl.u32 %v2138, 7
        %v2140 = vsub.s32 1, %v2139
        %v2141 = vrot.slane %v2131, %v2140
        %v2160 = vunpack.c.l.b16 %v2115
        %v2161 = vunpack.c.h.b16 %v2115
        %v2162 = vunpack.c.l.b16 %v2116
        %v2163 = vunpack.c.h.b16 %v2116
        %v2164 = vunpack.c.l.b16 %v2117
        %v2165 = vunpack.c.h.b16 %v2117
        %v2166 = vunpack.c.l.b16 %v2118
        %v2167 = vunpack.c.h.b16 %v2118
        %v2168 = vunpack.c.l.b16 %v2119
        %v2169 = vunpack.c.h.b16 %v2119
        %v2170 = vunpack.c.l.b16 %v2120
        %v2171 = vunpack.c.h.b16 %v2120
        %v2172 = vunpack.c.l.b16 %v2121
        %v2173 = vunpack.c.h.b16 %v2121
        %v2174 = vunpack.c.l.b16 %v2122
        %v2175 = vunpack.c.h.b16 %v2122
        %v2176 = vunpack.c.l.b16 %v2123
        %v2177 = vunpack.c.h.b16 %v2123
        %v2178 = vunpack.c.l.b16 %v2124
        %v2179 = vunpack.c.h.b16 %v2124
        %v2180 = vunpack.c.l.b16 %v2125
        %v2181 = vunpack.c.h.b16 %v2125
        %v2182 = vunpack.c.l.b16 %v2126
        %v2183 = vunpack.c.h.b16 %v2126
        %v2184 = vunpack.c.l.b16 %v2127
        %v2185 = vunpack.c.h.b16 %v2127
        %v2186 = vunpack.c.l.b16 %v2128
        %v2187 = vunpack.c.h.b16 %v2128
        %v2188 = vunpack.c.l.b16 %v2129
        %v2189 = vunpack.c.h.b16 %v2129
        %v2190 = vunpack.c.l.b16 %v2130
        %v2191 = vunpack.c.h.b16 %v2130
        %v2192 = vpack.c.b16 %v2162, %v2160
        %v2193 = vpack.c.b16 %v2163, %v2161
        %v2194 = vpack.c.b16 %v2166, %v2164
        %v2195 = vpack.c.b16 %v2167, %v2165
        %v2196 = vpack.c.b16 %v2170, %v2168
        %v2197 = vpack.c.b16 %v2171, %v2169
        %v2198 = vpack.c.b16 %v2174, %v2172
        %v2199 = vpack.c.b16 %v2175, %v2173
        %v2200 = vpack.c.b16 %v2178, %v2176
        %v2201 = vpack.c.b16 %v2179, %v2177
        %v2202 = vpack.c.b16 %v2182, %v2180
        %v2203 = vpack.c.b16 %v2183, %v2181
        %v2204 = vpack.c.b16 %v2186, %v2184
        %v2205 = vpack.c.b16 %v2187, %v2185
        %v2206 = vpack.c.b16 %v2190, %v2188
        %v2207 = vpack.c.b16 %v2191, %v2189
        %2224 = vmatprep.subr.bf16.mxu0 %v2207
        %2225 = vmatpush1.bf16.msra.mxu0 %v2206
        %2226 = vmatprep.subr.bf16.mxu0 %v2205
        %2227 = vmatpush1.bf16.msra.mxu0 %v2204
        %2228 = vmatprep.subr.bf16.mxu0 %v2203
        %2229 = vmatpush1.bf16.msra.mxu0 %v2202
        %2230 = vmatprep.subr.bf16.mxu0 %v2201
        %2231 = vmatpush1.bf16.msra.mxu0 %v2200
        %2232 = vmatprep.subr.bf16.mxu0 %v2199
        %2233 = vmatpush1.bf16.msra.mxu0 %v2198
        %2234 = vmatprep.subr.bf16.mxu0 %v2197
        %2235 = vmatpush1.bf16.msra.mxu0 %v2196
        %2236 = vmatprep.subr.bf16.mxu0 %v2195
        %2237 = vmatpush1.bf16.msra.mxu0 %v2194
        %2238 = vmatprep.subr.bf16.mxu0 %v2193
        %2239 = vmatpush1.bf16.msra.mxu0 %v2192
        %2240 = vmatprep.subr.bf16.mxu0 0
        %2241 = vmatpush2.bf16.msra.mxu0 0
        %2242 = vmatprep.subr.bf16.mxu0 0
        %2243 = vmatpush2.bf16.msra.mxu0 0
        %2244 = vmatprep.subr.bf16.mxu0 0
        %2245 = vmatpush2.bf16.msra.mxu0 0
        %2246 = vmatprep.subr.bf16.mxu0 0
        %2247 = vmatpush2.bf16.msra.mxu0 0
        %2248 = vmatprep.subr.bf16.mxu0 0
        %2249 = vmatpush2.bf16.msra.mxu0 0
        %2250 = vmatprep.subr.bf16.mxu0 0
        %2251 = vmatpush2.bf16.msra.mxu0 0
        %2252 = vmatprep.subr.bf16.mxu0 0
        %2253 = vmatpush2.bf16.msra.mxu0 0
        %2254 = vmatprep.subr.bf16.mxu0 0
        %2255 = vmatpush2.bf16.msra.mxu0 0
        %2256 = vmatprep.mubr.bf16.mxu0 0
        %2257 = vmatmul.mubr.bf16.gmra.mxu0 %v2132
        %v2258 = vpop.f32.mrf.mxu0
        %v2259 = vadd.f32 %v2137, %v2258
        %v2260 = vpop.f32.mrf.mxu0
        %v2261 = vadd.f32 %v2141, %v2260
        %v2262 = vpop.f32.mrf.mxu0
        %v2263 = vpop.f32.mrf.mxu0
        %2264 = vdwg.mxu0
        %v2265 = vpack.c.bf16 %v2110, %v2110
        %v2266 = vpack.c.bf16 %v2259, %v2259
        %v2267 = vpack.c.bf16 %v2261, %v2261
        %v2269 = vsel %vm1391, %v2265, 0
        %v2272 = vsel %vm1391, %v2266, 0
        %2274 = vmatprep.subr.bf16.mxu0 0
        %2275 = vmatpush1.bf16.xpose.msra.mxu0 0
        %2276 = vmatprep.subr.bf16.mxu0 0
        %2277 = vmatpush1.bf16.xpose.msra.mxu0 0
        %2278 = vmatprep.subr.bf16.mxu0 0
        %2279 = vmatpush1.bf16.xpose.msra.mxu0 0
        %2280 = vmatprep.subr.bf16.mxu0 0
        %2281 = vmatpush1.bf16.xpose.msra.mxu0 0
        %2282 = vmatprep.subr.bf16.mxu0 0
        %2283 = vmatpush1.bf16.xpose.msra.mxu0 0
        %2284 = vmatprep.subr.bf16.mxu0 0
        %2285 = vmatpush1.bf16.xpose.msra.mxu0 0
        %2286 = vmatprep.subr.bf16.mxu0 0
        %2287 = vmatpush1.bf16.xpose.msra.mxu0 0
        %2288 = vmatprep.subr.bf16.mxu0 0
        %2289 = vmatpush1.bf16.xpose.msra.mxu0 %v2272
        %2290 = vmatprep.subr.bf16.mxu0 0
        %2291 = vmatpush2.bf16.xpose.msra.mxu0 0
        %2292 = vmatprep.subr.bf16.mxu0 0
        %2293 = vmatpush2.bf16.xpose.msra.mxu0 0
        %2294 = vmatprep.subr.bf16.mxu0 0
        %2295 = vmatpush2.bf16.xpose.msra.mxu0 0
        %2296 = vmatprep.subr.bf16.mxu0 0
        %2297 = vmatpush2.bf16.xpose.msra.mxu0 0
        %2298 = vmatprep.subr.bf16.mxu0 0
        %2299 = vmatpush2.bf16.xpose.msra.mxu0 0
        %2300 = vmatprep.subr.bf16.mxu0 0
        %2301 = vmatpush2.bf16.xpose.msra.mxu0 0
        %2302 = vmatprep.subr.bf16.mxu0 0
        %2303 = vmatpush2.bf16.xpose.msra.mxu0 0
        %2304 = vmatprep.subr.bf16.mxu0 0
        %2305 = vmatpush2.bf16.xpose.msra.mxu0 0
        %2306 = vmatprep.mubr.bf16.mxu0 0
        %2307 = vmatmul.mubr.bf16.gmra.mxu0 %v2269
        %v2308 = vpop.f32.mrf.mxu0
        %v2309 = vadd.f32 0.0, %v2308
        %v2310 = vpop.f32.mrf.mxu0
        %v2311 = vpop.f32.mrf.mxu0
        %v2312 = vpop.f32.mrf.mxu0
        %2313 = vdwg.mxu0
        %v2314 = vmul.f32 %v2309, 0.17677669
        %v2315 = vadd.f32 %v2314, %v1093
        %v2316 = vsel %vm1440, %v2315, -inf
        %2317 = vmax.xlane.f32.xlu0 %v2316
        %v2318 = vpop.xlane.xlu0 %2317
        %v2319 = vsub.f32 %v2315, %v2318
        %v2320 = vmul.f32 %v2319, 1.442695
        %v2321 = vpow.pop %v2320
        %v2322 = vsel %vm1440, %v2321, 0.0
        %2323 = vadd.xlane.f32.xlu0 %v2322
        %v2324 = vpop.xlane.xlu0 %2323
        %v2325 = vrcp.pop %v2324
        %v2326 = vmul.f32 %v2321, %v2325
        %v2327 = vpack.c.bf16 %v2326, %v2326
        %v2329 = vsel %vm1440, %v2327, 0
        %v2332 = vsel %vm1456, %v2267, 0
        %2334 = vmatprep.subr.bf16.mxu0 0
        %2335 = vmatpush1.bf16.msra.mxu0 0
        %2336 = vmatprep.subr.bf16.mxu0 0
        %2337 = vmatpush1.bf16.msra.mxu0 0
        %2338 = vmatprep.subr.bf16.mxu0 0
        %2339 = vmatpush1.bf16.msra.mxu0 0
        %2340 = vmatprep.subr.bf16.mxu0 0
        %2341 = vmatpush1.bf16.msra.mxu0 0
        %2342 = vmatprep.subr.bf16.mxu0 0
        %2343 = vmatpush1.bf16.msra.mxu0 0
        %2344 = vmatprep.subr.bf16.mxu0 0
        %2345 = vmatpush1.bf16.msra.mxu0 0
        %2346 = vmatprep.subr.bf16.mxu0 0
        %2347 = vmatpush1.bf16.msra.mxu0 0
        %2348 = vmatprep.subr.bf16.mxu0 0
        %2349 = vmatpush1.bf16.msra.mxu0 %v2332
        %2350 = vmatprep.subr.bf16.mxu0 0
        %2351 = vmatpush2.bf16.msra.mxu0 0
        %2352 = vmatprep.subr.bf16.mxu0 0
        %2353 = vmatpush2.bf16.msra.mxu0 0
        %2354 = vmatprep.subr.bf16.mxu0 0
        %2355 = vmatpush2.bf16.msra.mxu0 0
        %2356 = vmatprep.subr.bf16.mxu0 0
        %2357 = vmatpush2.bf16.msra.mxu0 0
        %2358 = vmatprep.subr.bf16.mxu0 0
        %2359 = vmatpush2.bf16.msra.mxu0 0
        %2360 = vmatprep.subr.bf16.mxu0 0
        %2361 = vmatpush2.bf16.msra.mxu0 0
        %2362 = vmatprep.subr.bf16.mxu0 0
        %2363 = vmatpush2.bf16.msra.mxu0 0
        %2364 = vmatprep.subr.bf16.mxu0 0
        %2365 = vmatpush2.bf16.msra.mxu0 0
        %2366 = vmatprep.mubr.bf16.mxu0 0
        %2367 = vmatmul.mubr.bf16.gmra.mxu0 %v2329
        %v2368 = vpop.f32.mrf.mxu0
        %v2369 = vadd.f32 0.0, %v2368
        %v2370 = vpop.f32.mrf.mxu0
        %v2371 = vpop.f32.mrf.mxu0
        %v2372 = vpop.f32.mrf.mxu0
        %2373 = vdwg.mxu0
        %2375 = vrot.lane.b32.xlu0 %v2265, 96
        %v2376 = vpop.permute.xlu0 %2375
        %2378 = vrot.lane.b32.xlu0 %v2266, 96
        %v2379 = vpop.permute.xlu0 %2378
        %v2381 = vsel %vm1391, %v2376, 0
        %v2384 = vsel %vm1391, %v2379, 0
        %2386 = vmatprep.subr.bf16.mxu0 0
        %2387 = vmatpush1.bf16.xpose.msra.mxu0 0
        %2388 = vmatprep.subr.bf16.mxu0 0
        %2389 = vmatpush1.bf16.xpose.msra.mxu0 0
        %2390 = vmatprep.subr.bf16.mxu0 0
        %2391 = vmatpush1.bf16.xpose.msra.mxu0 0
        %2392 = vmatprep.subr.bf16.mxu0 0
        %2393 = vmatpush1.bf16.xpose.msra.mxu0 0
        %2394 = vmatprep.subr.bf16.mxu0 0
        %2395 = vmatpush1.bf16.xpose.msra.mxu0 0
        %2396 = vmatprep.subr.bf16.mxu0 0
        %2397 = vmatpush1.bf16.xpose.msra.mxu0 0
        %2398 = vmatprep.subr.bf16.mxu0 0
        %2399 = vmatpush1.bf16.xpose.msra.mxu0 0
        %2400 = vmatprep.subr.bf16.mxu0 0
        %2401 = vmatpush1.bf16.xpose.msra.mxu0 %v2384
        %2402 = vmatprep.subr.bf16.mxu0 0
        %2403 = vmatpush2.bf16.xpose.msra.mxu0 0
        %2404 = vmatprep.subr.bf16.mxu0 0
        %2405 = vmatpush2.bf16.xpose.msra.mxu0 0
        %2406 = vmatprep.subr.bf16.mxu0 0
        %2407 = vmatpush2.bf16.xpose.msra.mxu0 0
        %2408 = vmatprep.subr.bf16.mxu0 0
        %2409 = vmatpush2.bf16.xpose.msra.mxu0 0
        %2410 = vmatprep.subr.bf16.mxu0 0
        %2411 = vmatpush2.bf16.xpose.msra.mxu0 0
        %2412 = vmatprep.subr.bf16.mxu0 0
        %2413 = vmatpush2.bf16.xpose.msra.mxu0 0
        %2414 = vmatprep.subr.bf16.mxu0 0
        %2415 = vmatpush2.bf16.xpose.msra.mxu0 0
        %2416 = vmatprep.subr.bf16.mxu0 0
        %2417 = vmatpush2.bf16.xpose.msra.mxu0 0
        %2418 = vmatprep.mubr.bf16.mxu0 0
        %2419 = vmatmul.mubr.bf16.gmra.mxu0 %v2381
        %v2420 = vpop.f32.mrf.mxu0
        %v2421 = vadd.f32 0.0, %v2420
        %v2422 = vpop.f32.mrf.mxu0
        %v2423 = vpop.f32.mrf.mxu0
        %v2424 = vpop.f32.mrf.mxu0
        %2425 = vdwg.mxu0
        %v2426 = vmul.f32 %v2421, 0.17677669
        %v2427 = vadd.f32 %v2426, %v1093
        %v2428 = vsel %vm1440, %v2427, -inf
        %2429 = vmax.xlane.f32.xlu0 %v2428
        %v2430 = vpop.xlane.xlu0 %2429
        %v2431 = vsub.f32 %v2427, %v2430
        %v2432 = vmul.f32 %v2431, 1.442695
        %v2433 = vpow.pop %v2432
        %v2434 = vsel %vm1440, %v2433, 0.0
        %2435 = vadd.xlane.f32.xlu0 %v2434
        %v2436 = vpop.xlane.xlu0 %2435
        %v2437 = vrcp.pop %v2436
        %v2438 = vmul.f32 %v2433, %v2437
        %v2439 = vpack.c.bf16 %v2438, %v2438
        %2441 = vrot.lane.b32.xlu0 %v2267, 96
        %v2442 = vpop.permute.xlu0 %2441
        %v2444 = vsel %vm1440, %v2439, 0
        %v2447 = vsel %vm1456, %v2442, 0
        %2449 = vmatprep.subr.bf16.mxu0 0
        %2450 = vmatpush1.bf16.msra.mxu0 0
        %2451 = vmatprep.subr.bf16.mxu0 0
        %2452 = vmatpush1.bf16.msra.mxu0 0
        %2453 = vmatprep.subr.bf16.mxu0 0
        %2454 = vmatpush1.bf16.msra.mxu0 0
        %2455 = vmatprep.subr.bf16.mxu0 0
        %2456 = vmatpush1.bf16.msra.mxu0 0
        %2457 = vmatprep.subr.bf16.mxu0 0
        %2458 = vmatpush1.bf16.msra.mxu0 0
        %2459 = vmatprep.subr.bf16.mxu0 0
        %2460 = vmatpush1.bf16.msra.mxu0 0
        %2461 = vmatprep.subr.bf16.mxu0 0
        %2462 = vmatpush1.bf16.msra.mxu0 0
        %2463 = vmatprep.subr.bf16.mxu0 0
        %2464 = vmatpush1.bf16.msra.mxu0 %v2447
        %2465 = vmatprep.subr.bf16.mxu0 0
        %2466 = vmatpush2.bf16.msra.mxu0 0
        %2467 = vmatprep.subr.bf16.mxu0 0
        %2468 = vmatpush2.bf16.msra.mxu0 0
        %2469 = vmatprep.subr.bf16.mxu0 0
        %2470 = vmatpush2.bf16.msra.mxu0 0
        %2471 = vmatprep.subr.bf16.mxu0 0
        %2472 = vmatpush2.bf16.msra.mxu0 0
        %2473 = vmatprep.subr.bf16.mxu0 0
        %2474 = vmatpush2.bf16.msra.mxu0 0
        %2475 = vmatprep.subr.bf16.mxu0 0
        %2476 = vmatpush2.bf16.msra.mxu0 0
        %2477 = vmatprep.subr.bf16.mxu0 0
        %2478 = vmatpush2.bf16.msra.mxu0 0
        %2479 = vmatprep.subr.bf16.mxu0 0
        %2480 = vmatpush2.bf16.msra.mxu0 0
        %2481 = vmatprep.mubr.bf16.mxu0 0
        %2482 = vmatmul.mubr.bf16.gmra.mxu0 %v2444
        %v2483 = vpop.f32.mrf.mxu0
        %v2484 = vadd.f32 0.0, %v2483
        %v2485 = vpop.f32.mrf.mxu0
        %v2486 = vpop.f32.mrf.mxu0
        %v2487 = vpop.f32.mrf.mxu0
        %2488 = vdwg.mxu0
        %2489 = vrot.lane.b32.xlu0 %v2265, 64
        %v2490 = vpop.permute.xlu0 %2489
        %2491 = vrot.lane.b32.xlu0 %v2266, 64
        %v2492 = vpop.permute.xlu0 %2491
        %v2494 = vsel %vm1391, %v2490, 0
        %v2497 = vsel %vm1391, %v2492, 0
        %2499 = vmatprep.subr.bf16.mxu0 0
        %2500 = vmatpush1.bf16.xpose.msra.mxu0 0
        %2501 = vmatprep.subr.bf16.mxu0 0
        %2502 = vmatpush1.bf16.xpose.msra.mxu0 0
        %2503 = vmatprep.subr.bf16.mxu0 0
        %2504 = vmatpush1.bf16.xpose.msra.mxu0 0
        %2505 = vmatprep.subr.bf16.mxu0 0
        %2506 = vmatpush1.bf16.xpose.msra.mxu0 0
        %2507 = vmatprep.subr.bf16.mxu0 0
        %2508 = vmatpush1.bf16.xpose.msra.mxu0 0
        %2509 = vmatprep.subr.bf16.mxu0 0
        %2510 = vmatpush1.bf16.xpose.msra.mxu0 0
        %2511 = vmatprep.subr.bf16.mxu0 0
        %2512 = vmatpush1.bf16.xpose.msra.mxu0 0
        %2513 = vmatprep.subr.bf16.mxu0 0
        %2514 = vmatpush1.bf16.xpose.msra.mxu0 %v2497
        %2515 = vmatprep.subr.bf16.mxu0 0
        %2516 = vmatpush2.bf16.xpose.msra.mxu0 0
        %2517 = vmatprep.subr.bf16.mxu0 0
        %2518 = vmatpush2.bf16.xpose.msra.mxu0 0
        %2519 = vmatprep.subr.bf16.mxu0 0
        %2520 = vmatpush2.bf16.xpose.msra.mxu0 0
        %2521 = vmatprep.subr.bf16.mxu0 0
        %2522 = vmatpush2.bf16.xpose.msra.mxu0 0
        %2523 = vmatprep.subr.bf16.mxu0 0
        %2524 = vmatpush2.bf16.xpose.msra.mxu0 0
        %2525 = vmatprep.subr.bf16.mxu0 0
        %2526 = vmatpush2.bf16.xpose.msra.mxu0 0
        %2527 = vmatprep.subr.bf16.mxu0 0
        %2528 = vmatpush2.bf16.xpose.msra.mxu0 0
        %2529 = vmatprep.subr.bf16.mxu0 0
        %2530 = vmatpush2.bf16.xpose.msra.mxu0 0
        %2531 = vmatprep.mubr.bf16.mxu0 0
        %2532 = vmatmul.mubr.bf16.gmra.mxu0 %v2494
        %v2533 = vpop.f32.mrf.mxu0
        %v2534 = vadd.f32 0.0, %v2533
        %v2535 = vpop.f32.mrf.mxu0
        %v2536 = vpop.f32.mrf.mxu0
        %v2537 = vpop.f32.mrf.mxu0
        %2538 = vdwg.mxu0
        %v2539 = vmul.f32 %v2534, 0.17677669
        %v2540 = vadd.f32 %v2539, %v1093
        %v2541 = vsel %vm1440, %v2540, -inf
        %2542 = vmax.xlane.f32.xlu0 %v2541
        %v2543 = vpop.xlane.xlu0 %2542
        %v2544 = vsub.f32 %v2540, %v2543
        %v2545 = vmul.f32 %v2544, 1.442695
        %v2546 = vpow.pop %v2545
        %v2547 = vsel %vm1440, %v2546, 0.0
        %2548 = vadd.xlane.f32.xlu0 %v2547
        %v2549 = vpop.xlane.xlu0 %2548
        %v2550 = vrcp.pop %v2549
        %v2551 = vmul.f32 %v2546, %v2550
        %v2552 = vpack.c.bf16 %v2551, %v2551
        %2553 = vrot.lane.b32.xlu0 %v2267, 64
        %v2554 = vpop.permute.xlu0 %2553
        %v2556 = vsel %vm1440, %v2552, 0
        %v2559 = vsel %vm1456, %v2554, 0
        %2561 = vmatprep.subr.bf16.mxu0 0
        %2562 = vmatpush1.bf16.msra.mxu0 0
        %2563 = vmatprep.subr.bf16.mxu0 0
        %2564 = vmatpush1.bf16.msra.mxu0 0
        %2565 = vmatprep.subr.bf16.mxu0 0
        %2566 = vmatpush1.bf16.msra.mxu0 0
        %2567 = vmatprep.subr.bf16.mxu0 0
        %2568 = vmatpush1.bf16.msra.mxu0 0
        %2569 = vmatprep.subr.bf16.mxu0 0
        %2570 = vmatpush1.bf16.msra.mxu0 0
        %2571 = vmatprep.subr.bf16.mxu0 0
        %2572 = vmatpush1.bf16.msra.mxu0 0
        %2573 = vmatprep.subr.bf16.mxu0 0
        %2574 = vmatpush1.bf16.msra.mxu0 0
        %2575 = vmatprep.subr.bf16.mxu0 0
        %2576 = vmatpush1.bf16.msra.mxu0 %v2559
        %2577 = vmatprep.subr.bf16.mxu0 0
        %2578 = vmatpush2.bf16.msra.mxu0 0
        %2579 = vmatprep.subr.bf16.mxu0 0
        %2580 = vmatpush2.bf16.msra.mxu0 0
        %2581 = vmatprep.subr.bf16.mxu0 0
        %2582 = vmatpush2.bf16.msra.mxu0 0
        %2583 = vmatprep.subr.bf16.mxu0 0
        %2584 = vmatpush2.bf16.msra.mxu0 0
        %2585 = vmatprep.subr.bf16.mxu0 0
        %2586 = vmatpush2.bf16.msra.mxu0 0
        %2587 = vmatprep.subr.bf16.mxu0 0
        %2588 = vmatpush2.bf16.msra.mxu0 0
        %2589 = vmatprep.subr.bf16.mxu0 0
        %2590 = vmatpush2.bf16.msra.mxu0 0
        %2591 = vmatprep.subr.bf16.mxu0 0
        %2592 = vmatpush2.bf16.msra.mxu0 0
        %2593 = vmatprep.mubr.bf16.mxu0 0
        %2594 = vmatmul.mubr.bf16.gmra.mxu0 %v2556
        %v2595 = vpop.f32.mrf.mxu0
        %v2596 = vadd.f32 0.0, %v2595
        %v2597 = vpop.f32.mrf.mxu0
        %v2598 = vpop.f32.mrf.mxu0
        %v2599 = vpop.f32.mrf.mxu0
        %2600 = vdwg.mxu0
        %2601 = vrot.lane.b32.xlu0 %v2265, 32
        %v2602 = vpop.permute.xlu0 %2601
        %2603 = vrot.lane.b32.xlu0 %v2266, 32
        %v2604 = vpop.permute.xlu0 %2603
        %v2606 = vsel %vm1391, %v2602, 0
        %v2609 = vsel %vm1391, %v2604, 0
        %2611 = vmatprep.subr.bf16.mxu0 0
        %2612 = vmatpush1.bf16.xpose.msra.mxu0 0
        %2613 = vmatprep.subr.bf16.mxu0 0
        %2614 = vmatpush1.bf16.xpose.msra.mxu0 0
        %2615 = vmatprep.subr.bf16.mxu0 0
        %2616 = vmatpush1.bf16.xpose.msra.mxu0 0
        %2617 = vmatprep.subr.bf16.mxu0 0
        %2618 = vmatpush1.bf16.xpose.msra.mxu0 0
        %2619 = vmatprep.subr.bf16.mxu0 0
        %2620 = vmatpush1.bf16.xpose.msra.mxu0 0
        %2621 = vmatprep.subr.bf16.mxu0 0
        %2622 = vmatpush1.bf16.xpose.msra.mxu0 0
        %2623 = vmatprep.subr.bf16.mxu0 0
        %2624 = vmatpush1.bf16.xpose.msra.mxu0 0
        %2625 = vmatprep.subr.bf16.mxu0 0
        %2626 = vmatpush1.bf16.xpose.msra.mxu0 %v2609
        %2627 = vmatprep.subr.bf16.mxu0 0
        %2628 = vmatpush2.bf16.xpose.msra.mxu0 0
        %2629 = vmatprep.subr.bf16.mxu0 0
        %2630 = vmatpush2.bf16.xpose.msra.mxu0 0
        %2631 = vmatprep.subr.bf16.mxu0 0
        %2632 = vmatpush2.bf16.xpose.msra.mxu0 0
        %2633 = vmatprep.subr.bf16.mxu0 0
        %2634 = vmatpush2.bf16.xpose.msra.mxu0 0
        %2635 = vmatprep.subr.bf16.mxu0 0
        %2636 = vmatpush2.bf16.xpose.msra.mxu0 0
        %2637 = vmatprep.subr.bf16.mxu0 0
        %2638 = vmatpush2.bf16.xpose.msra.mxu0 0
        %2639 = vmatprep.subr.bf16.mxu0 0
        %2640 = vmatpush2.bf16.xpose.msra.mxu0 0
        %2641 = vmatprep.subr.bf16.mxu0 0
        %2642 = vmatpush2.bf16.xpose.msra.mxu0 0
        %2643 = vmatprep.mubr.bf16.mxu0 0
        %2644 = vmatmul.mubr.bf16.gmra.mxu0 %v2606
        %v2645 = vpop.f32.mrf.mxu0
        %v2646 = vadd.f32 0.0, %v2645
        %v2647 = vpop.f32.mrf.mxu0
        %v2648 = vpop.f32.mrf.mxu0
        %v2649 = vpop.f32.mrf.mxu0
        %2650 = vdwg.mxu0
        %v2651 = vmul.f32 %v2646, 0.17677669
        %v2652 = vadd.f32 %v2651, %v1093
        %v2653 = vsel %vm1440, %v2652, -inf
        %2654 = vmax.xlane.f32.xlu0 %v2653
        %v2655 = vpop.xlane.xlu0 %2654
        %v2656 = vsub.f32 %v2652, %v2655
        %v2657 = vmul.f32 %v2656, 1.442695
        %v2658 = vpow.pop %v2657
        %v2659 = vsel %vm1440, %v2658, 0.0
        %2660 = vadd.xlane.f32.xlu0 %v2659
        %v2661 = vpop.xlane.xlu0 %2660
        %v2662 = vrcp.pop %v2661
        %v2663 = vmul.f32 %v2658, %v2662
        %v2664 = vpack.c.bf16 %v2663, %v2663
        %2665 = vrot.lane.b32.xlu0 %v2267, 32
        %v2666 = vpop.permute.xlu0 %2665
        %v2668 = vsel %vm1440, %v2664, 0
        %v2671 = vsel %vm1456, %v2666, 0
        %2673 = vmatprep.subr.bf16.mxu0 0
        %2674 = vmatpush1.bf16.msra.mxu0 0
        %2675 = vmatprep.subr.bf16.mxu0 0
        %2676 = vmatpush1.bf16.msra.mxu0 0
        %2677 = vmatprep.subr.bf16.mxu0 0
        %2678 = vmatpush1.bf16.msra.mxu0 0
        %2679 = vmatprep.subr.bf16.mxu0 0
        %2680 = vmatpush1.bf16.msra.mxu0 0
        %2681 = vmatprep.subr.bf16.mxu0 0
        %2682 = vmatpush1.bf16.msra.mxu0 0
        %2683 = vmatprep.subr.bf16.mxu0 0
        %2684 = vmatpush1.bf16.msra.mxu0 0
        %2685 = vmatprep.subr.bf16.mxu0 0
        %2686 = vmatpush1.bf16.msra.mxu0 0
        %2687 = vmatprep.subr.bf16.mxu0 0
        %2688 = vmatpush1.bf16.msra.mxu0 %v2671
        %2689 = vmatprep.subr.bf16.mxu0 0
        %2690 = vmatpush2.bf16.msra.mxu0 0
        %2691 = vmatprep.subr.bf16.mxu0 0
        %2692 = vmatpush2.bf16.msra.mxu0 0
        %2693 = vmatprep.subr.bf16.mxu0 0
        %2694 = vmatpush2.bf16.msra.mxu0 0
        %2695 = vmatprep.subr.bf16.mxu0 0
        %2696 = vmatpush2.bf16.msra.mxu0 0
        %2697 = vmatprep.subr.bf16.mxu0 0
        %2698 = vmatpush2.bf16.msra.mxu0 0
        %2699 = vmatprep.subr.bf16.mxu0 0
        %2700 = vmatpush2.bf16.msra.mxu0 0
        %2701 = vmatprep.subr.bf16.mxu0 0
        %2702 = vmatpush2.bf16.msra.mxu0 0
        %2703 = vmatprep.subr.bf16.mxu0 0
        %2704 = vmatpush2.bf16.msra.mxu0 0
        %2705 = vmatprep.mubr.bf16.mxu0 0
        %2706 = vmatmul.mubr.bf16.gmra.mxu0 %v2668
        %v2707 = vpop.f32.mrf.mxu0
        %v2708 = vadd.f32 0.0, %v2707
        %v2709 = vpop.f32.mrf.mxu0
        %v2710 = vpop.f32.mrf.mxu0
        %v2711 = vpop.f32.mrf.mxu0
        %2712 = vdwg.mxu0
        %2714 = vrot.lane.b32.xlu0 %v2484, 32
        %v2715 = vpop.permute.xlu0 %2714
        %2718 = vrot.lane.b32.xlu0 %v2596, 64
        %v2719 = vpop.permute.xlu0 %2718
        %2722 = vrot.lane.b32.xlu0 %v2708, 96
        %v2723 = vpop.permute.xlu0 %2722
        %v2725 = vsel %vm1391, %v2369, %v2715
        %v2726 = vsel %vm1852, %v2725, %v2719
        %v2727 = vsel %vm1854, %v2726, %v2723
        %v2728 = vld [vmem:[#allocation19] sm:$0xf]
        %v2729 = vld [vmem:[#allocation19 + $0x4] sm:$0xf]
        %v2730 = vld [vmem:[#allocation19 + $0x8] sm:$0xf]
        %v2731 = vld [vmem:[#allocation19 + $0xc] sm:$0xf]
        %v2732 = vld [vmem:[#allocation19 + $0x10] sm:$0xf]
        %v2733 = vld [vmem:[#allocation19 + $0x14] sm:$0xf]
        %v2734 = vld [vmem:[#allocation19 + $0x18] sm:$0xf]
        %v2735 = vld [vmem:[#allocation19 + $0x1c] sm:$0xf]
        %v2736 = vld [vmem:[#allocation19 + $0x20] sm:$0xf]
        %v2737 = vld [vmem:[#allocation19 + $0x24] sm:$0xf]
        %v2738 = vld [vmem:[#allocation19 + $0x28] sm:$0xf]
        %v2739 = vld [vmem:[#allocation19 + $0x2c] sm:$0xf]
        %v2740 = vld [vmem:[#allocation19 + $0x30] sm:$0xf]
        %v2741 = vld [vmem:[#allocation19 + $0x34] sm:$0xf]
        %v2742 = vld [vmem:[#allocation19 + $0x38] sm:$0xf]
        %v2743 = vld [vmem:[#allocation19 + $0x3c] sm:$0xf]
        %v2744 = vld [vmem:[#allocation21] sm:$0x1]
        %v2745 = vpack.c.bf16 %v2727, %v2727
        %v2747 = vlaneseq
        %v2748 = vshrl.u32 %v2747, 7
        %v2749 = vsub.s32 0, %v2748
        %v2750 = vrot.slane %v2744, %v2749
        %v2768 = vunpack.c.l.b16 %v2728
        %v2769 = vunpack.c.l.b16 %v2729
        %v2770 = vunpack.c.l.b16 %v2730
        %v2771 = vunpack.c.l.b16 %v2731
        %v2772 = vunpack.c.l.b16 %v2732
        %v2773 = vunpack.c.l.b16 %v2733
        %v2774 = vunpack.c.l.b16 %v2734
        %v2775 = vunpack.c.l.b16 %v2735
        %v2776 = vunpack.c.l.b16 %v2736
        %v2777 = vunpack.c.l.b16 %v2737
        %v2778 = vunpack.c.l.b16 %v2738
        %v2779 = vunpack.c.l.b16 %v2739
        %v2780 = vunpack.c.l.b16 %v2740
        %v2781 = vunpack.c.l.b16 %v2741
        %v2782 = vunpack.c.l.b16 %v2742
        %v2783 = vunpack.c.l.b16 %v2743
        %v2784 = vpack.c.b16 %v2769, %v2768
        %v2785 = vpack.c.b16 %v2771, %v2770
        %v2786 = vpack.c.b16 %v2773, %v2772
        %v2787 = vpack.c.b16 %v2775, %v2774
        %v2788 = vpack.c.b16 %v2777, %v2776
        %v2789 = vpack.c.b16 %v2779, %v2778
        %v2790 = vpack.c.b16 %v2781, %v2780
        %v2791 = vpack.c.b16 %v2783, %v2782
        %2800 = vmatprep.subr.bf16.mxu0 0
        %2801 = vmatpush1.bf16.msra.mxu0 %v2791
        %2802 = vmatprep.subr.bf16.mxu0 0
        %2803 = vmatpush1.bf16.msra.mxu0 %v2790
        %2804 = vmatprep.subr.bf16.mxu0 0
        %2805 = vmatpush1.bf16.msra.mxu0 %v2789
        %2806 = vmatprep.subr.bf16.mxu0 0
        %2807 = vmatpush1.bf16.msra.mxu0 %v2788
        %2808 = vmatprep.subr.bf16.mxu0 0
        %2809 = vmatpush1.bf16.msra.mxu0 %v2787
        %2810 = vmatprep.subr.bf16.mxu0 0
        %2811 = vmatpush1.bf16.msra.mxu0 %v2786
        %2812 = vmatprep.subr.bf16.mxu0 0
        %2813 = vmatpush1.bf16.msra.mxu0 %v2785
        %2814 = vmatprep.subr.bf16.mxu0 0
        %2815 = vmatpush1.bf16.msra.mxu0 %v2784
        %2816 = vmatprep.subr.bf16.mxu0 0
        %2817 = vmatpush2.bf16.msra.mxu0 0
        %2818 = vmatprep.subr.bf16.mxu0 0
        %2819 = vmatpush2.bf16.msra.mxu0 0
        %2820 = vmatprep.subr.bf16.mxu0 0
        %2821 = vmatpush2.bf16.msra.mxu0 0
        %2822 = vmatprep.subr.bf16.mxu0 0
        %2823 = vmatpush2.bf16.msra.mxu0 0
        %2824 = vmatprep.subr.bf16.mxu0 0
        %2825 = vmatpush2.bf16.msra.mxu0 0
        %2826 = vmatprep.subr.bf16.mxu0 0
        %2827 = vmatpush2.bf16.msra.mxu0 0
        %2828 = vmatprep.subr.bf16.mxu0 0
        %2829 = vmatpush2.bf16.msra.mxu0 0
        %2830 = vmatprep.subr.bf16.mxu0 0
        %2831 = vmatpush2.bf16.msra.mxu0 0
        %2832 = vmatprep.mubr.bf16.mxu0 0
        %2833 = vmatmul.mubr.bf16.gmra.mxu0 %v2745
        %v2834 = vpop.f32.mrf.mxu0
        %v2835 = vadd.f32 %v2750, %v2834
        %v2836 = vpop.f32.mrf.mxu0
        %v2837 = vpop.f32.mrf.mxu0
        %v2838 = vpop.f32.mrf.mxu0
        %2839 = vdwg.mxu0
        %v2840 = vadd.f32 %v1968, %v2835
        %v2841 = vld [vmem:[#allocation22] sm:$0x1]
        %v2842 = vld [vmem:[#allocation24] sm:$0x1]
        %2843 = vadd.xlane.f32.xlu0 %v2840
        %v2844 = vpop.xlane.xlu0 %2843
        %v2845 = vmul.f32 %v2844, %v1098
        %v2846 = vsub.f32 %v2840, %v2845
        %v2847 = vmul.f32 %v2846, %v2846
        %2848 = vadd.xlane.f32.xlu0 %v2847
        %v2849 = vpop.xlane.xlu0 %2848
        %v2850 = vmul.f32 %v2849, 0.007874016
        %v2851 = vrsqrt.pop %v2850
        %v2852 = vmul.f32 %v2850, %v2851
        %vm2853 = vcmp.eq.f32.partialorder %v2850, inf
        %v2854 = vsel %vm2853, %v2850, %v2852
        %vm2855 = vcmp.eq.f32.partialorder %v2850, 0.0
        %v2856 = vand.u32 %v2850, 2147483648
        %v2857 = vsel %vm2855, %v2856, %v2854
        %v2859 = vlaneseq
        %v2860 = vshrl.u32 %v2859, 7
        %v2861 = vsub.s32 0, %v2860
        %v2862 = vrot.slane %v2841, %v2861
        %v2864 = vmul.f32 %v2862, %v2846
        %v2865 = vadd.f32 %v2857, 1e-06
        %v2866 = vrcp.pop %v2865
        %v2867 = vmul.f32 %v2864, %v2866
        %v2869 = vlaneseq
        %v2870 = vshrl.u32 %v2869, 7
        %v2871 = vsub.s32 0, %v2870
        %v2872 = vrot.slane %v2842, %v2871
        %v2874 = vadd.f32 %v2867, %v2872
        %v2875 = vld [vmem:[%s20] sm:$0xff]
        %v2876 = vld [vmem:[%s20 + $0x8] sm:$0xff]
        %v2877 = vld [vmem:[%s20 + $0x10] sm:$0xff]
        %v2878 = vld [vmem:[%s20 + $0x18] sm:$0xff]
        %v2879 = vld [vmem:[%s20 + $0x20] sm:$0xff]
        %v2880 = vld [vmem:[%s20 + $0x28] sm:$0xff]
        %v2881 = vld [vmem:[%s20 + $0x30] sm:$0xff]
        %v2882 = vld [vmem:[%s20 + $0x38] sm:$0xff]
        %v2883 = vld [vmem:[%s20 + $0x40] sm:$0xff]
        %v2884 = vld [vmem:[%s20 + $0x48] sm:$0xff]
        %v2885 = vld [vmem:[%s20 + $0x50] sm:$0xff]
        %v2886 = vld [vmem:[%s20 + $0x58] sm:$0xff]
        %v2887 = vld [vmem:[%s20 + $0x60] sm:$0xff]
        %v2888 = vld [vmem:[%s20 + $0x68] sm:$0xff]
        %v2889 = vld [vmem:[%s20 + $0x70] sm:$0xff]
        %v2890 = vld [vmem:[%s20 + $0x78] sm:$0xff]
        %v2891 = vld [vmem:[#allocation25] sm:$0x3]
        %v2892 = vpack.c.bf16 %v2874, %v2874
        %v2894 = vlaneseq
        %v2895 = vshrl.u32 %v2894, 7
        %v2896 = vsub.s32 0, %v2895
        %v2897 = vrot.slane %v2891, %v2896
        %v2898 = vlaneseq
        %v2899 = vshrl.u32 %v2898, 7
        %v2900 = vsub.s32 1, %v2899
        %v2901 = vrot.slane %v2891, %v2900
        %v2920 = vunpack.c.l.b16 %v2875
        %v2921 = vunpack.c.h.b16 %v2875
        %v2922 = vunpack.c.l.b16 %v2876
        %v2923 = vunpack.c.h.b16 %v2876
        %v2924 = vunpack.c.l.b16 %v2877
        %v2925 = vunpack.c.h.b16 %v2877
        %v2926 = vunpack.c.l.b16 %v2878
        %v2927 = vunpack.c.h.b16 %v2878
        %v2928 = vunpack.c.l.b16 %v2879
        %v2929 = vunpack.c.h.b16 %v2879
        %v2930 = vunpack.c.l.b16 %v2880
        %v2931 = vunpack.c.h.b16 %v2880
        %v2932 = vunpack.c.l.b16 %v2881
        %v2933 = vunpack.c.h.b16 %v2881
        %v2934 = vunpack.c.l.b16 %v2882
        %v2935 = vunpack.c.h.b16 %v2882
        %v2936 = vunpack.c.l.b16 %v2883
        %v2937 = vunpack.c.h.b16 %v2883
        %v2938 = vunpack.c.l.b16 %v2884
        %v2939 = vunpack.c.h.b16 %v2884
        %v2940 = vunpack.c.l.b16 %v2885
        %v2941 = vunpack.c.h.b16 %v2885
        %v2942 = vunpack.c.l.b16 %v2886
        %v2943 = vunpack.c.h.b16 %v2886
        %v2944 = vunpack.c.l.b16 %v2887
        %v2945 = vunpack.c.h.b16 %v2887
        %v2946 = vunpack.c.l.b16 %v2888
        %v2947 = vunpack.c.h.b16 %v2888
        %v2948 = vunpack.c.l.b16 %v2889
        %v2949 = vunpack.c.h.b16 %v2889
        %v2950 = vunpack.c.l.b16 %v2890
        %v2951 = vunpack.c.h.b16 %v2890
        %v2952 = vpack.c.b16 %v2922, %v2920
        %v2953 = vpack.c.b16 %v2923, %v2921
        %v2954 = vpack.c.b16 %v2926, %v2924
        %v2955 = vpack.c.b16 %v2927, %v2925
        %v2956 = vpack.c.b16 %v2930, %v2928
        %v2957 = vpack.c.b16 %v2931, %v2929
        %v2958 = vpack.c.b16 %v2934, %v2932
        %v2959 = vpack.c.b16 %v2935, %v2933
        %v2960 = vpack.c.b16 %v2938, %v2936
        %v2961 = vpack.c.b16 %v2939, %v2937
        %v2962 = vpack.c.b16 %v2942, %v2940
        %v2963 = vpack.c.b16 %v2943, %v2941
        %v2964 = vpack.c.b16 %v2946, %v2944
        %v2965 = vpack.c.b16 %v2947, %v2945
        %v2966 = vpack.c.b16 %v2950, %v2948
        %v2967 = vpack.c.b16 %v2951, %v2949
        %2984 = vmatprep.subr.bf16.mxu0 %v2967
        %2985 = vmatpush1.bf16.msra.mxu0 %v2966
        %2986 = vmatprep.subr.bf16.mxu0 %v2965
        %2987 = vmatpush1.bf16.msra.mxu0 %v2964
        %2988 = vmatprep.subr.bf16.mxu0 %v2963
        %2989 = vmatpush1.bf16.msra.mxu0 %v2962
        %2990 = vmatprep.subr.bf16.mxu0 %v2961
        %2991 = vmatpush1.bf16.msra.mxu0 %v2960
        %2992 = vmatprep.subr.bf16.mxu0 %v2959
        %2993 = vmatpush1.bf16.msra.mxu0 %v2958
        %2994 = vmatprep.subr.bf16.mxu0 %v2957
        %2995 = vmatpush1.bf16.msra.mxu0 %v2956
        %2996 = vmatprep.subr.bf16.mxu0 %v2955
        %2997 = vmatpush1.bf16.msra.mxu0 %v2954
        %2998 = vmatprep.subr.bf16.mxu0 %v2953
        %2999 = vmatpush1.bf16.msra.mxu0 %v2952
        %3000 = vmatprep.subr.bf16.mxu0 0
        %3001 = vmatpush2.bf16.msra.mxu0 0
        %3002 = vmatprep.subr.bf16.mxu0 0
        %3003 = vmatpush2.bf16.msra.mxu0 0
        %3004 = vmatprep.subr.bf16.mxu0 0
        %3005 = vmatpush2.bf16.msra.mxu0 0
        %3006 = vmatprep.subr.bf16.mxu0 0
        %3007 = vmatpush2.bf16.msra.mxu0 0
        %3008 = vmatprep.subr.bf16.mxu0 0
        %3009 = vmatpush2.bf16.msra.mxu0 0
        %3010 = vmatprep.subr.bf16.mxu0 0
        %3011 = vmatpush2.bf16.msra.mxu0 0
        %3012 = vmatprep.subr.bf16.mxu0 0
        %3013 = vmatpush2.bf16.msra.mxu0 0
        %3014 = vmatprep.subr.bf16.mxu0 0
        %3015 = vmatpush2.bf16.msra.mxu0 0
        %3016 = vmatprep.mubr.bf16.mxu0 0
        %3017 = vmatmul.mubr.bf16.gmra.mxu0 %v2892
        %v3018 = vpop.f32.mrf.mxu0
        %v3019 = vadd.f32 %v2897, %v3018
        %v3020 = vpop.f32.mrf.mxu0
        %v3021 = vadd.f32 %v2901, %v3020
        %v3022 = vpop.f32.mrf.mxu0
        %v3023 = vpop.f32.mrf.mxu0
        %3024 = vdwg.mxu0
        %v3025 = vmax.f32 %v3019, 0.0
        %v3026 = vmax.f32 %v3021, 0.0
        %v3027 = vld [vmem:[#allocation27] sm:$0xf]
        %v3028 = vld [vmem:[#allocation27 + $0x4] sm:$0xf]
        %v3029 = vld [vmem:[#allocation27 + $0x8] sm:$0xf]
        %v3030 = vld [vmem:[#allocation27 + $0xc] sm:$0xf]
        %v3031 = vld [vmem:[#allocation27 + $0x10] sm:$0xf]
        %v3032 = vld [vmem:[#allocation27 + $0x14] sm:$0xf]
        %v3033 = vld [vmem:[#allocation27 + $0x18] sm:$0xf]
        %v3034 = vld [vmem:[#allocation27 + $0x1c] sm:$0xf]
        %v3035 = vld [vmem:[#allocation27 + $0x20] sm:$0xf]
        %v3036 = vld [vmem:[#allocation27 + $0x24] sm:$0xf]
        %v3037 = vld [vmem:[#allocation27 + $0x28] sm:$0xf]
        %v3038 = vld [vmem:[#allocation27 + $0x2c] sm:$0xf]
        %v3039 = vld [vmem:[#allocation27 + $0x30] sm:$0xf]
        %v3040 = vld [vmem:[#allocation27 + $0x34] sm:$0xf]
        %v3041 = vld [vmem:[#allocation27 + $0x38] sm:$0xf]
        %v3042 = vld [vmem:[#allocation27 + $0x3c] sm:$0xf]
        %v3043 = vld [vmem:[#allocation27 + $0x40] sm:$0xf]
        %v3044 = vld [vmem:[#allocation27 + $0x44] sm:$0xf]
        %v3045 = vld [vmem:[#allocation27 + $0x48] sm:$0xf]
        %v3046 = vld [vmem:[#allocation27 + $0x4c] sm:$0xf]
        %v3047 = vld [vmem:[#allocation27 + $0x50] sm:$0xf]
        %v3048 = vld [vmem:[#allocation27 + $0x54] sm:$0xf]
        %v3049 = vld [vmem:[#allocation27 + $0x58] sm:$0xf]
        %v3050 = vld [vmem:[#allocation27 + $0x5c] sm:$0xf]
        %v3051 = vld [vmem:[#allocation27 + $0x60] sm:$0xf]
        %v3052 = vld [vmem:[#allocation27 + $0x64] sm:$0xf]
        %v3053 = vld [vmem:[#allocation27 + $0x68] sm:$0xf]
        %v3054 = vld [vmem:[#allocation27 + $0x6c] sm:$0xf]
        %v3055 = vld [vmem:[#allocation27 + $0x70] sm:$0xf]
        %v3056 = vld [vmem:[#allocation27 + $0x74] sm:$0xf]
        %v3057 = vld [vmem:[#allocation27 + $0x78] sm:$0xf]
        %v3058 = vld [vmem:[#allocation27 + $0x7c] sm:$0xf]
        %v3059 = vld [vmem:[#allocation28] sm:$0x1]
        %v3060 = vpack.c.bf16 %v3025, %v3025
        %v3061 = vpack.c.bf16 %v3026, %v3026
        %v3063 = vlaneseq
        %v3064 = vshrl.u32 %v3063, 7
        %v3065 = vsub.s32 0, %v3064
        %v3066 = vrot.slane %v3059, %v3065
        %v3100 = vunpack.c.l.b16 %v3027
        %v3101 = vunpack.c.l.b16 %v3028
        %v3102 = vunpack.c.l.b16 %v3029
        %v3103 = vunpack.c.l.b16 %v3030
        %v3104 = vunpack.c.l.b16 %v3031
        %v3105 = vunpack.c.l.b16 %v3032
        %v3106 = vunpack.c.l.b16 %v3033
        %v3107 = vunpack.c.l.b16 %v3034
        %v3108 = vunpack.c.l.b16 %v3035
        %v3109 = vunpack.c.l.b16 %v3036
        %v3110 = vunpack.c.l.b16 %v3037
        %v3111 = vunpack.c.l.b16 %v3038
        %v3112 = vunpack.c.l.b16 %v3039
        %v3113 = vunpack.c.l.b16 %v3040
        %v3114 = vunpack.c.l.b16 %v3041
        %v3115 = vunpack.c.l.b16 %v3042
        %v3116 = vunpack.c.l.b16 %v3043
        %v3117 = vunpack.c.l.b16 %v3044
        %v3118 = vunpack.c.l.b16 %v3045
        %v3119 = vunpack.c.l.b16 %v3046
        %v3120 = vunpack.c.l.b16 %v3047
        %v3121 = vunpack.c.l.b16 %v3048
        %v3122 = vunpack.c.l.b16 %v3049
        %v3123 = vunpack.c.l.b16 %v3050
        %v3124 = vunpack.c.l.b16 %v3051
        %v3125 = vunpack.c.l.b16 %v3052
        %v3126 = vunpack.c.l.b16 %v3053
        %v3127 = vunpack.c.l.b16 %v3054
        %v3128 = vunpack.c.l.b16 %v3055
        %v3129 = vunpack.c.l.b16 %v3056
        %v3130 = vunpack.c.l.b16 %v3057
        %v3131 = vunpack.c.l.b16 %v3058
        %v3132 = vpack.c.b16 %v3101, %v3100
        %v3133 = vpack.c.b16 %v3103, %v3102
        %v3134 = vpack.c.b16 %v3105, %v3104
        %v3135 = vpack.c.b16 %v3107, %v3106
        %v3136 = vpack.c.b16 %v3109, %v3108
        %v3137 = vpack.c.b16 %v3111, %v3110
        %v3138 = vpack.c.b16 %v3113, %v3112
        %v3139 = vpack.c.b16 %v3115, %v3114
        %v3140 = vpack.c.b16 %v3117, %v3116
        %v3141 = vpack.c.b16 %v3119, %v3118
        %v3142 = vpack.c.b16 %v3121, %v3120
        %v3143 = vpack.c.b16 %v3123, %v3122
        %v3144 = vpack.c.b16 %v3125, %v3124
        %v3145 = vpack.c.b16 %v3127, %v3126
        %v3146 = vpack.c.b16 %v3129, %v3128
        %v3147 = vpack.c.b16 %v3131, %v3130
        %3164 = vmatprep.subr.bf16.mxu0 0
        %3165 = vmatpush1.bf16.msra.mxu0 %v3139
        %3166 = vmatprep.subr.bf16.mxu0 0
        %3167 = vmatpush1.bf16.msra.mxu0 %v3138
        %3168 = vmatprep.subr.bf16.mxu0 0
        %3169 = vmatpush1.bf16.msra.mxu0 %v3137
        %3170 = vmatprep.subr.bf16.mxu0 0
        %3171 = vmatpush1.bf16.msra.mxu0 %v3136
        %3172 = vmatprep.subr.bf16.mxu0 0
        %3173 = vmatpush1.bf16.msra.mxu0 %v3135
        %3174 = vmatprep.subr.bf16.mxu0 0
        %3175 = vmatpush1.bf16.msra.mxu0 %v3134
        %3176 = vmatprep.subr.bf16.mxu0 0
        %3177 = vmatpush1.bf16.msra.mxu0 %v3133
        %3178 = vmatprep.subr.bf16.mxu0 0
        %3179 = vmatpush1.bf16.msra.mxu0 %v3132
        %3180 = vmatprep.subr.bf16.mxu0 0
        %3181 = vmatpush2.bf16.msra.mxu0 %v3147
        %3182 = vmatprep.subr.bf16.mxu0 0
        %3183 = vmatpush2.bf16.msra.mxu0 %v3146
        %3184 = vmatprep.subr.bf16.mxu0 0
        %3185 = vmatpush2.bf16.msra.mxu0 %v3145
        %3186 = vmatprep.subr.bf16.mxu0 0
        %3187 = vmatpush2.bf16.msra.mxu0 %v3144
        %3188 = vmatprep.subr.bf16.mxu0 0
        %3189 = vmatpush2.bf16.msra.mxu0 %v3143
        %3190 = vmatprep.subr.bf16.mxu0 0
        %3191 = vmatpush2.bf16.msra.mxu0 %v3142
        %3192 = vmatprep.subr.bf16.mxu0 0
        %3193 = vmatpush2.bf16.msra.mxu0 %v3141
        %3194 = vmatprep.subr.bf16.mxu0 0
        %3195 = vmatpush2.bf16.msra.mxu0 %v3140
        %3196 = vmatprep.mubr.bf16.mxu0 %v3061
        %3197 = vmatmul.mubr.bf16.gmra.mxu0 %v3060
        %v3198 = vpop.f32.mrf.mxu0
        %v3199 = vadd.f32 %v3066, %v3198
        %v3200 = vpop.f32.mrf.mxu0
        %v3201 = vpop.f32.mrf.mxu0
        %v3202 = vpop.f32.mrf.mxu0
        %3203 = vdwg.mxu0
        %v3204 = vadd.f32 %v2840, %v3199
        %3205 = vst [vmem:[%s1082] sm:$0xff] %v3204
        %p3206 = scmp.lt.s32.totalorder %s49, 1
        %s3207 = scalar_select %p3206, %s49, 1
        %s3208 = smul.addr %s3207, 8
        %s3209 = scalar_lea.vmem %s26, %s3208
        // Predicated region
        $region197: #{encoder_forward.2} parent=123 // pred_check
          %p3210 = pneg %p633
        $region198: #{encoder_forward.2} parent=123 // pred_check_branch
          %3212 = sbr.rel (%p3210) target = $region200
        $region199: #{encoder_forward.2} parent=123 // pred_region
          _
        $region200: #{encoder_forward.2} parent=123 // pred_fallthru
          _
      $region124: #{encoder_forward.2} parent=5 // pred_fallthru
        _
      %p3213 = scmp.le.s32.totalorder 2, %s44
      // Predicated region
      $region201: #{encoder_forward.2} parent=5 // pred_check
        %p3214 = pneg %p3213
      $region202: #{encoder_forward.2} parent=5 // pred_check_branch
        %3216 = sbr.rel (%p3214) target = $region204
      $region203: #{encoder_forward.2} parent=5 // pred_region
        %s3217 = ssub.s32 %s44, 2
        // Predicated region
        $region205: #{encoder_forward.2} parent=203 // pred_check
          %p3218 = pneg %p639
        $region206: #{encoder_forward.2} parent=203 // pred_check_branch
          %3220 = sbr.rel (%p3218) target = $region208
        $region207: #{encoder_forward.2} parent=203 // pred_region
          %p3221 = scmp.lt.s32.totalorder %s50, 1
          %s3222 = scalar_select %p3221, %s50, 1
          %s3223 = smul.addr %s3222, 8
          %s3224 = scalar_lea.vmem %s26, %s3223
        $region208: #{encoder_forward.2} parent=203 // pred_fallthru
          _
      $region204: #{encoder_forward.2} parent=5 // pred_fallthru
        _
    $region6: #{encoder_forward.2} parent=1 // loop_footer
      %s48 = sadd.s32 1, %s44
    $region7: #{encoder_forward.2} parent=1 // loop_footer_branch
      %43 = sbr.rel target = $region3
    $region8: #{encoder_forward.2} parent=1 // loop_exit
      _
    %3225 = vsyncpa [#allocation3], 1
    %s3226 = scalar_lea.sflag [#allocation3], 1
    %3227 = vsyncpa %s3226, 1
    %3228 = vsyncpa [#allocation5], 1
    %3229 = vsyncpa [#allocation8], 1
    %3230 = vsyncpa [#allocation11], 1
    %3231 = vsyncpa [#allocation14], 1
    %3232 = vsyncpa [#allocation17], 1
    %3233 = vsyncpa [#allocation20], 1
    %3234 = vsyncpa [#allocation23], 1
    %3235 = vsyncpa [#allocation26], 1
    %3236 = vsyncpa [#allocation29], 1

// kernel: encoder_forward.3
$region0: #{encoder_forward.3}
  #allocation0 [shape = 'u32[]', space=smem, size = 0x4, offset = 0x4, fixed_abs, tag = 'smem constant byte address 0x4 - core index']
  #allocation1 [shape = 'u32[144,128]{1,0:T(1,128)}', space=vmem, size = 0x12000, scoped, tag = 'internal scratch']
  %s0 = inlined_call_operand.vmem [shape: f32[2,8,128], index: 0, kind: input, shape index: {}]
  %s1 = inlined_call_operand.vmem [shape: f32[2,8,128], index: 1, kind: input, shape index: {}]
  %s2 = inlined_call_operand.vmem [shape: bf16[2,8,8], index: 2, kind: input, shape index: {}]
  %s3 = inlined_call_operand.vmem [shape: bf16[2,8,8], index: 3, kind: input, shape index: {}]
  %s4 = inlined_call_operand.vmem [shape: f32[1,128], index: 4, kind: input, shape index: {}]
  %s5 = inlined_call_operand.vmem [shape: f32[1,128], index: 5, kind: input, shape index: {}]
  %s6 = inlined_call_operand.vmem [shape: bf16[128,384], index: 6, kind: input, shape index: {}]
  %s7 = inlined_call_operand.vmem [shape: f32[1,384], index: 7, kind: input, shape index: {}]
  %s8 = inlined_call_operand.vmem [shape: bf16[128,128], index: 8, kind: input, shape index: {}]
  %s9 = inlined_call_operand.vmem [shape: f32[1,128], index: 9, kind: input, shape index: {}]
  %s10 = inlined_call_operand.vmem [shape: f32[1,128], index: 10, kind: input, shape index: {}]
  %s11 = inlined_call_operand.vmem [shape: f32[1,128], index: 11, kind: input, shape index: {}]
  %s12 = inlined_call_operand.vmem [shape: bf16[128,128], index: 12, kind: input, shape index: {}]
  %s13 = inlined_call_operand.vmem [shape: f32[1,128], index: 13, kind: input, shape index: {}]
  %s14 = inlined_call_operand.vmem [shape: bf16[128,256], index: 14, kind: input, shape index: {}]
  %s15 = inlined_call_operand.vmem [shape: f32[1,256], index: 15, kind: input, shape index: {}]
  %s16 = inlined_call_operand.vmem [shape: bf16[128,128], index: 16, kind: input, shape index: {}]
  %s17 = inlined_call_operand.vmem [shape: f32[1,128], index: 17, kind: input, shape index: {}]
  %s18 = inlined_call_operand.vmem [shape: f32[1,128], index: 18, kind: input, shape index: {}]
  %s19 = inlined_call_operand.vmem [shape: f32[1,128], index: 19, kind: input, shape index: {}]
  %s20 = inlined_call_operand.vmem [shape: bf16[128,256], index: 20, kind: input, shape index: {}]
  %s21 = inlined_call_operand.vmem [shape: f32[1,256], index: 21, kind: input, shape index: {}]
  %s22 = inlined_call_operand.vmem [shape: bf16[256,128], index: 22, kind: input, shape index: {}]
  %s23 = inlined_call_operand.vmem [shape: f32[1,128], index: 23, kind: input, shape index: {}]
  %s24 = inlined_call_operand.vmem [shape: f32[1,128], index: 24, kind: input, shape index: {}]
  %s25 = inlined_call_operand.vmem [shape: f32[1,128], index: 25, kind: input, shape index: {}]
  %s26 = inlined_call_operand.hbm [shape: f32[2,8,128], index: 26, kind: output, shape index: {}]
  %s27 = sld [smem:[#allocation0]]
  $region137: #{encoder_forward.3} parent=0
    _
  %s29 = ssub.s32 1, %s27
  %s30 = scalar_select 0, %s29, %s27
  $region1: #{encoder_forward.3} parent=0
    #allocation2 [shape = 'u8[8192]{0}', space=vmem, size = 0x2000, scoped, tag = 'output window, operand 0']
    #allocation3 [shape = 's32[2]{0}', space=sflag, size = 0x8, scoped, tag = 'scoped memory for encoder_forward.3']
    %31 = vsyncpa [#allocation3], 0
    %s32 = scalar_lea.sflag [#allocation3], 1
    %33 = vsyncpa %s32, 0
    loop: start=0, step=1, limit=4
    $region2: #{encoder_forward.3} parent=1 // loop_pre_header
      _
    $region3: #{encoder_forward.3} parent=1 // loop_header
      %s35 = sphi 0, %s39
      %p36 = scmp.ge.s32.totalorder %s35, 4
      %s45 = sphi 0, %s47
      %s48 = sphi 0, %s45
      %s49 = sphi 0, %s48
      %s65 = sphi 0, %s49
      %s71 = sphi 0, %s73
      %s74 = sphi 0, %s71
      %s75 = sphi 0, %s74
      %s91 = sphi 0, %s75
      %s97 = sphi 0, %s99
      %s100 = sphi 0, %s97
      %s101 = sphi 0, %s100
      %s117 = sphi 0, %s101
      %s123 = sphi 0, %s125
      %s126 = sphi 0, %s123
      %s127 = sphi 0, %s126
      %s143 = sphi 0, %s127
      %s147 = sphi 0, %s147
      %s149 = sphi 0, %s147
      %s150 = sphi 0, %s149
      %s164 = sphi 0, %s150
      %s168 = sphi 0, %s168
      %s170 = sphi 0, %s168
      %s171 = sphi 0, %s170
      %s185 = sphi 0, %s171
      %s189 = sphi 0, %s189
      %s191 = sphi 0, %s189
      %s192 = sphi 0, %s191
      %s206 = sphi 0, %s192
      %s210 = sphi 0, %s210
      %s212 = sphi 0, %s210
      %s213 = sphi 0, %s212
      %s227 = sphi 0, %s213
      %s231 = sphi 0, %s231
      %s233 = sphi 0, %s231
      %s234 = sphi 0, %s233
      %s248 = sphi 0, %s234
      %s252 = sphi 0, %s252
      %s254 = sphi 0, %s252
      %s255 = sphi 0, %s254
      %s269 = sphi 0, %s255
      %s273 = sphi 0, %s273
      %s275 = sphi 0, %s273
      %s276 = sphi 0, %s275
      %s290 = sphi 0, %s276
      %s294 = sphi 0, %s294
      %s296 = sphi 0, %s294
      %s297 = sphi 0, %s296
      %s311 = sphi 0, %s297
      %s315 = sphi 0, %s315
      %s317 = sphi 0, %s315
      %s318 = sphi 0, %s317
      %s332 = sphi 0, %s318
      %s336 = sphi 0, %s336
      %s338 = sphi 0, %s336
      %s339 = sphi 0, %s338
      %s353 = sphi 0, %s339
      %s357 = sphi 0, %s357
      %s359 = sphi 0, %s357
      %s360 = sphi 0, %s359
      %s374 = sphi 0, %s360
      %s378 = sphi 0, %s378
      %s380 = sphi 0, %s378
      %s381 = sphi 0, %s380
      %s395 = sphi 0, %s381
      %s399 = sphi 0, %s399
      %s401 = sphi 0, %s399
      %s402 = sphi 0, %s401
      %s416 = sphi 0, %s402
      %s420 = sphi 0, %s420
      %s422 = sphi 0, %s420
      %s423 = sphi 0, %s422
      %s437 = sphi 0, %s423
      %s441 = sphi 0, %s441
      %s443 = sphi 0, %s441
      %s444 = sphi 0, %s443
      %s458 = sphi 0, %s444
      %s462 = sphi 0, %s462
      %s464 = sphi 0, %s462
      %s465 = sphi 0, %s464
      %s479 = sphi 0, %s465
      %s483 = sphi 0, %s483
      %s485 = sphi 0, %s483
      %s486 = sphi 0, %s485
      %s500 = sphi 0, %s486
      %s504 = sphi 0, %s504
      %s506 = sphi 0, %s504
      %s507 = sphi 0, %s506
      %s521 = sphi 0, %s507
      %s525 = sphi 0, %s525
      %s527 = sphi 0, %s525
      %s528 = sphi 0, %s527
      %s542 = sphi 0, %s528
      %s546 = sphi 0, %s546
      %s548 = sphi 0, %s546
      %s549 = sphi 0, %s548
      %s563 = sphi 0, %s549
      %s567 = sphi 0, %s567
      %s569 = sphi 0, %s567
      %s570 = sphi 0, %s569
      %s584 = sphi 0, %s570
      %s588 = sphi 0, %s588
      %s590 = sphi 0, %s588
      %s591 = sphi 0, %s590
      %s605 = sphi 0, %s591
      %s611 = sphi 0, %s613
      %s614 = sphi 0, %s611
      %s615 = sphi 0, %s614
      %s631 = sphi 0, %s615
    $region4: #{encoder_forward.3} parent=1 // loop_header_branch
      %38 = sbr.rel (%p36) target = $region8
    $region5: #{encoder_forward.3} parent=1 // loop_body
      %s40 = ssub.s32 %s35, 1
      %s41 = ssub.s32 %s35, 2
      %s42 = sadd.s32 %s35, 1
      %s43 = ssub.s32 %s35, %s42
      %p44 = scmp.eq.s32.totalorder %s43, 0
      %s46 = sadd.s32 %s45, 1
      %s47 = scalar_select %p44, %s45, %s46
      %p50 = pneg %p44
      %p51 = scmp.eq.s32.totalorder %s35, 1
      %p52 = por %p50, %p51
      %p53 = scmp.ne.s32.totalorder %s45, %s48
      %p54 = scmp.eq.s32.totalorder %s35, 0
      %p55 = por %p53, %p54
      %p56 = scmp.ne.s32.totalorder %s45, %s48
      %p57 = scmp.eq.s32.totalorder %s40, 1
      %p58 = por %p56, %p57
      %p59 = scmp.ne.s32.totalorder %s48, %s49
      %p60 = scmp.eq.s32.totalorder %s40, 0
      %p61 = por %p59, %p60
      %p62 = scmp.ne.s32.totalorder %s48, %s49
      %p63 = scmp.eq.s32.totalorder %s41, 1
      %p64 = por %p62, %p63
      %p66 = scmp.ne.s32.totalorder %s49, %s65
      %p67 = scmp.eq.s32.totalorder %s41, 0
      %p68 = por %p66, %p67
      %s69 = ssub.s32 %s35, %s42
      %p70 = scmp.eq.s32.totalorder %s69, 0
      %s72 = sadd.s32 %s71, 1
      %s73 = scalar_select %p70, %s71, %s72
      %p76 = pneg %p70
      %p77 = scmp.eq.s32.totalorder %s35, 1
      %p78 = por %p76, %p77
      %p79 = scmp.ne.s32.totalorder %s71, %s74
      %p80 = scmp.eq.s32.totalorder %s35, 0
      %p81 = por %p79, %p80
      %p82 = scmp.ne.s32.totalorder %s71, %s74
      %p83 = scmp.eq.s32.totalorder %s40, 1
      %p84 = por %p82, %p83
      %p85 = scmp.ne.s32.totalorder %s74, %s75
      %p86 = scmp.eq.s32.totalorder %s40, 0
      %p87 = por %p85, %p86
      %p88 = scmp.ne.s32.totalorder %s74, %s75
      %p89 = scmp.eq.s32.totalorder %s41, 1
      %p90 = por %p88, %p89
      %p92 = scmp.ne.s32.totalorder %s75, %s91
      %p93 = scmp.eq.s32.totalorder %s41, 0
      %p94 = por %p92, %p93
      %s95 = ssub.s32 %s35, %s42
      %p96 = scmp.eq.s32.totalorder %s95, 0
      %s98 = sadd.s32 %s97, 1
      %s99 = scalar_select %p96, %s97, %s98
      %p102 = pneg %p96
      %p103 = scmp.eq.s32.totalorder %s35, 1
      %p104 = por %p102, %p103
      %p105 = scmp.ne.s32.totalorder %s97, %s100
      %p106 = scmp.eq.s32.totalorder %s35, 0
      %p107 = por %p105, %p106
      %p108 = scmp.ne.s32.totalorder %s97, %s100
      %p109 = scmp.eq.s32.totalorder %s40, 1
      %p110 = por %p108, %p109
      %p111 = scmp.ne.s32.totalorder %s100, %s101
      %p112 = scmp.eq.s32.totalorder %s40, 0
      %p113 = por %p111, %p112
      %p114 = scmp.ne.s32.totalorder %s100, %s101
      %p115 = scmp.eq.s32.totalorder %s41, 1
      %p116 = por %p114, %p115
      %p118 = scmp.ne.s32.totalorder %s101, %s117
      %p119 = scmp.eq.s32.totalorder %s41, 0
      %p120 = por %p118, %p119
      %s121 = ssub.s32 %s35, %s42
      %p122 = scmp.eq.s32.totalorder %s121, 0
      %s124 = sadd.s32 %s123, 1
      %s125 = scalar_select %p122, %s123, %s124
      %p128 = pneg %p122
      %p129 = scmp.eq.s32.totalorder %s35, 1
      %p130 = por %p128, %p129
      %p131 = scmp.ne.s32.totalorder %s123, %s126
      %p132 = scmp.eq.s32.totalorder %s35, 0
      %p133 = por %p131, %p132
      %p134 = scmp.ne.s32.totalorder %s123, %s126
      %p135 = scmp.eq.s32.totalorder %s40, 1
      %p136 = por %p134, %p135
      %p137 = scmp.ne.s32.totalorder %s126, %s127
      %p138 = scmp.eq.s32.totalorder %s40, 0
      %p139 = por %p137, %p138
      %p140 = scmp.ne.s32.totalorder %s126, %s127
      %p141 = scmp.eq.s32.totalorder %s41, 1
      %p142 = por %p140, %p141
      %p144 = scmp.ne.s32.totalorder %s127, %s143
      %p145 = scmp.eq.s32.totalorder %s41, 0
      %p146 = por %p144, %p145
      %s148 = sadd.s32 %s147, 1
      %p151 = scmp.eq.s32.totalorder %s35, 1
      %p152 = scmp.ne.s32.totalorder %s147, %s149
      %p153 = scmp.eq.s32.totalorder %s35, 0
      %p154 = por %p152, %p153
      %p155 = scmp.ne.s32.totalorder %s147, %s149
      %p156 = scmp.eq.s32.totalorder %s40, 1
      %p157 = por %p155, %p156
      %p158 = scmp.ne.s32.totalorder %s149, %s150
      %p159 = scmp.eq.s32.totalorder %s40, 0
      %p160 = por %p158, %p159
      %p161 = scmp.ne.s32.totalorder %s149, %s150
      %p162 = scmp.eq.s32.totalorder %s41, 1
      %p163 = por %p161, %p162
      %p165 = scmp.ne.s32.totalorder %s150, %s164
      %p166 = scmp.eq.s32.totalorder %s41, 0
      %p167 = por %p165, %p166
      %s169 = sadd.s32 %s168, 1
      %p172 = scmp.eq.s32.totalorder %s35, 1
      %p173 = scmp.ne.s32.totalorder %s168, %s170
      %p174 = scmp.eq.s32.totalorder %s35, 0
      %p175 = por %p173, %p174
      %p176 = scmp.ne.s32.totalorder %s168, %s170
      %p177 = scmp.eq.s32.totalorder %s40, 1
      %p178 = por %p176, %p177
      %p179 = scmp.ne.s32.totalorder %s170, %s171
      %p180 = scmp.eq.s32.totalorder %s40, 0
      %p181 = por %p179, %p180
      %p182 = scmp.ne.s32.totalorder %s170, %s171
      %p183 = scmp.eq.s32.totalorder %s41, 1
      %p184 = por %p182, %p183
      %p186 = scmp.ne.s32.totalorder %s171, %s185
      %p187 = scmp.eq.s32.totalorder %s41, 0
      %p188 = por %p186, %p187
      %s190 = sadd.s32 %s189, 1
      %p193 = scmp.eq.s32.totalorder %s35, 1
      %p194 = scmp.ne.s32.totalorder %s189, %s191
      %p195 = scmp.eq.s32.totalorder %s35, 0
      %p196 = por %p194, %p195
      %p197 = scmp.ne.s32.totalorder %s189, %s191
      %p198 = scmp.eq.s32.totalorder %s40, 1
      %p199 = por %p197, %p198
      %p200 = scmp.ne.s32.totalorder %s191, %s192
      %p201 = scmp.eq.s32.totalorder %s40, 0
      %p202 = por %p200, %p201
      %p203 = scmp.ne.s32.totalorder %s191, %s192
      %p204 = scmp.eq.s32.totalorder %s41, 1
      %p205 = por %p203, %p204
      %p207 = scmp.ne.s32.totalorder %s192, %s206
      %p208 = scmp.eq.s32.totalorder %s41, 0
      %p209 = por %p207, %p208
      %s211 = sadd.s32 %s210, 1
      %p214 = scmp.eq.s32.totalorder %s35, 1
      %p215 = scmp.ne.s32.totalorder %s210, %s212
      %p216 = scmp.eq.s32.totalorder %s35, 0
      %p217 = por %p215, %p216
      %p218 = scmp.ne.s32.totalorder %s210, %s212
      %p219 = scmp.eq.s32.totalorder %s40, 1
      %p220 = por %p218, %p219
      %p221 = scmp.ne.s32.totalorder %s212, %s213
      %p222 = scmp.eq.s32.totalorder %s40, 0
      %p223 = por %p221, %p222
      %p224 = scmp.ne.s32.totalorder %s212, %s213
      %p225 = scmp.eq.s32.totalorder %s41, 1
      %p226 = por %p224, %p225
      %p228 = scmp.ne.s32.totalorder %s213, %s227
      %p229 = scmp.eq.s32.totalorder %s41, 0
      %p230 = por %p228, %p229
      %s232 = sadd.s32 %s231, 1
      %p235 = scmp.eq.s32.totalorder %s35, 1
      %p236 = scmp.ne.s32.totalorder %s231, %s233
      %p237 = scmp.eq.s32.totalorder %s35, 0
      %p238 = por %p236, %p237
      %p239 = scmp.ne.s32.totalorder %s231, %s233
      %p240 = scmp.eq.s32.totalorder %s40, 1
      %p241 = por %p239, %p240
      %p242 = scmp.ne.s32.totalorder %s233, %s234
      %p243 = scmp.eq.s32.totalorder %s40, 0
      %p244 = por %p242, %p243
      %p245 = scmp.ne.s32.totalorder %s233, %s234
      %p246 = scmp.eq.s32.totalorder %s41, 1
      %p247 = por %p245, %p246
      %p249 = scmp.ne.s32.totalorder %s234, %s248
      %p250 = scmp.eq.s32.totalorder %s41, 0
      %p251 = por %p249, %p250
      %s253 = sadd.s32 %s252, 1
      %p256 = scmp.eq.s32.totalorder %s35, 1
      %p257 = scmp.ne.s32.totalorder %s252, %s254
      %p258 = scmp.eq.s32.totalorder %s35, 0
      %p259 = por %p257, %p258
      %p260 = scmp.ne.s32.totalorder %s252, %s254
      %p261 = scmp.eq.s32.totalorder %s40, 1
      %p262 = por %p260, %p261
      %p263 = scmp.ne.s32.totalorder %s254, %s255
      %p264 = scmp.eq.s32.totalorder %s40, 0
      %p265 = por %p263, %p264
      %p266 = scmp.ne.s32.totalorder %s254, %s255
      %p267 = scmp.eq.s32.totalorder %s41, 1
      %p268 = por %p266, %p267
      %p270 = scmp.ne.s32.totalorder %s255, %s269
      %p271 = scmp.eq.s32.totalorder %s41, 0
      %p272 = por %p270, %p271
      %s274 = sadd.s32 %s273, 1
      %p277 = scmp.eq.s32.totalorder %s35, 1
      %p278 = scmp.ne.s32.totalorder %s273, %s275
      %p279 = scmp.eq.s32.totalorder %s35, 0
      %p280 = por %p278, %p279
      %p281 = scmp.ne.s32.totalorder %s273, %s275
      %p282 = scmp.eq.s32.totalorder %s40, 1
      %p283 = por %p281, %p282
      %p284 = scmp.ne.s32.totalorder %s275, %s276
      %p285 = scmp.eq.s32.totalorder %s40, 0
      %p286 = por %p284, %p285
      %p287 = scmp.ne.s32.totalorder %s275, %s276
      %p288 = scmp.eq.s32.totalorder %s41, 1
      %p289 = por %p287, %p288
      %p291 = scmp.ne.s32.totalorder %s276, %s290
      %p292 = scmp.eq.s32.totalorder %s41, 0
      %p293 = por %p291, %p292
      %s295 = sadd.s32 %s294, 1
      %p298 = scmp.eq.s32.totalorder %s35, 1
      %p299 = scmp.ne.s32.totalorder %s294, %s296
      %p300 = scmp.eq.s32.totalorder %s35, 0
      %p301 = por %p299, %p300
      %p302 = scmp.ne.s32.totalorder %s294, %s296
      %p303 = scmp.eq.s32.totalorder %s40, 1
      %p304 = por %p302, %p303
      %p305 = scmp.ne.s32.totalorder %s296, %s297
      %p306 = scmp.eq.s32.totalorder %s40, 0
      %p307 = por %p305, %p306
      %p308 = scmp.ne.s32.totalorder %s296, %s297
      %p309 = scmp.eq.s32.totalorder %s41, 1
      %p310 = por %p308, %p309
      %p312 = scmp.ne.s32.totalorder %s297, %s311
      %p313 = scmp.eq.s32.totalorder %s41, 0
      %p314 = por %p312, %p313
      %s316 = sadd.s32 %s315, 1
      %p319 = scmp.eq.s32.totalorder %s35, 1
      %p320 = scmp.ne.s32.totalorder %s315, %s317
      %p321 = scmp.eq.s32.totalorder %s35, 0
      %p322 = por %p320, %p321
      %p323 = scmp.ne.s32.totalorder %s315, %s317
      %p324 = scmp.eq.s32.totalorder %s40, 1
      %p325 = por %p323, %p324
      %p326 = scmp.ne.s32.totalorder %s317, %s318
      %p327 = scmp.eq.s32.totalorder %s40, 0
      %p328 = por %p326, %p327
      %p329 = scmp.ne.s32.totalorder %s317, %s318
      %p330 = scmp.eq.s32.totalorder %s41, 1
      %p331 = por %p329, %p330
      %p333 = scmp.ne.s32.totalorder %s318, %s332
      %p334 = scmp.eq.s32.totalorder %s41, 0
      %p335 = por %p333, %p334
      %s337 = sadd.s32 %s336, 1
      %p340 = scmp.eq.s32.totalorder %s35, 1
      %p341 = scmp.ne.s32.totalorder %s336, %s338
      %p342 = scmp.eq.s32.totalorder %s35, 0
      %p343 = por %p341, %p342
      %p344 = scmp.ne.s32.totalorder %s336, %s338
      %p345 = scmp.eq.s32.totalorder %s40, 1
      %p346 = por %p344, %p345
      %p347 = scmp.ne.s32.totalorder %s338, %s339
      %p348 = scmp.eq.s32.totalorder %s40, 0
      %p349 = por %p347, %p348
      %p350 = scmp.ne.s32.totalorder %s338, %s339
      %p351 = scmp.eq.s32.totalorder %s41, 1
      %p352 = por %p350, %p351
      %p354 = scmp.ne.s32.totalorder %s339, %s353
      %p355 = scmp.eq.s32.totalorder %s41, 0
      %p356 = por %p354, %p355
      %s358 = sadd.s32 %s357, 1
      %p361 = scmp.eq.s32.totalorder %s35, 1
      %p362 = scmp.ne.s32.totalorder %s357, %s359
      %p363 = scmp.eq.s32.totalorder %s35, 0
      %p364 = por %p362, %p363
      %p365 = scmp.ne.s32.totalorder %s357, %s359
      %p366 = scmp.eq.s32.totalorder %s40, 1
      %p367 = por %p365, %p366
      %p368 = scmp.ne.s32.totalorder %s359, %s360
      %p369 = scmp.eq.s32.totalorder %s40, 0
      %p370 = por %p368, %p369
      %p371 = scmp.ne.s32.totalorder %s359, %s360
      %p372 = scmp.eq.s32.totalorder %s41, 1
      %p373 = por %p371, %p372
      %p375 = scmp.ne.s32.totalorder %s360, %s374
      %p376 = scmp.eq.s32.totalorder %s41, 0
      %p377 = por %p375, %p376
      %s379 = sadd.s32 %s378, 1
      %p382 = scmp.eq.s32.totalorder %s35, 1
      %p383 = scmp.ne.s32.totalorder %s378, %s380
      %p384 = scmp.eq.s32.totalorder %s35, 0
      %p385 = por %p383, %p384
      %p386 = scmp.ne.s32.totalorder %s378, %s380
      %p387 = scmp.eq.s32.totalorder %s40, 1
      %p388 = por %p386, %p387
      %p389 = scmp.ne.s32.totalorder %s380, %s381
      %p390 = scmp.eq.s32.totalorder %s40, 0
      %p391 = por %p389, %p390
      %p392 = scmp.ne.s32.totalorder %s380, %s381
      %p393 = scmp.eq.s32.totalorder %s41, 1
      %p394 = por %p392, %p393
      %p396 = scmp.ne.s32.totalorder %s381, %s395
      %p397 = scmp.eq.s32.totalorder %s41, 0
      %p398 = por %p396, %p397
      %s400 = sadd.s32 %s399, 1
      %p403 = scmp.eq.s32.totalorder %s35, 1
      %p404 = scmp.ne.s32.totalorder %s399, %s401
      %p405 = scmp.eq.s32.totalorder %s35, 0
      %p406 = por %p404, %p405
      %p407 = scmp.ne.s32.totalorder %s399, %s401
      %p408 = scmp.eq.s32.totalorder %s40, 1
      %p409 = por %p407, %p408
      %p410 = scmp.ne.s32.totalorder %s401, %s402
      %p411 = scmp.eq.s32.totalorder %s40, 0
      %p412 = por %p410, %p411
      %p413 = scmp.ne.s32.totalorder %s401, %s402
      %p414 = scmp.eq.s32.totalorder %s41, 1
      %p415 = por %p413, %p414
      %p417 = scmp.ne.s32.totalorder %s402, %s416
      %p418 = scmp.eq.s32.totalorder %s41, 0
      %p419 = por %p417, %p418
      %s421 = sadd.s32 %s420, 1
      %p424 = scmp.eq.s32.totalorder %s35, 1
      %p425 = scmp.ne.s32.totalorder %s420, %s422
      %p426 = scmp.eq.s32.totalorder %s35, 0
      %p427 = por %p425, %p426
      %p428 = scmp.ne.s32.totalorder %s420, %s422
      %p429 = scmp.eq.s32.totalorder %s40, 1
      %p430 = por %p428, %p429
      %p431 = scmp.ne.s32.totalorder %s422, %s423
      %p432 = scmp.eq.s32.totalorder %s40, 0
      %p433 = por %p431, %p432
      %p434 = scmp.ne.s32.totalorder %s422, %s423
      %p435 = scmp.eq.s32.totalorder %s41, 1
      %p436 = por %p434, %p435
      %p438 = scmp.ne.s32.totalorder %s423, %s437
      %p439 = scmp.eq.s32.totalorder %s41, 0
      %p440 = por %p438, %p439
      %s442 = sadd.s32 %s441, 1
      %p445 = scmp.eq.s32.totalorder %s35, 1
      %p446 = scmp.ne.s32.totalorder %s441, %s443
      %p447 = scmp.eq.s32.totalorder %s35, 0
      %p448 = por %p446, %p447
      %p449 = scmp.ne.s32.totalorder %s441, %s443
      %p450 = scmp.eq.s32.totalorder %s40, 1
      %p451 = por %p449, %p450
      %p452 = scmp.ne.s32.totalorder %s443, %s444
      %p453 = scmp.eq.s32.totalorder %s40, 0
      %p454 = por %p452, %p453
      %p455 = scmp.ne.s32.totalorder %s443, %s444
      %p456 = scmp.eq.s32.totalorder %s41, 1
      %p457 = por %p455, %p456
      %p459 = scmp.ne.s32.totalorder %s444, %s458
      %p460 = scmp.eq.s32.totalorder %s41, 0
      %p461 = por %p459, %p460
      %s463 = sadd.s32 %s462, 1
      %p466 = scmp.eq.s32.totalorder %s35, 1
      %p467 = scmp.ne.s32.totalorder %s462, %s464
      %p468 = scmp.eq.s32.totalorder %s35, 0
      %p469 = por %p467, %p468
      %p470 = scmp.ne.s32.totalorder %s462, %s464
      %p471 = scmp.eq.s32.totalorder %s40, 1
      %p472 = por %p470, %p471
      %p473 = scmp.ne.s32.totalorder %s464, %s465
      %p474 = scmp.eq.s32.totalorder %s40, 0
      %p475 = por %p473, %p474
      %p476 = scmp.ne.s32.totalorder %s464, %s465
      %p477 = scmp.eq.s32.totalorder %s41, 1
      %p478 = por %p476, %p477
      %p480 = scmp.ne.s32.totalorder %s465, %s479
      %p481 = scmp.eq.s32.totalorder %s41, 0
      %p482 = por %p480, %p481
      %s484 = sadd.s32 %s483, 1
      %p487 = scmp.eq.s32.totalorder %s35, 1
      %p488 = scmp.ne.s32.totalorder %s483, %s485
      %p489 = scmp.eq.s32.totalorder %s35, 0
      %p490 = por %p488, %p489
      %p491 = scmp.ne.s32.totalorder %s483, %s485
      %p492 = scmp.eq.s32.totalorder %s40, 1
      %p493 = por %p491, %p492
      %p494 = scmp.ne.s32.totalorder %s485, %s486
      %p495 = scmp.eq.s32.totalorder %s40, 0
      %p496 = por %p494, %p495
      %p497 = scmp.ne.s32.totalorder %s485, %s486
      %p498 = scmp.eq.s32.totalorder %s41, 1
      %p499 = por %p497, %p498
      %p501 = scmp.ne.s32.totalorder %s486, %s500
      %p502 = scmp.eq.s32.totalorder %s41, 0
      %p503 = por %p501, %p502
      %s505 = sadd.s32 %s504, 1
      %p508 = scmp.eq.s32.totalorder %s35, 1
      %p509 = scmp.ne.s32.totalorder %s504, %s506
      %p510 = scmp.eq.s32.totalorder %s35, 0
      %p511 = por %p509, %p510
      %p512 = scmp.ne.s32.totalorder %s504, %s506
      %p513 = scmp.eq.s32.totalorder %s40, 1
      %p514 = por %p512, %p513
      %p515 = scmp.ne.s32.totalorder %s506, %s507
      %p516 = scmp.eq.s32.totalorder %s40, 0
      %p517 = por %p515, %p516
      %p518 = scmp.ne.s32.totalorder %s506, %s507
      %p519 = scmp.eq.s32.totalorder %s41, 1
      %p520 = por %p518, %p519
      %p522 = scmp.ne.s32.totalorder %s507, %s521
      %p523 = scmp.eq.s32.totalorder %s41, 0
      %p524 = por %p522, %p523
      %s526 = sadd.s32 %s525, 1
      %p529 = scmp.eq.s32.totalorder %s35, 1
      %p530 = scmp.ne.s32.totalorder %s525, %s527
      %p531 = scmp.eq.s32.totalorder %s35, 0
      %p532 = por %p530, %p531
      %p533 = scmp.ne.s32.totalorder %s525, %s527
      %p534 = scmp.eq.s32.totalorder %s40, 1
      %p535 = por %p533, %p534
      %p536 = scmp.ne.s32.totalorder %s527, %s528
      %p537 = scmp.eq.s32.totalorder %s40, 0
      %p538 = por %p536, %p537
      %p539 = scmp.ne.s32.totalorder %s527, %s528
      %p540 = scmp.eq.s32.totalorder %s41, 1
      %p541 = por %p539, %p540
      %p543 = scmp.ne.s32.totalorder %s528, %s542
      %p544 = scmp.eq.s32.totalorder %s41, 0
      %p545 = por %p543, %p544
      %s547 = sadd.s32 %s546, 1
      %p550 = scmp.eq.s32.totalorder %s35, 1
      %p551 = scmp.ne.s32.totalorder %s546, %s548
      %p552 = scmp.eq.s32.totalorder %s35, 0
      %p553 = por %p551, %p552
      %p554 = scmp.ne.s32.totalorder %s546, %s548
      %p555 = scmp.eq.s32.totalorder %s40, 1
      %p556 = por %p554, %p555
      %p557 = scmp.ne.s32.totalorder %s548, %s549
      %p558 = scmp.eq.s32.totalorder %s40, 0
      %p559 = por %p557, %p558
      %p560 = scmp.ne.s32.totalorder %s548, %s549
      %p561 = scmp.eq.s32.totalorder %s41, 1
      %p562 = por %p560, %p561
      %p564 = scmp.ne.s32.totalorder %s549, %s563
      %p565 = scmp.eq.s32.totalorder %s41, 0
      %p566 = por %p564, %p565
      %s568 = sadd.s32 %s567, 1
      %p571 = scmp.eq.s32.totalorder %s35, 1
      %p572 = scmp.ne.s32.totalorder %s567, %s569
      %p573 = scmp.eq.s32.totalorder %s35, 0
      %p574 = por %p572, %p573
      %p575 = scmp.ne.s32.totalorder %s567, %s569
      %p576 = scmp.eq.s32.totalorder %s40, 1
      %p577 = por %p575, %p576
      %p578 = scmp.ne.s32.totalorder %s569, %s570
      %p579 = scmp.eq.s32.totalorder %s40, 0
      %p580 = por %p578, %p579
      %p581 = scmp.ne.s32.totalorder %s569, %s570
      %p582 = scmp.eq.s32.totalorder %s41, 1
      %p583 = por %p581, %p582
      %p585 = scmp.ne.s32.totalorder %s570, %s584
      %p586 = scmp.eq.s32.totalorder %s41, 0
      %p587 = por %p585, %p586
      %s589 = sadd.s32 %s588, 1
      %p592 = scmp.eq.s32.totalorder %s35, 1
      %p593 = scmp.ne.s32.totalorder %s588, %s590
      %p594 = scmp.eq.s32.totalorder %s35, 0
      %p595 = por %p593, %p594
      %p596 = scmp.ne.s32.totalorder %s588, %s590
      %p597 = scmp.eq.s32.totalorder %s40, 1
      %p598 = por %p596, %p597
      %p599 = scmp.ne.s32.totalorder %s590, %s591
      %p600 = scmp.eq.s32.totalorder %s40, 0
      %p601 = por %p599, %p600
      %p602 = scmp.ne.s32.totalorder %s590, %s591
      %p603 = scmp.eq.s32.totalorder %s41, 1
      %p604 = por %p602, %p603
      %p606 = scmp.ne.s32.totalorder %s591, %s605
      %p607 = scmp.eq.s32.totalorder %s41, 0
      %p608 = por %p606, %p607
      %s609 = ssub.s32 %s35, %s42
      %p610 = scmp.eq.s32.totalorder %s609, 0
      %s612 = sadd.s32 %s611, 1
      %s613 = scalar_select %p610, %s611, %s612
      %p616 = pneg %p610
      %p617 = scmp.eq.s32.totalorder %s35, 1
      %p618 = por %p616, %p617
      %p619 = scmp.ne.s32.totalorder %s611, %s614
      %p620 = scmp.eq.s32.totalorder %s35, 0
      %p621 = por %p619, %p620
      %p622 = scmp.ne.s32.totalorder %s611, %s614
      %p623 = scmp.eq.s32.totalorder %s40, 1
      %p624 = por %p622, %p623
      %p625 = scmp.ne.s32.totalorder %s614, %s615
      %p626 = scmp.eq.s32.totalorder %s40, 0
      %p627 = por %p625, %p626
      %p628 = scmp.ne.s32.totalorder %s614, %s615
      %p629 = scmp.eq.s32.totalorder %s41, 1
      %p630 = por %p628, %p629
      %p632 = scmp.ne.s32.totalorder %s615, %s631
      %p633 = scmp.eq.s32.totalorder %s41, 0
      %p634 = por %p632, %p633
      %p635 = scmp.le.s32.totalorder 1, %s35
      %p636 = scmp.lt.s32.totalorder %s35, 3
      %p637 = pnand %p635, %p636
      %p638 = pneg %p637
      // Predicated region
      $region9: #{encoder_forward.3} parent=5 // pred_check
        _
      $region10: #{encoder_forward.3} parent=5 // pred_check_branch
        %640 = sbr.rel (%p637) target = $region12
      $region11: #{encoder_forward.3} parent=5 // pred_region
        %s641 = ssub.s32 %s35, 1
        // Predicated region
        $region13: #{encoder_forward.3} parent=11 // pred_check
          %p642 = pneg %p160
        $region14: #{encoder_forward.3} parent=11 // pred_check_branch
          %644 = sbr.rel (%p642) target = $region16
        $region15: #{encoder_forward.3} parent=11 // pred_region
          _
        $region16: #{encoder_forward.3} parent=11 // pred_fallthru
          _
        // Predicated region
        $region17: #{encoder_forward.3} parent=11 // pred_check
          %p645 = pneg %p181
        $region18: #{encoder_forward.3} parent=11 // pred_check_branch
          %647 = sbr.rel (%p645) target = $region20
        $region19: #{encoder_forward.3} parent=11 // pred_region
          _
        $region20: #{encoder_forward.3} parent=11 // pred_fallthru
          _
        // Predicated region
        $region21: #{encoder_forward.3} parent=11 // pred_check
          %p648 = pneg %p202
        $region22: #{encoder_forward.3} parent=11 // pred_check_branch
          %650 = sbr.rel (%p648) target = $region24
        $region23: #{encoder_forward.3} parent=11 // pred_region
          _
        $region24: #{encoder_forward.3} parent=11 // pred_fallthru
          _
        // Predicated region
        $region25: #{encoder_forward.3} parent=11 // pred_check
          %p651 = pneg %p223
        $region26: #{encoder_forward.3} parent=11 // pred_check_branch
          %653 = sbr.rel (%p651) target = $region28
        $region27: #{encoder_forward.3} parent=11 // pred_region
          _
        $region28: #{encoder_forward.3} parent=11 // pred_fallthru
          _
        // Predicated region
        $region29: #{encoder_forward.3} parent=11 // pred_check
          %p654 = pneg %p244
        $region30: #{encoder_forward.3} parent=11 // pred_check_branch
          %656 = sbr.rel (%p654) target = $region32
        $region31: #{encoder_forward.3} parent=11 // pred_region
          _
        $region32: #{encoder_forward.3} parent=11 // pred_fallthru
          _
        // Predicated region
        $region33: #{encoder_forward.3} parent=11 // pred_check
          %p657 = pneg %p265
        $region34: #{encoder_forward.3} parent=11 // pred_check_branch
          %659 = sbr.rel (%p657) target = $region36
        $region35: #{encoder_forward.3} parent=11 // pred_region
          _
        $region36: #{encoder_forward.3} parent=11 // pred_fallthru
          _
        // Predicated region
        $region37: #{encoder_forward.3} parent=11 // pred_check
          %p660 = pneg %p286
        $region38: #{encoder_forward.3} parent=11 // pred_check_branch
          %662 = sbr.rel (%p660) target = $region40
        $region39: #{encoder_forward.3} parent=11 // pred_region
          _
        $region40: #{encoder_forward.3} parent=11 // pred_fallthru
          _
        // Predicated region
        $region41: #{encoder_forward.3} parent=11 // pred_check
          %p663 = pneg %p307
        $region42: #{encoder_forward.3} parent=11 // pred_check_branch
          %665 = sbr.rel (%p663) target = $region44
        $region43: #{encoder_forward.3} parent=11 // pred_region
          _
        $region44: #{encoder_forward.3} parent=11 // pred_fallthru
          _
        // Predicated region
        $region45: #{encoder_forward.3} parent=11 // pred_check
          %p666 = pneg %p328
        $region46: #{encoder_forward.3} parent=11 // pred_check_branch
          %668 = sbr.rel (%p666) target = $region48
        $region47: #{encoder_forward.3} parent=11 // pred_region
          _
        $region48: #{encoder_forward.3} parent=11 // pred_fallthru
          _
        // Predicated region
        $region49: #{encoder_forward.3} parent=11 // pred_check
          %p669 = pneg %p349
        $region50: #{encoder_forward.3} parent=11 // pred_check_branch
          %671 = sbr.rel (%p669) target = $region52
        $region51: #{encoder_forward.3} parent=11 // pred_region
          _
        $region52: #{encoder_forward.3} parent=11 // pred_fallthru
          _
        // Predicated region
        $region53: #{encoder_forward.3} parent=11 // pred_check
          %p672 = pneg %p370
        $region54: #{encoder_forward.3} parent=11 // pred_check_branch
          %674 = sbr.rel (%p672) target = $region56
        $region55: #{encoder_forward.3} parent=11 // pred_region
          _
        $region56: #{encoder_forward.3} parent=11 // pred_fallthru
          _
        // Predicated region
        $region57: #{encoder_forward.3} parent=11 // pred_check
          %p675 = pneg %p391
        $region58: #{encoder_forward.3} parent=11 // pred_check_branch
          %677 = sbr.rel (%p675) target = $region60
        $region59: #{encoder_forward.3} parent=11 // pred_region
          _
        $region60: #{encoder_forward.3} parent=11 // pred_fallthru
          _
        // Predicated region
        $region61: #{encoder_forward.3} parent=11 // pred_check
          %p678 = pneg %p412
        $region62: #{encoder_forward.3} parent=11 // pred_check_branch
          %680 = sbr.rel (%p678) target = $region64
        $region63: #{encoder_forward.3} parent=11 // pred_region
          _
        $region64: #{encoder_forward.3} parent=11 // pred_fallthru
          _
        // Predicated region
        $region65: #{encoder_forward.3} parent=11 // pred_check
          %p681 = pneg %p433
        $region66: #{encoder_forward.3} parent=11 // pred_check_branch
          %683 = sbr.rel (%p681) target = $region68
        $region67: #{encoder_forward.3} parent=11 // pred_region
          _
        $region68: #{encoder_forward.3} parent=11 // pred_fallthru
          _
        // Predicated region
        $region69: #{encoder_forward.3} parent=11 // pred_check
          %p684 = pneg %p454
        $region70: #{encoder_forward.3} parent=11 // pred_check_branch
          %686 = sbr.rel (%p684) target = $region72
        $region71: #{encoder_forward.3} parent=11 // pred_region
          _
        $region72: #{encoder_forward.3} parent=11 // pred_fallthru
          _
        // Predicated region
        $region73: #{encoder_forward.3} parent=11 // pred_check
          %p687 = pneg %p475
        $region74: #{encoder_forward.3} parent=11 // pred_check_branch
          %689 = sbr.rel (%p687) target = $region76
        $region75: #{encoder_forward.3} parent=11 // pred_region
          _
        $region76: #{encoder_forward.3} parent=11 // pred_fallthru
          _
        // Predicated region
        $region77: #{encoder_forward.3} parent=11 // pred_check
          %p690 = pneg %p496
        $region78: #{encoder_forward.3} parent=11 // pred_check_branch
          %692 = sbr.rel (%p690) target = $region80
        $region79: #{encoder_forward.3} parent=11 // pred_region
          _
        $region80: #{encoder_forward.3} parent=11 // pred_fallthru
          _
        // Predicated region
        $region81: #{encoder_forward.3} parent=11 // pred_check
          %p693 = pneg %p517
        $region82: #{encoder_forward.3} parent=11 // pred_check_branch
          %695 = sbr.rel (%p693) target = $region84
        $region83: #{encoder_forward.3} parent=11 // pred_region
          _
        $region84: #{encoder_forward.3} parent=11 // pred_fallthru
          _
        // Predicated region
        $region85: #{encoder_forward.3} parent=11 // pred_check
          %p696 = pneg %p538
        $region86: #{encoder_forward.3} parent=11 // pred_check_branch
          %698 = sbr.rel (%p696) target = $region88
        $region87: #{encoder_forward.3} parent=11 // pred_region
          _
        $region88: #{encoder_forward.3} parent=11 // pred_fallthru
          _
        // Predicated region
        $region89: #{encoder_forward.3} parent=11 // pred_check
          %p699 = pneg %p559
        $region90: #{encoder_forward.3} parent=11 // pred_check_branch
          %701 = sbr.rel (%p699) target = $region92
        $region91: #{encoder_forward.3} parent=11 // pred_region
          _
        $region92: #{encoder_forward.3} parent=11 // pred_fallthru
          _
        // Predicated region
        $region93: #{encoder_forward.3} parent=11 // pred_check
          %p702 = pneg %p580
        $region94: #{encoder_forward.3} parent=11 // pred_check_branch
          %704 = sbr.rel (%p702) target = $region96
        $region95: #{encoder_forward.3} parent=11 // pred_region
          _
        $region96: #{encoder_forward.3} parent=11 // pred_fallthru
          _
        // Predicated region
        $region97: #{encoder_forward.3} parent=11 // pred_check
          %p705 = pneg %p601
        $region98: #{encoder_forward.3} parent=11 // pred_check_branch
          %707 = sbr.rel (%p705) target = $region100
        $region99: #{encoder_forward.3} parent=11 // pred_region
          _
        $region100: #{encoder_forward.3} parent=11 // pred_fallthru
          _
      $region12: #{encoder_forward.3} parent=5 // pred_fallthru
        _
      %p708 = scmp.lt.s32.totalorder %s35, 2
      // Predicated region
      $region101: #{encoder_forward.3} parent=5 // pred_check
        %p709 = pneg %p708
      $region102: #{encoder_forward.3} parent=5 // pred_check_branch
        %711 = sbr.rel (%p709) target = $region104
      $region103: #{encoder_forward.3} parent=5 // pred_region
        // Predicated region
        $region105: #{encoder_forward.3} parent=103 // pred_check
          %p712 = pneg %p55
        $region106: #{encoder_forward.3} parent=103 // pred_check_branch
          %714 = sbr.rel (%p712) target = $region108
        $region107: #{encoder_forward.3} parent=103 // pred_region
          %p715 = scmp.lt.s32.totalorder %s35, 1
          %s716 = scalar_select %p715, %s35, 1
          %s717 = smul.addr %s716, 8
          %s718 = scalar_lea.vmem %s0, %s717
        $region108: #{encoder_forward.3} parent=103 // pred_fallthru
          _
        // Predicated region
        $region109: #{encoder_forward.3} parent=103 // pred_check
          %p719 = pneg %p81
        $region110: #{encoder_forward.3} parent=103 // pred_check_branch
          %721 = sbr.rel (%p719) target = $region112
        $region111: #{encoder_forward.3} parent=103 // pred_region
          %p722 = scmp.lt.s32.totalorder %s35, 1
          %s723 = scalar_select %p722, %s35, 1
          %s724 = smul.addr %s723, 8
          %s725 = scalar_lea.vmem %s1, %s724
        $region112: #{encoder_forward.3} parent=103 // pred_fallthru
          _
        // Predicated region
        $region113: #{encoder_forward.3} parent=103 // pred_check
          %p726 = pneg %p107
        $region114: #{encoder_forward.3} parent=103 // pred_check_branch
          %728 = sbr.rel (%p726) target = $region116
        $region115: #{encoder_forward.3} parent=103 // pred_region
          %p729 = scmp.lt.s32.totalorder %s35, 1
          %s730 = scalar_select %p729, %s35, 1
          %s731 = smul.addr %s730, 4
          %s732 = scalar_lea.vmem %s2, %s731
        $region116: #{encoder_forward.3} parent=103 // pred_fallthru
          _
        // Predicated region
        $region117: #{encoder_forward.3} parent=103 // pred_check
          %p733 = pneg %p133
        $region118: #{encoder_forward.3} parent=103 // pred_check_branch
          %735 = sbr.rel (%p733) target = $region120
        $region119: #{encoder_forward.3} parent=103 // pred_region
          %p736 = scmp.lt.s32.totalorder %s35, 1
          %s737 = scalar_select %p736, %s35, 1
          %s738 = smul.addr %s737, 4
          %s739 = scalar_lea.vmem %s3, %s738
        $region120: #{encoder_forward.3} parent=103 // pred_fallthru
          _
      $region104: #{encoder_forward.3} parent=5 // pred_fallthru
        _
      %p740 = scmp.le.s32.totalorder 1, %s35
      %p741 = scmp.lt.s32.totalorder %s35, 3
      %p742 = pnand %p740, %p741
      %p743 = pneg %p742
      // Predicated region
      $region121: #{encoder_forward.3} parent=5 // pred_check
        _
      $region122: #{encoder_forward.3} parent=5 // pred_check_branch
        %745 = sbr.rel (%p742) target = $region124
      $region123: #{encoder_forward.3} parent=5 // pred_region
        %s746 = ssub.s32 %s35, 1
        %p747 = scmp.lt.s32.totalorder %s40, 1
        %s748 = scalar_select %p747, %s40, 1
        %s749 = smul.addr %s748, 8
        %s750 = scalar_lea.vmem %s0, %s749
        %p751 = pneg %p61
        %p752 = pneg %p58
        %p753 = scmp.lt.s32.totalorder %s40, 1
        %s754 = scalar_select %p753, %s40, 1
        %s755 = smul.addr %s754, 8
        %s756 = scalar_lea.vmem %s1, %s755
        %p757 = pneg %p87
        %p758 = pneg %p84
        %p759 = scmp.lt.s32.totalorder %s40, 1
        %s760 = scalar_select %p759, %s40, 1
        %s761 = smul.addr %s760, 4
        %s762 = scalar_lea.vmem %s2, %s761
        %p763 = pneg %p113
        %p764 = pneg %p110
        %p765 = scmp.lt.s32.totalorder %s40, 1
        %s766 = scalar_select %p765, %s40, 1
        %s767 = smul.addr %s766, 4
        %s768 = scalar_lea.vmem %s3, %s767
        %p769 = pneg %p139
        %p770 = pneg %p136
        %p771 = pneg %p160
        %p772 = pneg %p157
        %p773 = pneg %p181
        %p774 = pneg %p178
        %p775 = pneg %p202
        %p776 = pneg %p199
        %p777 = pneg %p223
        %p778 = pneg %p220
        %p779 = pneg %p244
        %p780 = pneg %p241
        %p781 = pneg %p265
        %p782 = pneg %p262
        %p783 = pneg %p286
        %p784 = pneg %p283
        %p785 = pneg %p307
        %p786 = pneg %p304
        %p787 = pneg %p328
        %p788 = pneg %p325
        %p789 = pneg %p349
        %p790 = pneg %p346
        %p791 = pneg %p370
        %p792 = pneg %p367
        %p793 = pneg %p391
        %p794 = pneg %p388
        %p795 = pneg %p412
        %p796 = pneg %p409
        %p797 = pneg %p433
        %p798 = pneg %p430
        %p799 = pneg %p454
        %p800 = pneg %p451
        %p801 = pneg %p475
        %p802 = pneg %p472
        %p803 = pneg %p496
        %p804 = pneg %p493
        %p805 = pneg %p517
        %p806 = pneg %p514
        %p807 = pneg %p538
        %p808 = pneg %p535
        %p809 = pneg %p559
        %p810 = pneg %p556
        %p811 = pneg %p580
        %p812 = pneg %p577
        %p813 = pneg %p601
        %p814 = pneg %p598
        %p815 = pneg %p627
        %p816 = pneg %p624
        %s817 = sand.u32 %s614, 1
        %s818 = scalar_lea.sflag [#allocation3], %s817
        %s819 = sand.u32 %s614, 1
        %s820 = smul.addr %s819, 8
        %s821 = scalar_lea.vmem [#allocation2], %s820
        %p822 = scmp.lt.s32.totalorder %s40, 1
        %s823 = scalar_select %p822, %s40, 1
        %s824 = smul.addr %s823, 8
        %s825 = scalar_lea.vmem %s0, %s824
        %p826 = scmp.lt.s32.totalorder %s40, 1
        %s827 = scalar_select %p826, %s40, 1
        %s828 = smul.addr %s827, 8
        %s829 = scalar_lea.vmem %s1, %s828
        %p830 = scmp.lt.s32.totalorder %s40, 1
        %s831 = scalar_select %p830, %s40, 1
        %s832 = smul.addr %s831, 4
        %s833 = scalar_lea.vmem %s2, %s832
        %p834 = scmp.lt.s32.totalorder %s40, 1
        %s835 = scalar_select %p834, %s40, 1
        %s836 = smul.addr %s835, 4
        %s837 = scalar_lea.vmem %s3, %s836
        %v839 = vld [vmem:[%s825] sm:$0xff]
        %v840 = vld [vmem:[%s829] sm:$0xff]
        %v841 = vld [vmem:[%s833] sm:$0xf]
        %v842 = vunpack.c.l.bf16 %v841
        %v843 = vsub.f32 %v842, 1.0
        %v844 = vmul.f32 %v843, 1e+09
        %v845 = vld [vmem:[%s837] sm:$0xf]
        %v846 = vunpack.c.l.bf16 %v845
        %v847 = vsub.f32 %v846, 1.0
        %v848 = vmul.f32 %v847, 1e+09
        %v849 = vld [vmem:[%s4] sm:$0x1]
        %v850 = vld [vmem:[%s5] sm:$0x1]
        %851 = vadd.xlane.f32.xlu0 %v839
        %v852 = vpop.xlane.xlu0 %851
        %v853 = vrcp.pop 128.0
        %v854 = vmul.f32 %v852, %v853
        %v855 = vsub.f32 %v839, %v854
        %v856 = vmul.f32 %v855, %v855
        %857 = vadd.xlane.f32.xlu0 %v856
        %v858 = vpop.xlane.xlu0 %857
        %v859 = vmul.f32 %v858, 0.007874016
        %v860 = vrsqrt.pop %v859
        %v861 = vmul.f32 %v859, %v860
        %vm862 = vcmp.eq.f32.partialorder %v859, inf
        %v863 = vsel %vm862, %v859, %v861
        %vm864 = vcmp.eq.f32.partialorder %v859, 0.0
        %v865 = vand.u32 %v859, 2147483648
        %v866 = vsel %vm864, %v865, %v863
        %v868 = vlaneseq
        %v869 = vshrl.u32 %v868, 7
        %v870 = vsub.s32 0, %v869
        %v871 = vrot.slane %v849, %v870
        %v873 = vmul.f32 %v871, %v855
        %v874 = vadd.f32 %v866, 1e-06
        %v875 = vrcp.pop %v874
        %v876 = vmul.f32 %v873, %v875
        %v878 = vlaneseq
        %v879 = vshrl.u32 %v878, 7
        %v880 = vsub.s32 0, %v879
        %v881 = vrot.slane %v850, %v880
        %v883 = vadd.f32 %v876, %v881
        %v884 = vld [vmem:[%s6] sm:$0xff]
        %v885 = vld [vmem:[%s6 + $0x8] sm:$0xf]
        %v886 = vld [vmem:[%s6 + $0xc] sm:$0xff]
        %v887 = vld [vmem:[%s6 + $0x14] sm:$0xf]
        %v888 = vld [vmem:[%s6 + $0x18] sm:$0xff]
        %v889 = vld [vmem:[%s6 + $0x20] sm:$0xf]
        %v890 = vld [vmem:[%s6 + $0x24] sm:$0xff]
        %v891 = vld [vmem:[%s6 + $0x2c] sm:$0xf]
        %v892 = vld [vmem:[%s6 + $0x30] sm:$0xff]
        %v893 = vld [vmem:[%s6 + $0x38] sm:$0xf]
        %v894 = vld [vmem:[%s6 + $0x3c] sm:$0xff]
        %v895 = vld [vmem:[%s6 + $0x44] sm:$0xf]
        %v896 = vld [vmem:[%s6 + $0x48] sm:$0xff]
        %v897 = vld [vmem:[%s6 + $0x50] sm:$0xf]
        %v898 = vld [vmem:[%s6 + $0x54] sm:$0xff]
        %v899 = vld [vmem:[%s6 + $0x5c] sm:$0xf]
        %v900 = vld [vmem:[%s6 + $0x60] sm:$0xff]
        %v901 = vld [vmem:[%s6 + $0x68] sm:$0xf]
        %v902 = vld [vmem:[%s6 + $0x6c] sm:$0xff]
        %v903 = vld [vmem:[%s6 + $0x74] sm:$0xf]
        %v904 = vld [vmem:[%s6 + $0x78] sm:$0xff]
        %v905 = vld [vmem:[%s6 + $0x80] sm:$0xf]
        %v906 = vld [vmem:[%s6 + $0x84] sm:$0xff]
        %v907 = vld [vmem:[%s6 + $0x8c] sm:$0xf]
        %v908 = vld [vmem:[%s6 + $0x90] sm:$0xff]
        %v909 = vld [vmem:[%s6 + $0x98] sm:$0xf]
        %v910 = vld [vmem:[%s6 + $0x9c] sm:$0xff]
        %v911 = vld [vmem:[%s6 + $0xa4] sm:$0xf]
        %v912 = vld [vmem:[%s6 + $0xa8] sm:$0xff]
        %v913 = vld [vmem:[%s6 + $0xb0] sm:$0xf]
        %v914 = vld [vmem:[%s6 + $0xb4] sm:$0xff]
        %v915 = vld [vmem:[%s6 + $0xbc] sm:$0xf]
        %v916 = vld [vmem:[%s7] sm:$0x7]
        %v917 = vpack.c.bf16 %v883, %v883
        %v919 = vlaneseq
        %v920 = vshrl.u32 %v919, 7
        %v921 = vsub.s32 0, %v920
        %v922 = vrot.slane %v916, %v921
        %v923 = vlaneseq
        %v924 = vshrl.u32 %v923, 7
        %v925 = vsub.s32 1, %v924
        %v926 = vrot.slane %v916, %v925
        %v927 = vlaneseq
        %v928 = vshrl.u32 %v927, 7
        %v929 = vsub.s32 2, %v928
        %v930 = vrot.slane %v916, %v929
        %v966 = vunpack.c.l.b16 %v884
        %v967 = vunpack.c.h.b16 %v884
        %v968 = vunpack.c.l.b16 %v885
        %v969 = vunpack.c.l.b16 %v886
        %v970 = vunpack.c.h.b16 %v886
        %v971 = vunpack.c.l.b16 %v887
        %v972 = vunpack.c.l.b16 %v888
        %v973 = vunpack.c.h.b16 %v888
        %v974 = vunpack.c.l.b16 %v889
        %v975 = vunpack.c.l.b16 %v890
        %v976 = vunpack.c.h.b16 %v890
        %v977 = vunpack.c.l.b16 %v891
        %v978 = vunpack.c.l.b16 %v892
        %v979 = vunpack.c.h.b16 %v892
        %v980 = vunpack.c.l.b16 %v893
        %v981 = vunpack.c.l.b16 %v894
        %v982 = vunpack.c.h.b16 %v894
        %v983 = vunpack.c.l.b16 %v895
        %v984 = vunpack.c.l.b16 %v896
        %v985 = vunpack.c.h.b16 %v896
        %v986 = vunpack.c.l.b16 %v897
        %v987 = vunpack.c.l.b16 %v898
        %v988 = vunpack.c.h.b16 %v898
        %v989 = vunpack.c.l.b16 %v899
        %v990 = vunpack.c.l.b16 %v900
        %v991 = vunpack.c.h.b16 %v900
        %v992 = vunpack.c.l.b16 %v901
        %v993 = vunpack.c.l.b16 %v902
        %v994 = vunpack.c.h.b16 %v902
        %v995 = vunpack.c.l.b16 %v903
        %v996 = vunpack.c.l.b16 %v904
        %v997 = vunpack.c.h.b16 %v904
        %v998 = vunpack.c.l.b16 %v905
        %v999 = vunpack.c.l.b16 %v906
        %v1000 = vunpack.c.h.b16 %v906
        %v1001 = vunpack.c.l.b16 %v907
        %v1002 = vunpack.c.l.b16 %v908
        %v1003 = vunpack.c.h.b16 %v908
        %v1004 = vunpack.c.l.b16 %v909
        %v1005 = vunpack.c.l.b16 %v910
        %v1006 = vunpack.c.h.b16 %v910
        %v1007 = vunpack.c.l.b16 %v911
        %v1008 = vunpack.c.l.b16 %v912
        %v1009 = vunpack.c.h.b16 %v912
        %v1010 = vunpack.c.l.b16 %v913
        %v1011 = vunpack.c.l.b16 %v914
        %v1012 = vunpack.c.h.b16 %v914
        %v1013 = vunpack.c.l.b16 %v915
        %v1014 = vpack.c.b16 %v969, %v966
        %v1015 = vpack.c.b16 %v970, %v967
        %v1016 = vpack.c.b16 %v971, %v968
        %v1017 = vpack.c.b16 %v975, %v972
        %v1018 = vpack.c.b16 %v976, %v973
        %v1019 = vpack.c.b16 %v977, %v974
        %v1020 = vpack.c.b16 %v981, %v978
        %v1021 = vpack.c.b16 %v982, %v979
        %v1022 = vpack.c.b16 %v983, %v980
        %v1023 = vpack.c.b16 %v987, %v984
        %v1024 = vpack.c.b16 %v988, %v985
        %v1025 = vpack.c.b16 %v989, %v986
        %v1026 = vpack.c.b16 %v993, %v990
        %v1027 = vpack.c.b16 %v994, %v991
        %v1028 = vpack.c.b16 %v995, %v992
        %v1029 = vpack.c.b16 %v999, %v996
        %v1030 = vpack.c.b16 %v1000, %v997
        %v1031 = vpack.c.b16 %v1001, %v998
        %v1032 = vpack.c.b16 %v1005, %v1002
        %v1033 = vpack.c.b16 %v1006, %v1003
        %v1034 = vpack.c.b16 %v1007, %v1004
        %v1035 = vpack.c.b16 %v1011, %v1008
        %v1036 = vpack.c.b16 %v1012, %v1009
        %v1037 = vpack.c.b16 %v1013, %v1010
        %1062 = vmatprep.subr.bf16.mxu0 %v1036
        %1063 = vmatpush1.bf16.msra.mxu0 %v1035
        %1064 = vmatprep.subr.bf16.mxu0 %v1033
        %1065 = vmatpush1.bf16.msra.mxu0 %v1032
        %1066 = vmatprep.subr.bf16.mxu0 %v1030
        %1067 = vmatpush1.bf16.msra.mxu0 %v1029
        %1068 = vmatprep.subr.bf16.mxu0 %v1027
        %1069 = vmatpush1.bf16.msra.mxu0 %v1026
        %1070 = vmatprep.subr.bf16.mxu0 %v1024
        %1071 = vmatpush1.bf16.msra.mxu0 %v1023
        %1072 = vmatprep.subr.bf16.mxu0 %v1021
        %1073 = vmatpush1.bf16.msra.mxu0 %v1020
        %1074 = vmatprep.subr.bf16.mxu0 %v1018
        %1075 = vmatpush1.bf16.msra.mxu0 %v1017
        %1076 = vmatprep.subr.bf16.mxu0 %v1015
        %1077 = vmatpush1.bf16.msra.mxu0 %v1014
        %1078 = vmatprep.subr.bf16.mxu0 0
        %1079 = vmatpush2.bf16.msra.mxu0 0
        %1080 = vmatprep.subr.bf16.mxu0 0
        %1081 = vmatpush2.bf16.msra.mxu0 0
        %1082 = vmatprep.subr.bf16.mxu0 0
        %1083 = vmatpush2.bf16.msra.mxu0 0
        %1084 = vmatprep.subr.bf16.mxu0 0
        %1085 = vmatpush2.bf16.msra.mxu0 0
        %1086 = vmatprep.subr.bf16.mxu0 0
        %1087 = vmatpush2.bf16.msra.mxu0 0
        %1088 = vmatprep.subr.bf16.mxu0 0
        %1089 = vmatpush2.bf16.msra.mxu0 0
        %1090 = vmatprep.subr.bf16.mxu0 0
        %1091 = vmatpush2.bf16.msra.mxu0 0
        %1092 = vmatprep.subr.bf16.mxu0 0
        %1093 = vmatpush2.bf16.msra.mxu0 0
        %1094 = vmatprep.mubr.bf16.mxu0 0
        %1095 = vmatmul.mubr.bf16.gmra.mxu0 %v917
        %v1096 = vpop.f32.mrf.mxu0
        %v1097 = vadd.f32 %v922, %v1096
        %v1098 = vpop.f32.mrf.mxu0
        %v1099 = vadd.f32 %v926, %v1098
        %v1100 = vpop.f32.mrf.mxu0
        %v1101 = vpop.f32.mrf.mxu0
        %1102 = vdwg.mxu0
        %1103 = vmatprep.subr.bf16.mxu0 0
        %1104 = vmatpush1.bf16.msra.mxu0 %v1037
        %1105 = vmatprep.subr.bf16.mxu0 0
        %1106 = vmatpush1.bf16.msra.mxu0 %v1034
        %1107 = vmatprep.subr.bf16.mxu0 0
        %1108 = vmatpush1.bf16.msra.mxu0 %v1031
        %1109 = vmatprep.subr.bf16.mxu0 0
        %1110 = vmatpush1.bf16.msra.mxu0 %v1028
        %1111 = vmatprep.subr.bf16.mxu0 0
        %1112 = vmatpush1.bf16.msra.mxu0 %v1025
        %1113 = vmatprep.subr.bf16.mxu0 0
        %1114 = vmatpush1.bf16.msra.mxu0 %v1022
        %1115 = vmatprep.subr.bf16.mxu0 0
        %1116 = vmatpush1.bf16.msra.mxu0 %v1019
        %1117 = vmatprep.subr.bf16.mxu0 0
        %1118 = vmatpush1.bf16.msra.mxu0 %v1016
        %1119 = vmatprep.subr.bf16.mxu0 0
        %1120 = vmatpush2.bf16.msra.mxu0 0
        %1121 = vmatprep.subr.bf16.mxu0 0
        %1122 = vmatpush2.bf16.msra.mxu0 0
        %1123 = vmatprep.subr.bf16.mxu0 0
        %1124 = vmatpush2.bf16.msra.mxu0 0
        %1125 = vmatprep.subr.bf16.mxu0 0
        %1126 = vmatpush2.bf16.msra.mxu0 0
        %1127 = vmatprep.subr.bf16.mxu0 0
        %1128 = vmatpush2.bf16.msra.mxu0 0
        %1129 = vmatprep.subr.bf16.mxu0 0
        %1130 = vmatpush2.bf16.msra.mxu0 0
        %1131 = vmatprep.subr.bf16.mxu0 0
        %1132 = vmatpush2.bf16.msra.mxu0 0
        %1133 = vmatprep.subr.bf16.mxu0 0
        %1134 = vmatpush2.bf16.msra.mxu0 0
        %1135 = vmatprep.mubr.bf16.mxu0 0
        %1136 = vmatmul.mubr.bf16.gmra.mxu0 %v917
        %v1137 = vpop.f32.mrf.mxu0
        %v1138 = vadd.f32 %v930, %v1137
        %v1139 = vpop.f32.mrf.mxu0
        %v1140 = vpop.f32.mrf.mxu0
        %v1141 = vpop.f32.mrf.mxu0
        %1142 = vdwg.mxu0
        %v1143 = vpack.c.bf16 %v1097, %v1097
        %v1144 = vpack.c.bf16 %v1099, %v1099
        %v1145 = vpack.c.bf16 %v1138, %v1138
        %vm1146 = vcmask 261120
        %v1148 = vsel %vm1146, %v1143, 0
        %v1151 = vsel %vm1146, %v1144, 0
        %1153 = vmatprep.subr.bf16.mxu0 0
        %1154 = vmatpush1.bf16.xpose.msra.mxu0 0
        %1155 = vmatprep.subr.bf16.mxu0 0
        %1156 = vmatpush1.bf16.xpose.msra.mxu0 0
        %1157 = vmatprep.subr.bf16.mxu0 0
        %1158 = vmatpush1.bf16.xpose.msra.mxu0 0
        %1159 = vmatprep.subr.bf16.mxu0 0
        %1160 = vmatpush1.bf16.xpose.msra.mxu0 0
        %1161 = vmatprep.subr.bf16.mxu0 0
        %1162 = vmatpush1.bf16.xpose.msra.mxu0 0
        %1163 = vmatprep.subr.bf16.mxu0 0
        %1164 = vmatpush1.bf16.xpose.msra.mxu0 0
        %1165 = vmatprep.subr.bf16.mxu0 0
        %1166 = vmatpush1.bf16.xpose.msra.mxu0 0
        %1167 = vmatprep.subr.bf16.mxu0 0
        %1168 = vmatpush1.bf16.xpose.msra.mxu0 %v1151
        %1169 = vmatprep.subr.bf16.mxu0 0
        %1170 = vmatpush2.bf16.xpose.msra.mxu0 0
        %1171 = vmatprep.subr.bf16.mxu0 0
        %1172 = vmatpush2.bf16.xpose.msra.mxu0 0
        %1173 = vmatprep.subr.bf16.mxu0 0
        %1174 = vmatpush2.bf16.xpose.msra.mxu0 0
        %1175 = vmatprep.subr.bf16.mxu0 0
        %1176 = vmatpush2.bf16.xpose.msra.mxu0 0
        %1177 = vmatprep.subr.bf16.mxu0 0
        %1178 = vmatpush2.bf16.xpose.msra.mxu0 0
        %1179 = vmatprep.subr.bf16.mxu0 0
        %1180 = vmatpush2.bf16.xpose.msra.mxu0 0
        %1181 = vmatprep.subr.bf16.mxu0 0
        %1182 = vmatpush2.bf16.xpose.msra.mxu0 0
        %1183 = vmatprep.subr.bf16.mxu0 0
        %1184 = vmatpush2.bf16.xpose.msra.mxu0 0
        %1185 = vmatprep.mubr.bf16.mxu0 0
        %1186 = vmatmul.mubr.bf16.gmra.mxu0 %v1148
        %v1187 = vpop.f32.mrf.mxu0
        %v1188 = vadd.f32 0.0, %v1187
        %v1189 = vpop.f32.mrf.mxu0
        %v1190 = vpop.f32.mrf.mxu0
        %v1191 = vpop.f32.mrf.mxu0
        %1192 = vdwg.mxu0
        %v1193 = vmul.f32 %v1188, 0.17677669
        %v1194 = vadd.f32 %v1193, %v844
        %vm1195 = vcmask 64512
        %v1196 = vsel %vm1195, %v1194, -inf
        %1197 = vmax.xlane.f32.xlu0 %v1196
        %v1198 = vpop.xlane.xlu0 %1197
        %v1199 = vsub.f32 %v1194, %v1198
        %v1200 = vmul.f32 %v1199, 1.442695
        %v1201 = vpow.pop %v1200
        %v1202 = vsel %vm1195, %v1201, 0.0
        %1203 = vadd.xlane.f32.xlu0 %v1202
        %v1204 = vpop.xlane.xlu0 %1203
        %v1205 = vrcp.pop %v1204
        %v1206 = vmul.f32 %v1201, %v1205
        %v1207 = vpack.c.bf16 %v1206, %v1206
        %v1209 = vsel %vm1195, %v1207, 0
        %vm1211 = vcmask 1043456
        %v1213 = vsel %vm1211, %v1145, 0
        %1215 = vmatprep.subr.bf16.mxu0 0
        %1216 = vmatpush1.bf16.msra.mxu0 0
        %1217 = vmatprep.subr.bf16.mxu0 0
        %1218 = vmatpush1.bf16.msra.mxu0 0
        %1219 = vmatprep.subr.bf16.mxu0 0
        %1220 = vmatpush1.bf16.msra.mxu0 0
        %1221 = vmatprep.subr.bf16.mxu0 0
        %1222 = vmatpush1.bf16.msra.mxu0 0
        %1223 = vmatprep.subr.bf16.mxu0 0
        %1224 = vmatpush1.bf16.msra.mxu0 0
        %1225 = vmatprep.subr.bf16.mxu0 0
        %1226 = vmatpush1.bf16.msra.mxu0 0
        %1227 = vmatprep.subr.bf16.mxu0 0
        %1228 = vmatpush1.bf16.msra.mxu0 0
        %1229 = vmatprep.subr.bf16.mxu0 0
        %1230 = vmatpush1.bf16.msra.mxu0 %v1213
        %1231 = vmatprep.subr.bf16.mxu0 0
        %1232 = vmatpush2.bf16.msra.mxu0 0
        %1233 = vmatprep.subr.bf16.mxu0 0
        %1234 = vmatpush2.bf16.msra.mxu0 0
        %1235 = vmatprep.subr.bf16.mxu0 0
        %1236 = vmatpush2.bf16.msra.mxu0 0
        %1237 = vmatprep.subr.bf16.mxu0 0
        %1238 = vmatpush2.bf16.msra.mxu0 0
        %1239 = vmatprep.subr.bf16.mxu0 0
        %1240 = vmatpush2.bf16.msra.mxu0 0
        %1241 = vmatprep.subr.bf16.mxu0 0
        %1242 = vmatpush2.bf16.msra.mxu0 0
        %1243 = vmatprep.subr.bf16.mxu0 0
        %1244 = vmatpush2.bf16.msra.mxu0 0
        %1245 = vmatprep.subr.bf16.mxu0 0
        %1246 = vmatpush2.bf16.msra.mxu0 0
        %1247 = vmatprep.mubr.bf16.mxu0 0
        %1248 = vmatmul.mubr.bf16.gmra.mxu0 %v1209
        %v1249 = vpop.f32.mrf.mxu0
        %v1250 = vadd.f32 0.0, %v1249
        %v1251 = vpop.f32.mrf.mxu0
        %v1252 = vpop.f32.mrf.mxu0
        %v1253 = vpop.f32.mrf.mxu0
        %1254 = vdwg.mxu0
        %1256 = vrot.lane.b32.xlu0 %v1143, 96
        %v1257 = vpop.permute.xlu0 %1256
        %1259 = vrot.lane.b32.xlu0 %v1144, 96
        %v1260 = vpop.permute.xlu0 %1259
        %v1262 = vsel %vm1146, %v1257, 0
        %v1265 = vsel %vm1146, %v1260, 0
        %1267 = vmatprep.subr.bf16.mxu0 0
        %1268 = vmatpush1.bf16.xpose.msra.mxu0 0
        %1269 = vmatprep.subr.bf16.mxu0 0
        %1270 = vmatpush1.bf16.xpose.msra.mxu0 0
        %1271 = vmatprep.subr.bf16.mxu0 0
        %1272 = vmatpush1.bf16.xpose.msra.mxu0 0
        %1273 = vmatprep.subr.bf16.mxu0 0
        %1274 = vmatpush1.bf16.xpose.msra.mxu0 0
        %1275 = vmatprep.subr.bf16.mxu0 0
        %1276 = vmatpush1.bf16.xpose.msra.mxu0 0
        %1277 = vmatprep.subr.bf16.mxu0 0
        %1278 = vmatpush1.bf16.xpose.msra.mxu0 0
        %1279 = vmatprep.subr.bf16.mxu0 0
        %1280 = vmatpush1.bf16.xpose.msra.mxu0 0
        %1281 = vmatprep.subr.bf16.mxu0 0
        %1282 = vmatpush1.bf16.xpose.msra.mxu0 %v1265
        %1283 = vmatprep.subr.bf16.mxu0 0
        %1284 = vmatpush2.bf16.xpose.msra.mxu0 0
        %1285 = vmatprep.subr.bf16.mxu0 0
        %1286 = vmatpush2.bf16.xpose.msra.mxu0 0
        %1287 = vmatprep.subr.bf16.mxu0 0
        %1288 = vmatpush2.bf16.xpose.msra.mxu0 0
        %1289 = vmatprep.subr.bf16.mxu0 0
        %1290 = vmatpush2.bf16.xpose.msra.mxu0 0
        %1291 = vmatprep.subr.bf16.mxu0 0
        %1292 = vmatpush2.bf16.xpose.msra.mxu0 0
        %1293 = vmatprep.subr.bf16.mxu0 0
        %1294 = vmatpush2.bf16.xpose.msra.mxu0 0
        %1295 = vmatprep.subr.bf16.mxu0 0
        %1296 = vmatpush2.bf16.xpose.msra.mxu0 0
        %1297 = vmatprep.subr.bf16.mxu0 0
        %1298 = vmatpush2.bf16.xpose.msra.mxu0 0
        %1299 = vmatprep.mubr.bf16.mxu0 0
        %1300 = vmatmul.mubr.bf16.gmra.mxu0 %v1262
        %v1301 = vpop.f32.mrf.mxu0
        %v1302 = vadd.f32 0.0, %v1301
        %v1303 = vpop.f32.mrf.mxu0
        %v1304 = vpop.f32.mrf.mxu0
        %v1305 = vpop.f32.mrf.mxu0
        %1306 = vdwg.mxu0
        %v1307 = vmul.f32 %v1302, 0.17677669
        %v1308 = vadd.f32 %v1307, %v844
        %v1309 = vsel %vm1195, %v1308, -inf
        %1310 = vmax.xlane.f32.xlu0 %v1309
        %v1311 = vpop.xlane.xlu0 %1310
        %v1312 = vsub.f32 %v1308, %v1311
        %v1313 = vmul.f32 %v1312, 1.442695
        %v1314 = vpow.pop %v1313
        %v1315 = vsel %vm1195, %v1314, 0.0
        %1316 = vadd.xlane.f32.xlu0 %v1315
        %v1317 = vpop.xlane.xlu0 %1316
        %v1318 = vrcp.pop %v1317
        %v1319 = vmul.f32 %v1314, %v1318
        %v1320 = vpack.c.bf16 %v1319, %v1319
        %1322 = vrot.lane.b32.xlu0 %v1145, 96
        %v1323 = vpop.permute.xlu0 %1322
        %v1325 = vsel %vm1195, %v1320, 0
        %v1328 = vsel %vm1211, %v1323, 0
        %1330 = vmatprep.subr.bf16.mxu0 0
        %1331 = vmatpush1.bf16.msra.mxu0 0
        %1332 = vmatprep.subr.bf16.mxu0 0
        %1333 = vmatpush1.bf16.msra.mxu0 0
        %1334 = vmatprep.subr.bf16.mxu0 0
        %1335 = vmatpush1.bf16.msra.mxu0 0
        %1336 = vmatprep.subr.bf16.mxu0 0
        %1337 = vmatpush1.bf16.msra.mxu0 0
        %1338 = vmatprep.subr.bf16.mxu0 0
        %1339 = vmatpush1.bf16.msra.mxu0 0
        %1340 = vmatprep.subr.bf16.mxu0 0
        %1341 = vmatpush1.bf16.msra.mxu0 0
        %1342 = vmatprep.subr.bf16.mxu0 0
        %1343 = vmatpush1.bf16.msra.mxu0 0
        %1344 = vmatprep.subr.bf16.mxu0 0
        %1345 = vmatpush1.bf16.msra.mxu0 %v1328
        %1346 = vmatprep.subr.bf16.mxu0 0
        %1347 = vmatpush2.bf16.msra.mxu0 0
        %1348 = vmatprep.subr.bf16.mxu0 0
        %1349 = vmatpush2.bf16.msra.mxu0 0
        %1350 = vmatprep.subr.bf16.mxu0 0
        %1351 = vmatpush2.bf16.msra.mxu0 0
        %1352 = vmatprep.subr.bf16.mxu0 0
        %1353 = vmatpush2.bf16.msra.mxu0 0
        %1354 = vmatprep.subr.bf16.mxu0 0
        %1355 = vmatpush2.bf16.msra.mxu0 0
        %1356 = vmatprep.subr.bf16.mxu0 0
        %1357 = vmatpush2.bf16.msra.mxu0 0
        %1358 = vmatprep.subr.bf16.mxu0 0
        %1359 = vmatpush2.bf16.msra.mxu0 0
        %1360 = vmatprep.subr.bf16.mxu0 0
        %1361 = vmatpush2.bf16.msra.mxu0 0
        %1362 = vmatprep.mubr.bf16.mxu0 0
        %1363 = vmatmul.mubr.bf16.gmra.mxu0 %v1325
        %v1364 = vpop.f32.mrf.mxu0
        %v1365 = vadd.f32 0.0, %v1364
        %v1366 = vpop.f32.mrf.mxu0
        %v1367 = vpop.f32.mrf.mxu0
        %v1368 = vpop.f32.mrf.mxu0
        %1369 = vdwg.mxu0
        %1370 = vrot.lane.b32.xlu0 %v1143, 64
        %v1371 = vpop.permute.xlu0 %1370
        %1372 = vrot.lane.b32.xlu0 %v1144, 64
        %v1373 = vpop.permute.xlu0 %1372
        %v1375 = vsel %vm1146, %v1371, 0
        %v1378 = vsel %vm1146, %v1373, 0
        %1380 = vmatprep.subr.bf16.mxu0 0
        %1381 = vmatpush1.bf16.xpose.msra.mxu0 0
        %1382 = vmatprep.subr.bf16.mxu0 0
        %1383 = vmatpush1.bf16.xpose.msra.mxu0 0
        %1384 = vmatprep.subr.bf16.mxu0 0
        %1385 = vmatpush1.bf16.xpose.msra.mxu0 0
        %1386 = vmatprep.subr.bf16.mxu0 0
        %1387 = vmatpush1.bf16.xpose.msra.mxu0 0
        %1388 = vmatprep.subr.bf16.mxu0 0
        %1389 = vmatpush1.bf16.xpose.msra.mxu0 0
        %1390 = vmatprep.subr.bf16.mxu0 0
        %1391 = vmatpush1.bf16.xpose.msra.mxu0 0
        %1392 = vmatprep.subr.bf16.mxu0 0
        %1393 = vmatpush1.bf16.xpose.msra.mxu0 0
        %1394 = vmatprep.subr.bf16.mxu0 0
        %1395 = vmatpush1.bf16.xpose.msra.mxu0 %v1378
        %1396 = vmatprep.subr.bf16.mxu0 0
        %1397 = vmatpush2.bf16.xpose.msra.mxu0 0
        %1398 = vmatprep.subr.bf16.mxu0 0
        %1399 = vmatpush2.bf16.xpose.msra.mxu0 0
        %1400 = vmatprep.subr.bf16.mxu0 0
        %1401 = vmatpush2.bf16.xpose.msra.mxu0 0
        %1402 = vmatprep.subr.bf16.mxu0 0
        %1403 = vmatpush2.bf16.xpose.msra.mxu0 0
        %1404 = vmatprep.subr.bf16.mxu0 0
        %1405 = vmatpush2.bf16.xpose.msra.mxu0 0
        %1406 = vmatprep.subr.bf16.mxu0 0
        %1407 = vmatpush2.bf16.xpose.msra.mxu0 0
        %1408 = vmatprep.subr.bf16.mxu0 0
        %1409 = vmatpush2.bf16.xpose.msra.mxu0 0
        %1410 = vmatprep.subr.bf16.mxu0 0
        %1411 = vmatpush2.bf16.xpose.msra.mxu0 0
        %1412 = vmatprep.mubr.bf16.mxu0 0
        %1413 = vmatmul.mubr.bf16.gmra.mxu0 %v1375
        %v1414 = vpop.f32.mrf.mxu0
        %v1415 = vadd.f32 0.0, %v1414
        %v1416 = vpop.f32.mrf.mxu0
        %v1417 = vpop.f32.mrf.mxu0
        %v1418 = vpop.f32.mrf.mxu0
        %1419 = vdwg.mxu0
        %v1420 = vmul.f32 %v1415, 0.17677669
        %v1421 = vadd.f32 %v1420, %v844
        %v1422 = vsel %vm1195, %v1421, -inf
        %1423 = vmax.xlane.f32.xlu0 %v1422
        %v1424 = vpop.xlane.xlu0 %1423
        %v1425 = vsub.f32 %v1421, %v1424
        %v1426 = vmul.f32 %v1425, 1.442695
        %v1427 = vpow.pop %v1426
        %v1428 = vsel %vm1195, %v1427, 0.0
        %1429 = vadd.xlane.f32.xlu0 %v1428
        %v1430 = vpop.xlane.xlu0 %1429
        %v1431 = vrcp.pop %v1430
        %v1432 = vmul.f32 %v1427, %v1431
        %v1433 = vpack.c.bf16 %v1432, %v1432
        %1434 = vrot.lane.b32.xlu0 %v1145, 64
        %v1435 = vpop.permute.xlu0 %1434
        %v1437 = vsel %vm1195, %v1433, 0
        %v1440 = vsel %vm1211, %v1435, 0
        %1442 = vmatprep.subr.bf16.mxu0 0
        %1443 = vmatpush1.bf16.msra.mxu0 0
        %1444 = vmatprep.subr.bf16.mxu0 0
        %1445 = vmatpush1.bf16.msra.mxu0 0
        %1446 = vmatprep.subr.bf16.mxu0 0
        %1447 = vmatpush1.bf16.msra.mxu0 0
        %1448 = vmatprep.subr.bf16.mxu0 0
        %1449 = vmatpush1.bf16.msra.mxu0 0
        %1450 = vmatprep.subr.bf16.mxu0 0
        %1451 = vmatpush1.bf16.msra.mxu0 0
        %1452 = vmatprep.subr.bf16.mxu0 0
        %1453 = vmatpush1.bf16.msra.mxu0 0
        %1454 = vmatprep.subr.bf16.mxu0 0
        %1455 = vmatpush1.bf16.msra.mxu0 0
        %1456 = vmatprep.subr.bf16.mxu0 0
        %1457 = vmatpush1.bf16.msra.mxu0 %v1440
        %1458 = vmatprep.subr.bf16.mxu0 0
        %1459 = vmatpush2.bf16.msra.mxu0 0
        %1460 = vmatprep.subr.bf16.mxu0 0
        %1461 = vmatpush2.bf16.msra.mxu0 0
        %1462 = vmatprep.subr.bf16.mxu0 0
        %1463 = vmatpush2.bf16.msra.mxu0 0
        %1464 = vmatprep.subr.bf16.mxu0 0
        %1465 = vmatpush2.bf16.msra.mxu0 0
        %1466 = vmatprep.subr.bf16.mxu0 0
        %1467 = vmatpush2.bf16.msra.mxu0 0
        %1468 = vmatprep.subr.bf16.mxu0 0
        %1469 = vmatpush2.bf16.msra.mxu0 0
        %1470 = vmatprep.subr.bf16.mxu0 0
        %1471 = vmatpush2.bf16.msra.mxu0 0
        %1472 = vmatprep.subr.bf16.mxu0 0
        %1473 = vmatpush2.bf16.msra.mxu0 0
        %1474 = vmatprep.mubr.bf16.mxu0 0
        %1475 = vmatmul.mubr.bf16.gmra.mxu0 %v1437
        %v1476 = vpop.f32.mrf.mxu0
        %v1477 = vadd.f32 0.0, %v1476
        %v1478 = vpop.f32.mrf.mxu0
        %v1479 = vpop.f32.mrf.mxu0
        %v1480 = vpop.f32.mrf.mxu0
        %1481 = vdwg.mxu0
        %1482 = vrot.lane.b32.xlu0 %v1143, 32
        %v1483 = vpop.permute.xlu0 %1482
        %1484 = vrot.lane.b32.xlu0 %v1144, 32
        %v1485 = vpop.permute.xlu0 %1484
        %v1487 = vsel %vm1146, %v1483, 0
        %v1490 = vsel %vm1146, %v1485, 0
        %1492 = vmatprep.subr.bf16.mxu0 0
        %1493 = vmatpush1.bf16.xpose.msra.mxu0 0
        %1494 = vmatprep.subr.bf16.mxu0 0
        %1495 = vmatpush1.bf16.xpose.msra.mxu0 0
        %1496 = vmatprep.subr.bf16.mxu0 0
        %1497 = vmatpush1.bf16.xpose.msra.mxu0 0
        %1498 = vmatprep.subr.bf16.mxu0 0
        %1499 = vmatpush1.bf16.xpose.msra.mxu0 0
        %1500 = vmatprep.subr.bf16.mxu0 0
        %1501 = vmatpush1.bf16.xpose.msra.mxu0 0
        %1502 = vmatprep.subr.bf16.mxu0 0
        %1503 = vmatpush1.bf16.xpose.msra.mxu0 0
        %1504 = vmatprep.subr.bf16.mxu0 0
        %1505 = vmatpush1.bf16.xpose.msra.mxu0 0
        %1506 = vmatprep.subr.bf16.mxu0 0
        %1507 = vmatpush1.bf16.xpose.msra.mxu0 %v1490
        %1508 = vmatprep.subr.bf16.mxu0 0
        %1509 = vmatpush2.bf16.xpose.msra.mxu0 0
        %1510 = vmatprep.subr.bf16.mxu0 0
        %1511 = vmatpush2.bf16.xpose.msra.mxu0 0
        %1512 = vmatprep.subr.bf16.mxu0 0
        %1513 = vmatpush2.bf16.xpose.msra.mxu0 0
        %1514 = vmatprep.subr.bf16.mxu0 0
        %1515 = vmatpush2.bf16.xpose.msra.mxu0 0
        %1516 = vmatprep.subr.bf16.mxu0 0
        %1517 = vmatpush2.bf16.xpose.msra.mxu0 0
        %1518 = vmatprep.subr.bf16.mxu0 0
        %1519 = vmatpush2.bf16.xpose.msra.mxu0 0
        %1520 = vmatprep.subr.bf16.mxu0 0
        %1521 = vmatpush2.bf16.xpose.msra.mxu0 0
        %1522 = vmatprep.subr.bf16.mxu0 0
        %1523 = vmatpush2.bf16.xpose.msra.mxu0 0
        %1524 = vmatprep.mubr.bf16.mxu0 0
        %1525 = vmatmul.mubr.bf16.gmra.mxu0 %v1487
        %v1526 = vpop.f32.mrf.mxu0
        %v1527 = vadd.f32 0.0, %v1526
        %v1528 = vpop.f32.mrf.mxu0
        %v1529 = vpop.f32.mrf.mxu0
        %v1530 = vpop.f32.mrf.mxu0
        %1531 = vdwg.mxu0
        %v1532 = vmul.f32 %v1527, 0.17677669
        %v1533 = vadd.f32 %v1532, %v844
        %v1534 = vsel %vm1195, %v1533, -inf
        %1535 = vmax.xlane.f32.xlu0 %v1534
        %v1536 = vpop.xlane.xlu0 %1535
        %v1537 = vsub.f32 %v1533, %v1536
        %v1538 = vmul.f32 %v1537, 1.442695
        %v1539 = vpow.pop %v1538
        %v1540 = vsel %vm1195, %v1539, 0.0
        %1541 = vadd.xlane.f32.xlu0 %v1540
        %v1542 = vpop.xlane.xlu0 %1541
        %v1543 = vrcp.pop %v1542
        %v1544 = vmul.f32 %v1539, %v1543
        %v1545 = vpack.c.bf16 %v1544, %v1544
        %1546 = vrot.lane.b32.xlu0 %v1145, 32
        %v1547 = vpop.permute.xlu0 %1546
        %v1549 = vsel %vm1195, %v1545, 0
        %v1552 = vsel %vm1211, %v1547, 0
        %1554 = vmatprep.subr.bf16.mxu0 0
        %1555 = vmatpush1.bf16.msra.mxu0 0
        %1556 = vmatprep.subr.bf16.mxu0 0
        %1557 = vmatpush1.bf16.msra.mxu0 0
        %1558 = vmatprep.subr.bf16.mxu0 0
        %1559 = vmatpush1.bf16.msra.mxu0 0
        %1560 = vmatprep.subr.bf16.mxu0 0
        %1561 = vmatpush1.bf16.msra.mxu0 0
        %1562 = vmatprep.subr.bf16.mxu0 0
        %1563 = vmatpush1.bf16.msra.mxu0 0
        %1564 = vmatprep.subr.bf16.mxu0 0
        %1565 = vmatpush1.bf16.msra.mxu0 0
        %1566 = vmatprep.subr.bf16.mxu0 0
        %1567 = vmatpush1.bf16.msra.mxu0 0
        %1568 = vmatprep.subr.bf16.mxu0 0
        %1569 = vmatpush1.bf16.msra.mxu0 %v1552
        %1570 = vmatprep.subr.bf16.mxu0 0
        %1571 = vmatpush2.bf16.msra.mxu0 0
        %1572 = vmatprep.subr.bf16.mxu0 0
        %1573 = vmatpush2.bf16.msra.mxu0 0
        %1574 = vmatprep.subr.bf16.mxu0 0
        %1575 = vmatpush2.bf16.msra.mxu0 0
        %1576 = vmatprep.subr.bf16.mxu0 0
        %1577 = vmatpush2.bf16.msra.mxu0 0
        %1578 = vmatprep.subr.bf16.mxu0 0
        %1579 = vmatpush2.bf16.msra.mxu0 0
        %1580 = vmatprep.subr.bf16.mxu0 0
        %1581 = vmatpush2.bf16.msra.mxu0 0
        %1582 = vmatprep.subr.bf16.mxu0 0
        %1583 = vmatpush2.bf16.msra.mxu0 0
        %1584 = vmatprep.subr.bf16.mxu0 0
        %1585 = vmatpush2.bf16.msra.mxu0 0
        %1586 = vmatprep.mubr.bf16.mxu0 0
        %1587 = vmatmul.mubr.bf16.gmra.mxu0 %v1549
        %v1588 = vpop.f32.mrf.mxu0
        %v1589 = vadd.f32 0.0, %v1588
        %v1590 = vpop.f32.mrf.mxu0
        %v1591 = vpop.f32.mrf.mxu0
        %v1592 = vpop.f32.mrf.mxu0
        %1593 = vdwg.mxu0
        %1595 = vrot.lane.b32.xlu0 %v1365, 32
        %v1596 = vpop.permute.xlu0 %1595
        %1599 = vrot.lane.b32.xlu0 %v1477, 64
        %v1600 = vpop.permute.xlu0 %1599
        %1603 = vrot.lane.b32.xlu0 %v1589, 96
        %v1604 = vpop.permute.xlu0 %1603
        %v1606 = vsel %vm1146, %v1250, %v1596
        %vm1607 = vcmask 523264
        %v1608 = vsel %vm1607, %v1606, %v1600
        %vm1609 = vcmask 785408
        %v1610 = vsel %vm1609, %v1608, %v1604
        %v1611 = vld [vmem:[%s8] sm:$0xf]
        %v1612 = vld [vmem:[%s8 + $0x4] sm:$0xf]
        %v1613 = vld [vmem:[%s8 + $0x8] sm:$0xf]
        %v1614 = vld [vmem:[%s8 + $0xc] sm:$0xf]
        %v1615 = vld [vmem:[%s8 + $0x10] sm:$0xf]
        %v1616 = vld [vmem:[%s8 + $0x14] sm:$0xf]
        %v1617 = vld [vmem:[%s8 + $0x18] sm:$0xf]
        %v1618 = vld [vmem:[%s8 + $0x1c] sm:$0xf]
        %v1619 = vld [vmem:[%s8 + $0x20] sm:$0xf]
        %v1620 = vld [vmem:[%s8 + $0x24] sm:$0xf]
        %v1621 = vld [vmem:[%s8 + $0x28] sm:$0xf]
        %v1622 = vld [vmem:[%s8 + $0x2c] sm:$0xf]
        %v1623 = vld [vmem:[%s8 + $0x30] sm:$0xf]
        %v1624 = vld [vmem:[%s8 + $0x34] sm:$0xf]
        %v1625 = vld [vmem:[%s8 + $0x38] sm:$0xf]
        %v1626 = vld [vmem:[%s8 + $0x3c] sm:$0xf]
        %v1627 = vld [vmem:[%s9] sm:$0x1]
        %v1628 = vpack.c.bf16 %v1610, %v1610
        %v1630 = vlaneseq
        %v1631 = vshrl.u32 %v1630, 7
        %v1632 = vsub.s32 0, %v1631
        %v1633 = vrot.slane %v1627, %v1632
        %v1651 = vunpack.c.l.b16 %v1611
        %v1652 = vunpack.c.l.b16 %v1612
        %v1653 = vunpack.c.l.b16 %v1613
        %v1654 = vunpack.c.l.b16 %v1614
        %v1655 = vunpack.c.l.b16 %v1615
        %v1656 = vunpack.c.l.b16 %v1616
        %v1657 = vunpack.c.l.b16 %v1617
        %v1658 = vunpack.c.l.b16 %v1618
        %v1659 = vunpack.c.l.b16 %v1619
        %v1660 = vunpack.c.l.b16 %v1620
        %v1661 = vunpack.c.l.b16 %v1621
        %v1662 = vunpack.c.l.b16 %v1622
        %v1663 = vunpack.c.l.b16 %v1623
        %v1664 = vunpack.c.l.b16 %v1624
        %v1665 = vunpack.c.l.b16 %v1625
        %v1666 = vunpack.c.l.b16 %v1626
        %v1667 = vpack.c.b16 %v1652, %v1651
        %v1668 = vpack.c.b16 %v1654, %v1653
        %v1669 = vpack.c.b16 %v1656, %v1655
        %v1670 = vpack.c.b16 %v1658, %v1657
        %v1671 = vpack.c.b16 %v1660, %v1659
        %v1672 = vpack.c.b16 %v1662, %v1661
        %v1673 = vpack.c.b16 %v1664, %v1663
        %v1674 = vpack.c.b16 %v1666, %v1665
        %1683 = vmatprep.subr.bf16.mxu0 0
        %1684 = vmatpush1.bf16.msra.mxu0 %v1674
        %1685 = vmatprep.subr.bf16.mxu0 0
        %1686 = vmatpush1.bf16.msra.mxu0 %v1673
        %1687 = vmatprep.subr.bf16.mxu0 0
        %1688 = vmatpush1.bf16.msra.mxu0 %v1672
        %1689 = vmatprep.subr.bf16.mxu0 0
        %1690 = vmatpush1.bf16.msra.mxu0 %v1671
        %1691 = vmatprep.subr.bf16.mxu0 0
        %1692 = vmatpush1.bf16.msra.mxu0 %v1670
        %1693 = vmatprep.subr.bf16.mxu0 0
        %1694 = vmatpush1.bf16.msra.mxu0 %v1669
        %1695 = vmatprep.subr.bf16.mxu0 0
        %1696 = vmatpush1.bf16.msra.mxu0 %v1668
        %1697 = vmatprep.subr.bf16.mxu0 0
        %1698 = vmatpush1.bf16.msra.mxu0 %v1667
        %1699 = vmatprep.subr.bf16.mxu0 0
        %1700 = vmatpush2.bf16.msra.mxu0 0
        %1701 = vmatprep.subr.bf16.mxu0 0
        %1702 = vmatpush2.bf16.msra.mxu0 0
        %1703 = vmatprep.subr.bf16.mxu0 0
        %1704 = vmatpush2.bf16.msra.mxu0 0
        %1705 = vmatprep.subr.bf16.mxu0 0
        %1706 = vmatpush2.bf16.msra.mxu0 0
        %1707 = vmatprep.subr.bf16.mxu0 0
        %1708 = vmatpush2.bf16.msra.mxu0 0
        %1709 = vmatprep.subr.bf16.mxu0 0
        %1710 = vmatpush2.bf16.msra.mxu0 0
        %1711 = vmatprep.subr.bf16.mxu0 0
        %1712 = vmatpush2.bf16.msra.mxu0 0
        %1713 = vmatprep.subr.bf16.mxu0 0
        %1714 = vmatpush2.bf16.msra.mxu0 0
        %1715 = vmatprep.mubr.bf16.mxu0 0
        %1716 = vmatmul.mubr.bf16.gmra.mxu0 %v1628
        %v1717 = vpop.f32.mrf.mxu0
        %v1718 = vadd.f32 %v1633, %v1717
        %v1719 = vpop.f32.mrf.mxu0
        %v1720 = vpop.f32.mrf.mxu0
        %v1721 = vpop.f32.mrf.mxu0
        %1722 = vdwg.mxu0
        %v1723 = vadd.f32 %v839, %v1718
        %v1724 = vld [vmem:[%s10] sm:$0x1]
        %v1725 = vld [vmem:[%s11] sm:$0x1]
        %1726 = vadd.xlane.f32.xlu0 %v1723
        %v1727 = vpop.xlane.xlu0 %1726
        %v1728 = vmul.f32 %v1727, %v853
        %v1729 = vsub.f32 %v1723, %v1728
        %v1730 = vmul.f32 %v1729, %v1729
        %1731 = vadd.xlane.f32.xlu0 %v1730
        %v1732 = vpop.xlane.xlu0 %1731
        %v1733 = vmul.f32 %v1732, 0.007874016
        %v1734 = vrsqrt.pop %v1733
        %v1735 = vmul.f32 %v1733, %v1734
        %vm1736 = vcmp.eq.f32.partialorder %v1733, inf
        %v1737 = vsel %vm1736, %v1733, %v1735
        %vm1738 = vcmp.eq.f32.partialorder %v1733, 0.0
        %v1739 = vand.u32 %v1733, 2147483648
        %v1740 = vsel %vm1738, %v1739, %v1737
        %v1742 = vlaneseq
        %v1743 = vshrl.u32 %v1742, 7
        %v1744 = vsub.s32 0, %v1743
        %v1745 = vrot.slane %v1724, %v1744
        %v1747 = vmul.f32 %v1745, %v1729
        %v1748 = vadd.f32 %v1740, 1e-06
        %v1749 = vrcp.pop %v1748
        %v1750 = vmul.f32 %v1747, %v1749
        %v1752 = vlaneseq
        %v1753 = vshrl.u32 %v1752, 7
        %v1754 = vsub.s32 0, %v1753
        %v1755 = vrot.slane %v1725, %v1754
        %v1757 = vadd.f32 %v1750, %v1755
        %v1758 = vld [vmem:[%s12] sm:$0xf]
        %v1759 = vld [vmem:[%s12 + $0x4] sm:$0xf]
        %v1760 = vld [vmem:[%s12 + $0x8] sm:$0xf]
        %v1761 = vld [vmem:[%s12 + $0xc] sm:$0xf]
        %v1762 = vld [vmem:[%s12 + $0x10] sm:$0xf]
        %v1763 = vld [vmem:[%s12 + $0x14] sm:$0xf]
        %v1764 = vld [vmem:[%s12 + $0x18] sm:$0xf]
        %v1765 = vld [vmem:[%s12 + $0x1c] sm:$0xf]
        %v1766 = vld [vmem:[%s12 + $0x20] sm:$0xf]
        %v1767 = vld [vmem:[%s12 + $0x24] sm:$0xf]
        %v1768 = vld [vmem:[%s12 + $0x28] sm:$0xf]
        %v1769 = vld [vmem:[%s12 + $0x2c] sm:$0xf]
        %v1770 = vld [vmem:[%s12 + $0x30] sm:$0xf]
        %v1771 = vld [vmem:[%s12 + $0x34] sm:$0xf]
        %v1772 = vld [vmem:[%s12 + $0x38] sm:$0xf]
        %v1773 = vld [vmem:[%s12 + $0x3c] sm:$0xf]
        %v1774 = vld [vmem:[%s13] sm:$0x1]
        %v1775 = vpack.c.bf16 %v1757, %v1757
        %v1777 = vlaneseq
        %v1778 = vshrl.u32 %v1777, 7
        %v1779 = vsub.s32 0, %v1778
        %v1780 = vrot.slane %v1774, %v1779
        %v1798 = vunpack.c.l.b16 %v1758
        %v1799 = vunpack.c.l.b16 %v1759
        %v1800 = vunpack.c.l.b16 %v1760
        %v1801 = vunpack.c.l.b16 %v1761
        %v1802 = vunpack.c.l.b16 %v1762
        %v1803 = vunpack.c.l.b16 %v1763
        %v1804 = vunpack.c.l.b16 %v1764
        %v1805 = vunpack.c.l.b16 %v1765
        %v1806 = vunpack.c.l.b16 %v1766
        %v1807 = vunpack.c.l.b16 %v1767
        %v1808 = vunpack.c.l.b16 %v1768
        %v1809 = vunpack.c.l.b16 %v1769
        %v1810 = vunpack.c.l.b16 %v1770
        %v1811 = vunpack.c.l.b16 %v1771
        %v1812 = vunpack.c.l.b16 %v1772
        %v1813 = vunpack.c.l.b16 %v1773
        %v1814 = vpack.c.b16 %v1799, %v1798
        %v1815 = vpack.c.b16 %v1801, %v1800
        %v1816 = vpack.c.b16 %v1803, %v1802
        %v1817 = vpack.c.b16 %v1805, %v1804
        %v1818 = vpack.c.b16 %v1807, %v1806
        %v1819 = vpack.c.b16 %v1809, %v1808
        %v1820 = vpack.c.b16 %v1811, %v1810
        %v1821 = vpack.c.b16 %v1813, %v1812
        %1830 = vmatprep.subr.bf16.mxu0 0
        %1831 = vmatpush1.bf16.msra.mxu0 %v1821
        %1832 = vmatprep.subr.bf16.mxu0 0
        %1833 = vmatpush1.bf16.msra.mxu0 %v1820
        %1834 = vmatprep.subr.bf16.mxu0 0
        %1835 = vmatpush1.bf16.msra.mxu0 %v1819
        %1836 = vmatprep.subr.bf16.mxu0 0
        %1837 = vmatpush1.bf16.msra.mxu0 %v1818
        %1838 = vmatprep.subr.bf16.mxu0 0
        %1839 = vmatpush1.bf16.msra.mxu0 %v1817
        %1840 = vmatprep.subr.bf16.mxu0 0
        %1841 = vmatpush1.bf16.msra.mxu0 %v1816
        %1842 = vmatprep.subr.bf16.mxu0 0
        %1843 = vmatpush1.bf16.msra.mxu0 %v1815
        %1844 = vmatprep.subr.bf16.mxu0 0
        %1845 = vmatpush1.bf16.msra.mxu0 %v1814
        %1846 = vmatprep.subr.bf16.mxu0 0
        %1847 = vmatpush2.bf16.msra.mxu0 0
        %1848 = vmatprep.subr.bf16.mxu0 0
        %1849 = vmatpush2.bf16.msra.mxu0 0
        %1850 = vmatprep.subr.bf16.mxu0 0
        %1851 = vmatpush2.bf16.msra.mxu0 0
        %1852 = vmatprep.subr.bf16.mxu0 0
        %1853 = vmatpush2.bf16.msra.mxu0 0
        %1854 = vmatprep.subr.bf16.mxu0 0
        %1855 = vmatpush2.bf16.msra.mxu0 0
        %1856 = vmatprep.subr.bf16.mxu0 0
        %1857 = vmatpush2.bf16.msra.mxu0 0
        %1858 = vmatprep.subr.bf16.mxu0 0
        %1859 = vmatpush2.bf16.msra.mxu0 0
        %1860 = vmatprep.subr.bf16.mxu0 0
        %1861 = vmatpush2.bf16.msra.mxu0 0
        %1862 = vmatprep.mubr.bf16.mxu0 0
        %1863 = vmatmul.mubr.bf16.gmra.mxu0 %v1775
        %v1864 = vpop.f32.mrf.mxu0
        %v1865 = vadd.f32 %v1780, %v1864
        %v1866 = vpop.f32.mrf.mxu0
        %v1867 = vpop.f32.mrf.mxu0
        %v1868 = vpop.f32.mrf.mxu0
        %1869 = vdwg.mxu0
        %v1870 = vld [vmem:[%s14] sm:$0xff]
        %v1871 = vld [vmem:[%s14 + $0x8] sm:$0xff]
        %v1872 = vld [vmem:[%s14 + $0x10] sm:$0xff]
        %v1873 = vld [vmem:[%s14 + $0x18] sm:$0xff]
        %v1874 = vld [vmem:[%s14 + $0x20] sm:$0xff]
        %v1875 = vld [vmem:[%s14 + $0x28] sm:$0xff]
        %v1876 = vld [vmem:[%s14 + $0x30] sm:$0xff]
        %v1877 = vld [vmem:[%s14 + $0x38] sm:$0xff]
        %v1878 = vld [vmem:[%s14 + $0x40] sm:$0xff]
        %v1879 = vld [vmem:[%s14 + $0x48] sm:$0xff]
        %v1880 = vld [vmem:[%s14 + $0x50] sm:$0xff]
        %v1881 = vld [vmem:[%s14 + $0x58] sm:$0xff]
        %v1882 = vld [vmem:[%s14 + $0x60] sm:$0xff]
        %v1883 = vld [vmem:[%s14 + $0x68] sm:$0xff]
        %v1884 = vld [vmem:[%s14 + $0x70] sm:$0xff]
        %v1885 = vld [vmem:[%s14 + $0x78] sm:$0xff]
        %v1886 = vld [vmem:[%s15] sm:$0x3]
        %v1887 = vpack.c.bf16 %v840, %v840
        %v1889 = vlaneseq
        %v1890 = vshrl.u32 %v1889, 7
        %v1891 = vsub.s32 0, %v1890
        %v1892 = vrot.slane %v1886, %v1891
        %v1893 = vlaneseq
        %v1894 = vshrl.u32 %v1893, 7
        %v1895 = vsub.s32 1, %v1894
        %v1896 = vrot.slane %v1886, %v1895
        %v1915 = vunpack.c.l.b16 %v1870
        %v1916 = vunpack.c.h.b16 %v1870
        %v1917 = vunpack.c.l.b16 %v1871
        %v1918 = vunpack.c.h.b16 %v1871
        %v1919 = vunpack.c.l.b16 %v1872
        %v1920 = vunpack.c.h.b16 %v1872
        %v1921 = vunpack.c.l.b16 %v1873
        %v1922 = vunpack.c.h.b16 %v1873
        %v1923 = vunpack.c.l.b16 %v1874
        %v1924 = vunpack.c.h.b16 %v1874
        %v1925 = vunpack.c.l.b16 %v1875
        %v1926 = vunpack.c.h.b16 %v1875
        %v1927 = vunpack.c.l.b16 %v1876
        %v1928 = vunpack.c.h.b16 %v1876
        %v1929 = vunpack.c.l.b16 %v1877
        %v1930 = vunpack.c.h.b16 %v1877
        %v1931 = vunpack.c.l.b16 %v1878
        %v1932 = vunpack.c.h.b16 %v1878
        %v1933 = vunpack.c.l.b16 %v1879
        %v1934 = vunpack.c.h.b16 %v1879
        %v1935 = vunpack.c.l.b16 %v1880
        %v1936 = vunpack.c.h.b16 %v1880
        %v1937 = vunpack.c.l.b16 %v1881
        %v1938 = vunpack.c.h.b16 %v1881
        %v1939 = vunpack.c.l.b16 %v1882
        %v1940 = vunpack.c.h.b16 %v1882
        %v1941 = vunpack.c.l.b16 %v1883
        %v1942 = vunpack.c.h.b16 %v1883
        %v1943 = vunpack.c.l.b16 %v1884
        %v1944 = vunpack.c.h.b16 %v1884
        %v1945 = vunpack.c.l.b16 %v1885
        %v1946 = vunpack.c.h.b16 %v1885
        %v1947 = vpack.c.b16 %v1917, %v1915
        %v1948 = vpack.c.b16 %v1918, %v1916
        %v1949 = vpack.c.b16 %v1921, %v1919
        %v1950 = vpack.c.b16 %v1922, %v1920
        %v1951 = vpack.c.b16 %v1925, %v1923
        %v1952 = vpack.c.b16 %v1926, %v1924
        %v1953 = vpack.c.b16 %v1929, %v1927
        %v1954 = vpack.c.b16 %v1930, %v1928
        %v1955 = vpack.c.b16 %v1933, %v1931
        %v1956 = vpack.c.b16 %v1934, %v1932
        %v1957 = vpack.c.b16 %v1937, %v1935
        %v1958 = vpack.c.b16 %v1938, %v1936
        %v1959 = vpack.c.b16 %v1941, %v1939
        %v1960 = vpack.c.b16 %v1942, %v1940
        %v1961 = vpack.c.b16 %v1945, %v1943
        %v1962 = vpack.c.b16 %v1946, %v1944
        %1979 = vmatprep.subr.bf16.mxu0 %v1962
        %1980 = vmatpush1.bf16.msra.mxu0 %v1961
        %1981 = vmatprep.subr.bf16.mxu0 %v1960
        %1982 = vmatpush1.bf16.msra.mxu0 %v1959
        %1983 = vmatprep.subr.bf16.mxu0 %v1958
        %1984 = vmatpush1.bf16.msra.mxu0 %v1957
        %1985 = vmatprep.subr.bf16.mxu0 %v1956
        %1986 = vmatpush1.bf16.msra.mxu0 %v1955
        %1987 = vmatprep.subr.bf16.mxu0 %v1954
        %1988 = vmatpush1.bf16.msra.mxu0 %v1953
        %1989 = vmatprep.subr.bf16.mxu0 %v1952
        %1990 = vmatpush1.bf16.msra.mxu0 %v1951
        %1991 = vmatprep.subr.bf16.mxu0 %v1950
        %1992 = vmatpush1.bf16.msra.mxu0 %v1949
        %1993 = vmatprep.subr.bf16.mxu0 %v1948
        %1994 = vmatpush1.bf16.msra.mxu0 %v1947
        %1995 = vmatprep.subr.bf16.mxu0 0
        %1996 = vmatpush2.bf16.msra.mxu0 0
        %1997 = vmatprep.subr.bf16.mxu0 0
        %1998 = vmatpush2.bf16.msra.mxu0 0
        %1999 = vmatprep.subr.bf16.mxu0 0
        %2000 = vmatpush2.bf16.msra.mxu0 0
        %2001 = vmatprep.subr.bf16.mxu0 0
        %2002 = vmatpush2.bf16.msra.mxu0 0
        %2003 = vmatprep.subr.bf16.mxu0 0
        %2004 = vmatpush2.bf16.msra.mxu0 0
        %2005 = vmatprep.subr.bf16.mxu0 0
        %2006 = vmatpush2.bf16.msra.mxu0 0
        %2007 = vmatprep.subr.bf16.mxu0 0
        %2008 = vmatpush2.bf16.msra.mxu0 0
        %2009 = vmatprep.subr.bf16.mxu0 0
        %2010 = vmatpush2.bf16.msra.mxu0 0
        %2011 = vmatprep.mubr.bf16.mxu0 0
        %2012 = vmatmul.mubr.bf16.gmra.mxu0 %v1887
        %v2013 = vpop.f32.mrf.mxu0
        %v2014 = vadd.f32 %v1892, %v2013
        %v2015 = vpop.f32.mrf.mxu0
        %v2016 = vadd.f32 %v1896, %v2015
        %v2017 = vpop.f32.mrf.mxu0
        %v2018 = vpop.f32.mrf.mxu0
        %2019 = vdwg.mxu0
        %v2020 = vpack.c.bf16 %v1865, %v1865
        %v2021 = vpack.c.bf16 %v2014, %v2014
        %v2022 = vpack.c.bf16 %v2016, %v2016
        %v2024 = vsel %vm1146, %v2020, 0
        %v2027 = vsel %vm1146, %v2021, 0
        %2029 = vmatprep.subr.bf16.mxu0 0
        %2030 = vmatpush1.bf16.xpose.msra.mxu0 0
        %2031 = vmatprep.subr.bf16.mxu0 0
        %2032 = vmatpush1.bf16.xpose.msra.mxu0 0
        %2033 = vmatprep.subr.bf16.mxu0 0
        %2034 = vmatpush1.bf16.xpose.msra.mxu0 0
        %2035 = vmatprep.subr.bf16.mxu0 0
        %2036 = vmatpush1.bf16.xpose.msra.mxu0 0
        %2037 = vmatprep.subr.bf16.mxu0 0
        %2038 = vmatpush1.bf16.xpose.msra.mxu0 0
        %2039 = vmatprep.subr.bf16.mxu0 0
        %2040 = vmatpush1.bf16.xpose.msra.mxu0 0
        %2041 = vmatprep.subr.bf16.mxu0 0
        %2042 = vmatpush1.bf16.xpose.msra.mxu0 0
        %2043 = vmatprep.subr.bf16.mxu0 0
        %2044 = vmatpush1.bf16.xpose.msra.mxu0 %v2027
        %2045 = vmatprep.subr.bf16.mxu0 0
        %2046 = vmatpush2.bf16.xpose.msra.mxu0 0
        %2047 = vmatprep.subr.bf16.mxu0 0
        %2048 = vmatpush2.bf16.xpose.msra.mxu0 0
        %2049 = vmatprep.subr.bf16.mxu0 0
        %2050 = vmatpush2.bf16.xpose.msra.mxu0 0
        %2051 = vmatprep.subr.bf16.mxu0 0
        %2052 = vmatpush2.bf16.xpose.msra.mxu0 0
        %2053 = vmatprep.subr.bf16.mxu0 0
        %2054 = vmatpush2.bf16.xpose.msra.mxu0 0
        %2055 = vmatprep.subr.bf16.mxu0 0
        %2056 = vmatpush2.bf16.xpose.msra.mxu0 0
        %2057 = vmatprep.subr.bf16.mxu0 0
        %2058 = vmatpush2.bf16.xpose.msra.mxu0 0
        %2059 = vmatprep.subr.bf16.mxu0 0
        %2060 = vmatpush2.bf16.xpose.msra.mxu0 0
        %2061 = vmatprep.mubr.bf16.mxu0 0
        %2062 = vmatmul.mubr.bf16.gmra.mxu0 %v2024
        %v2063 = vpop.f32.mrf.mxu0
        %v2064 = vadd.f32 0.0, %v2063
        %v2065 = vpop.f32.mrf.mxu0
        %v2066 = vpop.f32.mrf.mxu0
        %v2067 = vpop.f32.mrf.mxu0
        %2068 = vdwg.mxu0
        %v2069 = vmul.f32 %v2064, 0.17677669
        %v2070 = vadd.f32 %v2069, %v848
        %v2071 = vsel %vm1195, %v2070, -inf
        %2072 = vmax.xlane.f32.xlu0 %v2071
        %v2073 = vpop.xlane.xlu0 %2072
        %v2074 = vsub.f32 %v2070, %v2073
        %v2075 = vmul.f32 %v2074, 1.442695
        %v2076 = vpow.pop %v2075
        %v2077 = vsel %vm1195, %v2076, 0.0
        %2078 = vadd.xlane.f32.xlu0 %v2077
        %v2079 = vpop.xlane.xlu0 %2078
        %v2080 = vrcp.pop %v2079
        %v2081 = vmul.f32 %v2076, %v2080
        %v2082 = vpack.c.bf16 %v2081, %v2081
        %v2084 = vsel %vm1195, %v2082, 0
        %v2087 = vsel %vm1211, %v2022, 0
        %2089 = vmatprep.subr.bf16.mxu0 0
        %2090 = vmatpush1.bf16.msra.mxu0 0
        %2091 = vmatprep.subr.bf16.mxu0 0
        %2092 = vmatpush1.bf16.msra.mxu0 0
        %2093 = vmatprep.subr.bf16.mxu0 0
        %2094 = vmatpush1.bf16.msra.mxu0 0
        %2095 = vmatprep.subr.bf16.mxu0 0
        %2096 = vmatpush1.bf16.msra.mxu0 0
        %2097 = vmatprep.subr.bf16.mxu0 0
        %2098 = vmatpush1.bf16.msra.mxu0 0
        %2099 = vmatprep.subr.bf16.mxu0 0
        %2100 = vmatpush1.bf16.msra.mxu0 0
        %2101 = vmatprep.subr.bf16.mxu0 0
        %2102 = vmatpush1.bf16.msra.mxu0 0
        %2103 = vmatprep.subr.bf16.mxu0 0
        %2104 = vmatpush1.bf16.msra.mxu0 %v2087
        %2105 = vmatprep.subr.bf16.mxu0 0
        %2106 = vmatpush2.bf16.msra.mxu0 0
        %2107 = vmatprep.subr.bf16.mxu0 0
        %2108 = vmatpush2.bf16.msra.mxu0 0
        %2109 = vmatprep.subr.bf16.mxu0 0
        %2110 = vmatpush2.bf16.msra.mxu0 0
        %2111 = vmatprep.subr.bf16.mxu0 0
        %2112 = vmatpush2.bf16.msra.mxu0 0
        %2113 = vmatprep.subr.bf16.mxu0 0
        %2114 = vmatpush2.bf16.msra.mxu0 0
        %2115 = vmatprep.subr.bf16.mxu0 0
        %2116 = vmatpush2.bf16.msra.mxu0 0
        %2117 = vmatprep.subr.bf16.mxu0 0
        %2118 = vmatpush2.bf16.msra.mxu0 0
        %2119 = vmatprep.subr.bf16.mxu0 0
        %2120 = vmatpush2.bf16.msra.mxu0 0
        %2121 = vmatprep.mubr.bf16.mxu0 0
        %2122 = vmatmul.mubr.bf16.gmra.mxu0 %v2084
        %v2123 = vpop.f32.mrf.mxu0
        %v2124 = vadd.f32 0.0, %v2123
        %v2125 = vpop.f32.mrf.mxu0
        %v2126 = vpop.f32.mrf.mxu0
        %v2127 = vpop.f32.mrf.mxu0
        %2128 = vdwg.mxu0
        %2130 = vrot.lane.b32.xlu0 %v2020, 96
        %v2131 = vpop.permute.xlu0 %2130
        %2133 = vrot.lane.b32.xlu0 %v2021, 96
        %v2134 = vpop.permute.xlu0 %2133
        %v2136 = vsel %vm1146, %v2131, 0
        %v2139 = vsel %vm1146, %v2134, 0
        %2141 = vmatprep.subr.bf16.mxu0 0
        %2142 = vmatpush1.bf16.xpose.msra.mxu0 0
        %2143 = vmatprep.subr.bf16.mxu0 0
        %2144 = vmatpush1.bf16.xpose.msra.mxu0 0
        %2145 = vmatprep.subr.bf16.mxu0 0
        %2146 = vmatpush1.bf16.xpose.msra.mxu0 0
        %2147 = vmatprep.subr.bf16.mxu0 0
        %2148 = vmatpush1.bf16.xpose.msra.mxu0 0
        %2149 = vmatprep.subr.bf16.mxu0 0
        %2150 = vmatpush1.bf16.xpose.msra.mxu0 0
        %2151 = vmatprep.subr.bf16.mxu0 0
        %2152 = vmatpush1.bf16.xpose.msra.mxu0 0
        %2153 = vmatprep.subr.bf16.mxu0 0
        %2154 = vmatpush1.bf16.xpose.msra.mxu0 0
        %2155 = vmatprep.subr.bf16.mxu0 0
        %2156 = vmatpush1.bf16.xpose.msra.mxu0 %v2139
        %2157 = vmatprep.subr.bf16.mxu0 0
        %2158 = vmatpush2.bf16.xpose.msra.mxu0 0
        %2159 = vmatprep.subr.bf16.mxu0 0
        %2160 = vmatpush2.bf16.xpose.msra.mxu0 0
        %2161 = vmatprep.subr.bf16.mxu0 0
        %2162 = vmatpush2.bf16.xpose.msra.mxu0 0
        %2163 = vmatprep.subr.bf16.mxu0 0
        %2164 = vmatpush2.bf16.xpose.msra.mxu0 0
        %2165 = vmatprep.subr.bf16.mxu0 0
        %2166 = vmatpush2.bf16.xpose.msra.mxu0 0
        %2167 = vmatprep.subr.bf16.mxu0 0
        %2168 = vmatpush2.bf16.xpose.msra.mxu0 0
        %2169 = vmatprep.subr.bf16.mxu0 0
        %2170 = vmatpush2.bf16.xpose.msra.mxu0 0
        %2171 = vmatprep.subr.bf16.mxu0 0
        %2172 = vmatpush2.bf16.xpose.msra.mxu0 0
        %2173 = vmatprep.mubr.bf16.mxu0 0
        %2174 = vmatmul.mubr.bf16.gmra.mxu0 %v2136
        %v2175 = vpop.f32.mrf.mxu0
        %v2176 = vadd.f32 0.0, %v2175
        %v2177 = vpop.f32.mrf.mxu0
        %v2178 = vpop.f32.mrf.mxu0
        %v2179 = vpop.f32.mrf.mxu0
        %2180 = vdwg.mxu0
        %v2181 = vmul.f32 %v2176, 0.17677669
        %v2182 = vadd.f32 %v2181, %v848
        %v2183 = vsel %vm1195, %v2182, -inf
        %2184 = vmax.xlane.f32.xlu0 %v2183
        %v2185 = vpop.xlane.xlu0 %2184
        %v2186 = vsub.f32 %v2182, %v2185
        %v2187 = vmul.f32 %v2186, 1.442695
        %v2188 = vpow.pop %v2187
        %v2189 = vsel %vm1195, %v2188, 0.0
        %2190 = vadd.xlane.f32.xlu0 %v2189
        %v2191 = vpop.xlane.xlu0 %2190
        %v2192 = vrcp.pop %v2191
        %v2193 = vmul.f32 %v2188, %v2192
        %v2194 = vpack.c.bf16 %v2193, %v2193
        %2196 = vrot.lane.b32.xlu0 %v2022, 96
        %v2197 = vpop.permute.xlu0 %2196
        %v2199 = vsel %vm1195, %v2194, 0
        %v2202 = vsel %vm1211, %v2197, 0
        %2204 = vmatprep.subr.bf16.mxu0 0
        %2205 = vmatpush1.bf16.msra.mxu0 0
        %2206 = vmatprep.subr.bf16.mxu0 0
        %2207 = vmatpush1.bf16.msra.mxu0 0
        %2208 = vmatprep.subr.bf16.mxu0 0
        %2209 = vmatpush1.bf16.msra.mxu0 0
        %2210 = vmatprep.subr.bf16.mxu0 0
        %2211 = vmatpush1.bf16.msra.mxu0 0
        %2212 = vmatprep.subr.bf16.mxu0 0
        %2213 = vmatpush1.bf16.msra.mxu0 0
        %2214 = vmatprep.subr.bf16.mxu0 0
        %2215 = vmatpush1.bf16.msra.mxu0 0
        %2216 = vmatprep.subr.bf16.mxu0 0
        %2217 = vmatpush1.bf16.msra.mxu0 0
        %2218 = vmatprep.subr.bf16.mxu0 0
        %2219 = vmatpush1.bf16.msra.mxu0 %v2202
        %2220 = vmatprep.subr.bf16.mxu0 0
        %2221 = vmatpush2.bf16.msra.mxu0 0
        %2222 = vmatprep.subr.bf16.mxu0 0
        %2223 = vmatpush2.bf16.msra.mxu0 0
        %2224 = vmatprep.subr.bf16.mxu0 0
        %2225 = vmatpush2.bf16.msra.mxu0 0
        %2226 = vmatprep.subr.bf16.mxu0 0
        %2227 = vmatpush2.bf16.msra.mxu0 0
        %2228 = vmatprep.subr.bf16.mxu0 0
        %2229 = vmatpush2.bf16.msra.mxu0 0
        %2230 = vmatprep.subr.bf16.mxu0 0
        %2231 = vmatpush2.bf16.msra.mxu0 0
        %2232 = vmatprep.subr.bf16.mxu0 0
        %2233 = vmatpush2.bf16.msra.mxu0 0
        %2234 = vmatprep.subr.bf16.mxu0 0
        %2235 = vmatpush2.bf16.msra.mxu0 0
        %2236 = vmatprep.mubr.bf16.mxu0 0
        %2237 = vmatmul.mubr.bf16.gmra.mxu0 %v2199
        %v2238 = vpop.f32.mrf.mxu0
        %v2239 = vadd.f32 0.0, %v2238
        %v2240 = vpop.f32.mrf.mxu0
        %v2241 = vpop.f32.mrf.mxu0
        %v2242 = vpop.f32.mrf.mxu0
        %2243 = vdwg.mxu0
        %2244 = vrot.lane.b32.xlu0 %v2020, 64
        %v2245 = vpop.permute.xlu0 %2244
        %2246 = vrot.lane.b32.xlu0 %v2021, 64
        %v2247 = vpop.permute.xlu0 %2246
        %v2249 = vsel %vm1146, %v2245, 0
        %v2252 = vsel %vm1146, %v2247, 0
        %2254 = vmatprep.subr.bf16.mxu0 0
        %2255 = vmatpush1.bf16.xpose.msra.mxu0 0
        %2256 = vmatprep.subr.bf16.mxu0 0
        %2257 = vmatpush1.bf16.xpose.msra.mxu0 0
        %2258 = vmatprep.subr.bf16.mxu0 0
        %2259 = vmatpush1.bf16.xpose.msra.mxu0 0
        %2260 = vmatprep.subr.bf16.mxu0 0
        %2261 = vmatpush1.bf16.xpose.msra.mxu0 0
        %2262 = vmatprep.subr.bf16.mxu0 0
        %2263 = vmatpush1.bf16.xpose.msra.mxu0 0
        %2264 = vmatprep.subr.bf16.mxu0 0
        %2265 = vmatpush1.bf16.xpose.msra.mxu0 0
        %2266 = vmatprep.subr.bf16.mxu0 0
        %2267 = vmatpush1.bf16.xpose.msra.mxu0 0
        %2268 = vmatprep.subr.bf16.mxu0 0
        %2269 = vmatpush1.bf16.xpose.msra.mxu0 %v2252
        %2270 = vmatprep.subr.bf16.mxu0 0
        %2271 = vmatpush2.bf16.xpose.msra.mxu0 0
        %2272 = vmatprep.subr.bf16.mxu0 0
        %2273 = vmatpush2.bf16.xpose.msra.mxu0 0
        %2274 = vmatprep.subr.bf16.mxu0 0
        %2275 = vmatpush2.bf16.xpose.msra.mxu0 0
        %2276 = vmatprep.subr.bf16.mxu0 0
        %2277 = vmatpush2.bf16.xpose.msra.mxu0 0
        %2278 = vmatprep.subr.bf16.mxu0 0
        %2279 = vmatpush2.bf16.xpose.msra.mxu0 0
        %2280 = vmatprep.subr.bf16.mxu0 0
        %2281 = vmatpush2.bf16.xpose.msra.mxu0 0
        %2282 = vmatprep.subr.bf16.mxu0 0
        %2283 = vmatpush2.bf16.xpose.msra.mxu0 0
        %2284 = vmatprep.subr.bf16.mxu0 0
        %2285 = vmatpush2.bf16.xpose.msra.mxu0 0
        %2286 = vmatprep.mubr.bf16.mxu0 0
        %2287 = vmatmul.mubr.bf16.gmra.mxu0 %v2249
        %v2288 = vpop.f32.mrf.mxu0
        %v2289 = vadd.f32 0.0, %v2288
        %v2290 = vpop.f32.mrf.mxu0
        %v2291 = vpop.f32.mrf.mxu0
        %v2292 = vpop.f32.mrf.mxu0
        %2293 = vdwg.mxu0
        %v2294 = vmul.f32 %v2289, 0.17677669
        %v2295 = vadd.f32 %v2294, %v848
        %v2296 = vsel %vm1195, %v2295, -inf
        %2297 = vmax.xlane.f32.xlu0 %v2296
        %v2298 = vpop.xlane.xlu0 %2297
        %v2299 = vsub.f32 %v2295, %v2298
        %v2300 = vmul.f32 %v2299, 1.442695
        %v2301 = vpow.pop %v2300
        %v2302 = vsel %vm1195, %v2301, 0.0
        %2303 = vadd.xlane.f32.xlu0 %v2302
        %v2304 = vpop.xlane.xlu0 %2303
        %v2305 = vrcp.pop %v2304
        %v2306 = vmul.f32 %v2301, %v2305
        %v2307 = vpack.c.bf16 %v2306, %v2306
        %2308 = vrot.lane.b32.xlu0 %v2022, 64
        %v2309 = vpop.permute.xlu0 %2308
        %v2311 = vsel %vm1195, %v2307, 0
        %v2314 = vsel %vm1211, %v2309, 0
        %2316 = vmatprep.subr.bf16.mxu0 0
        %2317 = vmatpush1.bf16.msra.mxu0 0
        %2318 = vmatprep.subr.bf16.mxu0 0
        %2319 = vmatpush1.bf16.msra.mxu0 0
        %2320 = vmatprep.subr.bf16.mxu0 0
        %2321 = vmatpush1.bf16.msra.mxu0 0
        %2322 = vmatprep.subr.bf16.mxu0 0
        %2323 = vmatpush1.bf16.msra.mxu0 0
        %2324 = vmatprep.subr.bf16.mxu0 0
        %2325 = vmatpush1.bf16.msra.mxu0 0
        %2326 = vmatprep.subr.bf16.mxu0 0
        %2327 = vmatpush1.bf16.msra.mxu0 0
        %2328 = vmatprep.subr.bf16.mxu0 0
        %2329 = vmatpush1.bf16.msra.mxu0 0
        %2330 = vmatprep.subr.bf16.mxu0 0
        %2331 = vmatpush1.bf16.msra.mxu0 %v2314
        %2332 = vmatprep.subr.bf16.mxu0 0
        %2333 = vmatpush2.bf16.msra.mxu0 0
        %2334 = vmatprep.subr.bf16.mxu0 0
        %2335 = vmatpush2.bf16.msra.mxu0 0
        %2336 = vmatprep.subr.bf16.mxu0 0
        %2337 = vmatpush2.bf16.msra.mxu0 0
        %2338 = vmatprep.subr.bf16.mxu0 0
        %2339 = vmatpush2.bf16.msra.mxu0 0
        %2340 = vmatprep.subr.bf16.mxu0 0
        %2341 = vmatpush2.bf16.msra.mxu0 0
        %2342 = vmatprep.subr.bf16.mxu0 0
        %2343 = vmatpush2.bf16.msra.mxu0 0
        %2344 = vmatprep.subr.bf16.mxu0 0
        %2345 = vmatpush2.bf16.msra.mxu0 0
        %2346 = vmatprep.subr.bf16.mxu0 0
        %2347 = vmatpush2.bf16.msra.mxu0 0
        %2348 = vmatprep.mubr.bf16.mxu0 0
        %2349 = vmatmul.mubr.bf16.gmra.mxu0 %v2311
        %v2350 = vpop.f32.mrf.mxu0
        %v2351 = vadd.f32 0.0, %v2350
        %v2352 = vpop.f32.mrf.mxu0
        %v2353 = vpop.f32.mrf.mxu0
        %v2354 = vpop.f32.mrf.mxu0
        %2355 = vdwg.mxu0
        %2356 = vrot.lane.b32.xlu0 %v2020, 32
        %v2357 = vpop.permute.xlu0 %2356
        %2358 = vrot.lane.b32.xlu0 %v2021, 32
        %v2359 = vpop.permute.xlu0 %2358
        %v2361 = vsel %vm1146, %v2357, 0
        %v2364 = vsel %vm1146, %v2359, 0
        %2366 = vmatprep.subr.bf16.mxu0 0
        %2367 = vmatpush1.bf16.xpose.msra.mxu0 0
        %2368 = vmatprep.subr.bf16.mxu0 0
        %2369 = vmatpush1.bf16.xpose.msra.mxu0 0
        %2370 = vmatprep.subr.bf16.mxu0 0
        %2371 = vmatpush1.bf16.xpose.msra.mxu0 0
        %2372 = vmatprep.subr.bf16.mxu0 0
        %2373 = vmatpush1.bf16.xpose.msra.mxu0 0
        %2374 = vmatprep.subr.bf16.mxu0 0
        %2375 = vmatpush1.bf16.xpose.msra.mxu0 0
        %2376 = vmatprep.subr.bf16.mxu0 0
        %2377 = vmatpush1.bf16.xpose.msra.mxu0 0
        %2378 = vmatprep.subr.bf16.mxu0 0
        %2379 = vmatpush1.bf16.xpose.msra.mxu0 0
        %2380 = vmatprep.subr.bf16.mxu0 0
        %2381 = vmatpush1.bf16.xpose.msra.mxu0 %v2364
        %2382 = vmatprep.subr.bf16.mxu0 0
        %2383 = vmatpush2.bf16.xpose.msra.mxu0 0
        %2384 = vmatprep.subr.bf16.mxu0 0
        %2385 = vmatpush2.bf16.xpose.msra.mxu0 0
        %2386 = vmatprep.subr.bf16.mxu0 0
        %2387 = vmatpush2.bf16.xpose.msra.mxu0 0
        %2388 = vmatprep.subr.bf16.mxu0 0
        %2389 = vmatpush2.bf16.xpose.msra.mxu0 0
        %2390 = vmatprep.subr.bf16.mxu0 0
        %2391 = vmatpush2.bf16.xpose.msra.mxu0 0
        %2392 = vmatprep.subr.bf16.mxu0 0
        %2393 = vmatpush2.bf16.xpose.msra.mxu0 0
        %2394 = vmatprep.subr.bf16.mxu0 0
        %2395 = vmatpush2.bf16.xpose.msra.mxu0 0
        %2396 = vmatprep.subr.bf16.mxu0 0
        %2397 = vmatpush2.bf16.xpose.msra.mxu0 0
        %2398 = vmatprep.mubr.bf16.mxu0 0
        %2399 = vmatmul.mubr.bf16.gmra.mxu0 %v2361
        %v2400 = vpop.f32.mrf.mxu0
        %v2401 = vadd.f32 0.0, %v2400
        %v2402 = vpop.f32.mrf.mxu0
        %v2403 = vpop.f32.mrf.mxu0
        %v2404 = vpop.f32.mrf.mxu0
        %2405 = vdwg.mxu0
        %v2406 = vmul.f32 %v2401, 0.17677669
        %v2407 = vadd.f32 %v2406, %v848
        %v2408 = vsel %vm1195, %v2407, -inf
        %2409 = vmax.xlane.f32.xlu0 %v2408
        %v2410 = vpop.xlane.xlu0 %2409
        %v2411 = vsub.f32 %v2407, %v2410
        %v2412 = vmul.f32 %v2411, 1.442695
        %v2413 = vpow.pop %v2412
        %v2414 = vsel %vm1195, %v2413, 0.0
        %2415 = vadd.xlane.f32.xlu0 %v2414
        %v2416 = vpop.xlane.xlu0 %2415
        %v2417 = vrcp.pop %v2416
        %v2418 = vmul.f32 %v2413, %v2417
        %v2419 = vpack.c.bf16 %v2418, %v2418
        %2420 = vrot.lane.b32.xlu0 %v2022, 32
        %v2421 = vpop.permute.xlu0 %2420
        %v2423 = vsel %vm1195, %v2419, 0
        %v2426 = vsel %vm1211, %v2421, 0
        %2428 = vmatprep.subr.bf16.mxu0 0
        %2429 = vmatpush1.bf16.msra.mxu0 0
        %2430 = vmatprep.subr.bf16.mxu0 0
        %2431 = vmatpush1.bf16.msra.mxu0 0
        %2432 = vmatprep.subr.bf16.mxu0 0
        %2433 = vmatpush1.bf16.msra.mxu0 0
        %2434 = vmatprep.subr.bf16.mxu0 0
        %2435 = vmatpush1.bf16.msra.mxu0 0
        %2436 = vmatprep.subr.bf16.mxu0 0
        %2437 = vmatpush1.bf16.msra.mxu0 0
        %2438 = vmatprep.subr.bf16.mxu0 0
        %2439 = vmatpush1.bf16.msra.mxu0 0
        %2440 = vmatprep.subr.bf16.mxu0 0
        %2441 = vmatpush1.bf16.msra.mxu0 0
        %2442 = vmatprep.subr.bf16.mxu0 0
        %2443 = vmatpush1.bf16.msra.mxu0 %v2426
        %2444 = vmatprep.subr.bf16.mxu0 0
        %2445 = vmatpush2.bf16.msra.mxu0 0
        %2446 = vmatprep.subr.bf16.mxu0 0
        %2447 = vmatpush2.bf16.msra.mxu0 0
        %2448 = vmatprep.subr.bf16.mxu0 0
        %2449 = vmatpush2.bf16.msra.mxu0 0
        %2450 = vmatprep.subr.bf16.mxu0 0
        %2451 = vmatpush2.bf16.msra.mxu0 0
        %2452 = vmatprep.subr.bf16.mxu0 0
        %2453 = vmatpush2.bf16.msra.mxu0 0
        %2454 = vmatprep.subr.bf16.mxu0 0
        %2455 = vmatpush2.bf16.msra.mxu0 0
        %2456 = vmatprep.subr.bf16.mxu0 0
        %2457 = vmatpush2.bf16.msra.mxu0 0
        %2458 = vmatprep.subr.bf16.mxu0 0
        %2459 = vmatpush2.bf16.msra.mxu0 0
        %2460 = vmatprep.mubr.bf16.mxu0 0
        %2461 = vmatmul.mubr.bf16.gmra.mxu0 %v2423
        %v2462 = vpop.f32.mrf.mxu0
        %v2463 = vadd.f32 0.0, %v2462
        %v2464 = vpop.f32.mrf.mxu0
        %v2465 = vpop.f32.mrf.mxu0
        %v2466 = vpop.f32.mrf.mxu0
        %2467 = vdwg.mxu0
        %2469 = vrot.lane.b32.xlu0 %v2239, 32
        %v2470 = vpop.permute.xlu0 %2469
        %2473 = vrot.lane.b32.xlu0 %v2351, 64
        %v2474 = vpop.permute.xlu0 %2473
        %2477 = vrot.lane.b32.xlu0 %v2463, 96
        %v2478 = vpop.permute.xlu0 %2477
        %v2480 = vsel %vm1146, %v2124, %v2470
        %v2481 = vsel %vm1607, %v2480, %v2474
        %v2482 = vsel %vm1609, %v2481, %v2478
        %v2483 = vld [vmem:[%s16] sm:$0xf]
        %v2484 = vld [vmem:[%s16 + $0x4] sm:$0xf]
        %v2485 = vld [vmem:[%s16 + $0x8] sm:$0xf]
        %v2486 = vld [vmem:[%s16 + $0xc] sm:$0xf]
        %v2487 = vld [vmem:[%s16 + $0x10] sm:$0xf]
        %v2488 = vld [vmem:[%s16 + $0x14] sm:$0xf]
        %v2489 = vld [vmem:[%s16 + $0x18] sm:$0xf]
        %v2490 = vld [vmem:[%s16 + $0x1c] sm:$0xf]
        %v2491 = vld [vmem:[%s16 + $0x20] sm:$0xf]
        %v2492 = vld [vmem:[%s16 + $0x24] sm:$0xf]
        %v2493 = vld [vmem:[%s16 + $0x28] sm:$0xf]
        %v2494 = vld [vmem:[%s16 + $0x2c] sm:$0xf]
        %v2495 = vld [vmem:[%s16 + $0x30] sm:$0xf]
        %v2496 = vld [vmem:[%s16 + $0x34] sm:$0xf]
        %v2497 = vld [vmem:[%s16 + $0x38] sm:$0xf]
        %v2498 = vld [vmem:[%s16 + $0x3c] sm:$0xf]
        %v2499 = vld [vmem:[%s17] sm:$0x1]
        %v2500 = vpack.c.bf16 %v2482, %v2482
        %v2502 = vlaneseq
        %v2503 = vshrl.u32 %v2502, 7
        %v2504 = vsub.s32 0, %v2503
        %v2505 = vrot.slane %v2499, %v2504
        %v2523 = vunpack.c.l.b16 %v2483
        %v2524 = vunpack.c.l.b16 %v2484
        %v2525 = vunpack.c.l.b16 %v2485
        %v2526 = vunpack.c.l.b16 %v2486
        %v2527 = vunpack.c.l.b16 %v2487
        %v2528 = vunpack.c.l.b16 %v2488
        %v2529 = vunpack.c.l.b16 %v2489
        %v2530 = vunpack.c.l.b16 %v2490
        %v2531 = vunpack.c.l.b16 %v2491
        %v2532 = vunpack.c.l.b16 %v2492
        %v2533 = vunpack.c.l.b16 %v2493
        %v2534 = vunpack.c.l.b16 %v2494
        %v2535 = vunpack.c.l.b16 %v2495
        %v2536 = vunpack.c.l.b16 %v2496
        %v2537 = vunpack.c.l.b16 %v2497
        %v2538 = vunpack.c.l.b16 %v2498
        %v2539 = vpack.c.b16 %v2524, %v2523
        %v2540 = vpack.c.b16 %v2526, %v2525
        %v2541 = vpack.c.b16 %v2528, %v2527
        %v2542 = vpack.c.b16 %v2530, %v2529
        %v2543 = vpack.c.b16 %v2532, %v2531
        %v2544 = vpack.c.b16 %v2534, %v2533
        %v2545 = vpack.c.b16 %v2536, %v2535
        %v2546 = vpack.c.b16 %v2538, %v2537
        %2555 = vmatprep.subr.bf16.mxu0 0
        %2556 = vmatpush1.bf16.msra.mxu0 %v2546
        %2557 = vmatprep.subr.bf16.mxu0 0
        %2558 = vmatpush1.bf16.msra.mxu0 %v2545
        %2559 = vmatprep.subr.bf16.mxu0 0
        %2560 = vmatpush1.bf16.msra.mxu0 %v2544
        %2561 = vmatprep.subr.bf16.mxu0 0
        %2562 = vmatpush1.bf16.msra.mxu0 %v2543
        %2563 = vmatprep.subr.bf16.mxu0 0
        %2564 = vmatpush1.bf16.msra.mxu0 %v2542
        %2565 = vmatprep.subr.bf16.mxu0 0
        %2566 = vmatpush1.bf16.msra.mxu0 %v2541
        %2567 = vmatprep.subr.bf16.mxu0 0
        %2568 = vmatpush1.bf16.msra.mxu0 %v2540
        %2569 = vmatprep.subr.bf16.mxu0 0
        %2570 = vmatpush1.bf16.msra.mxu0 %v2539
        %2571 = vmatprep.subr.bf16.mxu0 0
        %2572 = vmatpush2.bf16.msra.mxu0 0
        %2573 = vmatprep.subr.bf16.mxu0 0
        %2574 = vmatpush2.bf16.msra.mxu0 0
        %2575 = vmatprep.subr.bf16.mxu0 0
        %2576 = vmatpush2.bf16.msra.mxu0 0
        %2577 = vmatprep.subr.bf16.mxu0 0
        %2578 = vmatpush2.bf16.msra.mxu0 0
        %2579 = vmatprep.subr.bf16.mxu0 0
        %2580 = vmatpush2.bf16.msra.mxu0 0
        %2581 = vmatprep.subr.bf16.mxu0 0
        %2582 = vmatpush2.bf16.msra.mxu0 0
        %2583 = vmatprep.subr.bf16.mxu0 0
        %2584 = vmatpush2.bf16.msra.mxu0 0
        %2585 = vmatprep.subr.bf16.mxu0 0
        %2586 = vmatpush2.bf16.msra.mxu0 0
        %2587 = vmatprep.mubr.bf16.mxu0 0
        %2588 = vmatmul.mubr.bf16.gmra.mxu0 %v2500
        %v2589 = vpop.f32.mrf.mxu0
        %v2590 = vadd.f32 %v2505, %v2589
        %v2591 = vpop.f32.mrf.mxu0
        %v2592 = vpop.f32.mrf.mxu0
        %v2593 = vpop.f32.mrf.mxu0
        %2594 = vdwg.mxu0
        %v2595 = vadd.f32 %v1723, %v2590
        %v2596 = vld [vmem:[%s18] sm:$0x1]
        %v2597 = vld [vmem:[%s19] sm:$0x1]
        %2598 = vadd.xlane.f32.xlu0 %v2595
        %v2599 = vpop.xlane.xlu0 %2598
        %v2600 = vmul.f32 %v2599, %v853
        %v2601 = vsub.f32 %v2595, %v2600
        %v2602 = vmul.f32 %v2601, %v2601
        %2603 = vadd.xlane.f32.xlu0 %v2602
        %v2604 = vpop.xlane.xlu0 %2603
        %v2605 = vmul.f32 %v2604, 0.007874016
        %v2606 = vrsqrt.pop %v2605
        %v2607 = vmul.f32 %v2605, %v2606
        %vm2608 = vcmp.eq.f32.partialorder %v2605, inf
        %v2609 = vsel %vm2608, %v2605, %v2607
        %vm2610 = vcmp.eq.f32.partialorder %v2605, 0.0
        %v2611 = vand.u32 %v2605, 2147483648
        %v2612 = vsel %vm2610, %v2611, %v2609
        %v2614 = vlaneseq
        %v2615 = vshrl.u32 %v2614, 7
        %v2616 = vsub.s32 0, %v2615
        %v2617 = vrot.slane %v2596, %v2616
        %v2619 = vmul.f32 %v2617, %v2601
        %v2620 = vadd.f32 %v2612, 1e-06
        %v2621 = vrcp.pop %v2620
        %v2622 = vmul.f32 %v2619, %v2621
        %v2624 = vlaneseq
        %v2625 = vshrl.u32 %v2624, 7
        %v2626 = vsub.s32 0, %v2625
        %v2627 = vrot.slane %v2597, %v2626
        %v2629 = vadd.f32 %v2622, %v2627
        %v2630 = vld [vmem:[%s20] sm:$0xff]
        %v2631 = vld [vmem:[%s20 + $0x8] sm:$0xff]
        %v2632 = vld [vmem:[%s20 + $0x10] sm:$0xff]
        %v2633 = vld [vmem:[%s20 + $0x18] sm:$0xff]
        %v2634 = vld [vmem:[%s20 + $0x20] sm:$0xff]
        %v2635 = vld [vmem:[%s20 + $0x28] sm:$0xff]
        %v2636 = vld [vmem:[%s20 + $0x30] sm:$0xff]
        %v2637 = vld [vmem:[%s20 + $0x38] sm:$0xff]
        %v2638 = vld [vmem:[%s20 + $0x40] sm:$0xff]
        %v2639 = vld [vmem:[%s20 + $0x48] sm:$0xff]
        %v2640 = vld [vmem:[%s20 + $0x50] sm:$0xff]
        %v2641 = vld [vmem:[%s20 + $0x58] sm:$0xff]
        %v2642 = vld [vmem:[%s20 + $0x60] sm:$0xff]
        %v2643 = vld [vmem:[%s20 + $0x68] sm:$0xff]
        %v2644 = vld [vmem:[%s20 + $0x70] sm:$0xff]
        %v2645 = vld [vmem:[%s20 + $0x78] sm:$0xff]
        %v2646 = vld [vmem:[%s21] sm:$0x3]
        %v2647 = vpack.c.bf16 %v2629, %v2629
        %v2649 = vlaneseq
        %v2650 = vshrl.u32 %v2649, 7
        %v2651 = vsub.s32 0, %v2650
        %v2652 = vrot.slane %v2646, %v2651
        %v2653 = vlaneseq
        %v2654 = vshrl.u32 %v2653, 7
        %v2655 = vsub.s32 1, %v2654
        %v2656 = vrot.slane %v2646, %v2655
        %v2675 = vunpack.c.l.b16 %v2630
        %v2676 = vunpack.c.h.b16 %v2630
        %v2677 = vunpack.c.l.b16 %v2631
        %v2678 = vunpack.c.h.b16 %v2631
        %v2679 = vunpack.c.l.b16 %v2632
        %v2680 = vunpack.c.h.b16 %v2632
        %v2681 = vunpack.c.l.b16 %v2633
        %v2682 = vunpack.c.h.b16 %v2633
        %v2683 = vunpack.c.l.b16 %v2634
        %v2684 = vunpack.c.h.b16 %v2634
        %v2685 = vunpack.c.l.b16 %v2635
        %v2686 = vunpack.c.h.b16 %v2635
        %v2687 = vunpack.c.l.b16 %v2636
        %v2688 = vunpack.c.h.b16 %v2636
        %v2689 = vunpack.c.l.b16 %v2637
        %v2690 = vunpack.c.h.b16 %v2637
        %v2691 = vunpack.c.l.b16 %v2638
        %v2692 = vunpack.c.h.b16 %v2638
        %v2693 = vunpack.c.l.b16 %v2639
        %v2694 = vunpack.c.h.b16 %v2639
        %v2695 = vunpack.c.l.b16 %v2640
        %v2696 = vunpack.c.h.b16 %v2640
        %v2697 = vunpack.c.l.b16 %v2641
        %v2698 = vunpack.c.h.b16 %v2641
        %v2699 = vunpack.c.l.b16 %v2642
        %v2700 = vunpack.c.h.b16 %v2642
        %v2701 = vunpack.c.l.b16 %v2643
        %v2702 = vunpack.c.h.b16 %v2643
        %v2703 = vunpack.c.l.b16 %v2644
        %v2704 = vunpack.c.h.b16 %v2644
        %v2705 = vunpack.c.l.b16 %v2645
        %v2706 = vunpack.c.h.b16 %v2645
        %v2707 = vpack.c.b16 %v2677, %v2675
        %v2708 = vpack.c.b16 %v2678, %v2676
        %v2709 = vpack.c.b16 %v2681, %v2679
        %v2710 = vpack.c.b16 %v2682, %v2680
        %v2711 = vpack.c.b16 %v2685, %v2683
        %v2712 = vpack.c.b16 %v2686, %v2684
        %v2713 = vpack.c.b16 %v2689, %v2687
        %v2714 = vpack.c.b16 %v2690, %v2688
        %v2715 = vpack.c.b16 %v2693, %v2691
        %v2716 = vpack.c.b16 %v2694, %v2692
        %v2717 = vpack.c.b16 %v2697, %v2695
        %v2718 = vpack.c.b16 %v2698, %v2696
        %v2719 = vpack.c.b16 %v2701, %v2699
        %v2720 = vpack.c.b16 %v2702, %v2700
        %v2721 = vpack.c.b16 %v2705, %v2703
        %v2722 = vpack.c.b16 %v2706, %v2704
        %2739 = vmatprep.subr.bf16.mxu0 %v2722
        %2740 = vmatpush1.bf16.msra.mxu0 %v2721
        %2741 = vmatprep.subr.bf16.mxu0 %v2720
        %2742 = vmatpush1.bf16.msra.mxu0 %v2719
        %2743 = vmatprep.subr.bf16.mxu0 %v2718
        %2744 = vmatpush1.bf16.msra.mxu0 %v2717
        %2745 = vmatprep.subr.bf16.mxu0 %v2716
        %2746 = vmatpush1.bf16.msra.mxu0 %v2715
        %2747 = vmatprep.subr.bf16.mxu0 %v2714
        %2748 = vmatpush1.bf16.msra.mxu0 %v2713
        %2749 = vmatprep.subr.bf16.mxu0 %v2712
        %2750 = vmatpush1.bf16.msra.mxu0 %v2711
        %2751 = vmatprep.subr.bf16.mxu0 %v2710
        %2752 = vmatpush1.bf16.msra.mxu0 %v2709
        %2753 = vmatprep.subr.bf16.mxu0 %v2708
        %2754 = vmatpush1.bf16.msra.mxu0 %v2707
        %2755 = vmatprep.subr.bf16.mxu0 0
        %2756 = vmatpush2.bf16.msra.mxu0 0
        %2757 = vmatprep.subr.bf16.mxu0 0
        %2758 = vmatpush2.bf16.msra.mxu0 0
        %2759 = vmatprep.subr.bf16.mxu0 0
        %2760 = vmatpush2.bf16.msra.mxu0 0
        %2761 = vmatprep.subr.bf16.mxu0 0
        %2762 = vmatpush2.bf16.msra.mxu0 0
        %2763 = vmatprep.subr.bf16.mxu0 0
        %2764 = vmatpush2.bf16.msra.mxu0 0
        %2765 = vmatprep.subr.bf16.mxu0 0
        %2766 = vmatpush2.bf16.msra.mxu0 0
        %2767 = vmatprep.subr.bf16.mxu0 0
        %2768 = vmatpush2.bf16.msra.mxu0 0
        %2769 = vmatprep.subr.bf16.mxu0 0
        %2770 = vmatpush2.bf16.msra.mxu0 0
        %2771 = vmatprep.mubr.bf16.mxu0 0
        %2772 = vmatmul.mubr.bf16.gmra.mxu0 %v2647
        %v2773 = vpop.f32.mrf.mxu0
        %v2774 = vadd.f32 %v2652, %v2773
        %v2775 = vpop.f32.mrf.mxu0
        %v2776 = vadd.f32 %v2656, %v2775
        %v2777 = vpop.f32.mrf.mxu0
        %v2778 = vpop.f32.mrf.mxu0
        %2779 = vdwg.mxu0
        %v2780 = vmax.f32 %v2774, 0.0
        %v2781 = vmax.f32 %v2776, 0.0
        %v2782 = vld [vmem:[%s22] sm:$0xf]
        %v2783 = vld [vmem:[%s22 + $0x4] sm:$0xf]
        %v2784 = vld [vmem:[%s22 + $0x8] sm:$0xf]
        %v2785 = vld [vmem:[%s22 + $0xc] sm:$0xf]
        %v2786 = vld [vmem:[%s22 + $0x10] sm:$0xf]
        %v2787 = vld [vmem:[%s22 + $0x14] sm:$0xf]
        %v2788 = vld [vmem:[%s22 + $0x18] sm:$0xf]
        %v2789 = vld [vmem:[%s22 + $0x1c] sm:$0xf]
        %v2790 = vld [vmem:[%s22 + $0x20] sm:$0xf]
        %v2791 = vld [vmem:[%s22 + $0x24] sm:$0xf]
        %v2792 = vld [vmem:[%s22 + $0x28] sm:$0xf]
        %v2793 = vld [vmem:[%s22 + $0x2c] sm:$0xf]
        %v2794 = vld [vmem:[%s22 + $0x30] sm:$0xf]
        %v2795 = vld [vmem:[%s22 + $0x34] sm:$0xf]
        %v2796 = vld [vmem:[%s22 + $0x38] sm:$0xf]
        %v2797 = vld [vmem:[%s22 + $0x3c] sm:$0xf]
        %v2798 = vld [vmem:[%s22 + $0x40] sm:$0xf]
        %v2799 = vld [vmem:[%s22 + $0x44] sm:$0xf]
        %v2800 = vld [vmem:[%s22 + $0x48] sm:$0xf]
        %v2801 = vld [vmem:[%s22 + $0x4c] sm:$0xf]
        %v2802 = vld [vmem:[%s22 + $0x50] sm:$0xf]
        %v2803 = vld [vmem:[%s22 + $0x54] sm:$0xf]
        %v2804 = vld [vmem:[%s22 + $0x58] sm:$0xf]
        %v2805 = vld [vmem:[%s22 + $0x5c] sm:$0xf]
        %v2806 = vld [vmem:[%s22 + $0x60] sm:$0xf]
        %v2807 = vld [vmem:[%s22 + $0x64] sm:$0xf]
        %v2808 = vld [vmem:[%s22 + $0x68] sm:$0xf]
        %v2809 = vld [vmem:[%s22 + $0x6c] sm:$0xf]
        %v2810 = vld [vmem:[%s22 + $0x70] sm:$0xf]
        %v2811 = vld [vmem:[%s22 + $0x74] sm:$0xf]
        %v2812 = vld [vmem:[%s22 + $0x78] sm:$0xf]
        %v2813 = vld [vmem:[%s22 + $0x7c] sm:$0xf]
        %v2814 = vld [vmem:[%s23] sm:$0x1]
        %v2815 = vpack.c.bf16 %v2780, %v2780
        %v2816 = vpack.c.bf16 %v2781, %v2781
        %v2818 = vlaneseq
        %v2819 = vshrl.u32 %v2818, 7
        %v2820 = vsub.s32 0, %v2819
        %v2821 = vrot.slane %v2814, %v2820
        %v2855 = vunpack.c.l.b16 %v2782
        %v2856 = vunpack.c.l.b16 %v2783
        %v2857 = vunpack.c.l.b16 %v2784
        %v2858 = vunpack.c.l.b16 %v2785
        %v2859 = vunpack.c.l.b16 %v2786
        %v2860 = vunpack.c.l.b16 %v2787
        %v2861 = vunpack.c.l.b16 %v2788
        %v2862 = vunpack.c.l.b16 %v2789
        %v2863 = vunpack.c.l.b16 %v2790
        %v2864 = vunpack.c.l.b16 %v2791
        %v2865 = vunpack.c.l.b16 %v2792
        %v2866 = vunpack.c.l.b16 %v2793
        %v2867 = vunpack.c.l.b16 %v2794
        %v2868 = vunpack.c.l.b16 %v2795
        %v2869 = vunpack.c.l.b16 %v2796
        %v2870 = vunpack.c.l.b16 %v2797
        %v2871 = vunpack.c.l.b16 %v2798
        %v2872 = vunpack.c.l.b16 %v2799
        %v2873 = vunpack.c.l.b16 %v2800
        %v2874 = vunpack.c.l.b16 %v2801
        %v2875 = vunpack.c.l.b16 %v2802
        %v2876 = vunpack.c.l.b16 %v2803
        %v2877 = vunpack.c.l.b16 %v2804
        %v2878 = vunpack.c.l.b16 %v2805
        %v2879 = vunpack.c.l.b16 %v2806
        %v2880 = vunpack.c.l.b16 %v2807
        %v2881 = vunpack.c.l.b16 %v2808
        %v2882 = vunpack.c.l.b16 %v2809
        %v2883 = vunpack.c.l.b16 %v2810
        %v2884 = vunpack.c.l.b16 %v2811
        %v2885 = vunpack.c.l.b16 %v2812
        %v2886 = vunpack.c.l.b16 %v2813
        %v2887 = vpack.c.b16 %v2856, %v2855
        %v2888 = vpack.c.b16 %v2858, %v2857
        %v2889 = vpack.c.b16 %v2860, %v2859
        %v2890 = vpack.c.b16 %v2862, %v2861
        %v2891 = vpack.c.b16 %v2864, %v2863
        %v2892 = vpack.c.b16 %v2866, %v2865
        %v2893 = vpack.c.b16 %v2868, %v2867
        %v2894 = vpack.c.b16 %v2870, %v2869
        %v2895 = vpack.c.b16 %v2872, %v2871
        %v2896 = vpack.c.b16 %v2874, %v2873
        %v2897 = vpack.c.b16 %v2876, %v2875
        %v2898 = vpack.c.b16 %v2878, %v2877
        %v2899 = vpack.c.b16 %v2880, %v2879
        %v2900 = vpack.c.b16 %v2882, %v2881
        %v2901 = vpack.c.b16 %v2884, %v2883
        %v2902 = vpack.c.b16 %v2886, %v2885
        %2919 = vmatprep.subr.bf16.mxu0 0
        %2920 = vmatpush1.bf16.msra.mxu0 %v2894
        %2921 = vmatprep.subr.bf16.mxu0 0
        %2922 = vmatpush1.bf16.msra.mxu0 %v2893
        %2923 = vmatprep.subr.bf16.mxu0 0
        %2924 = vmatpush1.bf16.msra.mxu0 %v2892
        %2925 = vmatprep.subr.bf16.mxu0 0
        %2926 = vmatpush1.bf16.msra.mxu0 %v2891
        %2927 = vmatprep.subr.bf16.mxu0 0
        %2928 = vmatpush1.bf16.msra.mxu0 %v2890
        %2929 = vmatprep.subr.bf16.mxu0 0
        %2930 = vmatpush1.bf16.msra.mxu0 %v2889
        %2931 = vmatprep.subr.bf16.mxu0 0
        %2932 = vmatpush1.bf16.msra.mxu0 %v2888
        %2933 = vmatprep.subr.bf16.mxu0 0
        %2934 = vmatpush1.bf16.msra.mxu0 %v2887
        %2935 = vmatprep.subr.bf16.mxu0 0
        %2936 = vmatpush2.bf16.msra.mxu0 %v2902
        %2937 = vmatprep.subr.bf16.mxu0 0
        %2938 = vmatpush2.bf16.msra.mxu0 %v2901
        %2939 = vmatprep.subr.bf16.mxu0 0
        %2940 = vmatpush2.bf16.msra.mxu0 %v2900
        %2941 = vmatprep.subr.bf16.mxu0 0
        %2942 = vmatpush2.bf16.msra.mxu0 %v2899
        %2943 = vmatprep.subr.bf16.mxu0 0
        %2944 = vmatpush2.bf16.msra.mxu0 %v2898
        %2945 = vmatprep.subr.bf16.mxu0 0
        %2946 = vmatpush2.bf16.msra.mxu0 %v2897
        %2947 = vmatprep.subr.bf16.mxu0 0
        %2948 = vmatpush2.bf16.msra.mxu0 %v2896
        %2949 = vmatprep.subr.bf16.mxu0 0
        %2950 = vmatpush2.bf16.msra.mxu0 %v2895
        %2951 = vmatprep.mubr.bf16.mxu0 %v2816
        %2952 = vmatmul.mubr.bf16.gmra.mxu0 %v2815
        %v2953 = vpop.f32.mrf.mxu0
        %v2954 = vadd.f32 %v2821, %v2953
        %v2955 = vpop.f32.mrf.mxu0
        %v2956 = vpop.f32.mrf.mxu0
        %v2957 = vpop.f32.mrf.mxu0
        %2958 = vdwg.mxu0
        %v2959 = vadd.f32 %v2595, %v2954
        %v2960 = vld [vmem:[%s24] sm:$0x1]
        %v2961 = vld [vmem:[%s25] sm:$0x1]
        %2962 = vadd.xlane.f32.xlu0 %v2959
        %v2963 = vpop.xlane.xlu0 %2962
        %v2964 = vmul.f32 %v2963, %v853
        %v2965 = vsub.f32 %v2959, %v2964
        %v2966 = vmul.f32 %v2965, %v2965
        %2967 = vadd.xlane.f32.xlu0 %v2966
        %v2968 = vpop.xlane.xlu0 %2967
        %v2969 = vmul.f32 %v2968, 0.007874016
        %v2970 = vrsqrt.pop %v2969
        %v2971 = vmul.f32 %v2969, %v2970
        %vm2972 = vcmp.eq.f32.partialorder %v2969, inf
        %v2973 = vsel %vm2972, %v2969, %v2971
        %vm2974 = vcmp.eq.f32.partialorder %v2969, 0.0
        %v2975 = vand.u32 %v2969, 2147483648
        %v2976 = vsel %vm2974, %v2975, %v2973
        %v2978 = vlaneseq
        %v2979 = vshrl.u32 %v2978, 7
        %v2980 = vsub.s32 0, %v2979
        %v2981 = vrot.slane %v2960, %v2980
        %v2983 = vmul.f32 %v2981, %v2965
        %v2984 = vadd.f32 %v2976, 1e-06
        %v2985 = vrcp.pop %v2984
        %v2986 = vmul.f32 %v2983, %v2985
        %v2988 = vlaneseq
        %v2989 = vshrl.u32 %v2988, 7
        %v2990 = vsub.s32 0, %v2989
        %v2991 = vrot.slane %v2961, %v2990
        %v2993 = vadd.f32 %v2986, %v2991
        %2994 = vst [vmem:[%s821] sm:$0xff] %v2993
        %s2995 = sand.u32 %s614, 1
        %s2996 = scalar_lea.sflag [#allocation3], %s2995
        %s2997 = sand.u32 %s614, 1
        %s2998 = smul.addr %s2997, 8
        %s2999 = scalar_lea.vmem [#allocation2], %s2998
        // Predicated region
        $region125: #{encoder_forward.3} parent=123 // pred_check
          %p3000 = pneg %p624
        $region126: #{encoder_forward.3} parent=123 // pred_check_branch
          %3002 = sbr.rel (%p3000) target = $region128
        $region127: #{encoder_forward.3} parent=123 // pred_region
          %s3004 = ssub.s32 128, 128
          %3005 = vsyncadd %s2996, %s3004
          %s3006 = smul.addr %s40, 128
          %s3007 = scalar_lea.hbm %s26, %s3006
          %s3009 = sshll.u32 %s2999, 4
          %s3010 = int_to_ptr.vmem [resolvable:$true] %s3009
          %3012 = dma.vmem_to_hbm [thread:$0]  %s3010, 128, %s3007, %s2996
        $region128: #{encoder_forward.3} parent=123 // pred_fallthru
          _
      $region124: #{encoder_forward.3} parent=5 // pred_fallthru
        _
      %p3013 = scmp.le.s32.totalorder 2, %s35
      // Predicated region
      $region129: #{encoder_forward.3} parent=5 // pred_check
        %p3014 = pneg %p3013
      $region130: #{encoder_forward.3} parent=5 // pred_check_branch
        %3016 = sbr.rel (%p3014) target = $region132
      $region131: #{encoder_forward.3} parent=5 // pred_region
        %s3017 = ssub.s32 %s35, 2
        // Predicated region
        $region133: #{encoder_forward.3} parent=131 // pred_check
          %p3018 = pneg %p630
        $region134: #{encoder_forward.3} parent=131 // pred_check_branch
          %3020 = sbr.rel (%p3018) target = $region136
        $region135: #{encoder_forward.3} parent=131 // pred_region
          %s3021 = sand.u32 %s615, 1
          %s3022 = scalar_lea.sflag [#allocation3], %s3021
          %s3023 = sand.u32 %s615, 1
          %s3024 = smul.addr %s3023, 8
          %s3025 = scalar_lea.vmem [#allocation2], %s3024
          %3026 = dma.done %s3022, 128
        $region136: #{encoder_forward.3} parent=131 // pred_fallthru
          _
      $region132: #{encoder_forward.3} parent=5 // pred_fallthru
        _
    $region6: #{encoder_forward.3} parent=1 // loop_footer
      %s39 = sadd.s32 1, %s35
    $region7: #{encoder_forward.3} parent=1 // loop_footer_branch
      %34 = sbr.rel target = $region3
    $region8: #{encoder_forward.3} parent=1 // loop_exit
      _
    %3027 = vsyncpa [#allocation3], 1
    %s3028 = scalar_lea.sflag [#allocation3], 1
    %3029 = vsyncpa %s3028, 1

</llo_original>
